<compile_context>
chip_gen: v7x
topology: tpu7x:2x2x1
jax: 0.10.0
libtpu: 0.0.40
codegen_flags: <defaults>
</compile_context>

<pallas_src>
import jax
import jax.numpy as jnp
from jax.experimental import pallas as pl
from jax.experimental.pallas import tpu as pltpu


# ----------------------------------------------------------------------------
# Kernel
# ----------------------------------------------------------------------------
def bnn_pref_kernel(x_ref,
                    w1_ref, b1_ref, w2_ref, b2_ref,
                    whf_ref, bhf_ref, wf_ref, bf_ref,
                    wc1_ref, bc1_ref, wc2_ref, bc2_ref,
                    out_ref):
    tb = x_ref.shape[1]                  # rows of this batch tile
    d = x_ref.shape[2]                   # input feature dim
    attn_dim = bf_ref.shape[-1]          # 256
    num_heads = whf_ref.shape[-1] // attn_dim

    def mm(a_f32, w_bf16):
        # bf16 MXU matmul with f32 accumulation; activations stay f32 elsewhere
        # (v5e has no bf16 VPU/EUP).
        return jnp.dot(a_f32.astype(jnp.bfloat16), w_bf16,
                       preferred_element_type=jnp.float32)

    # --- twin network: both inputs in one row-stacked matmul ------------------
    xs = x_ref[...].reshape(2 * tb, d)                               # (2T, D)
    h = jnp.maximum(mm(xs, w1_ref[...]) + b1_ref[...], 0.0)         # (2T, 256)
    # TODO(synk): nn.Dropout is identity at inference; MC-dropout sampling
    # (model.train() during predict()) is not reproduced in-kernel.
    h = jnp.maximum(mm(h, w2_ref[...]) + b2_ref[...], 0.0)          # (2T, 128)
    combined = jnp.concatenate([h[:tb], h[tb:]], axis=-1)           # (T, 256)

    # --- multi-head attention ---------------------------------------------------
    # One fused matmul for all head projections (lane-dense packed wh),
    # per-head softmax on lane-aligned 256-wide slices.
    comb16 = combined.astype(jnp.bfloat16)
    logits = (jnp.dot(comb16, whf_ref[...],
                      preferred_element_type=jnp.float32)
              + bhf_ref[...])                                        # (T, H*256)

    head_outs = []
    for hh in range(num_heads):
        lh = logits[:, hh * attn_dim:(hh + 1) * attn_dim]            # (T, 256)
        m = jnp.max(lh, axis=-1, keepdims=True)
        e = jnp.exp(lh - m)
        # EUP approximate reciprocal (~1e-3 rel err, inside the 2e-3 tolerance).
        p = e * pl.reciprocal(jnp.sum(e, axis=-1, keepdims=True), approx=True)
        head_outs.append((p * combined).astype(jnp.bfloat16))        # (T, 256)

    # Fused final_linear: one K = H*256 matmul instead of H accumulated matmuls.
    heads = jnp.concatenate(head_outs, axis=-1)                      # (T, H*256)
    attn = (jnp.dot(heads, wf_ref[...],
                    preferred_element_type=jnp.float32)
            + bf_ref[...])                                           # (T, 256)

    # --- comparator --------------------------------------------------------------
    c = jnp.maximum(mm(attn, wc1_ref[...]) + bc1_ref[...], 0.0)     # (T, 64)
    # Final 64->1 linear with the batch moved onto lanes:
    #   wc2 (1, 64) @ c^T (64, T)  ->  (1, T)  (same pattern as q @ k^T),
    # so the output store is lane-dense (unmasked vst) instead of 1-lane masked.
    logit = (jnp.dot(wc2_ref[...], c.astype(jnp.bfloat16).T,
                     preferred_element_type=jnp.float32)
             + bc2_ref[...])                                         # (1, T)
    # numerically-stable sigmoid (no inf intermediate)
    z = jnp.exp(-jnp.abs(logit))
    out_ref[...] = jnp.where(logit >= 0.0, 1.0, z) / (1.0 + z)


# ----------------------------------------------------------------------------
# Wrapper
# ----------------------------------------------------------------------------
def _round_up(x, m):
    return ((x + m - 1) // m) * m


def _resident_spec(a):
    # full-array block, constant index_map -> DMA'd once, VMEM-resident across
    # grid steps.
    n = a.ndim
    return pl.BlockSpec(a.shape, lambda i, _n=n: (0,) * _n)


def bnn_pref_forward(x1, x2, params, tile_b=512):
    """sigmoid(comparator(MHA(cat(twin(x1), twin(x2))))), batched over rows."""
    B, D = x1.shape
    H = params["wh"].shape[0]
    attn_dim = params["wf"].shape[-1]            # 256
    assert tile_b % 128 == 0, "tile_b must be a multiple of 128"

    bf16 = jnp.bfloat16
    f32 = jnp.float32

    # pack weights into kernel layout: bf16 matmul operands, f32 biases
    w1 = params["w1"].astype(bf16)
    w2 = params["w2"].astype(bf16)
    whf = (jnp.transpose(params["wh"], (1, 0, 2))
           .reshape(attn_dim, H * attn_dim).astype(bf16))            # (256, H*256)
    bhf = params["bh"].reshape(1, H * attn_dim).astype(f32)          # (1, H*256)
    wf = params["wf"].astype(bf16)                                   # (H*256, 256)
    bfb = params["bf"].astype(f32)                                   # (1, 256)
    wc1 = params["wc1"].astype(bf16)                                 # (256, 64)
    wc2 = params["wc2"].reshape(1, -1).astype(bf16)                  # (1, 64)
    b1 = params["b1"].astype(f32)
    b2 = params["b2"].astype(f32)
    bc1 = params["bc1"].astype(f32)
    bc2 = params["bc2"].astype(f32)

    # Row tile: as large as requested, shrunk only if the batch itself is
    # smaller; always a multiple of 128 so all sublane/lane slices stay aligned.
    tb = min(tile_b, _round_up(B, 128))
    Bp = _round_up(B, tb)
    if Bp != B:
        pad = ((0, Bp - B), (0, 0))
        x1 = jnp.pad(x1, pad)
        x2 = jnp.pad(x2, pad)

    # Pre-stack both twin inputs: one DMA per grid step, no in-kernel concat.
    x = jnp.stack([x1, x2], axis=0)                                  # (2, Bp, D)

    weights = (w1, b1, w2, b2, whf, bhf, wf, bfb, wc1, bc1, wc2, bc2)
    n_tiles = Bp // tb

    out = pl.pallas_call(
        bnn_pref_kernel,
        out_shape=jax.ShapeDtypeStruct((n_tiles, tb), jnp.float32),  # lane-dense
        grid=(n_tiles,),
        in_specs=[pl.BlockSpec((2, tb, D), lambda i: (0, i, 0))]
                 + [_resident_spec(w) for w in weights],
        out_specs=pl.BlockSpec((1, tb), lambda i: (i, 0)),
        compiler_params=pltpu.CompilerParams(
            dimension_semantics=("parallel",),
            # large tiles need more than v5e's 16 MiB scoped default; 48 MiB
            # stays inside v7x's 64 MiB physical VMEM per core.
            vmem_limit_bytes=48 * 1024 * 1024),
    )(x, *weights)

    return out.reshape(-1)[:B].reshape(B, 1)


# ----------------------------------------------------------------------------
# Deterministic synthetic parameters (PyTorch-Linear-like bounds)
# ----------------------------------------------------------------------------
def init_params(input_dim, num_heads=4, seed=0):
    key = jax.random.PRNGKey(seed)

    def linear(key, fan_in, fan_out):
        kw, kb = jax.random.split(key)
        bound = 1.0 / jnp.sqrt(jnp.float32(fan_in))
        w = jax.random.uniform(kw, (fan_in, fan_out), jnp.float32, -bound, bound)
        b = jax.random.uniform(kb, (1, fan_out), jnp.float32, -bound, bound)
        return w, b

    keys = jax.random.split(key, 8 + num_heads)
    attn_dim = 128 * 2   # 256

    w1, b1 = linear(keys[0], input_dim, 256)
    w2, b2 = linear(keys[1], 256, 128)

    head_ws, head_bs = [], []
    for h in range(num_heads):
        wh, bh = linear(keys[2 + h], attn_dim, attn_dim)
        head_ws.append(wh)
        head_bs.append(bh)
    wh = jnp.stack(head_ws, axis=0)                      # (H, 256, 256)
    bh = jnp.stack(head_bs, axis=0)                      # (H, 1, 256)

    wf, bf = linear(keys[2 + num_heads], num_heads * attn_dim, attn_dim)
    wc1, bc1 = linear(keys[3 + num_heads], attn_dim, 64)
    wc2, bc2 = linear(keys[4 + num_heads], 64, 1)

    return dict(w1=w1, b1=b1, w2=w2, b2=b2,
                wh=wh, bh=bh, wf=wf, bf=bf,
                wc1=wc1, bc1=bc1, wc2=wc2, bc2=bc2)


# Pure-JAX reference mirroring the kernel's bf16-matmul / f32-accumulate
# precision (the kernel's remaining deltas are the approx softmax reciprocal
# and accumulation order, both well inside the 2e-3 tolerance).
def reference_forward(x1, x2, p):
    def mm(a, w):
        return jnp.dot(a.astype(jnp.bfloat16), w.astype(jnp.bfloat16),
                       preferred_element_type=jnp.float32)

    def twin(x):
        h = jnp.maximum(mm(x, p["w1"]) + p["b1"], 0.0)
        return jnp.maximum(mm(h, p["w2"]) + p["b2"], 0.0)

    combined = jnp.concatenate([twin(x1), twin(x2)], axis=-1)
    outs = []
    for h in range(p["wh"].shape[0]):
        logits = mm(combined, p["wh"][h]) + p["bh"][h]
        outs.append(jax.nn.softmax(logits, axis=-1) * combined)
    attn = mm(jnp.concatenate(outs, axis=-1), p["wf"]) + p["bf"]
    c = jnp.maximum(mm(attn, p["wc1"]) + p["bc1"], 0.0)
    logit = mm(c, p["wc2"]) + p["bc2"]
    return jax.nn.sigmoid(logit)


if __name__ == "__main__":
    B = 256            # demo batch -> single (tb=256) row tile
    input_dim = 32
    num_heads = 4

    key = jax.random.PRNGKey(0)
    k1, k2 = jax.random.split(key)
    x1 = jax.random.normal(k1, (B, input_dim), jnp.float32)
    x2 = jax.random.normal(k2, (B, input_dim), jnp.float32)

    params = init_params(input_dim, num_heads=num_heads, seed=0)

    out = jax.block_until_ready(bnn_pref_forward(x1, x2, params, tile_b=512))
    ref = jax.block_until_ready(reference_forward(x1, x2, params))

    assert out.shape == (B, 1)
    max_err = float(jnp.max(jnp.abs(out - ref)))
    assert jnp.allclose(out, ref, atol=2e-3, rtol=2e-3), f"max abs err {max_err}"
    print("KERNEL_OK")
</pallas_src>

<mosaic_0001>
module attributes {stable_mosaic.version = 11 : i64} {
  func.func @bnn_pref_kernel(%arg0: i32, %arg1: memref<2x256x32xf32, #tpu.memory_space<vmem>>, %arg2: memref<32x256xbf16, #tpu.memory_space<vmem>>, %arg3: memref<1x256xf32, #tpu.memory_space<vmem>>, %arg4: memref<256x128xbf16, #tpu.memory_space<vmem>>, %arg5: memref<1x128xf32, #tpu.memory_space<vmem>>, %arg6: memref<256x1024xbf16, #tpu.memory_space<vmem>>, %arg7: memref<1x1024xf32, #tpu.memory_space<vmem>>, %arg8: memref<1024x256xbf16, #tpu.memory_space<vmem>>, %arg9: memref<1x256xf32, #tpu.memory_space<vmem>>, %arg10: memref<256x64xbf16, #tpu.memory_space<vmem>>, %arg11: memref<1x64xf32, #tpu.memory_space<vmem>>, %arg12: memref<1x64xbf16, #tpu.memory_space<vmem>>, %arg13: memref<1x1xf32, #tpu.memory_space<vmem>>, %arg14: memref<1x256xf32, #tpu.memory_space<vmem>>) attributes {dimension_semantics = [#tpu.dimension_semantics<parallel>], iteration_bounds = array<i64: 1>, scalar_prefetch = 0 : i64, scratch_operands = 0 : i64, tpu.core_type = #tpu.core_type<tc>, window_params = [{transform_indices = @transform_0, window_bounds = array<i64: 2, 256, 32>}, {pipeline_mode = #tpu.pipeline_mode<synchronous>, transform_indices = @transform_1, window_bounds = array<i64: 32, 256>}, {pipeline_mode = #tpu.pipeline_mode<synchronous>, transform_indices = @transform_2, window_bounds = array<i64: 1, 256>}, {pipeline_mode = #tpu.pipeline_mode<synchronous>, transform_indices = @transform_3, window_bounds = array<i64: 256, 128>}, {pipeline_mode = #tpu.pipeline_mode<synchronous>, transform_indices = @transform_4, window_bounds = array<i64: 1, 128>}, {pipeline_mode = #tpu.pipeline_mode<synchronous>, transform_indices = @transform_5, window_bounds = array<i64: 256, 1024>}, {pipeline_mode = #tpu.pipeline_mode<synchronous>, transform_indices = @transform_6, window_bounds = array<i64: 1, 1024>}, {pipeline_mode = #tpu.pipeline_mode<synchronous>, transform_indices = @transform_7, window_bounds = array<i64: 1024, 256>}, {pipeline_mode = #tpu.pipeline_mode<synchronous>, transform_indices = @transform_8, window_bounds = array<i64: 1, 256>}, {pipeline_mode = #tpu.pipeline_mode<synchronous>, transform_indices = @transform_9, window_bounds = array<i64: 256, 64>}, {pipeline_mode = #tpu.pipeline_mode<synchronous>, transform_indices = @transform_10, window_bounds = array<i64: 1, 64>}, {pipeline_mode = #tpu.pipeline_mode<synchronous>, transform_indices = @transform_11, window_bounds = array<i64: 1, 64>}, {pipeline_mode = #tpu.pipeline_mode<synchronous>, transform_indices = @transform_12, window_bounds = array<i64: 1, 1>}, {transform_indices = @transform_13, window_bounds = array<i64: 1, 256>}]} {
    %c0 = arith.constant 0 : index
    %c0_0 = arith.constant 0 : index
    %c0_1 = arith.constant 0 : index
    %0 = vector.load %arg1[%c0, %c0_0, %c0_1] : memref<2x256x32xf32, #tpu.memory_space<vmem>>, vector<2x256x32xf32>
    %1 = vector.shape_cast %0 : vector<2x256x32xf32> to vector<512x32xf32>
    %c0_2 = arith.constant 0 : index
    %c0_3 = arith.constant 0 : index
    %2 = vector.load %arg2[%c0_2, %c0_3] : memref<32x256xbf16, #tpu.memory_space<vmem>>, vector<32x256xbf16>
    %3 = arith.truncf %1 : vector<512x32xf32> to vector<512x32xbf16>
    %cst = arith.constant dense<0.000000e+00> : vector<512x256xf32>
    %4 = tpu.matmul %3, %2, %cst {dimension_numbers = #tpu.dot_dimension_numbers<[1], [0], [0], [1], [0, 0, 1, 1], [], []>} : vector<512x32xbf16>, vector<32x256xbf16>, vector<512x256xf32> -> vector<512x256xf32>
    %c0_4 = arith.constant 0 : index
    %c0_5 = arith.constant 0 : index
    %5 = vector.load %arg3[%c0_4, %c0_5] : memref<1x256xf32, #tpu.memory_space<vmem>>, vector<1x256xf32>
    %6 = vector.broadcast %5 : vector<1x256xf32> to vector<512x256xf32>
    %7 = arith.addf %4, %6 : vector<512x256xf32>
    %cst_6 = arith.constant 0.000000e+00 : f32
    %8 = vector.broadcast %cst_6 : f32 to vector<512x256xf32>
    %9 = arith.maximumf %7, %8 : vector<512x256xf32>
    %c0_7 = arith.constant 0 : index
    %c0_8 = arith.constant 0 : index
    %10 = vector.load %arg4[%c0_7, %c0_8] : memref<256x128xbf16, #tpu.memory_space<vmem>>, vector<256x128xbf16>
    %11 = arith.truncf %9 : vector<512x256xf32> to vector<512x256xbf16>
    %cst_9 = arith.constant dense<0.000000e+00> : vector<512x128xf32>
    %12 = tpu.matmul %11, %10, %cst_9 {dimension_numbers = #tpu.dot_dimension_numbers<[1], [0], [0], [1], [0, 0, 1, 1], [], []>} : vector<512x256xbf16>, vector<256x128xbf16>, vector<512x128xf32> -> vector<512x128xf32>
    %c0_10 = arith.constant 0 : index
    %c0_11 = arith.constant 0 : index
    %13 = vector.load %arg5[%c0_10, %c0_11] : memref<1x128xf32, #tpu.memory_space<vmem>>, vector<1x128xf32>
    %14 = vector.broadcast %13 : vector<1x128xf32> to vector<512x128xf32>
    %15 = arith.addf %12, %14 : vector<512x128xf32>
    %cst_12 = arith.constant 0.000000e+00 : f32
    %16 = vector.broadcast %cst_12 : f32 to vector<512x128xf32>
    %17 = arith.maximumf %15, %16 : vector<512x128xf32>
    %18 = vector.extract_strided_slice %17 {offsets = [0, 0], sizes = [256, 128], strides = [1, 1]} : vector<512x128xf32> to vector<256x128xf32>
    %19 = vector.extract_strided_slice %17 {offsets = [256, 0], sizes = [256, 128], strides = [1, 1]} : vector<512x128xf32> to vector<256x128xf32>
    %20 = tpu.concatenate %18, %19 in 1 : vector<256x128xf32>, vector<256x128xf32> -> vector<256x256xf32>
    %21 = arith.truncf %20 : vector<256x256xf32> to vector<256x256xbf16>
    %c0_13 = arith.constant 0 : index
    %c0_14 = arith.constant 0 : index
    %22 = vector.load %arg6[%c0_13, %c0_14] : memref<256x1024xbf16, #tpu.memory_space<vmem>>, vector<256x1024xbf16>
    %cst_15 = arith.constant dense<0.000000e+00> : vector<256x1024xf32>
    %23 = tpu.matmul %21, %22, %cst_15 {dimension_numbers = #tpu.dot_dimension_numbers<[1], [0], [0], [1], [0, 0, 1, 1], [], []>} : vector<256x256xbf16>, vector<256x1024xbf16>, vector<256x1024xf32> -> vector<256x1024xf32>
    %c0_16 = arith.constant 0 : index
    %c0_17 = arith.constant 0 : index
    %24 = vector.load %arg7[%c0_16, %c0_17] : memref<1x1024xf32, #tpu.memory_space<vmem>>, vector<1x1024xf32>
    %25 = vector.broadcast %24 : vector<1x1024xf32> to vector<256x1024xf32>
    %26 = arith.addf %23, %25 : vector<256x1024xf32>
    %27 = vector.extract_strided_slice %26 {offsets = [0, 0], sizes = [256, 256], strides = [1, 1]} : vector<256x1024xf32> to vector<256x256xf32>
    %cst_18 = arith.constant dense<0xFF800000> : vector<256xf32>
    %28 = vector.multi_reduction <maximumf>, %27, %cst_18 [1] : vector<256x256xf32> to vector<256xf32>
    %29 = vector.shape_cast %28 : vector<256xf32> to vector<256x1xf32>
    %30 = vector.broadcast %29 : vector<256x1xf32> to vector<256x256xf32>
    %31 = arith.subf %27, %30 : vector<256x256xf32>
    %32 = math.exp %31 : vector<256x256xf32>
    %cst_19 = arith.constant dense<0.000000e+00> : vector<256xf32>
    %33 = vector.multi_reduction <add>, %32, %cst_19 [1] : vector<256x256xf32> to vector<256xf32>
    %34 = vector.shape_cast %33 : vector<256xf32> to vector<256x1xf32>
    %35 = tpu.reciprocal %34 {approx = true} : vector<256x1xf32> -> vector<256x1xf32>
    %36 = vector.broadcast %35 : vector<256x1xf32> to vector<256x256xf32>
    %37 = arith.mulf %32, %36 : vector<256x256xf32>
    %38 = arith.mulf %37, %20 : vector<256x256xf32>
    %39 = arith.truncf %38 : vector<256x256xf32> to vector<256x256xbf16>
    %40 = vector.extract_strided_slice %26 {offsets = [0, 256], sizes = [256, 256], strides = [1, 1]} : vector<256x1024xf32> to vector<256x256xf32>
    %cst_20 = arith.constant dense<0xFF800000> : vector<256xf32>
    %41 = vector.multi_reduction <maximumf>, %40, %cst_20 [1] : vector<256x256xf32> to vector<256xf32>
    %42 = vector.shape_cast %41 : vector<256xf32> to vector<256x1xf32>
    %43 = vector.broadcast %42 : vector<256x1xf32> to vector<256x256xf32>
    %44 = arith.subf %40, %43 : vector<256x256xf32>
    %45 = math.exp %44 : vector<256x256xf32>
    %cst_21 = arith.constant dense<0.000000e+00> : vector<256xf32>
    %46 = vector.multi_reduction <add>, %45, %cst_21 [1] : vector<256x256xf32> to vector<256xf32>
    %47 = vector.shape_cast %46 : vector<256xf32> to vector<256x1xf32>
    %48 = tpu.reciprocal %47 {approx = true} : vector<256x1xf32> -> vector<256x1xf32>
    %49 = vector.broadcast %48 : vector<256x1xf32> to vector<256x256xf32>
    %50 = arith.mulf %45, %49 : vector<256x256xf32>
    %51 = arith.mulf %50, %20 : vector<256x256xf32>
    %52 = arith.truncf %51 : vector<256x256xf32> to vector<256x256xbf16>
    %53 = vector.extract_strided_slice %26 {offsets = [0, 512], sizes = [256, 256], strides = [1, 1]} : vector<256x1024xf32> to vector<256x256xf32>
    %cst_22 = arith.constant dense<0xFF800000> : vector<256xf32>
    %54 = vector.multi_reduction <maximumf>, %53, %cst_22 [1] : vector<256x256xf32> to vector<256xf32>
    %55 = vector.shape_cast %54 : vector<256xf32> to vector<256x1xf32>
    %56 = vector.broadcast %55 : vector<256x1xf32> to vector<256x256xf32>
    %57 = arith.subf %53, %56 : vector<256x256xf32>
    %58 = math.exp %57 : vector<256x256xf32>
    %cst_23 = arith.constant dense<0.000000e+00> : vector<256xf32>
    %59 = vector.multi_reduction <add>, %58, %cst_23 [1] : vector<256x256xf32> to vector<256xf32>
    %60 = vector.shape_cast %59 : vector<256xf32> to vector<256x1xf32>
    %61 = tpu.reciprocal %60 {approx = true} : vector<256x1xf32> -> vector<256x1xf32>
    %62 = vector.broadcast %61 : vector<256x1xf32> to vector<256x256xf32>
    %63 = arith.mulf %58, %62 : vector<256x256xf32>
    %64 = arith.mulf %63, %20 : vector<256x256xf32>
    %65 = arith.truncf %64 : vector<256x256xf32> to vector<256x256xbf16>
    %66 = vector.extract_strided_slice %26 {offsets = [0, 768], sizes = [256, 256], strides = [1, 1]} : vector<256x1024xf32> to vector<256x256xf32>
    %cst_24 = arith.constant dense<0xFF800000> : vector<256xf32>
    %67 = vector.multi_reduction <maximumf>, %66, %cst_24 [1] : vector<256x256xf32> to vector<256xf32>
    %68 = vector.shape_cast %67 : vector<256xf32> to vector<256x1xf32>
    %69 = vector.broadcast %68 : vector<256x1xf32> to vector<256x256xf32>
    %70 = arith.subf %66, %69 : vector<256x256xf32>
    %71 = math.exp %70 : vector<256x256xf32>
    %cst_25 = arith.constant dense<0.000000e+00> : vector<256xf32>
    %72 = vector.multi_reduction <add>, %71, %cst_25 [1] : vector<256x256xf32> to vector<256xf32>
    %73 = vector.shape_cast %72 : vector<256xf32> to vector<256x1xf32>
    %74 = tpu.reciprocal %73 {approx = true} : vector<256x1xf32> -> vector<256x1xf32>
    %75 = vector.broadcast %74 : vector<256x1xf32> to vector<256x256xf32>
    %76 = arith.mulf %71, %75 : vector<256x256xf32>
    %77 = arith.mulf %76, %20 : vector<256x256xf32>
    %78 = arith.truncf %77 : vector<256x256xf32> to vector<256x256xbf16>
    %79 = tpu.concatenate %39, %52, %65, %78 in 1 : vector<256x256xbf16>, vector<256x256xbf16>, vector<256x256xbf16>, vector<256x256xbf16> -> vector<256x1024xbf16>
    %c0_26 = arith.constant 0 : index
    %c0_27 = arith.constant 0 : index
    %80 = vector.load %arg8[%c0_26, %c0_27] : memref<1024x256xbf16, #tpu.memory_space<vmem>>, vector<1024x256xbf16>
    %cst_28 = arith.constant dense<0.000000e+00> : vector<256x256xf32>
    %81 = tpu.matmul %79, %80, %cst_28 {dimension_numbers = #tpu.dot_dimension_numbers<[1], [0], [0], [1], [0, 0, 1, 1], [], []>} : vector<256x1024xbf16>, vector<1024x256xbf16>, vector<256x256xf32> -> vector<256x256xf32>
    %c0_29 = arith.constant 0 : index
    %c0_30 = arith.constant 0 : index
    %82 = vector.load %arg9[%c0_29, %c0_30] : memref<1x256xf32, #tpu.memory_space<vmem>>, vector<1x256xf32>
    %83 = vector.broadcast %82 : vector<1x256xf32> to vector<256x256xf32>
    %84 = arith.addf %81, %83 : vector<256x256xf32>
    %c0_31 = arith.constant 0 : index
    %c0_32 = arith.constant 0 : index
    %85 = vector.load %arg10[%c0_31, %c0_32] : memref<256x64xbf16, #tpu.memory_space<vmem>>, vector<256x64xbf16>
    %86 = arith.truncf %84 : vector<256x256xf32> to vector<256x256xbf16>
    %cst_33 = arith.constant dense<0.000000e+00> : vector<256x64xf32>
    %87 = tpu.matmul %86, %85, %cst_33 {dimension_numbers = #tpu.dot_dimension_numbers<[1], [0], [0], [1], [0, 0, 1, 1], [], []>} : vector<256x256xbf16>, vector<256x64xbf16>, vector<256x64xf32> -> vector<256x64xf32>
    %c0_34 = arith.constant 0 : index
    %c0_35 = arith.constant 0 : index
    %88 = vector.load %arg11[%c0_34, %c0_35] : memref<1x64xf32, #tpu.memory_space<vmem>>, vector<1x64xf32>
    %89 = vector.broadcast %88 : vector<1x64xf32> to vector<256x64xf32>
    %90 = arith.addf %87, %89 : vector<256x64xf32>
    %cst_36 = arith.constant 0.000000e+00 : f32
    %91 = vector.broadcast %cst_36 : f32 to vector<256x64xf32>
    %92 = arith.maximumf %90, %91 : vector<256x64xf32>
    %c0_37 = arith.constant 0 : index
    %c0_38 = arith.constant 0 : index
    %93 = vector.load %arg12[%c0_37, %c0_38] : memref<1x64xbf16, #tpu.memory_space<vmem>>, vector<1x64xbf16>
    %94 = arith.truncf %92 : vector<256x64xf32> to vector<256x64xbf16>
    %95 = tpu.transpose %94, [1, 0] : vector<256x64xbf16> -> vector<64x256xbf16>
    %cst_39 = arith.constant dense<0.000000e+00> : vector<1x256xf32>
    %96 = tpu.matmul %93, %95, %cst_39 {dimension_numbers = #tpu.dot_dimension_numbers<[1], [0], [0], [1], [0, 0, 1, 1], [], []>} : vector<1x64xbf16>, vector<64x256xbf16>, vector<1x256xf32> -> vector<1x256xf32>
    %c0_40 = arith.constant 0 : index
    %c0_41 = arith.constant 0 : index
    %97 = vector.load %arg13[%c0_40, %c0_41] : memref<1x1xf32, #tpu.memory_space<vmem>>, vector<1x1xf32>
    %98 = vector.broadcast %97 : vector<1x1xf32> to vector<1x256xf32>
    %99 = arith.addf %96, %98 : vector<1x256xf32>
    %100 = math.absf %99 : vector<1x256xf32>
    %cst_42 = arith.constant 0.000000e+00 : f32
    %101 = vector.broadcast %cst_42 : f32 to vector<1x256xf32>
    %102 = arith.subf %101, %100 : vector<1x256xf32>
    %103 = math.exp %102 : vector<1x256xf32>
    %cst_43 = arith.constant 0.000000e+00 : f32
    %104 = vector.broadcast %cst_43 : f32 to vector<1x256xf32>
    %105 = arith.cmpf oge, %99, %104 : vector<1x256xf32>
    %cst_44 = arith.constant 1.000000e+00 : f32
    %106 = vector.broadcast %cst_44 : f32 to vector<1x256xf32>
    %107 = arith.select %105, %106, %103 : vector<1x256xi1>, vector<1x256xf32>
    %cst_45 = arith.constant 1.000000e+00 : f32
    %108 = vector.broadcast %cst_45 : f32 to vector<1x256xf32>
    %109 = arith.addf %108, %103 : vector<1x256xf32>
    %110 = arith.divf %107, %109 : vector<1x256xf32>
    %c0_46 = arith.constant 0 : index
    %c0_47 = arith.constant 0 : index
    %111 = vector.load %arg14[%c0_46, %c0_47] : memref<1x256xf32, #tpu.memory_space<vmem>>, vector<1x256xf32>
    tpu.vector_store %arg14[%c0_46, %c0_47], %110 {strides = array<i32>} : memref<1x256xf32, #tpu.memory_space<vmem>>, vector<1x256xf32>,
    return
  }
  func.func @transform_0(%arg0: i32) -> (i32, i32, i32) {
    %c0_i32 = arith.constant 0 : i32
    %c0_i32_0 = arith.constant 0 : i32
    %c0_i32_1 = arith.constant 0 : i32
    return %c0_i32, %arg0, %c0_i32_0 : i32, i32, i32
  }
  func.func @transform_1(%arg0: i32) -> (i32, i32) {
    %c0_i32 = arith.constant 0 : i32
    %c0_i32_0 = arith.constant 0 : i32
    %c0_i32_1 = arith.constant 0 : i32
    return %c0_i32, %c0_i32_0 : i32, i32
  }
  func.func @transform_2(%arg0: i32) -> (i32, i32) {
    %c0_i32 = arith.constant 0 : i32
    %c0_i32_0 = arith.constant 0 : i32
    %c0_i32_1 = arith.constant 0 : i32
    return %c0_i32, %c0_i32_0 : i32, i32
  }
  func.func @transform_3(%arg0: i32) -> (i32, i32) {
    %c0_i32 = arith.constant 0 : i32
    %c0_i32_0 = arith.constant 0 : i32
    %c0_i32_1 = arith.constant 0 : i32
    return %c0_i32, %c0_i32_0 : i32, i32
  }
  func.func @transform_4(%arg0: i32) -> (i32, i32) {
    %c0_i32 = arith.constant 0 : i32
    %c0_i32_0 = arith.constant 0 : i32
    %c0_i32_1 = arith.constant 0 : i32
    return %c0_i32, %c0_i32_0 : i32, i32
  }
  func.func @transform_5(%arg0: i32) -> (i32, i32) {
    %c0_i32 = arith.constant 0 : i32
    %c0_i32_0 = arith.constant 0 : i32
    %c0_i32_1 = arith.constant 0 : i32
    return %c0_i32, %c0_i32_0 : i32, i32
  }
  func.func @transform_6(%arg0: i32) -> (i32, i32) {
    %c0_i32 = arith.constant 0 : i32
    %c0_i32_0 = arith.constant 0 : i32
    %c0_i32_1 = arith.constant 0 : i32
    return %c0_i32, %c0_i32_0 : i32, i32
  }
  func.func @transform_7(%arg0: i32) -> (i32, i32) {
    %c0_i32 = arith.constant 0 : i32
    %c0_i32_0 = arith.constant 0 : i32
    %c0_i32_1 = arith.constant 0 : i32
    return %c0_i32, %c0_i32_0 : i32, i32
  }
  func.func @transform_8(%arg0: i32) -> (i32, i32) {
    %c0_i32 = arith.constant 0 : i32
    %c0_i32_0 = arith.constant 0 : i32
    %c0_i32_1 = arith.constant 0 : i32
    return %c0_i32, %c0_i32_0 : i32, i32
  }
  func.func @transform_9(%arg0: i32) -> (i32, i32) {
    %c0_i32 = arith.constant 0 : i32
    %c0_i32_0 = arith.constant 0 : i32
    %c0_i32_1 = arith.constant 0 : i32
    return %c0_i32, %c0_i32_0 : i32, i32
  }
  func.func @transform_10(%arg0: i32) -> (i32, i32) {
    %c0_i32 = arith.constant 0 : i32
    %c0_i32_0 = arith.constant 0 : i32
    %c0_i32_1 = arith.constant 0 : i32
    return %c0_i32, %c0_i32_0 : i32, i32
  }
  func.func @transform_11(%arg0: i32) -> (i32, i32) {
    %c0_i32 = arith.constant 0 : i32
    %c0_i32_0 = arith.constant 0 : i32
    %c0_i32_1 = arith.constant 0 : i32
    return %c0_i32, %c0_i32_0 : i32, i32
  }
  func.func @transform_12(%arg0: i32) -> (i32, i32) {
    %c0_i32 = arith.constant 0 : i32
    %c0_i32_0 = arith.constant 0 : i32
    %c0_i32_1 = arith.constant 0 : i32
    return %c0_i32, %c0_i32_0 : i32, i32
  }
  func.func @transform_13(%arg0: i32) -> (i32, i32) {
    %c0_i32 = arith.constant 0 : i32
    %c0_i32_0 = arith.constant 0 : i32
    return %arg0, %c0_i32 : i32, i32
  }
}

</mosaic_0001>

<llo_original>
// kernel: tpu_custom_call.1
$region0: #{tpu_custom_call.1}
  #allocation0 [shape = 'u32[]', space=smem, size = 0x4, offset = 0x4, fixed_abs, tag = 'smem constant byte address 0x4 - core index']
  #allocation1 [shape = 'u32[144,128]{1,0:T(1,128)}', space=vmem, size = 0x12000, scoped, tag = 'internal scratch']
  #allocation2 [shape = 'f32[1,1]{1,0:T(1,128)S(1)}', space=vmem, size = 0x200, scoped, tag = 'scoped memory for tpu_custom_call.1']
  %s0 = inlined_call_operand.vmem [shape: f32[2,256,32], index: 0, kind: input, shape index: {}]
  %s1 = inlined_call_operand.vmem [shape: bf16[32,256], index: 1, kind: input, shape index: {}]
  %s2 = inlined_call_operand.vmem [shape: f32[1,256], index: 2, kind: input, shape index: {}]
  %s3 = inlined_call_operand.vmem [shape: bf16[256,128], index: 3, kind: input, shape index: {}]
  %s4 = inlined_call_operand.vmem [shape: f32[1,128], index: 4, kind: input, shape index: {}]
  %s5 = inlined_call_operand.hbm [shape: bf16[256,1024], index: 5, kind: input, shape index: {}]
  %s6 = inlined_call_operand.vmem [shape: f32[1,1024], index: 6, kind: input, shape index: {}]
  %s7 = inlined_call_operand.hbm [shape: bf16[1024,256], index: 7, kind: input, shape index: {}]
  %s8 = inlined_call_operand.vmem [shape: f32[1,256], index: 8, kind: input, shape index: {}]
  %s9 = inlined_call_operand.vmem [shape: bf16[256,64], index: 9, kind: input, shape index: {}]
  %s10 = inlined_call_operand.vmem [shape: f32[1,64], index: 10, kind: input, shape index: {}]
  %s11 = inlined_call_operand.vmem [shape: bf16[1,64], index: 11, kind: input, shape index: {}]
  %s12 = inlined_call_operand.<no memory space> [shape: f32[1,1], index: 12, kind: input, shape index: {}]
  %s13 = inlined_call_operand.hbm [shape: f32[1,256], index: 13, kind: output, shape index: {}]
  %s14 = sld [smem:[#allocation0]]
  $region70: #{tpu_custom_call.1} parent=0
    _
  %s16 = ssub.s32 1, %s14
  %s17 = scalar_select 0, %s16, %s14
  %v18 = vstv %s12
  %19 = vst [vmem:[#allocation2] sm:$0x1] %v18
  $region1: #{tpu_custom_call.1} parent=0
    #allocation3 [shape = 'u8[524288]{0}', space=vmem, size = 0x80000, scoped, tag = 'input window, operand 5, single buffered']
    #allocation4 [shape = 's32[1]{0}', space=sflag, size = 0x4, scoped, tag = 'scoped memory for tpu_custom_call.1']
    #allocation5 [shape = 's32[1]{0}', space=sflag, size = 0x4, scoped, tag = 'scoped memory for tpu_custom_call.1']
    #allocation6 [shape = 'u8[524288]{0}', space=vmem, size = 0x80000, scoped, tag = 'input window, operand 7, single buffered']
    #allocation7 [shape = 's32[1]{0}', space=sflag, size = 0x4, scoped, tag = 'scoped memory for tpu_custom_call.1']
    #allocation8 [shape = 'u8[1024]{0}', space=vmem, size = 0x400, scoped, tag = 'output window, operand 0, single buffered']
    %20 = vsyncpa [#allocation4], 0
    %21 = vsyncpa [#allocation7], 0
    %22 = vsyncpa [#allocation5], 0
    // Predicated region
    $region2: #{tpu_custom_call.1} parent=1 // pred_check
      _
    $region3: #{tpu_custom_call.1} parent=1 // pred_check_branch
      %24 = sbr.rel (0) target = $region5
    $region4: #{tpu_custom_call.1} parent=1 // pred_region
      _
    $region5: #{tpu_custom_call.1} parent=1 // pred_fallthru
      _
    // Predicated region
    $region6: #{tpu_custom_call.1} parent=1 // pred_check
      _
    $region7: #{tpu_custom_call.1} parent=1 // pred_check_branch
      %26 = sbr.rel (0) target = $region9
    $region8: #{tpu_custom_call.1} parent=1 // pred_region
      _
    $region9: #{tpu_custom_call.1} parent=1 // pred_fallthru
      _
    // Predicated region
    $region10: #{tpu_custom_call.1} parent=1 // pred_check
      _
    $region11: #{tpu_custom_call.1} parent=1 // pred_check_branch
      %28 = sbr.rel (0) target = $region13
    $region12: #{tpu_custom_call.1} parent=1 // pred_region
      _
    $region13: #{tpu_custom_call.1} parent=1 // pred_fallthru
      _
    // Predicated region
    $region14: #{tpu_custom_call.1} parent=1 // pred_check
      _
    $region15: #{tpu_custom_call.1} parent=1 // pred_check_branch
      %30 = sbr.rel (0) target = $region17
    $region16: #{tpu_custom_call.1} parent=1 // pred_region
      _
    $region17: #{tpu_custom_call.1} parent=1 // pred_fallthru
      _
    // Predicated region
    $region18: #{tpu_custom_call.1} parent=1 // pred_check
      _
    $region19: #{tpu_custom_call.1} parent=1 // pred_check_branch
      %32 = sbr.rel (0) target = $region21
    $region20: #{tpu_custom_call.1} parent=1 // pred_region
      _
    $region21: #{tpu_custom_call.1} parent=1 // pred_fallthru
      _
    // Predicated region
    $region22: #{tpu_custom_call.1} parent=1 // pred_check
      _
    $region23: #{tpu_custom_call.1} parent=1 // pred_check_branch
      %34 = sbr.rel (0) target = $region25
    $region24: #{tpu_custom_call.1} parent=1 // pred_region
      %s36 = ssub.s32 16384, 16384
      %37 = vsyncadd [#allocation4], %s36
      %s38 = sshll.u32 [#allocation3], 4
      %s39 = int_to_ptr.vmem [resolvable:$true] %s38
      %44 = dma.hbm_to_vmem [thread:$0]  %s5, 16384, %s39, [#allocation4], 512, 512, 32
    $region25: #{tpu_custom_call.1} parent=1 // pred_fallthru
      _
    // Predicated region
    $region26: #{tpu_custom_call.1} parent=1 // pred_check
      _
    $region27: #{tpu_custom_call.1} parent=1 // pred_check_branch
      %46 = sbr.rel (0) target = $region29
    $region28: #{tpu_custom_call.1} parent=1 // pred_region
      _
    $region29: #{tpu_custom_call.1} parent=1 // pred_fallthru
      _
    // Predicated region
    $region30: #{tpu_custom_call.1} parent=1 // pred_check
      _
    $region31: #{tpu_custom_call.1} parent=1 // pred_check_branch
      %48 = sbr.rel (0) target = $region33
    $region32: #{tpu_custom_call.1} parent=1 // pred_region
      %s50 = ssub.s32 16384, 16384
      %51 = vsyncadd [#allocation7], %s50
      %s52 = sshll.u32 [#allocation6], 4
      %s53 = int_to_ptr.vmem [resolvable:$true] %s52
      %58 = dma.hbm_to_vmem [thread:$0]  %s7, 16384, %s53, [#allocation7], 128, 128, 8
    $region33: #{tpu_custom_call.1} parent=1 // pred_fallthru
      _
    // Predicated region
    $region34: #{tpu_custom_call.1} parent=1 // pred_check
      _
    $region35: #{tpu_custom_call.1} parent=1 // pred_check_branch
      %60 = sbr.rel (0) target = $region37
    $region36: #{tpu_custom_call.1} parent=1 // pred_region
      _
    $region37: #{tpu_custom_call.1} parent=1 // pred_fallthru
      _
    // Predicated region
    $region38: #{tpu_custom_call.1} parent=1 // pred_check
      _
    $region39: #{tpu_custom_call.1} parent=1 // pred_check_branch
      %62 = sbr.rel (0) target = $region41
    $region40: #{tpu_custom_call.1} parent=1 // pred_region
      _
    $region41: #{tpu_custom_call.1} parent=1 // pred_fallthru
      _
    // Predicated region
    $region42: #{tpu_custom_call.1} parent=1 // pred_check
      _
    $region43: #{tpu_custom_call.1} parent=1 // pred_check_branch
      %64 = sbr.rel (0) target = $region45
    $region44: #{tpu_custom_call.1} parent=1 // pred_region
      _
    $region45: #{tpu_custom_call.1} parent=1 // pred_fallthru
      _
    // Predicated region
    $region46: #{tpu_custom_call.1} parent=1 // pred_check
      _
    $region47: #{tpu_custom_call.1} parent=1 // pred_check_branch
      %66 = sbr.rel (0) target = $region49
    $region48: #{tpu_custom_call.1} parent=1 // pred_region
      _
    $region49: #{tpu_custom_call.1} parent=1 // pred_fallthru
      _
    // Predicated region
    $region50: #{tpu_custom_call.1} parent=1 // pred_check
      _
    $region51: #{tpu_custom_call.1} parent=1 // pred_check_branch
      %68 = sbr.rel (0) target = $region53
    $region52: #{tpu_custom_call.1} parent=1 // pred_region
      _
    $region53: #{tpu_custom_call.1} parent=1 // pred_fallthru
      _
    // Predicated region
    $region54: #{tpu_custom_call.1} parent=1 // pred_check
      _
    $region55: #{tpu_custom_call.1} parent=1 // pred_check_branch
      %70 = sbr.rel (0) target = $region57
    $region56: #{tpu_custom_call.1} parent=1 // pred_region
      %71 = dma.done [#allocation4], 16384
    $region57: #{tpu_custom_call.1} parent=1 // pred_fallthru
      _
    // Predicated region
    $region58: #{tpu_custom_call.1} parent=1 // pred_check
      _
    $region59: #{tpu_custom_call.1} parent=1 // pred_check_branch
      %73 = sbr.rel (0) target = $region61
    $region60: #{tpu_custom_call.1} parent=1 // pred_region
      %74 = dma.done [#allocation7], 16384
    $region61: #{tpu_custom_call.1} parent=1 // pred_fallthru
      _
    %v76 = vld [vmem:[%s0] sm:$0xff]
    %v77 = vld [vmem:[%s0 + $0x8] sm:$0xff]
    %v78 = vld [vmem:[%s0 + $0x10] sm:$0xff]
    %v79 = vld [vmem:[%s0 + $0x18] sm:$0xff]
    %v80 = vld [vmem:[%s0 + $0x20] sm:$0xff]
    %v81 = vld [vmem:[%s0 + $0x28] sm:$0xff]
    %v82 = vld [vmem:[%s0 + $0x30] sm:$0xff]
    %v83 = vld [vmem:[%s0 + $0x38] sm:$0xff]
    %v84 = vld [vmem:[%s0 + $0x40] sm:$0xff]
    %v85 = vld [vmem:[%s0 + $0x48] sm:$0xff]
    %v86 = vld [vmem:[%s0 + $0x50] sm:$0xff]
    %v87 = vld [vmem:[%s0 + $0x58] sm:$0xff]
    %v88 = vld [vmem:[%s0 + $0x60] sm:$0xff]
    %v89 = vld [vmem:[%s0 + $0x68] sm:$0xff]
    %v90 = vld [vmem:[%s0 + $0x70] sm:$0xff]
    %v91 = vld [vmem:[%s0 + $0x78] sm:$0xff]
    %v92 = vld [vmem:[%s0 + $0x80] sm:$0xff]
    %v93 = vld [vmem:[%s0 + $0x88] sm:$0xff]
    %v94 = vld [vmem:[%s0 + $0x90] sm:$0xff]
    %v95 = vld [vmem:[%s0 + $0x98] sm:$0xff]
    %v96 = vld [vmem:[%s0 + $0xa0] sm:$0xff]
    %v97 = vld [vmem:[%s0 + $0xa8] sm:$0xff]
    %v98 = vld [vmem:[%s0 + $0xb0] sm:$0xff]
    %v99 = vld [vmem:[%s0 + $0xb8] sm:$0xff]
    %v100 = vld [vmem:[%s0 + $0xc0] sm:$0xff]
    %v101 = vld [vmem:[%s0 + $0xc8] sm:$0xff]
    %v102 = vld [vmem:[%s0 + $0xd0] sm:$0xff]
    %v103 = vld [vmem:[%s0 + $0xd8] sm:$0xff]
    %v104 = vld [vmem:[%s0 + $0xe0] sm:$0xff]
    %v105 = vld [vmem:[%s0 + $0xe8] sm:$0xff]
    %v106 = vld [vmem:[%s0 + $0xf0] sm:$0xff]
    %v107 = vld [vmem:[%s0 + $0xf8] sm:$0xff]
    %v108 = vld [vmem:[%s0 + $0x100] sm:$0xff]
    %v109 = vld [vmem:[%s0 + $0x108] sm:$0xff]
    %v110 = vld [vmem:[%s0 + $0x110] sm:$0xff]
    %v111 = vld [vmem:[%s0 + $0x118] sm:$0xff]
    %v112 = vld [vmem:[%s0 + $0x120] sm:$0xff]
    %v113 = vld [vmem:[%s0 + $0x128] sm:$0xff]
    %v114 = vld [vmem:[%s0 + $0x130] sm:$0xff]
    %v115 = vld [vmem:[%s0 + $0x138] sm:$0xff]
    %v116 = vld [vmem:[%s0 + $0x140] sm:$0xff]
    %v117 = vld [vmem:[%s0 + $0x148] sm:$0xff]
    %v118 = vld [vmem:[%s0 + $0x150] sm:$0xff]
    %v119 = vld [vmem:[%s0 + $0x158] sm:$0xff]
    %v120 = vld [vmem:[%s0 + $0x160] sm:$0xff]
    %v121 = vld [vmem:[%s0 + $0x168] sm:$0xff]
    %v122 = vld [vmem:[%s0 + $0x170] sm:$0xff]
    %v123 = vld [vmem:[%s0 + $0x178] sm:$0xff]
    %v124 = vld [vmem:[%s0 + $0x180] sm:$0xff]
    %v125 = vld [vmem:[%s0 + $0x188] sm:$0xff]
    %v126 = vld [vmem:[%s0 + $0x190] sm:$0xff]
    %v127 = vld [vmem:[%s0 + $0x198] sm:$0xff]
    %v128 = vld [vmem:[%s0 + $0x1a0] sm:$0xff]
    %v129 = vld [vmem:[%s0 + $0x1a8] sm:$0xff]
    %v130 = vld [vmem:[%s0 + $0x1b0] sm:$0xff]
    %v131 = vld [vmem:[%s0 + $0x1b8] sm:$0xff]
    %v132 = vld [vmem:[%s0 + $0x1c0] sm:$0xff]
    %v133 = vld [vmem:[%s0 + $0x1c8] sm:$0xff]
    %v134 = vld [vmem:[%s0 + $0x1d0] sm:$0xff]
    %v135 = vld [vmem:[%s0 + $0x1d8] sm:$0xff]
    %v136 = vld [vmem:[%s0 + $0x1e0] sm:$0xff]
    %v137 = vld [vmem:[%s0 + $0x1e8] sm:$0xff]
    %v138 = vld [vmem:[%s0 + $0x1f0] sm:$0xff]
    %v139 = vld [vmem:[%s0 + $0x1f8] sm:$0xff]
    %v140 = vld [vmem:[%s1] sm:$0xff]
    %v141 = vld [vmem:[%s1 + $0x8] sm:$0xff]
    %v142 = vld [vmem:[%s1 + $0x10] sm:$0xff]
    %v143 = vld [vmem:[%s1 + $0x18] sm:$0xff]
    %v144 = vpack.c.bf16 %v77, %v76
    %v145 = vpack.c.bf16 %v79, %v78
    %v146 = vpack.c.bf16 %v81, %v80
    %v147 = vpack.c.bf16 %v83, %v82
    %v148 = vpack.c.bf16 %v85, %v84
    %v149 = vpack.c.bf16 %v87, %v86
    %v150 = vpack.c.bf16 %v89, %v88
    %v151 = vpack.c.bf16 %v91, %v90
    %v152 = vpack.c.bf16 %v93, %v92
    %v153 = vpack.c.bf16 %v95, %v94
    %v154 = vpack.c.bf16 %v97, %v96
    %v155 = vpack.c.bf16 %v99, %v98
    %v156 = vpack.c.bf16 %v101, %v100
    %v157 = vpack.c.bf16 %v103, %v102
    %v158 = vpack.c.bf16 %v105, %v104
    %v159 = vpack.c.bf16 %v107, %v106
    %v160 = vpack.c.bf16 %v109, %v108
    %v161 = vpack.c.bf16 %v111, %v110
    %v162 = vpack.c.bf16 %v113, %v112
    %v163 = vpack.c.bf16 %v115, %v114
    %v164 = vpack.c.bf16 %v117, %v116
    %v165 = vpack.c.bf16 %v119, %v118
    %v166 = vpack.c.bf16 %v121, %v120
    %v167 = vpack.c.bf16 %v123, %v122
    %v168 = vpack.c.bf16 %v125, %v124
    %v169 = vpack.c.bf16 %v127, %v126
    %v170 = vpack.c.bf16 %v129, %v128
    %v171 = vpack.c.bf16 %v131, %v130
    %v172 = vpack.c.bf16 %v133, %v132
    %v173 = vpack.c.bf16 %v135, %v134
    %v174 = vpack.c.bf16 %v137, %v136
    %v175 = vpack.c.bf16 %v139, %v138
    %v176 = vld [vmem:[%s2] sm:$0x3]
    %v178 = vlaneseq
    %v179 = vshrl.u32 %v178, 7
    %v180 = vsub.s32 0, %v179
    %v181 = vrot.slane %v176, %v180
    %v182 = vlaneseq
    %v183 = vshrl.u32 %v182, 7
    %v184 = vsub.s32 1, %v183
    %v185 = vrot.slane %v176, %v184
    %v192 = vunpack.c.l.b16 %v140
    %v193 = vunpack.c.h.b16 %v140
    %v194 = vunpack.c.l.b16 %v141
    %v195 = vunpack.c.h.b16 %v141
    %v196 = vunpack.c.l.b16 %v142
    %v197 = vunpack.c.h.b16 %v142
    %v198 = vunpack.c.l.b16 %v143
    %v199 = vunpack.c.h.b16 %v143
    %v200 = vpack.c.b16 %v194, %v192
    %v201 = vpack.c.b16 %v195, %v193
    %v202 = vpack.c.b16 %v198, %v196
    %v203 = vpack.c.b16 %v199, %v197
    %vm208 = vcmask 261120
    %v210 = vsel %vm208, %v144, 0
    %v213 = vsel %vm208, %v145, 0
    %v216 = vsel %vm208, %v146, 0
    %v219 = vsel %vm208, %v147, 0
    %v222 = vsel %vm208, %v148, 0
    %v225 = vsel %vm208, %v149, 0
    %v228 = vsel %vm208, %v150, 0
    %v231 = vsel %vm208, %v151, 0
    %v234 = vsel %vm208, %v152, 0
    %v237 = vsel %vm208, %v153, 0
    %v240 = vsel %vm208, %v154, 0
    %v243 = vsel %vm208, %v155, 0
    %v246 = vsel %vm208, %v156, 0
    %v249 = vsel %vm208, %v157, 0
    %v252 = vsel %vm208, %v158, 0
    %v255 = vsel %vm208, %v159, 0
    %v258 = vsel %vm208, %v160, 0
    %v261 = vsel %vm208, %v161, 0
    %v264 = vsel %vm208, %v162, 0
    %v267 = vsel %vm208, %v163, 0
    %v270 = vsel %vm208, %v164, 0
    %v273 = vsel %vm208, %v165, 0
    %v276 = vsel %vm208, %v166, 0
    %v279 = vsel %vm208, %v167, 0
    %v282 = vsel %vm208, %v168, 0
    %v285 = vsel %vm208, %v169, 0
    %v288 = vsel %vm208, %v170, 0
    %v291 = vsel %vm208, %v171, 0
    %v294 = vsel %vm208, %v172, 0
    %v297 = vsel %vm208, %v173, 0
    %v300 = vsel %vm208, %v174, 0
    %v303 = vsel %vm208, %v175, 0
    %305 = vmatprep.subr.bf16.mxu0 %v201
    %306 = vmatpush1.bf16.msra.mxu0 %v200
    %307 = vmatprep.subr.bf16.mxu0 %v203
    %308 = vmatpush1.bf16.msra.mxu0 %v202
    %309 = vmatprep.subr.bf16.mxu0 0
    %310 = vmatpush1.bf16.msra.mxu0 0
    %311 = vmatprep.subr.bf16.mxu0 0
    %312 = vmatpush1.bf16.msra.mxu0 0
    %313 = vmatprep.subr.bf16.mxu0 0
    %314 = vmatpush1.bf16.msra.mxu0 0
    %315 = vmatprep.subr.bf16.mxu0 0
    %316 = vmatpush1.bf16.msra.mxu0 0
    %317 = vmatprep.subr.bf16.mxu0 0
    %318 = vmatpush1.bf16.msra.mxu0 0
    %319 = vmatprep.subr.bf16.mxu0 0
    %320 = vmatpush1.bf16.msra.mxu0 0
    %321 = vmatprep.subr.bf16.mxu0 0
    %322 = vmatpush1.bf16.msra.mxu0 0
    %323 = vmatprep.subr.bf16.mxu0 0
    %324 = vmatpush1.bf16.msra.mxu0 0
    %325 = vmatprep.subr.bf16.mxu0 0
    %326 = vmatpush1.bf16.msra.mxu0 0
    %327 = vmatprep.subr.bf16.mxu0 0
    %328 = vmatpush1.bf16.msra.mxu0 0
    %329 = vmatprep.subr.bf16.mxu0 0
    %330 = vmatpush1.bf16.msra.mxu0 0
    %331 = vmatprep.subr.bf16.mxu0 0
    %332 = vmatpush1.bf16.msra.mxu0 0
    %333 = vmatprep.subr.bf16.mxu0 0
    %334 = vmatpush1.bf16.msra.mxu0 0
    %335 = vmatprep.subr.bf16.mxu0 0
    %336 = vmatpush1.bf16.msra.mxu0 0
    %337 = vmatprep.mubr.bf16.mxu0 0
    %338 = vmatmul.mubr.bf16.gmra.mrb[0].mxu0 %v210
    %v339 = vpop.f32.mrb[0].mxu0
    %v340 = vadd.f32 %v181, %v339
    %v341 = vpop.f32.mrb[0].mxu0
    %v342 = vadd.f32 %v185, %v341
    %v343 = vpop.f32.mrb[0].mxu0
    %v344 = vadd.f32 %v181, %v343
    %v345 = vpop.f32.mrb[0].mxu0
    %v346 = vadd.f32 %v185, %v345
    %347 = vmatprep.mubr.bf16.mxu0 0
    %348 = vmatmul.mubr.bf16.gmra.mrb[0].mxu0 %v213
    %v349 = vpop.f32.mrb[0].mxu0
    %v350 = vadd.f32 %v181, %v349
    %v351 = vpop.f32.mrb[0].mxu0
    %v352 = vadd.f32 %v185, %v351
    %v353 = vpop.f32.mrb[0].mxu0
    %v354 = vadd.f32 %v181, %v353
    %v355 = vpop.f32.mrb[0].mxu0
    %v356 = vadd.f32 %v185, %v355
    %357 = vmatprep.mubr.bf16.mxu0 0
    %358 = vmatmul.mubr.bf16.gmra.mrb[0].mxu0 %v216
    %v359 = vpop.f32.mrb[0].mxu0
    %v360 = vadd.f32 %v181, %v359
    %v361 = vpop.f32.mrb[0].mxu0
    %v362 = vadd.f32 %v185, %v361
    %v363 = vpop.f32.mrb[0].mxu0
    %v364 = vadd.f32 %v181, %v363
    %v365 = vpop.f32.mrb[0].mxu0
    %v366 = vadd.f32 %v185, %v365
    %367 = vmatprep.mubr.bf16.mxu0 0
    %368 = vmatmul.mubr.bf16.gmra.mrb[0].mxu0 %v219
    %v369 = vpop.f32.mrb[0].mxu0
    %v370 = vadd.f32 %v181, %v369
    %v371 = vpop.f32.mrb[0].mxu0
    %v372 = vadd.f32 %v185, %v371
    %v373 = vpop.f32.mrb[0].mxu0
    %v374 = vadd.f32 %v181, %v373
    %v375 = vpop.f32.mrb[0].mxu0
    %v376 = vadd.f32 %v185, %v375
    %377 = vmatprep.mubr.bf16.mxu0 0
    %378 = vmatmul.mubr.bf16.gmra.mrb[0].mxu0 %v222
    %v379 = vpop.f32.mrb[0].mxu0
    %v380 = vadd.f32 %v181, %v379
    %v381 = vpop.f32.mrb[0].mxu0
    %v382 = vadd.f32 %v185, %v381
    %v383 = vpop.f32.mrb[0].mxu0
    %v384 = vadd.f32 %v181, %v383
    %v385 = vpop.f32.mrb[0].mxu0
    %v386 = vadd.f32 %v185, %v385
    %387 = vmatprep.mubr.bf16.mxu0 0
    %388 = vmatmul.mubr.bf16.gmra.mrb[0].mxu0 %v225
    %v389 = vpop.f32.mrb[0].mxu0
    %v390 = vadd.f32 %v181, %v389
    %v391 = vpop.f32.mrb[0].mxu0
    %v392 = vadd.f32 %v185, %v391
    %v393 = vpop.f32.mrb[0].mxu0
    %v394 = vadd.f32 %v181, %v393
    %v395 = vpop.f32.mrb[0].mxu0
    %v396 = vadd.f32 %v185, %v395
    %397 = vmatprep.mubr.bf16.mxu0 0
    %398 = vmatmul.mubr.bf16.gmra.mrb[0].mxu0 %v228
    %v399 = vpop.f32.mrb[0].mxu0
    %v400 = vadd.f32 %v181, %v399
    %v401 = vpop.f32.mrb[0].mxu0
    %v402 = vadd.f32 %v185, %v401
    %v403 = vpop.f32.mrb[0].mxu0
    %v404 = vadd.f32 %v181, %v403
    %v405 = vpop.f32.mrb[0].mxu0
    %v406 = vadd.f32 %v185, %v405
    %407 = vmatprep.mubr.bf16.mxu0 0
    %408 = vmatmul.mubr.bf16.gmra.mrb[0].mxu0 %v231
    %v409 = vpop.f32.mrb[0].mxu0
    %v410 = vadd.f32 %v181, %v409
    %v411 = vpop.f32.mrb[0].mxu0
    %v412 = vadd.f32 %v185, %v411
    %v413 = vpop.f32.mrb[0].mxu0
    %v414 = vadd.f32 %v181, %v413
    %v415 = vpop.f32.mrb[0].mxu0
    %v416 = vadd.f32 %v185, %v415
    %417 = vmatprep.mubr.bf16.mxu0 0
    %418 = vmatmul.mubr.bf16.gmra.mrb[0].mxu0 %v234
    %v419 = vpop.f32.mrb[0].mxu0
    %v420 = vadd.f32 %v181, %v419
    %v421 = vpop.f32.mrb[0].mxu0
    %v422 = vadd.f32 %v185, %v421
    %v423 = vpop.f32.mrb[0].mxu0
    %v424 = vadd.f32 %v181, %v423
    %v425 = vpop.f32.mrb[0].mxu0
    %v426 = vadd.f32 %v185, %v425
    %427 = vmatprep.mubr.bf16.mxu0 0
    %428 = vmatmul.mubr.bf16.gmra.mrb[0].mxu0 %v237
    %v429 = vpop.f32.mrb[0].mxu0
    %v430 = vadd.f32 %v181, %v429
    %v431 = vpop.f32.mrb[0].mxu0
    %v432 = vadd.f32 %v185, %v431
    %v433 = vpop.f32.mrb[0].mxu0
    %v434 = vadd.f32 %v181, %v433
    %v435 = vpop.f32.mrb[0].mxu0
    %v436 = vadd.f32 %v185, %v435
    %437 = vmatprep.mubr.bf16.mxu0 0
    %438 = vmatmul.mubr.bf16.gmra.mrb[0].mxu0 %v240
    %v439 = vpop.f32.mrb[0].mxu0
    %v440 = vadd.f32 %v181, %v439
    %v441 = vpop.f32.mrb[0].mxu0
    %v442 = vadd.f32 %v185, %v441
    %v443 = vpop.f32.mrb[0].mxu0
    %v444 = vadd.f32 %v181, %v443
    %v445 = vpop.f32.mrb[0].mxu0
    %v446 = vadd.f32 %v185, %v445
    %447 = vmatprep.mubr.bf16.mxu0 0
    %448 = vmatmul.mubr.bf16.gmra.mrb[0].mxu0 %v243
    %v449 = vpop.f32.mrb[0].mxu0
    %v450 = vadd.f32 %v181, %v449
    %v451 = vpop.f32.mrb[0].mxu0
    %v452 = vadd.f32 %v185, %v451
    %v453 = vpop.f32.mrb[0].mxu0
    %v454 = vadd.f32 %v181, %v453
    %v455 = vpop.f32.mrb[0].mxu0
    %v456 = vadd.f32 %v185, %v455
    %457 = vmatprep.mubr.bf16.mxu0 0
    %458 = vmatmul.mubr.bf16.gmra.mrb[0].mxu0 %v246
    %v459 = vpop.f32.mrb[0].mxu0
    %v460 = vadd.f32 %v181, %v459
    %v461 = vpop.f32.mrb[0].mxu0
    %v462 = vadd.f32 %v185, %v461
    %v463 = vpop.f32.mrb[0].mxu0
    %v464 = vadd.f32 %v181, %v463
    %v465 = vpop.f32.mrb[0].mxu0
    %v466 = vadd.f32 %v185, %v465
    %467 = vmatprep.mubr.bf16.mxu0 0
    %468 = vmatmul.mubr.bf16.gmra.mrb[0].mxu0 %v249
    %v469 = vpop.f32.mrb[0].mxu0
    %v470 = vadd.f32 %v181, %v469
    %v471 = vpop.f32.mrb[0].mxu0
    %v472 = vadd.f32 %v185, %v471
    %v473 = vpop.f32.mrb[0].mxu0
    %v474 = vadd.f32 %v181, %v473
    %v475 = vpop.f32.mrb[0].mxu0
    %v476 = vadd.f32 %v185, %v475
    %477 = vmatprep.mubr.bf16.mxu0 0
    %478 = vmatmul.mubr.bf16.gmra.mrb[0].mxu0 %v252
    %v479 = vpop.f32.mrb[0].mxu0
    %v480 = vadd.f32 %v181, %v479
    %v481 = vpop.f32.mrb[0].mxu0
    %v482 = vadd.f32 %v185, %v481
    %v483 = vpop.f32.mrb[0].mxu0
    %v484 = vadd.f32 %v181, %v483
    %v485 = vpop.f32.mrb[0].mxu0
    %v486 = vadd.f32 %v185, %v485
    %487 = vmatprep.mubr.bf16.mxu0 0
    %488 = vmatmul.mubr.bf16.gmra.mrb[0].mxu0 %v255
    %v489 = vpop.f32.mrb[0].mxu0
    %v490 = vadd.f32 %v181, %v489
    %v491 = vpop.f32.mrb[0].mxu0
    %v492 = vadd.f32 %v185, %v491
    %v493 = vpop.f32.mrb[0].mxu0
    %v494 = vadd.f32 %v181, %v493
    %v495 = vpop.f32.mrb[0].mxu0
    %v496 = vadd.f32 %v185, %v495
    %497 = vmatprep.mubr.bf16.mxu0 0
    %498 = vmatmul.mubr.bf16.gmra.mrb[0].mxu0 %v258
    %v499 = vpop.f32.mrb[0].mxu0
    %v500 = vadd.f32 %v181, %v499
    %v501 = vpop.f32.mrb[0].mxu0
    %v502 = vadd.f32 %v185, %v501
    %v503 = vpop.f32.mrb[0].mxu0
    %v504 = vadd.f32 %v181, %v503
    %v505 = vpop.f32.mrb[0].mxu0
    %v506 = vadd.f32 %v185, %v505
    %507 = vmatprep.mubr.bf16.mxu0 0
    %508 = vmatmul.mubr.bf16.gmra.mrb[0].mxu0 %v261
    %v509 = vpop.f32.mrb[0].mxu0
    %v510 = vadd.f32 %v181, %v509
    %v511 = vpop.f32.mrb[0].mxu0
    %v512 = vadd.f32 %v185, %v511
    %v513 = vpop.f32.mrb[0].mxu0
    %v514 = vadd.f32 %v181, %v513
    %v515 = vpop.f32.mrb[0].mxu0
    %v516 = vadd.f32 %v185, %v515
    %517 = vmatprep.mubr.bf16.mxu0 0
    %518 = vmatmul.mubr.bf16.gmra.mrb[0].mxu0 %v264
    %v519 = vpop.f32.mrb[0].mxu0
    %v520 = vadd.f32 %v181, %v519
    %v521 = vpop.f32.mrb[0].mxu0
    %v522 = vadd.f32 %v185, %v521
    %v523 = vpop.f32.mrb[0].mxu0
    %v524 = vadd.f32 %v181, %v523
    %v525 = vpop.f32.mrb[0].mxu0
    %v526 = vadd.f32 %v185, %v525
    %527 = vmatprep.mubr.bf16.mxu0 0
    %528 = vmatmul.mubr.bf16.gmra.mrb[0].mxu0 %v267
    %v529 = vpop.f32.mrb[0].mxu0
    %v530 = vadd.f32 %v181, %v529
    %v531 = vpop.f32.mrb[0].mxu0
    %v532 = vadd.f32 %v185, %v531
    %v533 = vpop.f32.mrb[0].mxu0
    %v534 = vadd.f32 %v181, %v533
    %v535 = vpop.f32.mrb[0].mxu0
    %v536 = vadd.f32 %v185, %v535
    %537 = vmatprep.mubr.bf16.mxu0 0
    %538 = vmatmul.mubr.bf16.gmra.mrb[0].mxu0 %v270
    %v539 = vpop.f32.mrb[0].mxu0
    %v540 = vadd.f32 %v181, %v539
    %v541 = vpop.f32.mrb[0].mxu0
    %v542 = vadd.f32 %v185, %v541
    %v543 = vpop.f32.mrb[0].mxu0
    %v544 = vadd.f32 %v181, %v543
    %v545 = vpop.f32.mrb[0].mxu0
    %v546 = vadd.f32 %v185, %v545
    %547 = vmatprep.mubr.bf16.mxu0 0
    %548 = vmatmul.mubr.bf16.gmra.mrb[0].mxu0 %v273
    %v549 = vpop.f32.mrb[0].mxu0
    %v550 = vadd.f32 %v181, %v549
    %v551 = vpop.f32.mrb[0].mxu0
    %v552 = vadd.f32 %v185, %v551
    %v553 = vpop.f32.mrb[0].mxu0
    %v554 = vadd.f32 %v181, %v553
    %v555 = vpop.f32.mrb[0].mxu0
    %v556 = vadd.f32 %v185, %v555
    %557 = vmatprep.mubr.bf16.mxu0 0
    %558 = vmatmul.mubr.bf16.gmra.mrb[0].mxu0 %v276
    %v559 = vpop.f32.mrb[0].mxu0
    %v560 = vadd.f32 %v181, %v559
    %v561 = vpop.f32.mrb[0].mxu0
    %v562 = vadd.f32 %v185, %v561
    %v563 = vpop.f32.mrb[0].mxu0
    %v564 = vadd.f32 %v181, %v563
    %v565 = vpop.f32.mrb[0].mxu0
    %v566 = vadd.f32 %v185, %v565
    %567 = vmatprep.mubr.bf16.mxu0 0
    %568 = vmatmul.mubr.bf16.gmra.mrb[0].mxu0 %v279
    %v569 = vpop.f32.mrb[0].mxu0
    %v570 = vadd.f32 %v181, %v569
    %v571 = vpop.f32.mrb[0].mxu0
    %v572 = vadd.f32 %v185, %v571
    %v573 = vpop.f32.mrb[0].mxu0
    %v574 = vadd.f32 %v181, %v573
    %v575 = vpop.f32.mrb[0].mxu0
    %v576 = vadd.f32 %v185, %v575
    %577 = vmatprep.mubr.bf16.mxu0 0
    %578 = vmatmul.mubr.bf16.gmra.mrb[0].mxu0 %v282
    %v579 = vpop.f32.mrb[0].mxu0
    %v580 = vadd.f32 %v181, %v579
    %v581 = vpop.f32.mrb[0].mxu0
    %v582 = vadd.f32 %v185, %v581
    %v583 = vpop.f32.mrb[0].mxu0
    %v584 = vadd.f32 %v181, %v583
    %v585 = vpop.f32.mrb[0].mxu0
    %v586 = vadd.f32 %v185, %v585
    %587 = vmatprep.mubr.bf16.mxu0 0
    %588 = vmatmul.mubr.bf16.gmra.mrb[0].mxu0 %v285
    %v589 = vpop.f32.mrb[0].mxu0
    %v590 = vadd.f32 %v181, %v589
    %v591 = vpop.f32.mrb[0].mxu0
    %v592 = vadd.f32 %v185, %v591
    %v593 = vpop.f32.mrb[0].mxu0
    %v594 = vadd.f32 %v181, %v593
    %v595 = vpop.f32.mrb[0].mxu0
    %v596 = vadd.f32 %v185, %v595
    %597 = vmatprep.mubr.bf16.mxu0 0
    %598 = vmatmul.mubr.bf16.gmra.mrb[0].mxu0 %v288
    %v599 = vpop.f32.mrb[0].mxu0
    %v600 = vadd.f32 %v181, %v599
    %v601 = vpop.f32.mrb[0].mxu0
    %v602 = vadd.f32 %v185, %v601
    %v603 = vpop.f32.mrb[0].mxu0
    %v604 = vadd.f32 %v181, %v603
    %v605 = vpop.f32.mrb[0].mxu0
    %v606 = vadd.f32 %v185, %v605
    %607 = vmatprep.mubr.bf16.mxu0 0
    %608 = vmatmul.mubr.bf16.gmra.mrb[0].mxu0 %v291
    %v609 = vpop.f32.mrb[0].mxu0
    %v610 = vadd.f32 %v181, %v609
    %v611 = vpop.f32.mrb[0].mxu0
    %v612 = vadd.f32 %v185, %v611
    %v613 = vpop.f32.mrb[0].mxu0
    %v614 = vadd.f32 %v181, %v613
    %v615 = vpop.f32.mrb[0].mxu0
    %v616 = vadd.f32 %v185, %v615
    %617 = vmatprep.mubr.bf16.mxu0 0
    %618 = vmatmul.mubr.bf16.gmra.mrb[0].mxu0 %v294
    %v619 = vpop.f32.mrb[0].mxu0
    %v620 = vadd.f32 %v181, %v619
    %v621 = vpop.f32.mrb[0].mxu0
    %v622 = vadd.f32 %v185, %v621
    %v623 = vpop.f32.mrb[0].mxu0
    %v624 = vadd.f32 %v181, %v623
    %v625 = vpop.f32.mrb[0].mxu0
    %v626 = vadd.f32 %v185, %v625
    %627 = vmatprep.mubr.bf16.mxu0 0
    %628 = vmatmul.mubr.bf16.gmra.mrb[0].mxu0 %v297
    %v629 = vpop.f32.mrb[0].mxu0
    %v630 = vadd.f32 %v181, %v629
    %v631 = vpop.f32.mrb[0].mxu0
    %v632 = vadd.f32 %v185, %v631
    %v633 = vpop.f32.mrb[0].mxu0
    %v634 = vadd.f32 %v181, %v633
    %v635 = vpop.f32.mrb[0].mxu0
    %v636 = vadd.f32 %v185, %v635
    %637 = vmatprep.mubr.bf16.mxu0 0
    %638 = vmatmul.mubr.bf16.gmra.mrb[0].mxu0 %v300
    %v639 = vpop.f32.mrb[0].mxu0
    %v640 = vadd.f32 %v181, %v639
    %v641 = vpop.f32.mrb[0].mxu0
    %v642 = vadd.f32 %v185, %v641
    %v643 = vpop.f32.mrb[0].mxu0
    %v644 = vadd.f32 %v181, %v643
    %v645 = vpop.f32.mrb[0].mxu0
    %v646 = vadd.f32 %v185, %v645
    %647 = vmatprep.mubr.bf16.mxu0 0
    %648 = vmatmul.mubr.bf16.gmra.mrb[0].mxu0 %v303
    %v649 = vpop.f32.mrb[0].mxu0
    %v650 = vadd.f32 %v181, %v649
    %v651 = vpop.f32.mrb[0].mxu0
    %v652 = vadd.f32 %v185, %v651
    %v653 = vpop.f32.mrb[0].mxu0
    %v654 = vadd.f32 %v181, %v653
    %v655 = vpop.f32.mrb[0].mxu0
    %v656 = vadd.f32 %v185, %v655
    %657 = vdwg.mxu0
    %v658 = vmax.f32 %v340, 0.0
    %v659 = vmax.f32 %v342, 0.0
    %v660 = vmax.f32 %v344, 0.0
    %v661 = vmax.f32 %v346, 0.0
    %v662 = vmax.f32 %v350, 0.0
    %v663 = vmax.f32 %v352, 0.0
    %v664 = vmax.f32 %v354, 0.0
    %v665 = vmax.f32 %v356, 0.0
    %v666 = vmax.f32 %v360, 0.0
    %v667 = vmax.f32 %v362, 0.0
    %v668 = vmax.f32 %v364, 0.0
    %v669 = vmax.f32 %v366, 0.0
    %v670 = vmax.f32 %v370, 0.0
    %v671 = vmax.f32 %v372, 0.0
    %v672 = vmax.f32 %v374, 0.0
    %v673 = vmax.f32 %v376, 0.0
    %v674 = vmax.f32 %v380, 0.0
    %v675 = vmax.f32 %v382, 0.0
    %v676 = vmax.f32 %v384, 0.0
    %v677 = vmax.f32 %v386, 0.0
    %v678 = vmax.f32 %v390, 0.0
    %v679 = vmax.f32 %v392, 0.0
    %v680 = vmax.f32 %v394, 0.0
    %v681 = vmax.f32 %v396, 0.0
    %v682 = vmax.f32 %v400, 0.0
    %v683 = vmax.f32 %v402, 0.0
    %v684 = vmax.f32 %v404, 0.0
    %v685 = vmax.f32 %v406, 0.0
    %v686 = vmax.f32 %v410, 0.0
    %v687 = vmax.f32 %v412, 0.0
    %v688 = vmax.f32 %v414, 0.0
    %v689 = vmax.f32 %v416, 0.0
    %v690 = vmax.f32 %v420, 0.0
    %v691 = vmax.f32 %v422, 0.0
    %v692 = vmax.f32 %v424, 0.0
    %v693 = vmax.f32 %v426, 0.0
    %v694 = vmax.f32 %v430, 0.0
    %v695 = vmax.f32 %v432, 0.0
    %v696 = vmax.f32 %v434, 0.0
    %v697 = vmax.f32 %v436, 0.0
    %v698 = vmax.f32 %v440, 0.0
    %v699 = vmax.f32 %v442, 0.0
    %v700 = vmax.f32 %v444, 0.0
    %v701 = vmax.f32 %v446, 0.0
    %v702 = vmax.f32 %v450, 0.0
    %v703 = vmax.f32 %v452, 0.0
    %v704 = vmax.f32 %v454, 0.0
    %v705 = vmax.f32 %v456, 0.0
    %v706 = vmax.f32 %v460, 0.0
    %v707 = vmax.f32 %v462, 0.0
    %v708 = vmax.f32 %v464, 0.0
    %v709 = vmax.f32 %v466, 0.0
    %v710 = vmax.f32 %v470, 0.0
    %v711 = vmax.f32 %v472, 0.0
    %v712 = vmax.f32 %v474, 0.0
    %v713 = vmax.f32 %v476, 0.0
    %v714 = vmax.f32 %v480, 0.0
    %v715 = vmax.f32 %v482, 0.0
    %v716 = vmax.f32 %v484, 0.0
    %v717 = vmax.f32 %v486, 0.0
    %v718 = vmax.f32 %v490, 0.0
    %v719 = vmax.f32 %v492, 0.0
    %v720 = vmax.f32 %v494, 0.0
    %v721 = vmax.f32 %v496, 0.0
    %v722 = vmax.f32 %v500, 0.0
    %v723 = vmax.f32 %v502, 0.0
    %v724 = vmax.f32 %v504, 0.0
    %v725 = vmax.f32 %v506, 0.0
    %v726 = vmax.f32 %v510, 0.0
    %v727 = vmax.f32 %v512, 0.0
    %v728 = vmax.f32 %v514, 0.0
    %v729 = vmax.f32 %v516, 0.0
    %v730 = vmax.f32 %v520, 0.0
    %v731 = vmax.f32 %v522, 0.0
    %v732 = vmax.f32 %v524, 0.0
    %v733 = vmax.f32 %v526, 0.0
    %v734 = vmax.f32 %v530, 0.0
    %v735 = vmax.f32 %v532, 0.0
    %v736 = vmax.f32 %v534, 0.0
    %v737 = vmax.f32 %v536, 0.0
    %v738 = vmax.f32 %v540, 0.0
    %v739 = vmax.f32 %v542, 0.0
    %v740 = vmax.f32 %v544, 0.0
    %v741 = vmax.f32 %v546, 0.0
    %v742 = vmax.f32 %v550, 0.0
    %v743 = vmax.f32 %v552, 0.0
    %v744 = vmax.f32 %v554, 0.0
    %v745 = vmax.f32 %v556, 0.0
    %v746 = vmax.f32 %v560, 0.0
    %v747 = vmax.f32 %v562, 0.0
    %v748 = vmax.f32 %v564, 0.0
    %v749 = vmax.f32 %v566, 0.0
    %v750 = vmax.f32 %v570, 0.0
    %v751 = vmax.f32 %v572, 0.0
    %v752 = vmax.f32 %v574, 0.0
    %v753 = vmax.f32 %v576, 0.0
    %v754 = vmax.f32 %v580, 0.0
    %v755 = vmax.f32 %v582, 0.0
    %v756 = vmax.f32 %v584, 0.0
    %v757 = vmax.f32 %v586, 0.0
    %v758 = vmax.f32 %v590, 0.0
    %v759 = vmax.f32 %v592, 0.0
    %v760 = vmax.f32 %v594, 0.0
    %v761 = vmax.f32 %v596, 0.0
    %v762 = vmax.f32 %v600, 0.0
    %v763 = vmax.f32 %v602, 0.0
    %v764 = vmax.f32 %v604, 0.0
    %v765 = vmax.f32 %v606, 0.0
    %v766 = vmax.f32 %v610, 0.0
    %v767 = vmax.f32 %v612, 0.0
    %v768 = vmax.f32 %v614, 0.0
    %v769 = vmax.f32 %v616, 0.0
    %v770 = vmax.f32 %v620, 0.0
    %v771 = vmax.f32 %v622, 0.0
    %v772 = vmax.f32 %v624, 0.0
    %v773 = vmax.f32 %v626, 0.0
    %v774 = vmax.f32 %v630, 0.0
    %v775 = vmax.f32 %v632, 0.0
    %v776 = vmax.f32 %v634, 0.0
    %v777 = vmax.f32 %v636, 0.0
    %v778 = vmax.f32 %v640, 0.0
    %v779 = vmax.f32 %v642, 0.0
    %v780 = vmax.f32 %v644, 0.0
    %v781 = vmax.f32 %v646, 0.0
    %v782 = vmax.f32 %v650, 0.0
    %v783 = vmax.f32 %v652, 0.0
    %v784 = vmax.f32 %v654, 0.0
    %v785 = vmax.f32 %v656, 0.0
    %v786 = vld [vmem:[%s3] sm:$0xf]
    %v787 = vld [vmem:[%s3 + $0x4] sm:$0xf]
    %v788 = vld [vmem:[%s3 + $0x8] sm:$0xf]
    %v789 = vld [vmem:[%s3 + $0xc] sm:$0xf]
    %v790 = vld [vmem:[%s3 + $0x10] sm:$0xf]
    %v791 = vld [vmem:[%s3 + $0x14] sm:$0xf]
    %v792 = vld [vmem:[%s3 + $0x18] sm:$0xf]
    %v793 = vld [vmem:[%s3 + $0x1c] sm:$0xf]
    %v794 = vld [vmem:[%s3 + $0x20] sm:$0xf]
    %v795 = vld [vmem:[%s3 + $0x24] sm:$0xf]
    %v796 = vld [vmem:[%s3 + $0x28] sm:$0xf]
    %v797 = vld [vmem:[%s3 + $0x2c] sm:$0xf]
    %v798 = vld [vmem:[%s3 + $0x30] sm:$0xf]
    %v799 = vld [vmem:[%s3 + $0x34] sm:$0xf]
    %v800 = vld [vmem:[%s3 + $0x38] sm:$0xf]
    %v801 = vld [vmem:[%s3 + $0x3c] sm:$0xf]
    %v802 = vld [vmem:[%s3 + $0x40] sm:$0xf]
    %v803 = vld [vmem:[%s3 + $0x44] sm:$0xf]
    %v804 = vld [vmem:[%s3 + $0x48] sm:$0xf]
    %v805 = vld [vmem:[%s3 + $0x4c] sm:$0xf]
    %v806 = vld [vmem:[%s3 + $0x50] sm:$0xf]
    %v807 = vld [vmem:[%s3 + $0x54] sm:$0xf]
    %v808 = vld [vmem:[%s3 + $0x58] sm:$0xf]
    %v809 = vld [vmem:[%s3 + $0x5c] sm:$0xf]
    %v810 = vld [vmem:[%s3 + $0x60] sm:$0xf]
    %v811 = vld [vmem:[%s3 + $0x64] sm:$0xf]
    %v812 = vld [vmem:[%s3 + $0x68] sm:$0xf]
    %v813 = vld [vmem:[%s3 + $0x6c] sm:$0xf]
    %v814 = vld [vmem:[%s3 + $0x70] sm:$0xf]
    %v815 = vld [vmem:[%s3 + $0x74] sm:$0xf]
    %v816 = vld [vmem:[%s3 + $0x78] sm:$0xf]
    %v817 = vld [vmem:[%s3 + $0x7c] sm:$0xf]
    %v818 = vpack.c.bf16 %v660, %v658
    %v819 = vpack.c.bf16 %v661, %v659
    %v820 = vpack.c.bf16 %v664, %v662
    %v821 = vpack.c.bf16 %v665, %v663
    %v822 = vpack.c.bf16 %v668, %v666
    %v823 = vpack.c.bf16 %v669, %v667
    %v824 = vpack.c.bf16 %v672, %v670
    %v825 = vpack.c.bf16 %v673, %v671
    %v826 = vpack.c.bf16 %v676, %v674
    %v827 = vpack.c.bf16 %v677, %v675
    %v828 = vpack.c.bf16 %v680, %v678
    %v829 = vpack.c.bf16 %v681, %v679
    %v830 = vpack.c.bf16 %v684, %v682
    %v831 = vpack.c.bf16 %v685, %v683
    %v832 = vpack.c.bf16 %v688, %v686
    %v833 = vpack.c.bf16 %v689, %v687
    %v834 = vpack.c.bf16 %v692, %v690
    %v835 = vpack.c.bf16 %v693, %v691
    %v836 = vpack.c.bf16 %v696, %v694
    %v837 = vpack.c.bf16 %v697, %v695
    %v838 = vpack.c.bf16 %v700, %v698
    %v839 = vpack.c.bf16 %v701, %v699
    %v840 = vpack.c.bf16 %v704, %v702
    %v841 = vpack.c.bf16 %v705, %v703
    %v842 = vpack.c.bf16 %v708, %v706
    %v843 = vpack.c.bf16 %v709, %v707
    %v844 = vpack.c.bf16 %v712, %v710
    %v845 = vpack.c.bf16 %v713, %v711
    %v846 = vpack.c.bf16 %v716, %v714
    %v847 = vpack.c.bf16 %v717, %v715
    %v848 = vpack.c.bf16 %v720, %v718
    %v849 = vpack.c.bf16 %v721, %v719
    %v850 = vpack.c.bf16 %v724, %v722
    %v851 = vpack.c.bf16 %v725, %v723
    %v852 = vpack.c.bf16 %v728, %v726
    %v853 = vpack.c.bf16 %v729, %v727
    %v854 = vpack.c.bf16 %v732, %v730
    %v855 = vpack.c.bf16 %v733, %v731
    %v856 = vpack.c.bf16 %v736, %v734
    %v857 = vpack.c.bf16 %v737, %v735
    %v858 = vpack.c.bf16 %v740, %v738
    %v859 = vpack.c.bf16 %v741, %v739
    %v860 = vpack.c.bf16 %v744, %v742
    %v861 = vpack.c.bf16 %v745, %v743
    %v862 = vpack.c.bf16 %v748, %v746
    %v863 = vpack.c.bf16 %v749, %v747
    %v864 = vpack.c.bf16 %v752, %v750
    %v865 = vpack.c.bf16 %v753, %v751
    %v866 = vpack.c.bf16 %v756, %v754
    %v867 = vpack.c.bf16 %v757, %v755
    %v868 = vpack.c.bf16 %v760, %v758
    %v869 = vpack.c.bf16 %v761, %v759
    %v870 = vpack.c.bf16 %v764, %v762
    %v871 = vpack.c.bf16 %v765, %v763
    %v872 = vpack.c.bf16 %v768, %v766
    %v873 = vpack.c.bf16 %v769, %v767
    %v874 = vpack.c.bf16 %v772, %v770
    %v875 = vpack.c.bf16 %v773, %v771
    %v876 = vpack.c.bf16 %v776, %v774
    %v877 = vpack.c.bf16 %v777, %v775
    %v878 = vpack.c.bf16 %v780, %v778
    %v879 = vpack.c.bf16 %v781, %v779
    %v880 = vpack.c.bf16 %v784, %v782
    %v881 = vpack.c.bf16 %v785, %v783
    %v882 = vld [vmem:[%s4] sm:$0x1]
    %v884 = vlaneseq
    %v885 = vshrl.u32 %v884, 7
    %v886 = vsub.s32 0, %v885
    %v887 = vrot.slane %v882, %v886
    %v921 = vunpack.c.l.b16 %v786
    %v922 = vunpack.c.l.b16 %v787
    %v923 = vunpack.c.l.b16 %v788
    %v924 = vunpack.c.l.b16 %v789
    %v925 = vunpack.c.l.b16 %v790
    %v926 = vunpack.c.l.b16 %v791
    %v927 = vunpack.c.l.b16 %v792
    %v928 = vunpack.c.l.b16 %v793
    %v929 = vunpack.c.l.b16 %v794
    %v930 = vunpack.c.l.b16 %v795
    %v931 = vunpack.c.l.b16 %v796
    %v932 = vunpack.c.l.b16 %v797
    %v933 = vunpack.c.l.b16 %v798
    %v934 = vunpack.c.l.b16 %v799
    %v935 = vunpack.c.l.b16 %v800
    %v936 = vunpack.c.l.b16 %v801
    %v937 = vunpack.c.l.b16 %v802
    %v938 = vunpack.c.l.b16 %v803
    %v939 = vunpack.c.l.b16 %v804
    %v940 = vunpack.c.l.b16 %v805
    %v941 = vunpack.c.l.b16 %v806
    %v942 = vunpack.c.l.b16 %v807
    %v943 = vunpack.c.l.b16 %v808
    %v944 = vunpack.c.l.b16 %v809
    %v945 = vunpack.c.l.b16 %v810
    %v946 = vunpack.c.l.b16 %v811
    %v947 = vunpack.c.l.b16 %v812
    %v948 = vunpack.c.l.b16 %v813
    %v949 = vunpack.c.l.b16 %v814
    %v950 = vunpack.c.l.b16 %v815
    %v951 = vunpack.c.l.b16 %v816
    %v952 = vunpack.c.l.b16 %v817
    %v953 = vpack.c.b16 %v922, %v921
    %v954 = vpack.c.b16 %v924, %v923
    %v955 = vpack.c.b16 %v926, %v925
    %v956 = vpack.c.b16 %v928, %v927
    %v957 = vpack.c.b16 %v930, %v929
    %v958 = vpack.c.b16 %v932, %v931
    %v959 = vpack.c.b16 %v934, %v933
    %v960 = vpack.c.b16 %v936, %v935
    %v961 = vpack.c.b16 %v938, %v937
    %v962 = vpack.c.b16 %v940, %v939
    %v963 = vpack.c.b16 %v942, %v941
    %v964 = vpack.c.b16 %v944, %v943
    %v965 = vpack.c.b16 %v946, %v945
    %v966 = vpack.c.b16 %v948, %v947
    %v967 = vpack.c.b16 %v950, %v949
    %v968 = vpack.c.b16 %v952, %v951
    %985 = vmatprep.subr.bf16.mxu0 0
    %986 = vmatpush1.bf16.msra.mxu0 %v953
    %987 = vmatprep.subr.bf16.mxu0 0
    %988 = vmatpush1.bf16.msra.mxu0 %v954
    %989 = vmatprep.subr.bf16.mxu0 0
    %990 = vmatpush1.bf16.msra.mxu0 %v955
    %991 = vmatprep.subr.bf16.mxu0 0
    %992 = vmatpush1.bf16.msra.mxu0 %v956
    %993 = vmatprep.subr.bf16.mxu0 0
    %994 = vmatpush1.bf16.msra.mxu0 %v957
    %995 = vmatprep.subr.bf16.mxu0 0
    %996 = vmatpush1.bf16.msra.mxu0 %v958
    %997 = vmatprep.subr.bf16.mxu0 0
    %998 = vmatpush1.bf16.msra.mxu0 %v959
    %999 = vmatprep.subr.bf16.mxu0 0
    %1000 = vmatpush1.bf16.msra.mxu0 %v960
    %1001 = vmatprep.subr.bf16.mxu0 0
    %1002 = vmatpush1.bf16.msra.mxu0 %v961
    %1003 = vmatprep.subr.bf16.mxu0 0
    %1004 = vmatpush1.bf16.msra.mxu0 %v962
    %1005 = vmatprep.subr.bf16.mxu0 0
    %1006 = vmatpush1.bf16.msra.mxu0 %v963
    %1007 = vmatprep.subr.bf16.mxu0 0
    %1008 = vmatpush1.bf16.msra.mxu0 %v964
    %1009 = vmatprep.subr.bf16.mxu0 0
    %1010 = vmatpush1.bf16.msra.mxu0 %v965
    %1011 = vmatprep.subr.bf16.mxu0 0
    %1012 = vmatpush1.bf16.msra.mxu0 %v966
    %1013 = vmatprep.subr.bf16.mxu0 0
    %1014 = vmatpush1.bf16.msra.mxu0 %v967
    %1015 = vmatprep.subr.bf16.mxu0 0
    %1016 = vmatpush1.bf16.msra.mxu0 %v968
    %1017 = vmatprep.mubr.bf16.mxu0 %v819
    %1018 = vmatmul.mubr.bf16.gmra.mrb[0].mxu0 %v818
    %v1019 = vpop.f32.mrb[0].mxu0
    %v1020 = vadd.f32 %v887, %v1019
    %v1021 = vpop.f32.mrb[0].mxu0
    %v1022 = vpop.f32.mrb[0].mxu0
    %v1023 = vadd.f32 %v887, %v1022
    %v1024 = vpop.f32.mrb[0].mxu0
    %1025 = vmatprep.mubr.bf16.mxu0 %v821
    %1026 = vmatmul.mubr.bf16.gmra.mrb[0].mxu0 %v820
    %v1027 = vpop.f32.mrb[0].mxu0
    %v1028 = vadd.f32 %v887, %v1027
    %v1029 = vpop.f32.mrb[0].mxu0
    %v1030 = vpop.f32.mrb[0].mxu0
    %v1031 = vadd.f32 %v887, %v1030
    %v1032 = vpop.f32.mrb[0].mxu0
    %1033 = vmatprep.mubr.bf16.mxu0 %v823
    %1034 = vmatmul.mubr.bf16.gmra.mrb[0].mxu0 %v822
    %v1035 = vpop.f32.mrb[0].mxu0
    %v1036 = vadd.f32 %v887, %v1035
    %v1037 = vpop.f32.mrb[0].mxu0
    %v1038 = vpop.f32.mrb[0].mxu0
    %v1039 = vadd.f32 %v887, %v1038
    %v1040 = vpop.f32.mrb[0].mxu0
    %1041 = vmatprep.mubr.bf16.mxu0 %v825
    %1042 = vmatmul.mubr.bf16.gmra.mrb[0].mxu0 %v824
    %v1043 = vpop.f32.mrb[0].mxu0
    %v1044 = vadd.f32 %v887, %v1043
    %v1045 = vpop.f32.mrb[0].mxu0
    %v1046 = vpop.f32.mrb[0].mxu0
    %v1047 = vadd.f32 %v887, %v1046
    %v1048 = vpop.f32.mrb[0].mxu0
    %1049 = vmatprep.mubr.bf16.mxu0 %v827
    %1050 = vmatmul.mubr.bf16.gmra.mrb[0].mxu0 %v826
    %v1051 = vpop.f32.mrb[0].mxu0
    %v1052 = vadd.f32 %v887, %v1051
    %v1053 = vpop.f32.mrb[0].mxu0
    %v1054 = vpop.f32.mrb[0].mxu0
    %v1055 = vadd.f32 %v887, %v1054
    %v1056 = vpop.f32.mrb[0].mxu0
    %1057 = vmatprep.mubr.bf16.mxu0 %v829
    %1058 = vmatmul.mubr.bf16.gmra.mrb[0].mxu0 %v828
    %v1059 = vpop.f32.mrb[0].mxu0
    %v1060 = vadd.f32 %v887, %v1059
    %v1061 = vpop.f32.mrb[0].mxu0
    %v1062 = vpop.f32.mrb[0].mxu0
    %v1063 = vadd.f32 %v887, %v1062
    %v1064 = vpop.f32.mrb[0].mxu0
    %1065 = vmatprep.mubr.bf16.mxu0 %v831
    %1066 = vmatmul.mubr.bf16.gmra.mrb[0].mxu0 %v830
    %v1067 = vpop.f32.mrb[0].mxu0
    %v1068 = vadd.f32 %v887, %v1067
    %v1069 = vpop.f32.mrb[0].mxu0
    %v1070 = vpop.f32.mrb[0].mxu0
    %v1071 = vadd.f32 %v887, %v1070
    %v1072 = vpop.f32.mrb[0].mxu0
    %1073 = vmatprep.mubr.bf16.mxu0 %v833
    %1074 = vmatmul.mubr.bf16.gmra.mrb[0].mxu0 %v832
    %v1075 = vpop.f32.mrb[0].mxu0
    %v1076 = vadd.f32 %v887, %v1075
    %v1077 = vpop.f32.mrb[0].mxu0
    %v1078 = vpop.f32.mrb[0].mxu0
    %v1079 = vadd.f32 %v887, %v1078
    %v1080 = vpop.f32.mrb[0].mxu0
    %1081 = vmatprep.mubr.bf16.mxu0 %v835
    %1082 = vmatmul.mubr.bf16.gmra.mrb[0].mxu0 %v834
    %v1083 = vpop.f32.mrb[0].mxu0
    %v1084 = vadd.f32 %v887, %v1083
    %v1085 = vpop.f32.mrb[0].mxu0
    %v1086 = vpop.f32.mrb[0].mxu0
    %v1087 = vadd.f32 %v887, %v1086
    %v1088 = vpop.f32.mrb[0].mxu0
    %1089 = vmatprep.mubr.bf16.mxu0 %v837
    %1090 = vmatmul.mubr.bf16.gmra.mrb[0].mxu0 %v836
    %v1091 = vpop.f32.mrb[0].mxu0
    %v1092 = vadd.f32 %v887, %v1091
    %v1093 = vpop.f32.mrb[0].mxu0
    %v1094 = vpop.f32.mrb[0].mxu0
    %v1095 = vadd.f32 %v887, %v1094
    %v1096 = vpop.f32.mrb[0].mxu0
    %1097 = vmatprep.mubr.bf16.mxu0 %v839
    %1098 = vmatmul.mubr.bf16.gmra.mrb[0].mxu0 %v838
    %v1099 = vpop.f32.mrb[0].mxu0
    %v1100 = vadd.f32 %v887, %v1099
    %v1101 = vpop.f32.mrb[0].mxu0
    %v1102 = vpop.f32.mrb[0].mxu0
    %v1103 = vadd.f32 %v887, %v1102
    %v1104 = vpop.f32.mrb[0].mxu0
    %1105 = vmatprep.mubr.bf16.mxu0 %v841
    %1106 = vmatmul.mubr.bf16.gmra.mrb[0].mxu0 %v840
    %v1107 = vpop.f32.mrb[0].mxu0
    %v1108 = vadd.f32 %v887, %v1107
    %v1109 = vpop.f32.mrb[0].mxu0
    %v1110 = vpop.f32.mrb[0].mxu0
    %v1111 = vadd.f32 %v887, %v1110
    %v1112 = vpop.f32.mrb[0].mxu0
    %1113 = vmatprep.mubr.bf16.mxu0 %v843
    %1114 = vmatmul.mubr.bf16.gmra.mrb[0].mxu0 %v842
    %v1115 = vpop.f32.mrb[0].mxu0
    %v1116 = vadd.f32 %v887, %v1115
    %v1117 = vpop.f32.mrb[0].mxu0
    %v1118 = vpop.f32.mrb[0].mxu0
    %v1119 = vadd.f32 %v887, %v1118
    %v1120 = vpop.f32.mrb[0].mxu0
    %1121 = vmatprep.mubr.bf16.mxu0 %v845
    %1122 = vmatmul.mubr.bf16.gmra.mrb[0].mxu0 %v844
    %v1123 = vpop.f32.mrb[0].mxu0
    %v1124 = vadd.f32 %v887, %v1123
    %v1125 = vpop.f32.mrb[0].mxu0
    %v1126 = vpop.f32.mrb[0].mxu0
    %v1127 = vadd.f32 %v887, %v1126
    %v1128 = vpop.f32.mrb[0].mxu0
    %1129 = vmatprep.mubr.bf16.mxu0 %v847
    %1130 = vmatmul.mubr.bf16.gmra.mrb[0].mxu0 %v846
    %v1131 = vpop.f32.mrb[0].mxu0
    %v1132 = vadd.f32 %v887, %v1131
    %v1133 = vpop.f32.mrb[0].mxu0
    %v1134 = vpop.f32.mrb[0].mxu0
    %v1135 = vadd.f32 %v887, %v1134
    %v1136 = vpop.f32.mrb[0].mxu0
    %1137 = vmatprep.mubr.bf16.mxu0 %v849
    %1138 = vmatmul.mubr.bf16.gmra.mrb[0].mxu0 %v848
    %v1139 = vpop.f32.mrb[0].mxu0
    %v1140 = vadd.f32 %v887, %v1139
    %v1141 = vpop.f32.mrb[0].mxu0
    %v1142 = vpop.f32.mrb[0].mxu0
    %v1143 = vadd.f32 %v887, %v1142
    %v1144 = vpop.f32.mrb[0].mxu0
    %1145 = vmatprep.mubr.bf16.mxu0 %v851
    %1146 = vmatmul.mubr.bf16.gmra.mrb[0].mxu0 %v850
    %v1147 = vpop.f32.mrb[0].mxu0
    %v1148 = vadd.f32 %v887, %v1147
    %v1149 = vpop.f32.mrb[0].mxu0
    %v1150 = vpop.f32.mrb[0].mxu0
    %v1151 = vadd.f32 %v887, %v1150
    %v1152 = vpop.f32.mrb[0].mxu0
    %1153 = vmatprep.mubr.bf16.mxu0 %v853
    %1154 = vmatmul.mubr.bf16.gmra.mrb[0].mxu0 %v852
    %v1155 = vpop.f32.mrb[0].mxu0
    %v1156 = vadd.f32 %v887, %v1155
    %v1157 = vpop.f32.mrb[0].mxu0
    %v1158 = vpop.f32.mrb[0].mxu0
    %v1159 = vadd.f32 %v887, %v1158
    %v1160 = vpop.f32.mrb[0].mxu0
    %1161 = vmatprep.mubr.bf16.mxu0 %v855
    %1162 = vmatmul.mubr.bf16.gmra.mrb[0].mxu0 %v854
    %v1163 = vpop.f32.mrb[0].mxu0
    %v1164 = vadd.f32 %v887, %v1163
    %v1165 = vpop.f32.mrb[0].mxu0
    %v1166 = vpop.f32.mrb[0].mxu0
    %v1167 = vadd.f32 %v887, %v1166
    %v1168 = vpop.f32.mrb[0].mxu0
    %1169 = vmatprep.mubr.bf16.mxu0 %v857
    %1170 = vmatmul.mubr.bf16.gmra.mrb[0].mxu0 %v856
    %v1171 = vpop.f32.mrb[0].mxu0
    %v1172 = vadd.f32 %v887, %v1171
    %v1173 = vpop.f32.mrb[0].mxu0
    %v1174 = vpop.f32.mrb[0].mxu0
    %v1175 = vadd.f32 %v887, %v1174
    %v1176 = vpop.f32.mrb[0].mxu0
    %1177 = vmatprep.mubr.bf16.mxu0 %v859
    %1178 = vmatmul.mubr.bf16.gmra.mrb[0].mxu0 %v858
    %v1179 = vpop.f32.mrb[0].mxu0
    %v1180 = vadd.f32 %v887, %v1179
    %v1181 = vpop.f32.mrb[0].mxu0
    %v1182 = vpop.f32.mrb[0].mxu0
    %v1183 = vadd.f32 %v887, %v1182
    %v1184 = vpop.f32.mrb[0].mxu0
    %1185 = vmatprep.mubr.bf16.mxu0 %v861
    %1186 = vmatmul.mubr.bf16.gmra.mrb[0].mxu0 %v860
    %v1187 = vpop.f32.mrb[0].mxu0
    %v1188 = vadd.f32 %v887, %v1187
    %v1189 = vpop.f32.mrb[0].mxu0
    %v1190 = vpop.f32.mrb[0].mxu0
    %v1191 = vadd.f32 %v887, %v1190
    %v1192 = vpop.f32.mrb[0].mxu0
    %1193 = vmatprep.mubr.bf16.mxu0 %v863
    %1194 = vmatmul.mubr.bf16.gmra.mrb[0].mxu0 %v862
    %v1195 = vpop.f32.mrb[0].mxu0
    %v1196 = vadd.f32 %v887, %v1195
    %v1197 = vpop.f32.mrb[0].mxu0
    %v1198 = vpop.f32.mrb[0].mxu0
    %v1199 = vadd.f32 %v887, %v1198
    %v1200 = vpop.f32.mrb[0].mxu0
    %1201 = vmatprep.mubr.bf16.mxu0 %v865
    %1202 = vmatmul.mubr.bf16.gmra.mrb[0].mxu0 %v864
    %v1203 = vpop.f32.mrb[0].mxu0
    %v1204 = vadd.f32 %v887, %v1203
    %v1205 = vpop.f32.mrb[0].mxu0
    %v1206 = vpop.f32.mrb[0].mxu0
    %v1207 = vadd.f32 %v887, %v1206
    %v1208 = vpop.f32.mrb[0].mxu0
    %1209 = vmatprep.mubr.bf16.mxu0 %v867
    %1210 = vmatmul.mubr.bf16.gmra.mrb[0].mxu0 %v866
    %v1211 = vpop.f32.mrb[0].mxu0
    %v1212 = vadd.f32 %v887, %v1211
    %v1213 = vpop.f32.mrb[0].mxu0
    %v1214 = vpop.f32.mrb[0].mxu0
    %v1215 = vadd.f32 %v887, %v1214
    %v1216 = vpop.f32.mrb[0].mxu0
    %1217 = vmatprep.mubr.bf16.mxu0 %v869
    %1218 = vmatmul.mubr.bf16.gmra.mrb[0].mxu0 %v868
    %v1219 = vpop.f32.mrb[0].mxu0
    %v1220 = vadd.f32 %v887, %v1219
    %v1221 = vpop.f32.mrb[0].mxu0
    %v1222 = vpop.f32.mrb[0].mxu0
    %v1223 = vadd.f32 %v887, %v1222
    %v1224 = vpop.f32.mrb[0].mxu0
    %1225 = vmatprep.mubr.bf16.mxu0 %v871
    %1226 = vmatmul.mubr.bf16.gmra.mrb[0].mxu0 %v870
    %v1227 = vpop.f32.mrb[0].mxu0
    %v1228 = vadd.f32 %v887, %v1227
    %v1229 = vpop.f32.mrb[0].mxu0
    %v1230 = vpop.f32.mrb[0].mxu0
    %v1231 = vadd.f32 %v887, %v1230
    %v1232 = vpop.f32.mrb[0].mxu0
    %1233 = vmatprep.mubr.bf16.mxu0 %v873
    %1234 = vmatmul.mubr.bf16.gmra.mrb[0].mxu0 %v872
    %v1235 = vpop.f32.mrb[0].mxu0
    %v1236 = vadd.f32 %v887, %v1235
    %v1237 = vpop.f32.mrb[0].mxu0
    %v1238 = vpop.f32.mrb[0].mxu0
    %v1239 = vadd.f32 %v887, %v1238
    %v1240 = vpop.f32.mrb[0].mxu0
    %1241 = vmatprep.mubr.bf16.mxu0 %v875
    %1242 = vmatmul.mubr.bf16.gmra.mrb[0].mxu0 %v874
    %v1243 = vpop.f32.mrb[0].mxu0
    %v1244 = vadd.f32 %v887, %v1243
    %v1245 = vpop.f32.mrb[0].mxu0
    %v1246 = vpop.f32.mrb[0].mxu0
    %v1247 = vadd.f32 %v887, %v1246
    %v1248 = vpop.f32.mrb[0].mxu0
    %1249 = vmatprep.mubr.bf16.mxu0 %v877
    %1250 = vmatmul.mubr.bf16.gmra.mrb[0].mxu0 %v876
    %v1251 = vpop.f32.mrb[0].mxu0
    %v1252 = vadd.f32 %v887, %v1251
    %v1253 = vpop.f32.mrb[0].mxu0
    %v1254 = vpop.f32.mrb[0].mxu0
    %v1255 = vadd.f32 %v887, %v1254
    %v1256 = vpop.f32.mrb[0].mxu0
    %1257 = vmatprep.mubr.bf16.mxu0 %v879
    %1258 = vmatmul.mubr.bf16.gmra.mrb[0].mxu0 %v878
    %v1259 = vpop.f32.mrb[0].mxu0
    %v1260 = vadd.f32 %v887, %v1259
    %v1261 = vpop.f32.mrb[0].mxu0
    %v1262 = vpop.f32.mrb[0].mxu0
    %v1263 = vadd.f32 %v887, %v1262
    %v1264 = vpop.f32.mrb[0].mxu0
    %1265 = vmatprep.mubr.bf16.mxu0 %v881
    %1266 = vmatmul.mubr.bf16.gmra.mrb[0].mxu0 %v880
    %v1267 = vpop.f32.mrb[0].mxu0
    %v1268 = vadd.f32 %v887, %v1267
    %v1269 = vpop.f32.mrb[0].mxu0
    %v1270 = vpop.f32.mrb[0].mxu0
    %v1271 = vadd.f32 %v887, %v1270
    %v1272 = vpop.f32.mrb[0].mxu0
    %1273 = vdwg.mxu0
    %v1274 = vmax.f32 %v1020, 0.0
    %v1275 = vmax.f32 %v1023, 0.0
    %v1276 = vmax.f32 %v1028, 0.0
    %v1277 = vmax.f32 %v1031, 0.0
    %v1278 = vmax.f32 %v1036, 0.0
    %v1279 = vmax.f32 %v1039, 0.0
    %v1280 = vmax.f32 %v1044, 0.0
    %v1281 = vmax.f32 %v1047, 0.0
    %v1282 = vmax.f32 %v1052, 0.0
    %v1283 = vmax.f32 %v1055, 0.0
    %v1284 = vmax.f32 %v1060, 0.0
    %v1285 = vmax.f32 %v1063, 0.0
    %v1286 = vmax.f32 %v1068, 0.0
    %v1287 = vmax.f32 %v1071, 0.0
    %v1288 = vmax.f32 %v1076, 0.0
    %v1289 = vmax.f32 %v1079, 0.0
    %v1290 = vmax.f32 %v1084, 0.0
    %v1291 = vmax.f32 %v1087, 0.0
    %v1292 = vmax.f32 %v1092, 0.0
    %v1293 = vmax.f32 %v1095, 0.0
    %v1294 = vmax.f32 %v1100, 0.0
    %v1295 = vmax.f32 %v1103, 0.0
    %v1296 = vmax.f32 %v1108, 0.0
    %v1297 = vmax.f32 %v1111, 0.0
    %v1298 = vmax.f32 %v1116, 0.0
    %v1299 = vmax.f32 %v1119, 0.0
    %v1300 = vmax.f32 %v1124, 0.0
    %v1301 = vmax.f32 %v1127, 0.0
    %v1302 = vmax.f32 %v1132, 0.0
    %v1303 = vmax.f32 %v1135, 0.0
    %v1304 = vmax.f32 %v1140, 0.0
    %v1305 = vmax.f32 %v1143, 0.0
    %v1306 = vmax.f32 %v1148, 0.0
    %v1307 = vmax.f32 %v1151, 0.0
    %v1308 = vmax.f32 %v1156, 0.0
    %v1309 = vmax.f32 %v1159, 0.0
    %v1310 = vmax.f32 %v1164, 0.0
    %v1311 = vmax.f32 %v1167, 0.0
    %v1312 = vmax.f32 %v1172, 0.0
    %v1313 = vmax.f32 %v1175, 0.0
    %v1314 = vmax.f32 %v1180, 0.0
    %v1315 = vmax.f32 %v1183, 0.0
    %v1316 = vmax.f32 %v1188, 0.0
    %v1317 = vmax.f32 %v1191, 0.0
    %v1318 = vmax.f32 %v1196, 0.0
    %v1319 = vmax.f32 %v1199, 0.0
    %v1320 = vmax.f32 %v1204, 0.0
    %v1321 = vmax.f32 %v1207, 0.0
    %v1322 = vmax.f32 %v1212, 0.0
    %v1323 = vmax.f32 %v1215, 0.0
    %v1324 = vmax.f32 %v1220, 0.0
    %v1325 = vmax.f32 %v1223, 0.0
    %v1326 = vmax.f32 %v1228, 0.0
    %v1327 = vmax.f32 %v1231, 0.0
    %v1328 = vmax.f32 %v1236, 0.0
    %v1329 = vmax.f32 %v1239, 0.0
    %v1330 = vmax.f32 %v1244, 0.0
    %v1331 = vmax.f32 %v1247, 0.0
    %v1332 = vmax.f32 %v1252, 0.0
    %v1333 = vmax.f32 %v1255, 0.0
    %v1334 = vmax.f32 %v1260, 0.0
    %v1335 = vmax.f32 %v1263, 0.0
    %v1336 = vmax.f32 %v1268, 0.0
    %v1337 = vmax.f32 %v1271, 0.0
    %v1338 = vpack.c.bf16 %v1275, %v1274
    %v1339 = vpack.c.bf16 %v1307, %v1306
    %v1340 = vpack.c.bf16 %v1277, %v1276
    %v1341 = vpack.c.bf16 %v1309, %v1308
    %v1342 = vpack.c.bf16 %v1279, %v1278
    %v1343 = vpack.c.bf16 %v1311, %v1310
    %v1344 = vpack.c.bf16 %v1281, %v1280
    %v1345 = vpack.c.bf16 %v1313, %v1312
    %v1346 = vpack.c.bf16 %v1283, %v1282
    %v1347 = vpack.c.bf16 %v1315, %v1314
    %v1348 = vpack.c.bf16 %v1285, %v1284
    %v1349 = vpack.c.bf16 %v1317, %v1316
    %v1350 = vpack.c.bf16 %v1287, %v1286
    %v1351 = vpack.c.bf16 %v1319, %v1318
    %v1352 = vpack.c.bf16 %v1289, %v1288
    %v1353 = vpack.c.bf16 %v1321, %v1320
    %v1354 = vpack.c.bf16 %v1291, %v1290
    %v1355 = vpack.c.bf16 %v1323, %v1322
    %v1356 = vpack.c.bf16 %v1293, %v1292
    %v1357 = vpack.c.bf16 %v1325, %v1324
    %v1358 = vpack.c.bf16 %v1295, %v1294
    %v1359 = vpack.c.bf16 %v1327, %v1326
    %v1360 = vpack.c.bf16 %v1297, %v1296
    %v1361 = vpack.c.bf16 %v1329, %v1328
    %v1362 = vpack.c.bf16 %v1299, %v1298
    %v1363 = vpack.c.bf16 %v1331, %v1330
    %v1364 = vpack.c.bf16 %v1301, %v1300
    %v1365 = vpack.c.bf16 %v1333, %v1332
    %v1366 = vpack.c.bf16 %v1303, %v1302
    %v1367 = vpack.c.bf16 %v1335, %v1334
    %v1368 = vpack.c.bf16 %v1305, %v1304
    %v1369 = vpack.c.bf16 %v1337, %v1336
    %v1370 = vld [vmem:[#allocation3] sm:$0xff]
    %v1371 = vld [vmem:[#allocation3 + $0x8] sm:$0xff]
    %v1372 = vld [vmem:[#allocation3 + $0x10] sm:$0xff]
    %v1373 = vld [vmem:[#allocation3 + $0x18] sm:$0xff]
    %v1374 = vld [vmem:[#allocation3 + $0x20] sm:$0xff]
    %v1375 = vld [vmem:[#allocation3 + $0x28] sm:$0xff]
    %v1376 = vld [vmem:[#allocation3 + $0x30] sm:$0xff]
    %v1377 = vld [vmem:[#allocation3 + $0x38] sm:$0xff]
    %v1378 = vld [vmem:[#allocation3 + $0x40] sm:$0xff]
    %v1379 = vld [vmem:[#allocation3 + $0x48] sm:$0xff]
    %v1380 = vld [vmem:[#allocation3 + $0x50] sm:$0xff]
    %v1381 = vld [vmem:[#allocation3 + $0x58] sm:$0xff]
    %v1382 = vld [vmem:[#allocation3 + $0x60] sm:$0xff]
    %v1383 = vld [vmem:[#allocation3 + $0x68] sm:$0xff]
    %v1384 = vld [vmem:[#allocation3 + $0x70] sm:$0xff]
    %v1385 = vld [vmem:[#allocation3 + $0x78] sm:$0xff]
    %v1386 = vld [vmem:[#allocation3 + $0x80] sm:$0xff]
    %v1387 = vld [vmem:[#allocation3 + $0x88] sm:$0xff]
    %v1388 = vld [vmem:[#allocation3 + $0x90] sm:$0xff]
    %v1389 = vld [vmem:[#allocation3 + $0x98] sm:$0xff]
    %v1390 = vld [vmem:[#allocation3 + $0xa0] sm:$0xff]
    %v1391 = vld [vmem:[#allocation3 + $0xa8] sm:$0xff]
    %v1392 = vld [vmem:[#allocation3 + $0xb0] sm:$0xff]
    %v1393 = vld [vmem:[#allocation3 + $0xb8] sm:$0xff]
    %v1394 = vld [vmem:[#allocation3 + $0xc0] sm:$0xff]
    %v1395 = vld [vmem:[#allocation3 + $0xc8] sm:$0xff]
    %v1396 = vld [vmem:[#allocation3 + $0xd0] sm:$0xff]
    %v1397 = vld [vmem:[#allocation3 + $0xd8] sm:$0xff]
    %v1398 = vld [vmem:[#allocation3 + $0xe0] sm:$0xff]
    %v1399 = vld [vmem:[#allocation3 + $0xe8] sm:$0xff]
    %v1400 = vld [vmem:[#allocation3 + $0xf0] sm:$0xff]
    %v1401 = vld [vmem:[#allocation3 + $0xf8] sm:$0xff]
    %v1402 = vld [vmem:[#allocation3 + $0x100] sm:$0xff]
    %v1403 = vld [vmem:[#allocation3 + $0x108] sm:$0xff]
    %v1404 = vld [vmem:[#allocation3 + $0x110] sm:$0xff]
    %v1405 = vld [vmem:[#allocation3 + $0x118] sm:$0xff]
    %v1406 = vld [vmem:[#allocation3 + $0x120] sm:$0xff]
    %v1407 = vld [vmem:[#allocation3 + $0x128] sm:$0xff]
    %v1408 = vld [vmem:[#allocation3 + $0x130] sm:$0xff]
    %v1409 = vld [vmem:[#allocation3 + $0x138] sm:$0xff]
    %v1410 = vld [vmem:[#allocation3 + $0x140] sm:$0xff]
    %v1411 = vld [vmem:[#allocation3 + $0x148] sm:$0xff]
    %v1412 = vld [vmem:[#allocation3 + $0x150] sm:$0xff]
    %v1413 = vld [vmem:[#allocation3 + $0x158] sm:$0xff]
    %v1414 = vld [vmem:[#allocation3 + $0x160] sm:$0xff]
    %v1415 = vld [vmem:[#allocation3 + $0x168] sm:$0xff]
    %v1416 = vld [vmem:[#allocation3 + $0x170] sm:$0xff]
    %v1417 = vld [vmem:[#allocation3 + $0x178] sm:$0xff]
    %v1418 = vld [vmem:[#allocation3 + $0x180] sm:$0xff]
    %v1419 = vld [vmem:[#allocation3 + $0x188] sm:$0xff]
    %v1420 = vld [vmem:[#allocation3 + $0x190] sm:$0xff]
    %v1421 = vld [vmem:[#allocation3 + $0x198] sm:$0xff]
    %v1422 = vld [vmem:[#allocation3 + $0x1a0] sm:$0xff]
    %v1423 = vld [vmem:[#allocation3 + $0x1a8] sm:$0xff]
    %v1424 = vld [vmem:[#allocation3 + $0x1b0] sm:$0xff]
    %v1425 = vld [vmem:[#allocation3 + $0x1b8] sm:$0xff]
    %v1426 = vld [vmem:[#allocation3 + $0x1c0] sm:$0xff]
    %v1427 = vld [vmem:[#allocation3 + $0x1c8] sm:$0xff]
    %v1428 = vld [vmem:[#allocation3 + $0x1d0] sm:$0xff]
    %v1429 = vld [vmem:[#allocation3 + $0x1d8] sm:$0xff]
    %v1430 = vld [vmem:[#allocation3 + $0x1e0] sm:$0xff]
    %v1431 = vld [vmem:[#allocation3 + $0x1e8] sm:$0xff]
    %v1432 = vld [vmem:[#allocation3 + $0x1f0] sm:$0xff]
    %v1433 = vld [vmem:[#allocation3 + $0x1f8] sm:$0xff]
    %v1434 = vld [vmem:[#allocation3 + $0x200] sm:$0xff]
    %v1435 = vld [vmem:[#allocation3 + $0x208] sm:$0xff]
    %v1436 = vld [vmem:[#allocation3 + $0x210] sm:$0xff]
    %v1437 = vld [vmem:[#allocation3 + $0x218] sm:$0xff]
    %v1438 = vld [vmem:[#allocation3 + $0x220] sm:$0xff]
    %v1439 = vld [vmem:[#allocation3 + $0x228] sm:$0xff]
    %v1440 = vld [vmem:[#allocation3 + $0x230] sm:$0xff]
    %v1441 = vld [vmem:[#allocation3 + $0x238] sm:$0xff]
    %v1442 = vld [vmem:[#allocation3 + $0x240] sm:$0xff]
    %v1443 = vld [vmem:[#allocation3 + $0x248] sm:$0xff]
    %v1444 = vld [vmem:[#allocation3 + $0x250] sm:$0xff]
    %v1445 = vld [vmem:[#allocation3 + $0x258] sm:$0xff]
    %v1446 = vld [vmem:[#allocation3 + $0x260] sm:$0xff]
    %v1447 = vld [vmem:[#allocation3 + $0x268] sm:$0xff]
    %v1448 = vld [vmem:[#allocation3 + $0x270] sm:$0xff]
    %v1449 = vld [vmem:[#allocation3 + $0x278] sm:$0xff]
    %v1450 = vld [vmem:[#allocation3 + $0x280] sm:$0xff]
    %v1451 = vld [vmem:[#allocation3 + $0x288] sm:$0xff]
    %v1452 = vld [vmem:[#allocation3 + $0x290] sm:$0xff]
    %v1453 = vld [vmem:[#allocation3 + $0x298] sm:$0xff]
    %v1454 = vld [vmem:[#allocation3 + $0x2a0] sm:$0xff]
    %v1455 = vld [vmem:[#allocation3 + $0x2a8] sm:$0xff]
    %v1456 = vld [vmem:[#allocation3 + $0x2b0] sm:$0xff]
    %v1457 = vld [vmem:[#allocation3 + $0x2b8] sm:$0xff]
    %v1458 = vld [vmem:[#allocation3 + $0x2c0] sm:$0xff]
    %v1459 = vld [vmem:[#allocation3 + $0x2c8] sm:$0xff]
    %v1460 = vld [vmem:[#allocation3 + $0x2d0] sm:$0xff]
    %v1461 = vld [vmem:[#allocation3 + $0x2d8] sm:$0xff]
    %v1462 = vld [vmem:[#allocation3 + $0x2e0] sm:$0xff]
    %v1463 = vld [vmem:[#allocation3 + $0x2e8] sm:$0xff]
    %v1464 = vld [vmem:[#allocation3 + $0x2f0] sm:$0xff]
    %v1465 = vld [vmem:[#allocation3 + $0x2f8] sm:$0xff]
    %v1466 = vld [vmem:[#allocation3 + $0x300] sm:$0xff]
    %v1467 = vld [vmem:[#allocation3 + $0x308] sm:$0xff]
    %v1468 = vld [vmem:[#allocation3 + $0x310] sm:$0xff]
    %v1469 = vld [vmem:[#allocation3 + $0x318] sm:$0xff]
    %v1470 = vld [vmem:[#allocation3 + $0x320] sm:$0xff]
    %v1471 = vld [vmem:[#allocation3 + $0x328] sm:$0xff]
    %v1472 = vld [vmem:[#allocation3 + $0x330] sm:$0xff]
    %v1473 = vld [vmem:[#allocation3 + $0x338] sm:$0xff]
    %v1474 = vld [vmem:[#allocation3 + $0x340] sm:$0xff]
    %v1475 = vld [vmem:[#allocation3 + $0x348] sm:$0xff]
    %v1476 = vld [vmem:[#allocation3 + $0x350] sm:$0xff]
    %v1477 = vld [vmem:[#allocation3 + $0x358] sm:$0xff]
    %v1478 = vld [vmem:[#allocation3 + $0x360] sm:$0xff]
    %v1479 = vld [vmem:[#allocation3 + $0x368] sm:$0xff]
    %v1480 = vld [vmem:[#allocation3 + $0x370] sm:$0xff]
    %v1481 = vld [vmem:[#allocation3 + $0x378] sm:$0xff]
    %v1482 = vld [vmem:[#allocation3 + $0x380] sm:$0xff]
    %v1483 = vld [vmem:[#allocation3 + $0x388] sm:$0xff]
    %v1484 = vld [vmem:[#allocation3 + $0x390] sm:$0xff]
    %v1485 = vld [vmem:[#allocation3 + $0x398] sm:$0xff]
    %v1486 = vld [vmem:[#allocation3 + $0x3a0] sm:$0xff]
    %v1487 = vld [vmem:[#allocation3 + $0x3a8] sm:$0xff]
    %v1488 = vld [vmem:[#allocation3 + $0x3b0] sm:$0xff]
    %v1489 = vld [vmem:[#allocation3 + $0x3b8] sm:$0xff]
    %v1490 = vld [vmem:[#allocation3 + $0x3c0] sm:$0xff]
    %v1491 = vld [vmem:[#allocation3 + $0x3c8] sm:$0xff]
    %v1492 = vld [vmem:[#allocation3 + $0x3d0] sm:$0xff]
    %v1493 = vld [vmem:[#allocation3 + $0x3d8] sm:$0xff]
    %v1494 = vld [vmem:[#allocation3 + $0x3e0] sm:$0xff]
    %v1495 = vld [vmem:[#allocation3 + $0x3e8] sm:$0xff]
    %v1496 = vld [vmem:[#allocation3 + $0x3f0] sm:$0xff]
    %v1497 = vld [vmem:[#allocation3 + $0x3f8] sm:$0xff]
    %v1498 = vld [vmem:[%s6] sm:$0xff]
    %v1500 = vlaneseq
    %v1501 = vshrl.u32 %v1500, 7
    %v1502 = vsub.s32 0, %v1501
    %v1503 = vrot.slane %v1498, %v1502
    %v1504 = vlaneseq
    %v1505 = vshrl.u32 %v1504, 7
    %v1506 = vsub.s32 1, %v1505
    %v1507 = vrot.slane %v1498, %v1506
    %v1508 = vlaneseq
    %v1509 = vshrl.u32 %v1508, 7
    %v1510 = vsub.s32 2, %v1509
    %v1511 = vrot.slane %v1498, %v1510
    %v1512 = vlaneseq
    %v1513 = vshrl.u32 %v1512, 7
    %v1514 = vsub.s32 3, %v1513
    %v1515 = vrot.slane %v1498, %v1514
    %v1516 = vlaneseq
    %v1517 = vshrl.u32 %v1516, 7
    %v1518 = vsub.s32 4, %v1517
    %v1519 = vrot.slane %v1498, %v1518
    %v1520 = vlaneseq
    %v1521 = vshrl.u32 %v1520, 7
    %v1522 = vsub.s32 5, %v1521
    %v1523 = vrot.slane %v1498, %v1522
    %v1524 = vlaneseq
    %v1525 = vshrl.u32 %v1524, 7
    %v1526 = vsub.s32 6, %v1525
    %v1527 = vrot.slane %v1498, %v1526
    %v1528 = vlaneseq
    %v1529 = vshrl.u32 %v1528, 7
    %v1530 = vsub.s32 7, %v1529
    %v1531 = vrot.slane %v1498, %v1530
    %v1668 = vunpack.c.l.b16 %v1370
    %v1669 = vunpack.c.h.b16 %v1370
    %v1670 = vunpack.c.l.b16 %v1371
    %v1671 = vunpack.c.h.b16 %v1371
    %v1672 = vunpack.c.l.b16 %v1372
    %v1673 = vunpack.c.h.b16 %v1372
    %v1674 = vunpack.c.l.b16 %v1373
    %v1675 = vunpack.c.h.b16 %v1373
    %v1676 = vunpack.c.l.b16 %v1374
    %v1677 = vunpack.c.h.b16 %v1374
    %v1678 = vunpack.c.l.b16 %v1375
    %v1679 = vunpack.c.h.b16 %v1375
    %v1680 = vunpack.c.l.b16 %v1376
    %v1681 = vunpack.c.h.b16 %v1376
    %v1682 = vunpack.c.l.b16 %v1377
    %v1683 = vunpack.c.h.b16 %v1377
    %v1684 = vunpack.c.l.b16 %v1378
    %v1685 = vunpack.c.h.b16 %v1378
    %v1686 = vunpack.c.l.b16 %v1379
    %v1687 = vunpack.c.h.b16 %v1379
    %v1688 = vunpack.c.l.b16 %v1380
    %v1689 = vunpack.c.h.b16 %v1380
    %v1690 = vunpack.c.l.b16 %v1381
    %v1691 = vunpack.c.h.b16 %v1381
    %v1692 = vunpack.c.l.b16 %v1382
    %v1693 = vunpack.c.h.b16 %v1382
    %v1694 = vunpack.c.l.b16 %v1383
    %v1695 = vunpack.c.h.b16 %v1383
    %v1696 = vunpack.c.l.b16 %v1384
    %v1697 = vunpack.c.h.b16 %v1384
    %v1698 = vunpack.c.l.b16 %v1385
    %v1699 = vunpack.c.h.b16 %v1385
    %v1700 = vunpack.c.l.b16 %v1386
    %v1701 = vunpack.c.h.b16 %v1386
    %v1702 = vunpack.c.l.b16 %v1387
    %v1703 = vunpack.c.h.b16 %v1387
    %v1704 = vunpack.c.l.b16 %v1388
    %v1705 = vunpack.c.h.b16 %v1388
    %v1706 = vunpack.c.l.b16 %v1389
    %v1707 = vunpack.c.h.b16 %v1389
    %v1708 = vunpack.c.l.b16 %v1390
    %v1709 = vunpack.c.h.b16 %v1390
    %v1710 = vunpack.c.l.b16 %v1391
    %v1711 = vunpack.c.h.b16 %v1391
    %v1712 = vunpack.c.l.b16 %v1392
    %v1713 = vunpack.c.h.b16 %v1392
    %v1714 = vunpack.c.l.b16 %v1393
    %v1715 = vunpack.c.h.b16 %v1393
    %v1716 = vunpack.c.l.b16 %v1394
    %v1717 = vunpack.c.h.b16 %v1394
    %v1718 = vunpack.c.l.b16 %v1395
    %v1719 = vunpack.c.h.b16 %v1395
    %v1720 = vunpack.c.l.b16 %v1396
    %v1721 = vunpack.c.h.b16 %v1396
    %v1722 = vunpack.c.l.b16 %v1397
    %v1723 = vunpack.c.h.b16 %v1397
    %v1724 = vunpack.c.l.b16 %v1398
    %v1725 = vunpack.c.h.b16 %v1398
    %v1726 = vunpack.c.l.b16 %v1399
    %v1727 = vunpack.c.h.b16 %v1399
    %v1728 = vunpack.c.l.b16 %v1400
    %v1729 = vunpack.c.h.b16 %v1400
    %v1730 = vunpack.c.l.b16 %v1401
    %v1731 = vunpack.c.h.b16 %v1401
    %v1732 = vunpack.c.l.b16 %v1402
    %v1733 = vunpack.c.h.b16 %v1402
    %v1734 = vunpack.c.l.b16 %v1403
    %v1735 = vunpack.c.h.b16 %v1403
    %v1736 = vunpack.c.l.b16 %v1404
    %v1737 = vunpack.c.h.b16 %v1404
    %v1738 = vunpack.c.l.b16 %v1405
    %v1739 = vunpack.c.h.b16 %v1405
    %v1740 = vunpack.c.l.b16 %v1406
    %v1741 = vunpack.c.h.b16 %v1406
    %v1742 = vunpack.c.l.b16 %v1407
    %v1743 = vunpack.c.h.b16 %v1407
    %v1744 = vunpack.c.l.b16 %v1408
    %v1745 = vunpack.c.h.b16 %v1408
    %v1746 = vunpack.c.l.b16 %v1409
    %v1747 = vunpack.c.h.b16 %v1409
    %v1748 = vunpack.c.l.b16 %v1410
    %v1749 = vunpack.c.h.b16 %v1410
    %v1750 = vunpack.c.l.b16 %v1411
    %v1751 = vunpack.c.h.b16 %v1411
    %v1752 = vunpack.c.l.b16 %v1412
    %v1753 = vunpack.c.h.b16 %v1412
    %v1754 = vunpack.c.l.b16 %v1413
    %v1755 = vunpack.c.h.b16 %v1413
    %v1756 = vunpack.c.l.b16 %v1414
    %v1757 = vunpack.c.h.b16 %v1414
    %v1758 = vunpack.c.l.b16 %v1415
    %v1759 = vunpack.c.h.b16 %v1415
    %v1760 = vunpack.c.l.b16 %v1416
    %v1761 = vunpack.c.h.b16 %v1416
    %v1762 = vunpack.c.l.b16 %v1417
    %v1763 = vunpack.c.h.b16 %v1417
    %v1764 = vunpack.c.l.b16 %v1418
    %v1765 = vunpack.c.h.b16 %v1418
    %v1766 = vunpack.c.l.b16 %v1419
    %v1767 = vunpack.c.h.b16 %v1419
    %v1768 = vunpack.c.l.b16 %v1420
    %v1769 = vunpack.c.h.b16 %v1420
    %v1770 = vunpack.c.l.b16 %v1421
    %v1771 = vunpack.c.h.b16 %v1421
    %v1772 = vunpack.c.l.b16 %v1422
    %v1773 = vunpack.c.h.b16 %v1422
    %v1774 = vunpack.c.l.b16 %v1423
    %v1775 = vunpack.c.h.b16 %v1423
    %v1776 = vunpack.c.l.b16 %v1424
    %v1777 = vunpack.c.h.b16 %v1424
    %v1778 = vunpack.c.l.b16 %v1425
    %v1779 = vunpack.c.h.b16 %v1425
    %v1780 = vunpack.c.l.b16 %v1426
    %v1781 = vunpack.c.h.b16 %v1426
    %v1782 = vunpack.c.l.b16 %v1427
    %v1783 = vunpack.c.h.b16 %v1427
    %v1784 = vunpack.c.l.b16 %v1428
    %v1785 = vunpack.c.h.b16 %v1428
    %v1786 = vunpack.c.l.b16 %v1429
    %v1787 = vunpack.c.h.b16 %v1429
    %v1788 = vunpack.c.l.b16 %v1430
    %v1789 = vunpack.c.h.b16 %v1430
    %v1790 = vunpack.c.l.b16 %v1431
    %v1791 = vunpack.c.h.b16 %v1431
    %v1792 = vunpack.c.l.b16 %v1432
    %v1793 = vunpack.c.h.b16 %v1432
    %v1794 = vunpack.c.l.b16 %v1433
    %v1795 = vunpack.c.h.b16 %v1433
    %v1796 = vunpack.c.l.b16 %v1434
    %v1797 = vunpack.c.h.b16 %v1434
    %v1798 = vunpack.c.l.b16 %v1435
    %v1799 = vunpack.c.h.b16 %v1435
    %v1800 = vunpack.c.l.b16 %v1436
    %v1801 = vunpack.c.h.b16 %v1436
    %v1802 = vunpack.c.l.b16 %v1437
    %v1803 = vunpack.c.h.b16 %v1437
    %v1804 = vunpack.c.l.b16 %v1438
    %v1805 = vunpack.c.h.b16 %v1438
    %v1806 = vunpack.c.l.b16 %v1439
    %v1807 = vunpack.c.h.b16 %v1439
    %v1808 = vunpack.c.l.b16 %v1440
    %v1809 = vunpack.c.h.b16 %v1440
    %v1810 = vunpack.c.l.b16 %v1441
    %v1811 = vunpack.c.h.b16 %v1441
    %v1812 = vunpack.c.l.b16 %v1442
    %v1813 = vunpack.c.h.b16 %v1442
    %v1814 = vunpack.c.l.b16 %v1443
    %v1815 = vunpack.c.h.b16 %v1443
    %v1816 = vunpack.c.l.b16 %v1444
    %v1817 = vunpack.c.h.b16 %v1444
    %v1818 = vunpack.c.l.b16 %v1445
    %v1819 = vunpack.c.h.b16 %v1445
    %v1820 = vunpack.c.l.b16 %v1446
    %v1821 = vunpack.c.h.b16 %v1446
    %v1822 = vunpack.c.l.b16 %v1447
    %v1823 = vunpack.c.h.b16 %v1447
    %v1824 = vunpack.c.l.b16 %v1448
    %v1825 = vunpack.c.h.b16 %v1448
    %v1826 = vunpack.c.l.b16 %v1449
    %v1827 = vunpack.c.h.b16 %v1449
    %v1828 = vunpack.c.l.b16 %v1450
    %v1829 = vunpack.c.h.b16 %v1450
    %v1830 = vunpack.c.l.b16 %v1451
    %v1831 = vunpack.c.h.b16 %v1451
    %v1832 = vunpack.c.l.b16 %v1452
    %v1833 = vunpack.c.h.b16 %v1452
    %v1834 = vunpack.c.l.b16 %v1453
    %v1835 = vunpack.c.h.b16 %v1453
    %v1836 = vunpack.c.l.b16 %v1454
    %v1837 = vunpack.c.h.b16 %v1454
    %v1838 = vunpack.c.l.b16 %v1455
    %v1839 = vunpack.c.h.b16 %v1455
    %v1840 = vunpack.c.l.b16 %v1456
    %v1841 = vunpack.c.h.b16 %v1456
    %v1842 = vunpack.c.l.b16 %v1457
    %v1843 = vunpack.c.h.b16 %v1457
    %v1844 = vunpack.c.l.b16 %v1458
    %v1845 = vunpack.c.h.b16 %v1458
    %v1846 = vunpack.c.l.b16 %v1459
    %v1847 = vunpack.c.h.b16 %v1459
    %v1848 = vunpack.c.l.b16 %v1460
    %v1849 = vunpack.c.h.b16 %v1460
    %v1850 = vunpack.c.l.b16 %v1461
    %v1851 = vunpack.c.h.b16 %v1461
    %v1852 = vunpack.c.l.b16 %v1462
    %v1853 = vunpack.c.h.b16 %v1462
    %v1854 = vunpack.c.l.b16 %v1463
    %v1855 = vunpack.c.h.b16 %v1463
    %v1856 = vunpack.c.l.b16 %v1464
    %v1857 = vunpack.c.h.b16 %v1464
    %v1858 = vunpack.c.l.b16 %v1465
    %v1859 = vunpack.c.h.b16 %v1465
    %v1860 = vunpack.c.l.b16 %v1466
    %v1861 = vunpack.c.h.b16 %v1466
    %v1862 = vunpack.c.l.b16 %v1467
    %v1863 = vunpack.c.h.b16 %v1467
    %v1864 = vunpack.c.l.b16 %v1468
    %v1865 = vunpack.c.h.b16 %v1468
    %v1866 = vunpack.c.l.b16 %v1469
    %v1867 = vunpack.c.h.b16 %v1469
    %v1868 = vunpack.c.l.b16 %v1470
    %v1869 = vunpack.c.h.b16 %v1470
    %v1870 = vunpack.c.l.b16 %v1471
    %v1871 = vunpack.c.h.b16 %v1471
    %v1872 = vunpack.c.l.b16 %v1472
    %v1873 = vunpack.c.h.b16 %v1472
    %v1874 = vunpack.c.l.b16 %v1473
    %v1875 = vunpack.c.h.b16 %v1473
    %v1876 = vunpack.c.l.b16 %v1474
    %v1877 = vunpack.c.h.b16 %v1474
    %v1878 = vunpack.c.l.b16 %v1475
    %v1879 = vunpack.c.h.b16 %v1475
    %v1880 = vunpack.c.l.b16 %v1476
    %v1881 = vunpack.c.h.b16 %v1476
    %v1882 = vunpack.c.l.b16 %v1477
    %v1883 = vunpack.c.h.b16 %v1477
    %v1884 = vunpack.c.l.b16 %v1478
    %v1885 = vunpack.c.h.b16 %v1478
    %v1886 = vunpack.c.l.b16 %v1479
    %v1887 = vunpack.c.h.b16 %v1479
    %v1888 = vunpack.c.l.b16 %v1480
    %v1889 = vunpack.c.h.b16 %v1480
    %v1890 = vunpack.c.l.b16 %v1481
    %v1891 = vunpack.c.h.b16 %v1481
    %v1892 = vunpack.c.l.b16 %v1482
    %v1893 = vunpack.c.h.b16 %v1482
    %v1894 = vunpack.c.l.b16 %v1483
    %v1895 = vunpack.c.h.b16 %v1483
    %v1896 = vunpack.c.l.b16 %v1484
    %v1897 = vunpack.c.h.b16 %v1484
    %v1898 = vunpack.c.l.b16 %v1485
    %v1899 = vunpack.c.h.b16 %v1485
    %v1900 = vunpack.c.l.b16 %v1486
    %v1901 = vunpack.c.h.b16 %v1486
    %v1902 = vunpack.c.l.b16 %v1487
    %v1903 = vunpack.c.h.b16 %v1487
    %v1904 = vunpack.c.l.b16 %v1488
    %v1905 = vunpack.c.h.b16 %v1488
    %v1906 = vunpack.c.l.b16 %v1489
    %v1907 = vunpack.c.h.b16 %v1489
    %v1908 = vunpack.c.l.b16 %v1490
    %v1909 = vunpack.c.h.b16 %v1490
    %v1910 = vunpack.c.l.b16 %v1491
    %v1911 = vunpack.c.h.b16 %v1491
    %v1912 = vunpack.c.l.b16 %v1492
    %v1913 = vunpack.c.h.b16 %v1492
    %v1914 = vunpack.c.l.b16 %v1493
    %v1915 = vunpack.c.h.b16 %v1493
    %v1916 = vunpack.c.l.b16 %v1494
    %v1917 = vunpack.c.h.b16 %v1494
    %v1918 = vunpack.c.l.b16 %v1495
    %v1919 = vunpack.c.h.b16 %v1495
    %v1920 = vunpack.c.l.b16 %v1496
    %v1921 = vunpack.c.h.b16 %v1496
    %v1922 = vunpack.c.l.b16 %v1497
    %v1923 = vunpack.c.h.b16 %v1497
    %v1924 = vpack.c.b16 %v1676, %v1668
    %v1925 = vpack.c.b16 %v1677, %v1669
    %v1926 = vpack.c.b16 %v1678, %v1670
    %v1927 = vpack.c.b16 %v1679, %v1671
    %v1928 = vpack.c.b16 %v1680, %v1672
    %v1929 = vpack.c.b16 %v1681, %v1673
    %v1930 = vpack.c.b16 %v1682, %v1674
    %v1931 = vpack.c.b16 %v1683, %v1675
    %v1932 = vpack.c.b16 %v1692, %v1684
    %v1933 = vpack.c.b16 %v1693, %v1685
    %v1934 = vpack.c.b16 %v1694, %v1686
    %v1935 = vpack.c.b16 %v1695, %v1687
    %v1936 = vpack.c.b16 %v1696, %v1688
    %v1937 = vpack.c.b16 %v1697, %v1689
    %v1938 = vpack.c.b16 %v1698, %v1690
    %v1939 = vpack.c.b16 %v1699, %v1691
    %v1940 = vpack.c.b16 %v1708, %v1700
    %v1941 = vpack.c.b16 %v1709, %v1701
    %v1942 = vpack.c.b16 %v1710, %v1702
    %v1943 = vpack.c.b16 %v1711, %v1703
    %v1944 = vpack.c.b16 %v1712, %v1704
    %v1945 = vpack.c.b16 %v1713, %v1705
    %v1946 = vpack.c.b16 %v1714, %v1706
    %v1947 = vpack.c.b16 %v1715, %v1707
    %v1948 = vpack.c.b16 %v1724, %v1716
    %v1949 = vpack.c.b16 %v1725, %v1717
    %v1950 = vpack.c.b16 %v1726, %v1718
    %v1951 = vpack.c.b16 %v1727, %v1719
    %v1952 = vpack.c.b16 %v1728, %v1720
    %v1953 = vpack.c.b16 %v1729, %v1721
    %v1954 = vpack.c.b16 %v1730, %v1722
    %v1955 = vpack.c.b16 %v1731, %v1723
    %v1956 = vpack.c.b16 %v1740, %v1732
    %v1957 = vpack.c.b16 %v1741, %v1733
    %v1958 = vpack.c.b16 %v1742, %v1734
    %v1959 = vpack.c.b16 %v1743, %v1735
    %v1960 = vpack.c.b16 %v1744, %v1736
    %v1961 = vpack.c.b16 %v1745, %v1737
    %v1962 = vpack.c.b16 %v1746, %v1738
    %v1963 = vpack.c.b16 %v1747, %v1739
    %v1964 = vpack.c.b16 %v1756, %v1748
    %v1965 = vpack.c.b16 %v1757, %v1749
    %v1966 = vpack.c.b16 %v1758, %v1750
    %v1967 = vpack.c.b16 %v1759, %v1751
    %v1968 = vpack.c.b16 %v1760, %v1752
    %v1969 = vpack.c.b16 %v1761, %v1753
    %v1970 = vpack.c.b16 %v1762, %v1754
    %v1971 = vpack.c.b16 %v1763, %v1755
    %v1972 = vpack.c.b16 %v1772, %v1764
    %v1973 = vpack.c.b16 %v1773, %v1765
    %v1974 = vpack.c.b16 %v1774, %v1766
    %v1975 = vpack.c.b16 %v1775, %v1767
    %v1976 = vpack.c.b16 %v1776, %v1768
    %v1977 = vpack.c.b16 %v1777, %v1769
    %v1978 = vpack.c.b16 %v1778, %v1770
    %v1979 = vpack.c.b16 %v1779, %v1771
    %v1980 = vpack.c.b16 %v1788, %v1780
    %v1981 = vpack.c.b16 %v1789, %v1781
    %v1982 = vpack.c.b16 %v1790, %v1782
    %v1983 = vpack.c.b16 %v1791, %v1783
    %v1984 = vpack.c.b16 %v1792, %v1784
    %v1985 = vpack.c.b16 %v1793, %v1785
    %v1986 = vpack.c.b16 %v1794, %v1786
    %v1987 = vpack.c.b16 %v1795, %v1787
    %v1988 = vpack.c.b16 %v1804, %v1796
    %v1989 = vpack.c.b16 %v1805, %v1797
    %v1990 = vpack.c.b16 %v1806, %v1798
    %v1991 = vpack.c.b16 %v1807, %v1799
    %v1992 = vpack.c.b16 %v1808, %v1800
    %v1993 = vpack.c.b16 %v1809, %v1801
    %v1994 = vpack.c.b16 %v1810, %v1802
    %v1995 = vpack.c.b16 %v1811, %v1803
    %v1996 = vpack.c.b16 %v1820, %v1812
    %v1997 = vpack.c.b16 %v1821, %v1813
    %v1998 = vpack.c.b16 %v1822, %v1814
    %v1999 = vpack.c.b16 %v1823, %v1815
    %v2000 = vpack.c.b16 %v1824, %v1816
    %v2001 = vpack.c.b16 %v1825, %v1817
    %v2002 = vpack.c.b16 %v1826, %v1818
    %v2003 = vpack.c.b16 %v1827, %v1819
    %v2004 = vpack.c.b16 %v1836, %v1828
    %v2005 = vpack.c.b16 %v1837, %v1829
    %v2006 = vpack.c.b16 %v1838, %v1830
    %v2007 = vpack.c.b16 %v1839, %v1831
    %v2008 = vpack.c.b16 %v1840, %v1832
    %v2009 = vpack.c.b16 %v1841, %v1833
    %v2010 = vpack.c.b16 %v1842, %v1834
    %v2011 = vpack.c.b16 %v1843, %v1835
    %v2012 = vpack.c.b16 %v1852, %v1844
    %v2013 = vpack.c.b16 %v1853, %v1845
    %v2014 = vpack.c.b16 %v1854, %v1846
    %v2015 = vpack.c.b16 %v1855, %v1847
    %v2016 = vpack.c.b16 %v1856, %v1848
    %v2017 = vpack.c.b16 %v1857, %v1849
    %v2018 = vpack.c.b16 %v1858, %v1850
    %v2019 = vpack.c.b16 %v1859, %v1851
    %v2020 = vpack.c.b16 %v1868, %v1860
    %v2021 = vpack.c.b16 %v1869, %v1861
    %v2022 = vpack.c.b16 %v1870, %v1862
    %v2023 = vpack.c.b16 %v1871, %v1863
    %v2024 = vpack.c.b16 %v1872, %v1864
    %v2025 = vpack.c.b16 %v1873, %v1865
    %v2026 = vpack.c.b16 %v1874, %v1866
    %v2027 = vpack.c.b16 %v1875, %v1867
    %v2028 = vpack.c.b16 %v1884, %v1876
    %v2029 = vpack.c.b16 %v1885, %v1877
    %v2030 = vpack.c.b16 %v1886, %v1878
    %v2031 = vpack.c.b16 %v1887, %v1879
    %v2032 = vpack.c.b16 %v1888, %v1880
    %v2033 = vpack.c.b16 %v1889, %v1881
    %v2034 = vpack.c.b16 %v1890, %v1882
    %v2035 = vpack.c.b16 %v1891, %v1883
    %v2036 = vpack.c.b16 %v1900, %v1892
    %v2037 = vpack.c.b16 %v1901, %v1893
    %v2038 = vpack.c.b16 %v1902, %v1894
    %v2039 = vpack.c.b16 %v1903, %v1895
    %v2040 = vpack.c.b16 %v1904, %v1896
    %v2041 = vpack.c.b16 %v1905, %v1897
    %v2042 = vpack.c.b16 %v1906, %v1898
    %v2043 = vpack.c.b16 %v1907, %v1899
    %v2044 = vpack.c.b16 %v1916, %v1908
    %v2045 = vpack.c.b16 %v1917, %v1909
    %v2046 = vpack.c.b16 %v1918, %v1910
    %v2047 = vpack.c.b16 %v1919, %v1911
    %v2048 = vpack.c.b16 %v1920, %v1912
    %v2049 = vpack.c.b16 %v1921, %v1913
    %v2050 = vpack.c.b16 %v1922, %v1914
    %v2051 = vpack.c.b16 %v1923, %v1915
    %2180 = vmatprep.subr.bf16.mxu0 %v1925
    %2181 = vmatpush1.bf16.msra.mxu0 %v1924
    %2182 = vmatprep.subr.bf16.mxu0 %v1933
    %2183 = vmatpush1.bf16.msra.mxu0 %v1932
    %2184 = vmatprep.subr.bf16.mxu0 %v1941
    %2185 = vmatpush1.bf16.msra.mxu0 %v1940
    %2186 = vmatprep.subr.bf16.mxu0 %v1949
    %2187 = vmatpush1.bf16.msra.mxu0 %v1948
    %2188 = vmatprep.subr.bf16.mxu0 %v1957
    %2189 = vmatpush1.bf16.msra.mxu0 %v1956
    %2190 = vmatprep.subr.bf16.mxu0 %v1965
    %2191 = vmatpush1.bf16.msra.mxu0 %v1964
    %2192 = vmatprep.subr.bf16.mxu0 %v1973
    %2193 = vmatpush1.bf16.msra.mxu0 %v1972
    %2194 = vmatprep.subr.bf16.mxu0 %v1981
    %2195 = vmatpush1.bf16.msra.mxu0 %v1980
    %2196 = vmatprep.subr.bf16.mxu0 %v1989
    %2197 = vmatpush1.bf16.msra.mxu0 %v1988
    %2198 = vmatprep.subr.bf16.mxu0 %v1997
    %2199 = vmatpush1.bf16.msra.mxu0 %v1996
    %2200 = vmatprep.subr.bf16.mxu0 %v2005
    %2201 = vmatpush1.bf16.msra.mxu0 %v2004
    %2202 = vmatprep.subr.bf16.mxu0 %v2013
    %2203 = vmatpush1.bf16.msra.mxu0 %v2012
    %2204 = vmatprep.subr.bf16.mxu0 %v2021
    %2205 = vmatpush1.bf16.msra.mxu0 %v2020
    %2206 = vmatprep.subr.bf16.mxu0 %v2029
    %2207 = vmatpush1.bf16.msra.mxu0 %v2028
    %2208 = vmatprep.subr.bf16.mxu0 %v2037
    %2209 = vmatpush1.bf16.msra.mxu0 %v2036
    %2210 = vmatprep.subr.bf16.mxu0 %v2045
    %2211 = vmatpush1.bf16.msra.mxu0 %v2044
    %2212 = vmatprep.mubr.bf16.mxu0 %v1339
    %2213 = vmatmul.mubr.bf16.gmra.mrb[0].mxu0 %v1338
    %v2214 = vpop.f32.mrb[0].mxu0
    %v2215 = vadd.f32 %v1503, %v2214
    %v2216 = vpop.f32.mrb[0].mxu0
    %v2217 = vadd.f32 %v1507, %v2216
    %v2218 = vpop.f32.mrb[0].mxu0
    %v2219 = vadd.f32 %v1503, %v2218
    %v2220 = vpop.f32.mrb[0].mxu0
    %v2221 = vadd.f32 %v1507, %v2220
    %2222 = vmatprep.mubr.bf16.mxu0 %v1341
    %2223 = vmatmul.mubr.bf16.gmra.mrb[0].mxu0 %v1340
    %v2224 = vpop.f32.mrb[0].mxu0
    %v2225 = vadd.f32 %v1503, %v2224
    %v2226 = vpop.f32.mrb[0].mxu0
    %v2227 = vadd.f32 %v1507, %v2226
    %v2228 = vpop.f32.mrb[0].mxu0
    %v2229 = vadd.f32 %v1503, %v2228
    %v2230 = vpop.f32.mrb[0].mxu0
    %v2231 = vadd.f32 %v1507, %v2230
    %2232 = vmatprep.mubr.bf16.mxu0 %v1343
    %2233 = vmatmul.mubr.bf16.gmra.mrb[0].mxu0 %v1342
    %v2234 = vpop.f32.mrb[0].mxu0
    %v2235 = vadd.f32 %v1503, %v2234
    %v2236 = vpop.f32.mrb[0].mxu0
    %v2237 = vadd.f32 %v1507, %v2236
    %v2238 = vpop.f32.mrb[0].mxu0
    %v2239 = vadd.f32 %v1503, %v2238
    %v2240 = vpop.f32.mrb[0].mxu0
    %v2241 = vadd.f32 %v1507, %v2240
    %2242 = vmatprep.mubr.bf16.mxu0 %v1345
    %2243 = vmatmul.mubr.bf16.gmra.mrb[0].mxu0 %v1344
    %v2244 = vpop.f32.mrb[0].mxu0
    %v2245 = vadd.f32 %v1503, %v2244
    %v2246 = vpop.f32.mrb[0].mxu0
    %v2247 = vadd.f32 %v1507, %v2246
    %v2248 = vpop.f32.mrb[0].mxu0
    %v2249 = vadd.f32 %v1503, %v2248
    %v2250 = vpop.f32.mrb[0].mxu0
    %v2251 = vadd.f32 %v1507, %v2250
    %2252 = vmatprep.mubr.bf16.mxu0 %v1347
    %2253 = vmatmul.mubr.bf16.gmra.mrb[0].mxu0 %v1346
    %v2254 = vpop.f32.mrb[0].mxu0
    %v2255 = vadd.f32 %v1503, %v2254
    %v2256 = vpop.f32.mrb[0].mxu0
    %v2257 = vadd.f32 %v1507, %v2256
    %v2258 = vpop.f32.mrb[0].mxu0
    %v2259 = vadd.f32 %v1503, %v2258
    %v2260 = vpop.f32.mrb[0].mxu0
    %v2261 = vadd.f32 %v1507, %v2260
    %2262 = vmatprep.mubr.bf16.mxu0 %v1349
    %2263 = vmatmul.mubr.bf16.gmra.mrb[0].mxu0 %v1348
    %v2264 = vpop.f32.mrb[0].mxu0
    %v2265 = vadd.f32 %v1503, %v2264
    %v2266 = vpop.f32.mrb[0].mxu0
    %v2267 = vadd.f32 %v1507, %v2266
    %v2268 = vpop.f32.mrb[0].mxu0
    %v2269 = vadd.f32 %v1503, %v2268
    %v2270 = vpop.f32.mrb[0].mxu0
    %v2271 = vadd.f32 %v1507, %v2270
    %2272 = vmatprep.mubr.bf16.mxu0 %v1351
    %2273 = vmatmul.mubr.bf16.gmra.mrb[0].mxu0 %v1350
    %v2274 = vpop.f32.mrb[0].mxu0
    %v2275 = vadd.f32 %v1503, %v2274
    %v2276 = vpop.f32.mrb[0].mxu0
    %v2277 = vadd.f32 %v1507, %v2276
    %v2278 = vpop.f32.mrb[0].mxu0
    %v2279 = vadd.f32 %v1503, %v2278
    %v2280 = vpop.f32.mrb[0].mxu0
    %v2281 = vadd.f32 %v1507, %v2280
    %2282 = vmatprep.mubr.bf16.mxu0 %v1353
    %2283 = vmatmul.mubr.bf16.gmra.mrb[0].mxu0 %v1352
    %v2284 = vpop.f32.mrb[0].mxu0
    %v2285 = vadd.f32 %v1503, %v2284
    %v2286 = vpop.f32.mrb[0].mxu0
    %v2287 = vadd.f32 %v1507, %v2286
    %v2288 = vpop.f32.mrb[0].mxu0
    %v2289 = vadd.f32 %v1503, %v2288
    %v2290 = vpop.f32.mrb[0].mxu0
    %v2291 = vadd.f32 %v1507, %v2290
    %2292 = vmatprep.mubr.bf16.mxu0 %v1355
    %2293 = vmatmul.mubr.bf16.gmra.mrb[0].mxu0 %v1354
    %v2294 = vpop.f32.mrb[0].mxu0
    %v2295 = vadd.f32 %v1503, %v2294
    %v2296 = vpop.f32.mrb[0].mxu0
    %v2297 = vadd.f32 %v1507, %v2296
    %v2298 = vpop.f32.mrb[0].mxu0
    %v2299 = vadd.f32 %v1503, %v2298
    %v2300 = vpop.f32.mrb[0].mxu0
    %v2301 = vadd.f32 %v1507, %v2300
    %2302 = vmatprep.mubr.bf16.mxu0 %v1357
    %2303 = vmatmul.mubr.bf16.gmra.mrb[0].mxu0 %v1356
    %v2304 = vpop.f32.mrb[0].mxu0
    %v2305 = vadd.f32 %v1503, %v2304
    %v2306 = vpop.f32.mrb[0].mxu0
    %v2307 = vadd.f32 %v1507, %v2306
    %v2308 = vpop.f32.mrb[0].mxu0
    %v2309 = vadd.f32 %v1503, %v2308
    %v2310 = vpop.f32.mrb[0].mxu0
    %v2311 = vadd.f32 %v1507, %v2310
    %2312 = vmatprep.mubr.bf16.mxu0 %v1359
    %2313 = vmatmul.mubr.bf16.gmra.mrb[0].mxu0 %v1358
    %v2314 = vpop.f32.mrb[0].mxu0
    %v2315 = vadd.f32 %v1503, %v2314
    %v2316 = vpop.f32.mrb[0].mxu0
    %v2317 = vadd.f32 %v1507, %v2316
    %v2318 = vpop.f32.mrb[0].mxu0
    %v2319 = vadd.f32 %v1503, %v2318
    %v2320 = vpop.f32.mrb[0].mxu0
    %v2321 = vadd.f32 %v1507, %v2320
    %2322 = vmatprep.mubr.bf16.mxu0 %v1361
    %2323 = vmatmul.mubr.bf16.gmra.mrb[0].mxu0 %v1360
    %v2324 = vpop.f32.mrb[0].mxu0
    %v2325 = vadd.f32 %v1503, %v2324
    %v2326 = vpop.f32.mrb[0].mxu0
    %v2327 = vadd.f32 %v1507, %v2326
    %v2328 = vpop.f32.mrb[0].mxu0
    %v2329 = vadd.f32 %v1503, %v2328
    %v2330 = vpop.f32.mrb[0].mxu0
    %v2331 = vadd.f32 %v1507, %v2330
    %2332 = vmatprep.mubr.bf16.mxu0 %v1363
    %2333 = vmatmul.mubr.bf16.gmra.mrb[0].mxu0 %v1362
    %v2334 = vpop.f32.mrb[0].mxu0
    %v2335 = vadd.f32 %v1503, %v2334
    %v2336 = vpop.f32.mrb[0].mxu0
    %v2337 = vadd.f32 %v1507, %v2336
    %v2338 = vpop.f32.mrb[0].mxu0
    %v2339 = vadd.f32 %v1503, %v2338
    %v2340 = vpop.f32.mrb[0].mxu0
    %v2341 = vadd.f32 %v1507, %v2340
    %2342 = vmatprep.mubr.bf16.mxu0 %v1365
    %2343 = vmatmul.mubr.bf16.gmra.mrb[0].mxu0 %v1364
    %v2344 = vpop.f32.mrb[0].mxu0
    %v2345 = vadd.f32 %v1503, %v2344
    %v2346 = vpop.f32.mrb[0].mxu0
    %v2347 = vadd.f32 %v1507, %v2346
    %v2348 = vpop.f32.mrb[0].mxu0
    %v2349 = vadd.f32 %v1503, %v2348
    %v2350 = vpop.f32.mrb[0].mxu0
    %v2351 = vadd.f32 %v1507, %v2350
    %2352 = vmatprep.mubr.bf16.mxu0 %v1367
    %2353 = vmatmul.mubr.bf16.gmra.mrb[0].mxu0 %v1366
    %v2354 = vpop.f32.mrb[0].mxu0
    %v2355 = vadd.f32 %v1503, %v2354
    %v2356 = vpop.f32.mrb[0].mxu0
    %v2357 = vadd.f32 %v1507, %v2356
    %v2358 = vpop.f32.mrb[0].mxu0
    %v2359 = vadd.f32 %v1503, %v2358
    %v2360 = vpop.f32.mrb[0].mxu0
    %v2361 = vadd.f32 %v1507, %v2360
    %2362 = vmatprep.mubr.bf16.mxu0 %v1369
    %2363 = vmatmul.mubr.bf16.gmra.mrb[0].mxu0 %v1368
    %v2364 = vpop.f32.mrb[0].mxu0
    %v2365 = vadd.f32 %v1503, %v2364
    %v2366 = vpop.f32.mrb[0].mxu0
    %v2367 = vadd.f32 %v1507, %v2366
    %v2368 = vpop.f32.mrb[0].mxu0
    %v2369 = vadd.f32 %v1503, %v2368
    %v2370 = vpop.f32.mrb[0].mxu0
    %v2371 = vadd.f32 %v1507, %v2370
    %2372 = vdwg.mxu0
    %2373 = vmatprep.subr.bf16.mxu0 %v1927
    %2374 = vmatpush1.bf16.msra.mxu0 %v1926
    %2375 = vmatprep.subr.bf16.mxu0 %v1935
    %2376 = vmatpush1.bf16.msra.mxu0 %v1934
    %2377 = vmatprep.subr.bf16.mxu0 %v1943
    %2378 = vmatpush1.bf16.msra.mxu0 %v1942
    %2379 = vmatprep.subr.bf16.mxu0 %v1951
    %2380 = vmatpush1.bf16.msra.mxu0 %v1950
    %2381 = vmatprep.subr.bf16.mxu0 %v1959
    %2382 = vmatpush1.bf16.msra.mxu0 %v1958
    %2383 = vmatprep.subr.bf16.mxu0 %v1967
    %2384 = vmatpush1.bf16.msra.mxu0 %v1966
    %2385 = vmatprep.subr.bf16.mxu0 %v1975
    %2386 = vmatpush1.bf16.msra.mxu0 %v1974
    %2387 = vmatprep.subr.bf16.mxu0 %v1983
    %2388 = vmatpush1.bf16.msra.mxu0 %v1982
    %2389 = vmatprep.subr.bf16.mxu0 %v1991
    %2390 = vmatpush1.bf16.msra.mxu0 %v1990
    %2391 = vmatprep.subr.bf16.mxu0 %v1999
    %2392 = vmatpush1.bf16.msra.mxu0 %v1998
    %2393 = vmatprep.subr.bf16.mxu0 %v2007
    %2394 = vmatpush1.bf16.msra.mxu0 %v2006
    %2395 = vmatprep.subr.bf16.mxu0 %v2015
    %2396 = vmatpush1.bf16.msra.mxu0 %v2014
    %2397 = vmatprep.subr.bf16.mxu0 %v2023
    %2398 = vmatpush1.bf16.msra.mxu0 %v2022
    %2399 = vmatprep.subr.bf16.mxu0 %v2031
    %2400 = vmatpush1.bf16.msra.mxu0 %v2030
    %2401 = vmatprep.subr.bf16.mxu0 %v2039
    %2402 = vmatpush1.bf16.msra.mxu0 %v2038
    %2403 = vmatprep.subr.bf16.mxu0 %v2047
    %2404 = vmatpush1.bf16.msra.mxu0 %v2046
    %2405 = vmatprep.mubr.bf16.mxu0 %v1339
    %2406 = vmatmul.mubr.bf16.gmra.mrb[0].mxu0 %v1338
    %v2407 = vpop.f32.mrb[0].mxu0
    %v2408 = vadd.f32 %v1511, %v2407
    %v2409 = vpop.f32.mrb[0].mxu0
    %v2410 = vadd.f32 %v1515, %v2409
    %v2411 = vpop.f32.mrb[0].mxu0
    %v2412 = vadd.f32 %v1511, %v2411
    %v2413 = vpop.f32.mrb[0].mxu0
    %v2414 = vadd.f32 %v1515, %v2413
    %2415 = vmatprep.mubr.bf16.mxu0 %v1341
    %2416 = vmatmul.mubr.bf16.gmra.mrb[0].mxu0 %v1340
    %v2417 = vpop.f32.mrb[0].mxu0
    %v2418 = vadd.f32 %v1511, %v2417
    %v2419 = vpop.f32.mrb[0].mxu0
    %v2420 = vadd.f32 %v1515, %v2419
    %v2421 = vpop.f32.mrb[0].mxu0
    %v2422 = vadd.f32 %v1511, %v2421
    %v2423 = vpop.f32.mrb[0].mxu0
    %v2424 = vadd.f32 %v1515, %v2423
    %2425 = vmatprep.mubr.bf16.mxu0 %v1343
    %2426 = vmatmul.mubr.bf16.gmra.mrb[0].mxu0 %v1342
    %v2427 = vpop.f32.mrb[0].mxu0
    %v2428 = vadd.f32 %v1511, %v2427
    %v2429 = vpop.f32.mrb[0].mxu0
    %v2430 = vadd.f32 %v1515, %v2429
    %v2431 = vpop.f32.mrb[0].mxu0
    %v2432 = vadd.f32 %v1511, %v2431
    %v2433 = vpop.f32.mrb[0].mxu0
    %v2434 = vadd.f32 %v1515, %v2433
    %2435 = vmatprep.mubr.bf16.mxu0 %v1345
    %2436 = vmatmul.mubr.bf16.gmra.mrb[0].mxu0 %v1344
    %v2437 = vpop.f32.mrb[0].mxu0
    %v2438 = vadd.f32 %v1511, %v2437
    %v2439 = vpop.f32.mrb[0].mxu0
    %v2440 = vadd.f32 %v1515, %v2439
    %v2441 = vpop.f32.mrb[0].mxu0
    %v2442 = vadd.f32 %v1511, %v2441
    %v2443 = vpop.f32.mrb[0].mxu0
    %v2444 = vadd.f32 %v1515, %v2443
    %2445 = vmatprep.mubr.bf16.mxu0 %v1347
    %2446 = vmatmul.mubr.bf16.gmra.mrb[0].mxu0 %v1346
    %v2447 = vpop.f32.mrb[0].mxu0
    %v2448 = vadd.f32 %v1511, %v2447
    %v2449 = vpop.f32.mrb[0].mxu0
    %v2450 = vadd.f32 %v1515, %v2449
    %v2451 = vpop.f32.mrb[0].mxu0
    %v2452 = vadd.f32 %v1511, %v2451
    %v2453 = vpop.f32.mrb[0].mxu0
    %v2454 = vadd.f32 %v1515, %v2453
    %2455 = vmatprep.mubr.bf16.mxu0 %v1349
    %2456 = vmatmul.mubr.bf16.gmra.mrb[0].mxu0 %v1348
    %v2457 = vpop.f32.mrb[0].mxu0
    %v2458 = vadd.f32 %v1511, %v2457
    %v2459 = vpop.f32.mrb[0].mxu0
    %v2460 = vadd.f32 %v1515, %v2459
    %v2461 = vpop.f32.mrb[0].mxu0
    %v2462 = vadd.f32 %v1511, %v2461
    %v2463 = vpop.f32.mrb[0].mxu0
    %v2464 = vadd.f32 %v1515, %v2463
    %2465 = vmatprep.mubr.bf16.mxu0 %v1351
    %2466 = vmatmul.mubr.bf16.gmra.mrb[0].mxu0 %v1350
    %v2467 = vpop.f32.mrb[0].mxu0
    %v2468 = vadd.f32 %v1511, %v2467
    %v2469 = vpop.f32.mrb[0].mxu0
    %v2470 = vadd.f32 %v1515, %v2469
    %v2471 = vpop.f32.mrb[0].mxu0
    %v2472 = vadd.f32 %v1511, %v2471
    %v2473 = vpop.f32.mrb[0].mxu0
    %v2474 = vadd.f32 %v1515, %v2473
    %2475 = vmatprep.mubr.bf16.mxu0 %v1353
    %2476 = vmatmul.mubr.bf16.gmra.mrb[0].mxu0 %v1352
    %v2477 = vpop.f32.mrb[0].mxu0
    %v2478 = vadd.f32 %v1511, %v2477
    %v2479 = vpop.f32.mrb[0].mxu0
    %v2480 = vadd.f32 %v1515, %v2479
    %v2481 = vpop.f32.mrb[0].mxu0
    %v2482 = vadd.f32 %v1511, %v2481
    %v2483 = vpop.f32.mrb[0].mxu0
    %v2484 = vadd.f32 %v1515, %v2483
    %2485 = vmatprep.mubr.bf16.mxu0 %v1355
    %2486 = vmatmul.mubr.bf16.gmra.mrb[0].mxu0 %v1354
    %v2487 = vpop.f32.mrb[0].mxu0
    %v2488 = vadd.f32 %v1511, %v2487
    %v2489 = vpop.f32.mrb[0].mxu0
    %v2490 = vadd.f32 %v1515, %v2489
    %v2491 = vpop.f32.mrb[0].mxu0
    %v2492 = vadd.f32 %v1511, %v2491
    %v2493 = vpop.f32.mrb[0].mxu0
    %v2494 = vadd.f32 %v1515, %v2493
    %2495 = vmatprep.mubr.bf16.mxu0 %v1357
    %2496 = vmatmul.mubr.bf16.gmra.mrb[0].mxu0 %v1356
    %v2497 = vpop.f32.mrb[0].mxu0
    %v2498 = vadd.f32 %v1511, %v2497
    %v2499 = vpop.f32.mrb[0].mxu0
    %v2500 = vadd.f32 %v1515, %v2499
    %v2501 = vpop.f32.mrb[0].mxu0
    %v2502 = vadd.f32 %v1511, %v2501
    %v2503 = vpop.f32.mrb[0].mxu0
    %v2504 = vadd.f32 %v1515, %v2503
    %2505 = vmatprep.mubr.bf16.mxu0 %v1359
    %2506 = vmatmul.mubr.bf16.gmra.mrb[0].mxu0 %v1358
    %v2507 = vpop.f32.mrb[0].mxu0
    %v2508 = vadd.f32 %v1511, %v2507
    %v2509 = vpop.f32.mrb[0].mxu0
    %v2510 = vadd.f32 %v1515, %v2509
    %v2511 = vpop.f32.mrb[0].mxu0
    %v2512 = vadd.f32 %v1511, %v2511
    %v2513 = vpop.f32.mrb[0].mxu0
    %v2514 = vadd.f32 %v1515, %v2513
    %2515 = vmatprep.mubr.bf16.mxu0 %v1361
    %2516 = vmatmul.mubr.bf16.gmra.mrb[0].mxu0 %v1360
    %v2517 = vpop.f32.mrb[0].mxu0
    %v2518 = vadd.f32 %v1511, %v2517
    %v2519 = vpop.f32.mrb[0].mxu0
    %v2520 = vadd.f32 %v1515, %v2519
    %v2521 = vpop.f32.mrb[0].mxu0
    %v2522 = vadd.f32 %v1511, %v2521
    %v2523 = vpop.f32.mrb[0].mxu0
    %v2524 = vadd.f32 %v1515, %v2523
    %2525 = vmatprep.mubr.bf16.mxu0 %v1363
    %2526 = vmatmul.mubr.bf16.gmra.mrb[0].mxu0 %v1362
    %v2527 = vpop.f32.mrb[0].mxu0
    %v2528 = vadd.f32 %v1511, %v2527
    %v2529 = vpop.f32.mrb[0].mxu0
    %v2530 = vadd.f32 %v1515, %v2529
    %v2531 = vpop.f32.mrb[0].mxu0
    %v2532 = vadd.f32 %v1511, %v2531
    %v2533 = vpop.f32.mrb[0].mxu0
    %v2534 = vadd.f32 %v1515, %v2533
    %2535 = vmatprep.mubr.bf16.mxu0 %v1365
    %2536 = vmatmul.mubr.bf16.gmra.mrb[0].mxu0 %v1364
    %v2537 = vpop.f32.mrb[0].mxu0
    %v2538 = vadd.f32 %v1511, %v2537
    %v2539 = vpop.f32.mrb[0].mxu0
    %v2540 = vadd.f32 %v1515, %v2539
    %v2541 = vpop.f32.mrb[0].mxu0
    %v2542 = vadd.f32 %v1511, %v2541
    %v2543 = vpop.f32.mrb[0].mxu0
    %v2544 = vadd.f32 %v1515, %v2543
    %2545 = vmatprep.mubr.bf16.mxu0 %v1367
    %2546 = vmatmul.mubr.bf16.gmra.mrb[0].mxu0 %v1366
    %v2547 = vpop.f32.mrb[0].mxu0
    %v2548 = vadd.f32 %v1511, %v2547
    %v2549 = vpop.f32.mrb[0].mxu0
    %v2550 = vadd.f32 %v1515, %v2549
    %v2551 = vpop.f32.mrb[0].mxu0
    %v2552 = vadd.f32 %v1511, %v2551
    %v2553 = vpop.f32.mrb[0].mxu0
    %v2554 = vadd.f32 %v1515, %v2553
    %2555 = vmatprep.mubr.bf16.mxu0 %v1369
    %2556 = vmatmul.mubr.bf16.gmra.mrb[0].mxu0 %v1368
    %v2557 = vpop.f32.mrb[0].mxu0
    %v2558 = vadd.f32 %v1511, %v2557
    %v2559 = vpop.f32.mrb[0].mxu0
    %v2560 = vadd.f32 %v1515, %v2559
    %v2561 = vpop.f32.mrb[0].mxu0
    %v2562 = vadd.f32 %v1511, %v2561
    %v2563 = vpop.f32.mrb[0].mxu0
    %v2564 = vadd.f32 %v1515, %v2563
    %2565 = vdwg.mxu0
    %2566 = vmatprep.subr.bf16.mxu0 %v1929
    %2567 = vmatpush1.bf16.msra.mxu0 %v1928
    %2568 = vmatprep.subr.bf16.mxu0 %v1937
    %2569 = vmatpush1.bf16.msra.mxu0 %v1936
    %2570 = vmatprep.subr.bf16.mxu0 %v1945
    %2571 = vmatpush1.bf16.msra.mxu0 %v1944
    %2572 = vmatprep.subr.bf16.mxu0 %v1953
    %2573 = vmatpush1.bf16.msra.mxu0 %v1952
    %2574 = vmatprep.subr.bf16.mxu0 %v1961
    %2575 = vmatpush1.bf16.msra.mxu0 %v1960
    %2576 = vmatprep.subr.bf16.mxu0 %v1969
    %2577 = vmatpush1.bf16.msra.mxu0 %v1968
    %2578 = vmatprep.subr.bf16.mxu0 %v1977
    %2579 = vmatpush1.bf16.msra.mxu0 %v1976
    %2580 = vmatprep.subr.bf16.mxu0 %v1985
    %2581 = vmatpush1.bf16.msra.mxu0 %v1984
    %2582 = vmatprep.subr.bf16.mxu0 %v1993
    %2583 = vmatpush1.bf16.msra.mxu0 %v1992
    %2584 = vmatprep.subr.bf16.mxu0 %v2001
    %2585 = vmatpush1.bf16.msra.mxu0 %v2000
    %2586 = vmatprep.subr.bf16.mxu0 %v2009
    %2587 = vmatpush1.bf16.msra.mxu0 %v2008
    %2588 = vmatprep.subr.bf16.mxu0 %v2017
    %2589 = vmatpush1.bf16.msra.mxu0 %v2016
    %2590 = vmatprep.subr.bf16.mxu0 %v2025
    %2591 = vmatpush1.bf16.msra.mxu0 %v2024
    %2592 = vmatprep.subr.bf16.mxu0 %v2033
    %2593 = vmatpush1.bf16.msra.mxu0 %v2032
    %2594 = vmatprep.subr.bf16.mxu0 %v2041
    %2595 = vmatpush1.bf16.msra.mxu0 %v2040
    %2596 = vmatprep.subr.bf16.mxu0 %v2049
    %2597 = vmatpush1.bf16.msra.mxu0 %v2048
    %2598 = vmatprep.mubr.bf16.mxu0 %v1339
    %2599 = vmatmul.mubr.bf16.gmra.mrb[0].mxu0 %v1338
    %v2600 = vpop.f32.mrb[0].mxu0
    %v2601 = vadd.f32 %v1519, %v2600
    %v2602 = vpop.f32.mrb[0].mxu0
    %v2603 = vadd.f32 %v1523, %v2602
    %v2604 = vpop.f32.mrb[0].mxu0
    %v2605 = vadd.f32 %v1519, %v2604
    %v2606 = vpop.f32.mrb[0].mxu0
    %v2607 = vadd.f32 %v1523, %v2606
    %2608 = vmatprep.mubr.bf16.mxu0 %v1341
    %2609 = vmatmul.mubr.bf16.gmra.mrb[0].mxu0 %v1340
    %v2610 = vpop.f32.mrb[0].mxu0
    %v2611 = vadd.f32 %v1519, %v2610
    %v2612 = vpop.f32.mrb[0].mxu0
    %v2613 = vadd.f32 %v1523, %v2612
    %v2614 = vpop.f32.mrb[0].mxu0
    %v2615 = vadd.f32 %v1519, %v2614
    %v2616 = vpop.f32.mrb[0].mxu0
    %v2617 = vadd.f32 %v1523, %v2616
    %2618 = vmatprep.mubr.bf16.mxu0 %v1343
    %2619 = vmatmul.mubr.bf16.gmra.mrb[0].mxu0 %v1342
    %v2620 = vpop.f32.mrb[0].mxu0
    %v2621 = vadd.f32 %v1519, %v2620
    %v2622 = vpop.f32.mrb[0].mxu0
    %v2623 = vadd.f32 %v1523, %v2622
    %v2624 = vpop.f32.mrb[0].mxu0
    %v2625 = vadd.f32 %v1519, %v2624
    %v2626 = vpop.f32.mrb[0].mxu0
    %v2627 = vadd.f32 %v1523, %v2626
    %2628 = vmatprep.mubr.bf16.mxu0 %v1345
    %2629 = vmatmul.mubr.bf16.gmra.mrb[0].mxu0 %v1344
    %v2630 = vpop.f32.mrb[0].mxu0
    %v2631 = vadd.f32 %v1519, %v2630
    %v2632 = vpop.f32.mrb[0].mxu0
    %v2633 = vadd.f32 %v1523, %v2632
    %v2634 = vpop.f32.mrb[0].mxu0
    %v2635 = vadd.f32 %v1519, %v2634
    %v2636 = vpop.f32.mrb[0].mxu0
    %v2637 = vadd.f32 %v1523, %v2636
    %2638 = vmatprep.mubr.bf16.mxu0 %v1347
    %2639 = vmatmul.mubr.bf16.gmra.mrb[0].mxu0 %v1346
    %v2640 = vpop.f32.mrb[0].mxu0
    %v2641 = vadd.f32 %v1519, %v2640
    %v2642 = vpop.f32.mrb[0].mxu0
    %v2643 = vadd.f32 %v1523, %v2642
    %v2644 = vpop.f32.mrb[0].mxu0
    %v2645 = vadd.f32 %v1519, %v2644
    %v2646 = vpop.f32.mrb[0].mxu0
    %v2647 = vadd.f32 %v1523, %v2646
    %2648 = vmatprep.mubr.bf16.mxu0 %v1349
    %2649 = vmatmul.mubr.bf16.gmra.mrb[0].mxu0 %v1348
    %v2650 = vpop.f32.mrb[0].mxu0
    %v2651 = vadd.f32 %v1519, %v2650
    %v2652 = vpop.f32.mrb[0].mxu0
    %v2653 = vadd.f32 %v1523, %v2652
    %v2654 = vpop.f32.mrb[0].mxu0
    %v2655 = vadd.f32 %v1519, %v2654
    %v2656 = vpop.f32.mrb[0].mxu0
    %v2657 = vadd.f32 %v1523, %v2656
    %2658 = vmatprep.mubr.bf16.mxu0 %v1351
    %2659 = vmatmul.mubr.bf16.gmra.mrb[0].mxu0 %v1350
    %v2660 = vpop.f32.mrb[0].mxu0
    %v2661 = vadd.f32 %v1519, %v2660
    %v2662 = vpop.f32.mrb[0].mxu0
    %v2663 = vadd.f32 %v1523, %v2662
    %v2664 = vpop.f32.mrb[0].mxu0
    %v2665 = vadd.f32 %v1519, %v2664
    %v2666 = vpop.f32.mrb[0].mxu0
    %v2667 = vadd.f32 %v1523, %v2666
    %2668 = vmatprep.mubr.bf16.mxu0 %v1353
    %2669 = vmatmul.mubr.bf16.gmra.mrb[0].mxu0 %v1352
    %v2670 = vpop.f32.mrb[0].mxu0
    %v2671 = vadd.f32 %v1519, %v2670
    %v2672 = vpop.f32.mrb[0].mxu0
    %v2673 = vadd.f32 %v1523, %v2672
    %v2674 = vpop.f32.mrb[0].mxu0
    %v2675 = vadd.f32 %v1519, %v2674
    %v2676 = vpop.f32.mrb[0].mxu0
    %v2677 = vadd.f32 %v1523, %v2676
    %2678 = vmatprep.mubr.bf16.mxu0 %v1355
    %2679 = vmatmul.mubr.bf16.gmra.mrb[0].mxu0 %v1354
    %v2680 = vpop.f32.mrb[0].mxu0
    %v2681 = vadd.f32 %v1519, %v2680
    %v2682 = vpop.f32.mrb[0].mxu0
    %v2683 = vadd.f32 %v1523, %v2682
    %v2684 = vpop.f32.mrb[0].mxu0
    %v2685 = vadd.f32 %v1519, %v2684
    %v2686 = vpop.f32.mrb[0].mxu0
    %v2687 = vadd.f32 %v1523, %v2686
    %2688 = vmatprep.mubr.bf16.mxu0 %v1357
    %2689 = vmatmul.mubr.bf16.gmra.mrb[0].mxu0 %v1356
    %v2690 = vpop.f32.mrb[0].mxu0
    %v2691 = vadd.f32 %v1519, %v2690
    %v2692 = vpop.f32.mrb[0].mxu0
    %v2693 = vadd.f32 %v1523, %v2692
    %v2694 = vpop.f32.mrb[0].mxu0
    %v2695 = vadd.f32 %v1519, %v2694
    %v2696 = vpop.f32.mrb[0].mxu0
    %v2697 = vadd.f32 %v1523, %v2696
    %2698 = vmatprep.mubr.bf16.mxu0 %v1359
    %2699 = vmatmul.mubr.bf16.gmra.mrb[0].mxu0 %v1358
    %v2700 = vpop.f32.mrb[0].mxu0
    %v2701 = vadd.f32 %v1519, %v2700
    %v2702 = vpop.f32.mrb[0].mxu0
    %v2703 = vadd.f32 %v1523, %v2702
    %v2704 = vpop.f32.mrb[0].mxu0
    %v2705 = vadd.f32 %v1519, %v2704
    %v2706 = vpop.f32.mrb[0].mxu0
    %v2707 = vadd.f32 %v1523, %v2706
    %2708 = vmatprep.mubr.bf16.mxu0 %v1361
    %2709 = vmatmul.mubr.bf16.gmra.mrb[0].mxu0 %v1360
    %v2710 = vpop.f32.mrb[0].mxu0
    %v2711 = vadd.f32 %v1519, %v2710
    %v2712 = vpop.f32.mrb[0].mxu0
    %v2713 = vadd.f32 %v1523, %v2712
    %v2714 = vpop.f32.mrb[0].mxu0
    %v2715 = vadd.f32 %v1519, %v2714
    %v2716 = vpop.f32.mrb[0].mxu0
    %v2717 = vadd.f32 %v1523, %v2716
    %2718 = vmatprep.mubr.bf16.mxu0 %v1363
    %2719 = vmatmul.mubr.bf16.gmra.mrb[0].mxu0 %v1362
    %v2720 = vpop.f32.mrb[0].mxu0
    %v2721 = vadd.f32 %v1519, %v2720
    %v2722 = vpop.f32.mrb[0].mxu0
    %v2723 = vadd.f32 %v1523, %v2722
    %v2724 = vpop.f32.mrb[0].mxu0
    %v2725 = vadd.f32 %v1519, %v2724
    %v2726 = vpop.f32.mrb[0].mxu0
    %v2727 = vadd.f32 %v1523, %v2726
    %2728 = vmatprep.mubr.bf16.mxu0 %v1365
    %2729 = vmatmul.mubr.bf16.gmra.mrb[0].mxu0 %v1364
    %v2730 = vpop.f32.mrb[0].mxu0
    %v2731 = vadd.f32 %v1519, %v2730
    %v2732 = vpop.f32.mrb[0].mxu0
    %v2733 = vadd.f32 %v1523, %v2732
    %v2734 = vpop.f32.mrb[0].mxu0
    %v2735 = vadd.f32 %v1519, %v2734
    %v2736 = vpop.f32.mrb[0].mxu0
    %v2737 = vadd.f32 %v1523, %v2736
    %2738 = vmatprep.mubr.bf16.mxu0 %v1367
    %2739 = vmatmul.mubr.bf16.gmra.mrb[0].mxu0 %v1366
    %v2740 = vpop.f32.mrb[0].mxu0
    %v2741 = vadd.f32 %v1519, %v2740
    %v2742 = vpop.f32.mrb[0].mxu0
    %v2743 = vadd.f32 %v1523, %v2742
    %v2744 = vpop.f32.mrb[0].mxu0
    %v2745 = vadd.f32 %v1519, %v2744
    %v2746 = vpop.f32.mrb[0].mxu0
    %v2747 = vadd.f32 %v1523, %v2746
    %2748 = vmatprep.mubr.bf16.mxu0 %v1369
    %2749 = vmatmul.mubr.bf16.gmra.mrb[0].mxu0 %v1368
    %v2750 = vpop.f32.mrb[0].mxu0
    %v2751 = vadd.f32 %v1519, %v2750
    %v2752 = vpop.f32.mrb[0].mxu0
    %v2753 = vadd.f32 %v1523, %v2752
    %v2754 = vpop.f32.mrb[0].mxu0
    %v2755 = vadd.f32 %v1519, %v2754
    %v2756 = vpop.f32.mrb[0].mxu0
    %v2757 = vadd.f32 %v1523, %v2756
    %2758 = vdwg.mxu0
    %2759 = vmatprep.subr.bf16.mxu0 %v1931
    %2760 = vmatpush1.bf16.msra.mxu0 %v1930
    %2761 = vmatprep.subr.bf16.mxu0 %v1939
    %2762 = vmatpush1.bf16.msra.mxu0 %v1938
    %2763 = vmatprep.subr.bf16.mxu0 %v1947
    %2764 = vmatpush1.bf16.msra.mxu0 %v1946
    %2765 = vmatprep.subr.bf16.mxu0 %v1955
    %2766 = vmatpush1.bf16.msra.mxu0 %v1954
    %2767 = vmatprep.subr.bf16.mxu0 %v1963
    %2768 = vmatpush1.bf16.msra.mxu0 %v1962
    %2769 = vmatprep.subr.bf16.mxu0 %v1971
    %2770 = vmatpush1.bf16.msra.mxu0 %v1970
    %2771 = vmatprep.subr.bf16.mxu0 %v1979
    %2772 = vmatpush1.bf16.msra.mxu0 %v1978
    %2773 = vmatprep.subr.bf16.mxu0 %v1987
    %2774 = vmatpush1.bf16.msra.mxu0 %v1986
    %2775 = vmatprep.subr.bf16.mxu0 %v1995
    %2776 = vmatpush1.bf16.msra.mxu0 %v1994
    %2777 = vmatprep.subr.bf16.mxu0 %v2003
    %2778 = vmatpush1.bf16.msra.mxu0 %v2002
    %2779 = vmatprep.subr.bf16.mxu0 %v2011
    %2780 = vmatpush1.bf16.msra.mxu0 %v2010
    %2781 = vmatprep.subr.bf16.mxu0 %v2019
    %2782 = vmatpush1.bf16.msra.mxu0 %v2018
    %2783 = vmatprep.subr.bf16.mxu0 %v2027
    %2784 = vmatpush1.bf16.msra.mxu0 %v2026
    %2785 = vmatprep.subr.bf16.mxu0 %v2035
    %2786 = vmatpush1.bf16.msra.mxu0 %v2034
    %2787 = vmatprep.subr.bf16.mxu0 %v2043
    %2788 = vmatpush1.bf16.msra.mxu0 %v2042
    %2789 = vmatprep.subr.bf16.mxu0 %v2051
    %2790 = vmatpush1.bf16.msra.mxu0 %v2050
    %2791 = vmatprep.mubr.bf16.mxu0 %v1339
    %2792 = vmatmul.mubr.bf16.gmra.mrb[0].mxu0 %v1338
    %v2793 = vpop.f32.mrb[0].mxu0
    %v2794 = vadd.f32 %v1527, %v2793
    %v2795 = vpop.f32.mrb[0].mxu0
    %v2796 = vadd.f32 %v1531, %v2795
    %v2797 = vpop.f32.mrb[0].mxu0
    %v2798 = vadd.f32 %v1527, %v2797
    %v2799 = vpop.f32.mrb[0].mxu0
    %v2800 = vadd.f32 %v1531, %v2799
    %2801 = vmatprep.mubr.bf16.mxu0 %v1341
    %2802 = vmatmul.mubr.bf16.gmra.mrb[0].mxu0 %v1340
    %v2803 = vpop.f32.mrb[0].mxu0
    %v2804 = vadd.f32 %v1527, %v2803
    %v2805 = vpop.f32.mrb[0].mxu0
    %v2806 = vadd.f32 %v1531, %v2805
    %v2807 = vpop.f32.mrb[0].mxu0
    %v2808 = vadd.f32 %v1527, %v2807
    %v2809 = vpop.f32.mrb[0].mxu0
    %v2810 = vadd.f32 %v1531, %v2809
    %2811 = vmatprep.mubr.bf16.mxu0 %v1343
    %2812 = vmatmul.mubr.bf16.gmra.mrb[0].mxu0 %v1342
    %v2813 = vpop.f32.mrb[0].mxu0
    %v2814 = vadd.f32 %v1527, %v2813
    %v2815 = vpop.f32.mrb[0].mxu0
    %v2816 = vadd.f32 %v1531, %v2815
    %v2817 = vpop.f32.mrb[0].mxu0
    %v2818 = vadd.f32 %v1527, %v2817
    %v2819 = vpop.f32.mrb[0].mxu0
    %v2820 = vadd.f32 %v1531, %v2819
    %2821 = vmatprep.mubr.bf16.mxu0 %v1345
    %2822 = vmatmul.mubr.bf16.gmra.mrb[0].mxu0 %v1344
    %v2823 = vpop.f32.mrb[0].mxu0
    %v2824 = vadd.f32 %v1527, %v2823
    %v2825 = vpop.f32.mrb[0].mxu0
    %v2826 = vadd.f32 %v1531, %v2825
    %v2827 = vpop.f32.mrb[0].mxu0
    %v2828 = vadd.f32 %v1527, %v2827
    %v2829 = vpop.f32.mrb[0].mxu0
    %v2830 = vadd.f32 %v1531, %v2829
    %2831 = vmatprep.mubr.bf16.mxu0 %v1347
    %2832 = vmatmul.mubr.bf16.gmra.mrb[0].mxu0 %v1346
    %v2833 = vpop.f32.mrb[0].mxu0
    %v2834 = vadd.f32 %v1527, %v2833
    %v2835 = vpop.f32.mrb[0].mxu0
    %v2836 = vadd.f32 %v1531, %v2835
    %v2837 = vpop.f32.mrb[0].mxu0
    %v2838 = vadd.f32 %v1527, %v2837
    %v2839 = vpop.f32.mrb[0].mxu0
    %v2840 = vadd.f32 %v1531, %v2839
    %2841 = vmatprep.mubr.bf16.mxu0 %v1349
    %2842 = vmatmul.mubr.bf16.gmra.mrb[0].mxu0 %v1348
    %v2843 = vpop.f32.mrb[0].mxu0
    %v2844 = vadd.f32 %v1527, %v2843
    %v2845 = vpop.f32.mrb[0].mxu0
    %v2846 = vadd.f32 %v1531, %v2845
    %v2847 = vpop.f32.mrb[0].mxu0
    %v2848 = vadd.f32 %v1527, %v2847
    %v2849 = vpop.f32.mrb[0].mxu0
    %v2850 = vadd.f32 %v1531, %v2849
    %2851 = vmatprep.mubr.bf16.mxu0 %v1351
    %2852 = vmatmul.mubr.bf16.gmra.mrb[0].mxu0 %v1350
    %v2853 = vpop.f32.mrb[0].mxu0
    %v2854 = vadd.f32 %v1527, %v2853
    %v2855 = vpop.f32.mrb[0].mxu0
    %v2856 = vadd.f32 %v1531, %v2855
    %v2857 = vpop.f32.mrb[0].mxu0
    %v2858 = vadd.f32 %v1527, %v2857
    %v2859 = vpop.f32.mrb[0].mxu0
    %v2860 = vadd.f32 %v1531, %v2859
    %2861 = vmatprep.mubr.bf16.mxu0 %v1353
    %2862 = vmatmul.mubr.bf16.gmra.mrb[0].mxu0 %v1352
    %v2863 = vpop.f32.mrb[0].mxu0
    %v2864 = vadd.f32 %v1527, %v2863
    %v2865 = vpop.f32.mrb[0].mxu0
    %v2866 = vadd.f32 %v1531, %v2865
    %v2867 = vpop.f32.mrb[0].mxu0
    %v2868 = vadd.f32 %v1527, %v2867
    %v2869 = vpop.f32.mrb[0].mxu0
    %v2870 = vadd.f32 %v1531, %v2869
    %2871 = vmatprep.mubr.bf16.mxu0 %v1355
    %2872 = vmatmul.mubr.bf16.gmra.mrb[0].mxu0 %v1354
    %v2873 = vpop.f32.mrb[0].mxu0
    %v2874 = vadd.f32 %v1527, %v2873
    %v2875 = vpop.f32.mrb[0].mxu0
    %v2876 = vadd.f32 %v1531, %v2875
    %v2877 = vpop.f32.mrb[0].mxu0
    %v2878 = vadd.f32 %v1527, %v2877
    %v2879 = vpop.f32.mrb[0].mxu0
    %v2880 = vadd.f32 %v1531, %v2879
    %2881 = vmatprep.mubr.bf16.mxu0 %v1357
    %2882 = vmatmul.mubr.bf16.gmra.mrb[0].mxu0 %v1356
    %v2883 = vpop.f32.mrb[0].mxu0
    %v2884 = vadd.f32 %v1527, %v2883
    %v2885 = vpop.f32.mrb[0].mxu0
    %v2886 = vadd.f32 %v1531, %v2885
    %v2887 = vpop.f32.mrb[0].mxu0
    %v2888 = vadd.f32 %v1527, %v2887
    %v2889 = vpop.f32.mrb[0].mxu0
    %v2890 = vadd.f32 %v1531, %v2889
    %2891 = vmatprep.mubr.bf16.mxu0 %v1359
    %2892 = vmatmul.mubr.bf16.gmra.mrb[0].mxu0 %v1358
    %v2893 = vpop.f32.mrb[0].mxu0
    %v2894 = vadd.f32 %v1527, %v2893
    %v2895 = vpop.f32.mrb[0].mxu0
    %v2896 = vadd.f32 %v1531, %v2895
    %v2897 = vpop.f32.mrb[0].mxu0
    %v2898 = vadd.f32 %v1527, %v2897
    %v2899 = vpop.f32.mrb[0].mxu0
    %v2900 = vadd.f32 %v1531, %v2899
    %2901 = vmatprep.mubr.bf16.mxu0 %v1361
    %2902 = vmatmul.mubr.bf16.gmra.mrb[0].mxu0 %v1360
    %v2903 = vpop.f32.mrb[0].mxu0
    %v2904 = vadd.f32 %v1527, %v2903
    %v2905 = vpop.f32.mrb[0].mxu0
    %v2906 = vadd.f32 %v1531, %v2905
    %v2907 = vpop.f32.mrb[0].mxu0
    %v2908 = vadd.f32 %v1527, %v2907
    %v2909 = vpop.f32.mrb[0].mxu0
    %v2910 = vadd.f32 %v1531, %v2909
    %2911 = vmatprep.mubr.bf16.mxu0 %v1363
    %2912 = vmatmul.mubr.bf16.gmra.mrb[0].mxu0 %v1362
    %v2913 = vpop.f32.mrb[0].mxu0
    %v2914 = vadd.f32 %v1527, %v2913
    %v2915 = vpop.f32.mrb[0].mxu0
    %v2916 = vadd.f32 %v1531, %v2915
    %v2917 = vpop.f32.mrb[0].mxu0
    %v2918 = vadd.f32 %v1527, %v2917
    %v2919 = vpop.f32.mrb[0].mxu0
    %v2920 = vadd.f32 %v1531, %v2919
    %2921 = vmatprep.mubr.bf16.mxu0 %v1365
    %2922 = vmatmul.mubr.bf16.gmra.mrb[0].mxu0 %v1364
    %v2923 = vpop.f32.mrb[0].mxu0
    %v2924 = vadd.f32 %v1527, %v2923
    %v2925 = vpop.f32.mrb[0].mxu0
    %v2926 = vadd.f32 %v1531, %v2925
    %v2927 = vpop.f32.mrb[0].mxu0
    %v2928 = vadd.f32 %v1527, %v2927
    %v2929 = vpop.f32.mrb[0].mxu0
    %v2930 = vadd.f32 %v1531, %v2929
    %2931 = vmatprep.mubr.bf16.mxu0 %v1367
    %2932 = vmatmul.mubr.bf16.gmra.mrb[0].mxu0 %v1366
    %v2933 = vpop.f32.mrb[0].mxu0
    %v2934 = vadd.f32 %v1527, %v2933
    %v2935 = vpop.f32.mrb[0].mxu0
    %v2936 = vadd.f32 %v1531, %v2935
    %v2937 = vpop.f32.mrb[0].mxu0
    %v2938 = vadd.f32 %v1527, %v2937
    %v2939 = vpop.f32.mrb[0].mxu0
    %v2940 = vadd.f32 %v1531, %v2939
    %2941 = vmatprep.mubr.bf16.mxu0 %v1369
    %2942 = vmatmul.mubr.bf16.gmra.mrb[0].mxu0 %v1368
    %v2943 = vpop.f32.mrb[0].mxu0
    %v2944 = vadd.f32 %v1527, %v2943
    %v2945 = vpop.f32.mrb[0].mxu0
    %v2946 = vadd.f32 %v1531, %v2945
    %v2947 = vpop.f32.mrb[0].mxu0
    %v2948 = vadd.f32 %v1527, %v2947
    %v2949 = vpop.f32.mrb[0].mxu0
    %v2950 = vadd.f32 %v1531, %v2949
    %2951 = vdwg.mxu0
    %v2952 = vmax.f32 %v2215, %v2217
    %2953 = vmax.xlane.f32.xlu0 %v2952
    %v2954 = vpop.xlane.xlu0 %2953
    %v2955 = vmax.f32 %v2219, %v2221
    %2956 = vmax.xlane.f32.xlu0 %v2955
    %v2957 = vpop.xlane.xlu0 %2956
    %v2958 = vmax.f32 %v2225, %v2227
    %2959 = vmax.xlane.f32.xlu0 %v2958
    %v2960 = vpop.xlane.xlu0 %2959
    %v2961 = vmax.f32 %v2229, %v2231
    %2962 = vmax.xlane.f32.xlu0 %v2961
    %v2963 = vpop.xlane.xlu0 %2962
    %v2964 = vmax.f32 %v2235, %v2237
    %2965 = vmax.xlane.f32.xlu0 %v2964
    %v2966 = vpop.xlane.xlu0 %2965
    %v2967 = vmax.f32 %v2239, %v2241
    %2968 = vmax.xlane.f32.xlu0 %v2967
    %v2969 = vpop.xlane.xlu0 %2968
    %v2970 = vmax.f32 %v2245, %v2247
    %2971 = vmax.xlane.f32.xlu0 %v2970
    %v2972 = vpop.xlane.xlu0 %2971
    %v2973 = vmax.f32 %v2249, %v2251
    %2974 = vmax.xlane.f32.xlu0 %v2973
    %v2975 = vpop.xlane.xlu0 %2974
    %v2976 = vmax.f32 %v2255, %v2257
    %2977 = vmax.xlane.f32.xlu0 %v2976
    %v2978 = vpop.xlane.xlu0 %2977
    %v2979 = vmax.f32 %v2259, %v2261
    %2980 = vmax.xlane.f32.xlu0 %v2979
    %v2981 = vpop.xlane.xlu0 %2980
    %v2982 = vmax.f32 %v2265, %v2267
    %2983 = vmax.xlane.f32.xlu0 %v2982
    %v2984 = vpop.xlane.xlu0 %2983
    %v2985 = vmax.f32 %v2269, %v2271
    %2986 = vmax.xlane.f32.xlu0 %v2985
    %v2987 = vpop.xlane.xlu0 %2986
    %v2988 = vmax.f32 %v2275, %v2277
    %2989 = vmax.xlane.f32.xlu0 %v2988
    %v2990 = vpop.xlane.xlu0 %2989
    %v2991 = vmax.f32 %v2279, %v2281
    %2992 = vmax.xlane.f32.xlu0 %v2991
    %v2993 = vpop.xlane.xlu0 %2992
    %v2994 = vmax.f32 %v2285, %v2287
    %2995 = vmax.xlane.f32.xlu0 %v2994
    %v2996 = vpop.xlane.xlu0 %2995
    %v2997 = vmax.f32 %v2289, %v2291
    %2998 = vmax.xlane.f32.xlu0 %v2997
    %v2999 = vpop.xlane.xlu0 %2998
    %v3000 = vmax.f32 %v2295, %v2297
    %3001 = vmax.xlane.f32.xlu0 %v3000
    %v3002 = vpop.xlane.xlu0 %3001
    %v3003 = vmax.f32 %v2299, %v2301
    %3004 = vmax.xlane.f32.xlu0 %v3003
    %v3005 = vpop.xlane.xlu0 %3004
    %v3006 = vmax.f32 %v2305, %v2307
    %3007 = vmax.xlane.f32.xlu0 %v3006
    %v3008 = vpop.xlane.xlu0 %3007
    %v3009 = vmax.f32 %v2309, %v2311
    %3010 = vmax.xlane.f32.xlu0 %v3009
    %v3011 = vpop.xlane.xlu0 %3010
    %v3012 = vmax.f32 %v2315, %v2317
    %3013 = vmax.xlane.f32.xlu0 %v3012
    %v3014 = vpop.xlane.xlu0 %3013
    %v3015 = vmax.f32 %v2319, %v2321
    %3016 = vmax.xlane.f32.xlu0 %v3015
    %v3017 = vpop.xlane.xlu0 %3016
    %v3018 = vmax.f32 %v2325, %v2327
    %3019 = vmax.xlane.f32.xlu0 %v3018
    %v3020 = vpop.xlane.xlu0 %3019
    %v3021 = vmax.f32 %v2329, %v2331
    %3022 = vmax.xlane.f32.xlu0 %v3021
    %v3023 = vpop.xlane.xlu0 %3022
    %v3024 = vmax.f32 %v2335, %v2337
    %3025 = vmax.xlane.f32.xlu0 %v3024
    %v3026 = vpop.xlane.xlu0 %3025
    %v3027 = vmax.f32 %v2339, %v2341
    %3028 = vmax.xlane.f32.xlu0 %v3027
    %v3029 = vpop.xlane.xlu0 %3028
    %v3030 = vmax.f32 %v2345, %v2347
    %3031 = vmax.xlane.f32.xlu0 %v3030
    %v3032 = vpop.xlane.xlu0 %3031
    %v3033 = vmax.f32 %v2349, %v2351
    %3034 = vmax.xlane.f32.xlu0 %v3033
    %v3035 = vpop.xlane.xlu0 %3034
    %v3036 = vmax.f32 %v2355, %v2357
    %3037 = vmax.xlane.f32.xlu0 %v3036
    %v3038 = vpop.xlane.xlu0 %3037
    %v3039 = vmax.f32 %v2359, %v2361
    %3040 = vmax.xlane.f32.xlu0 %v3039
    %v3041 = vpop.xlane.xlu0 %3040
    %v3042 = vmax.f32 %v2365, %v2367
    %3043 = vmax.xlane.f32.xlu0 %v3042
    %v3044 = vpop.xlane.xlu0 %3043
    %v3045 = vmax.f32 %v2369, %v2371
    %3046 = vmax.xlane.f32.xlu0 %v3045
    %v3047 = vpop.xlane.xlu0 %3046
    %v3048 = vsub.f32 %v2215, %v2954
    %v3049 = vsub.f32 %v2217, %v2954
    %v3050 = vsub.f32 %v2219, %v2957
    %v3051 = vsub.f32 %v2221, %v2957
    %v3052 = vsub.f32 %v2225, %v2960
    %v3053 = vsub.f32 %v2227, %v2960
    %v3054 = vsub.f32 %v2229, %v2963
    %v3055 = vsub.f32 %v2231, %v2963
    %v3056 = vsub.f32 %v2235, %v2966
    %v3057 = vsub.f32 %v2237, %v2966
    %v3058 = vsub.f32 %v2239, %v2969
    %v3059 = vsub.f32 %v2241, %v2969
    %v3060 = vsub.f32 %v2245, %v2972
    %v3061 = vsub.f32 %v2247, %v2972
    %v3062 = vsub.f32 %v2249, %v2975
    %v3063 = vsub.f32 %v2251, %v2975
    %v3064 = vsub.f32 %v2255, %v2978
    %v3065 = vsub.f32 %v2257, %v2978
    %v3066 = vsub.f32 %v2259, %v2981
    %v3067 = vsub.f32 %v2261, %v2981
    %v3068 = vsub.f32 %v2265, %v2984
    %v3069 = vsub.f32 %v2267, %v2984
    %v3070 = vsub.f32 %v2269, %v2987
    %v3071 = vsub.f32 %v2271, %v2987
    %v3072 = vsub.f32 %v2275, %v2990
    %v3073 = vsub.f32 %v2277, %v2990
    %v3074 = vsub.f32 %v2279, %v2993
    %v3075 = vsub.f32 %v2281, %v2993
    %v3076 = vsub.f32 %v2285, %v2996
    %v3077 = vsub.f32 %v2287, %v2996
    %v3078 = vsub.f32 %v2289, %v2999
    %v3079 = vsub.f32 %v2291, %v2999
    %v3080 = vsub.f32 %v2295, %v3002
    %v3081 = vsub.f32 %v2297, %v3002
    %v3082 = vsub.f32 %v2299, %v3005
    %v3083 = vsub.f32 %v2301, %v3005
    %v3084 = vsub.f32 %v2305, %v3008
    %v3085 = vsub.f32 %v2307, %v3008
    %v3086 = vsub.f32 %v2309, %v3011
    %v3087 = vsub.f32 %v2311, %v3011
    %v3088 = vsub.f32 %v2315, %v3014
    %v3089 = vsub.f32 %v2317, %v3014
    %v3090 = vsub.f32 %v2319, %v3017
    %v3091 = vsub.f32 %v2321, %v3017
    %v3092 = vsub.f32 %v2325, %v3020
    %v3093 = vsub.f32 %v2327, %v3020
    %v3094 = vsub.f32 %v2329, %v3023
    %v3095 = vsub.f32 %v2331, %v3023
    %v3096 = vsub.f32 %v2335, %v3026
    %v3097 = vsub.f32 %v2337, %v3026
    %v3098 = vsub.f32 %v2339, %v3029
    %v3099 = vsub.f32 %v2341, %v3029
    %v3100 = vsub.f32 %v2345, %v3032
    %v3101 = vsub.f32 %v2347, %v3032
    %v3102 = vsub.f32 %v2349, %v3035
    %v3103 = vsub.f32 %v2351, %v3035
    %v3104 = vsub.f32 %v2355, %v3038
    %v3105 = vsub.f32 %v2357, %v3038
    %v3106 = vsub.f32 %v2359, %v3041
    %v3107 = vsub.f32 %v2361, %v3041
    %v3108 = vsub.f32 %v2365, %v3044
    %v3109 = vsub.f32 %v2367, %v3044
    %v3110 = vsub.f32 %v2369, %v3047
    %v3111 = vsub.f32 %v2371, %v3047
    %v3112 = vmul.f32 %v3048, 1.442695
    %v3113 = vpow.pop %v3112
    %v3114 = vmul.f32 %v3049, 1.442695
    %v3115 = vpow.pop %v3114
    %v3116 = vmul.f32 %v3050, 1.442695
    %v3117 = vpow.pop %v3116
    %v3118 = vmul.f32 %v3051, 1.442695
    %v3119 = vpow.pop %v3118
    %v3120 = vmul.f32 %v3052, 1.442695
    %v3121 = vpow.pop %v3120
    %v3122 = vmul.f32 %v3053, 1.442695
    %v3123 = vpow.pop %v3122
    %v3124 = vmul.f32 %v3054, 1.442695
    %v3125 = vpow.pop %v3124
    %v3126 = vmul.f32 %v3055, 1.442695
    %v3127 = vpow.pop %v3126
    %v3128 = vmul.f32 %v3056, 1.442695
    %v3129 = vpow.pop %v3128
    %v3130 = vmul.f32 %v3057, 1.442695
    %v3131 = vpow.pop %v3130
    %v3132 = vmul.f32 %v3058, 1.442695
    %v3133 = vpow.pop %v3132
    %v3134 = vmul.f32 %v3059, 1.442695
    %v3135 = vpow.pop %v3134
    %v3136 = vmul.f32 %v3060, 1.442695
    %v3137 = vpow.pop %v3136
    %v3138 = vmul.f32 %v3061, 1.442695
    %v3139 = vpow.pop %v3138
    %v3140 = vmul.f32 %v3062, 1.442695
    %v3141 = vpow.pop %v3140
    %v3142 = vmul.f32 %v3063, 1.442695
    %v3143 = vpow.pop %v3142
    %v3144 = vmul.f32 %v3064, 1.442695
    %v3145 = vpow.pop %v3144
    %v3146 = vmul.f32 %v3065, 1.442695
    %v3147 = vpow.pop %v3146
    %v3148 = vmul.f32 %v3066, 1.442695
    %v3149 = vpow.pop %v3148
    %v3150 = vmul.f32 %v3067, 1.442695
    %v3151 = vpow.pop %v3150
    %v3152 = vmul.f32 %v3068, 1.442695
    %v3153 = vpow.pop %v3152
    %v3154 = vmul.f32 %v3069, 1.442695
    %v3155 = vpow.pop %v3154
    %v3156 = vmul.f32 %v3070, 1.442695
    %v3157 = vpow.pop %v3156
    %v3158 = vmul.f32 %v3071, 1.442695
    %v3159 = vpow.pop %v3158
    %v3160 = vmul.f32 %v3072, 1.442695
    %v3161 = vpow.pop %v3160
    %v3162 = vmul.f32 %v3073, 1.442695
    %v3163 = vpow.pop %v3162
    %v3164 = vmul.f32 %v3074, 1.442695
    %v3165 = vpow.pop %v3164
    %v3166 = vmul.f32 %v3075, 1.442695
    %v3167 = vpow.pop %v3166
    %v3168 = vmul.f32 %v3076, 1.442695
    %v3169 = vpow.pop %v3168
    %v3170 = vmul.f32 %v3077, 1.442695
    %v3171 = vpow.pop %v3170
    %v3172 = vmul.f32 %v3078, 1.442695
    %v3173 = vpow.pop %v3172
    %v3174 = vmul.f32 %v3079, 1.442695
    %v3175 = vpow.pop %v3174
    %v3176 = vmul.f32 %v3080, 1.442695
    %v3177 = vpow.pop %v3176
    %v3178 = vmul.f32 %v3081, 1.442695
    %v3179 = vpow.pop %v3178
    %v3180 = vmul.f32 %v3082, 1.442695
    %v3181 = vpow.pop %v3180
    %v3182 = vmul.f32 %v3083, 1.442695
    %v3183 = vpow.pop %v3182
    %v3184 = vmul.f32 %v3084, 1.442695
    %v3185 = vpow.pop %v3184
    %v3186 = vmul.f32 %v3085, 1.442695
    %v3187 = vpow.pop %v3186
    %v3188 = vmul.f32 %v3086, 1.442695
    %v3189 = vpow.pop %v3188
    %v3190 = vmul.f32 %v3087, 1.442695
    %v3191 = vpow.pop %v3190
    %v3192 = vmul.f32 %v3088, 1.442695
    %v3193 = vpow.pop %v3192
    %v3194 = vmul.f32 %v3089, 1.442695
    %v3195 = vpow.pop %v3194
    %v3196 = vmul.f32 %v3090, 1.442695
    %v3197 = vpow.pop %v3196
    %v3198 = vmul.f32 %v3091, 1.442695
    %v3199 = vpow.pop %v3198
    %v3200 = vmul.f32 %v3092, 1.442695
    %v3201 = vpow.pop %v3200
    %v3202 = vmul.f32 %v3093, 1.442695
    %v3203 = vpow.pop %v3202
    %v3204 = vmul.f32 %v3094, 1.442695
    %v3205 = vpow.pop %v3204
    %v3206 = vmul.f32 %v3095, 1.442695
    %v3207 = vpow.pop %v3206
    %v3208 = vmul.f32 %v3096, 1.442695
    %v3209 = vpow.pop %v3208
    %v3210 = vmul.f32 %v3097, 1.442695
    %v3211 = vpow.pop %v3210
    %v3212 = vmul.f32 %v3098, 1.442695
    %v3213 = vpow.pop %v3212
    %v3214 = vmul.f32 %v3099, 1.442695
    %v3215 = vpow.pop %v3214
    %v3216 = vmul.f32 %v3100, 1.442695
    %v3217 = vpow.pop %v3216
    %v3218 = vmul.f32 %v3101, 1.442695
    %v3219 = vpow.pop %v3218
    %v3220 = vmul.f32 %v3102, 1.442695
    %v3221 = vpow.pop %v3220
    %v3222 = vmul.f32 %v3103, 1.442695
    %v3223 = vpow.pop %v3222
    %v3224 = vmul.f32 %v3104, 1.442695
    %v3225 = vpow.pop %v3224
    %v3226 = vmul.f32 %v3105, 1.442695
    %v3227 = vpow.pop %v3226
    %v3228 = vmul.f32 %v3106, 1.442695
    %v3229 = vpow.pop %v3228
    %v3230 = vmul.f32 %v3107, 1.442695
    %v3231 = vpow.pop %v3230
    %v3232 = vmul.f32 %v3108, 1.442695
    %v3233 = vpow.pop %v3232
    %v3234 = vmul.f32 %v3109, 1.442695
    %v3235 = vpow.pop %v3234
    %v3236 = vmul.f32 %v3110, 1.442695
    %v3237 = vpow.pop %v3236
    %v3238 = vmul.f32 %v3111, 1.442695
    %v3239 = vpow.pop %v3238
    %v3240 = vadd.f32 %v3113, %v3115
    %3241 = vadd.xlane.f32.xlu0 %v3240
    %v3242 = vpop.xlane.xlu0 %3241
    %v3243 = vadd.f32 %v3117, %v3119
    %3244 = vadd.xlane.f32.xlu0 %v3243
    %v3245 = vpop.xlane.xlu0 %3244
    %v3246 = vadd.f32 %v3121, %v3123
    %3247 = vadd.xlane.f32.xlu0 %v3246
    %v3248 = vpop.xlane.xlu0 %3247
    %v3249 = vadd.f32 %v3125, %v3127
    %3250 = vadd.xlane.f32.xlu0 %v3249
    %v3251 = vpop.xlane.xlu0 %3250
    %v3252 = vadd.f32 %v3129, %v3131
    %3253 = vadd.xlane.f32.xlu0 %v3252
    %v3254 = vpop.xlane.xlu0 %3253
    %v3255 = vadd.f32 %v3133, %v3135
    %3256 = vadd.xlane.f32.xlu0 %v3255
    %v3257 = vpop.xlane.xlu0 %3256
    %v3258 = vadd.f32 %v3137, %v3139
    %3259 = vadd.xlane.f32.xlu0 %v3258
    %v3260 = vpop.xlane.xlu0 %3259
    %v3261 = vadd.f32 %v3141, %v3143
    %3262 = vadd.xlane.f32.xlu0 %v3261
    %v3263 = vpop.xlane.xlu0 %3262
    %v3264 = vadd.f32 %v3145, %v3147
    %3265 = vadd.xlane.f32.xlu0 %v3264
    %v3266 = vpop.xlane.xlu0 %3265
    %v3267 = vadd.f32 %v3149, %v3151
    %3268 = vadd.xlane.f32.xlu0 %v3267
    %v3269 = vpop.xlane.xlu0 %3268
    %v3270 = vadd.f32 %v3153, %v3155
    %3271 = vadd.xlane.f32.xlu0 %v3270
    %v3272 = vpop.xlane.xlu0 %3271
    %v3273 = vadd.f32 %v3157, %v3159
    %3274 = vadd.xlane.f32.xlu0 %v3273
    %v3275 = vpop.xlane.xlu0 %3274
    %v3276 = vadd.f32 %v3161, %v3163
    %3277 = vadd.xlane.f32.xlu0 %v3276
    %v3278 = vpop.xlane.xlu0 %3277
    %v3279 = vadd.f32 %v3165, %v3167
    %3280 = vadd.xlane.f32.xlu0 %v3279
    %v3281 = vpop.xlane.xlu0 %3280
    %v3282 = vadd.f32 %v3169, %v3171
    %3283 = vadd.xlane.f32.xlu0 %v3282
    %v3284 = vpop.xlane.xlu0 %3283
    %v3285 = vadd.f32 %v3173, %v3175
    %3286 = vadd.xlane.f32.xlu0 %v3285
    %v3287 = vpop.xlane.xlu0 %3286
    %v3288 = vadd.f32 %v3177, %v3179
    %3289 = vadd.xlane.f32.xlu0 %v3288
    %v3290 = vpop.xlane.xlu0 %3289
    %v3291 = vadd.f32 %v3181, %v3183
    %3292 = vadd.xlane.f32.xlu0 %v3291
    %v3293 = vpop.xlane.xlu0 %3292
    %v3294 = vadd.f32 %v3185, %v3187
    %3295 = vadd.xlane.f32.xlu0 %v3294
    %v3296 = vpop.xlane.xlu0 %3295
    %v3297 = vadd.f32 %v3189, %v3191
    %3298 = vadd.xlane.f32.xlu0 %v3297
    %v3299 = vpop.xlane.xlu0 %3298
    %v3300 = vadd.f32 %v3193, %v3195
    %3301 = vadd.xlane.f32.xlu0 %v3300
    %v3302 = vpop.xlane.xlu0 %3301
    %v3303 = vadd.f32 %v3197, %v3199
    %3304 = vadd.xlane.f32.xlu0 %v3303
    %v3305 = vpop.xlane.xlu0 %3304
    %v3306 = vadd.f32 %v3201, %v3203
    %3307 = vadd.xlane.f32.xlu0 %v3306
    %v3308 = vpop.xlane.xlu0 %3307
    %v3309 = vadd.f32 %v3205, %v3207
    %3310 = vadd.xlane.f32.xlu0 %v3309
    %v3311 = vpop.xlane.xlu0 %3310
    %v3312 = vadd.f32 %v3209, %v3211
    %3313 = vadd.xlane.f32.xlu0 %v3312
    %v3314 = vpop.xlane.xlu0 %3313
    %v3315 = vadd.f32 %v3213, %v3215
    %3316 = vadd.xlane.f32.xlu0 %v3315
    %v3317 = vpop.xlane.xlu0 %3316
    %v3318 = vadd.f32 %v3217, %v3219
    %3319 = vadd.xlane.f32.xlu0 %v3318
    %v3320 = vpop.xlane.xlu0 %3319
    %v3321 = vadd.f32 %v3221, %v3223
    %3322 = vadd.xlane.f32.xlu0 %v3321
    %v3323 = vpop.xlane.xlu0 %3322
    %v3324 = vadd.f32 %v3225, %v3227
    %3325 = vadd.xlane.f32.xlu0 %v3324
    %v3326 = vpop.xlane.xlu0 %3325
    %v3327 = vadd.f32 %v3229, %v3231
    %3328 = vadd.xlane.f32.xlu0 %v3327
    %v3329 = vpop.xlane.xlu0 %3328
    %v3330 = vadd.f32 %v3233, %v3235
    %3331 = vadd.xlane.f32.xlu0 %v3330
    %v3332 = vpop.xlane.xlu0 %3331
    %v3333 = vadd.f32 %v3237, %v3239
    %3334 = vadd.xlane.f32.xlu0 %v3333
    %v3335 = vpop.xlane.xlu0 %3334
    %v3336 = vrcp.pop %v3242
    %v3337 = vrcp.pop %v3245
    %v3338 = vrcp.pop %v3248
    %v3339 = vrcp.pop %v3251
    %v3340 = vrcp.pop %v3254
    %v3341 = vrcp.pop %v3257
    %v3342 = vrcp.pop %v3260
    %v3343 = vrcp.pop %v3263
    %v3344 = vrcp.pop %v3266
    %v3345 = vrcp.pop %v3269
    %v3346 = vrcp.pop %v3272
    %v3347 = vrcp.pop %v3275
    %v3348 = vrcp.pop %v3278
    %v3349 = vrcp.pop %v3281
    %v3350 = vrcp.pop %v3284
    %v3351 = vrcp.pop %v3287
    %v3352 = vrcp.pop %v3290
    %v3353 = vrcp.pop %v3293
    %v3354 = vrcp.pop %v3296
    %v3355 = vrcp.pop %v3299
    %v3356 = vrcp.pop %v3302
    %v3357 = vrcp.pop %v3305
    %v3358 = vrcp.pop %v3308
    %v3359 = vrcp.pop %v3311
    %v3360 = vrcp.pop %v3314
    %v3361 = vrcp.pop %v3317
    %v3362 = vrcp.pop %v3320
    %v3363 = vrcp.pop %v3323
    %v3364 = vrcp.pop %v3326
    %v3365 = vrcp.pop %v3329
    %v3366 = vrcp.pop %v3332
    %v3367 = vrcp.pop %v3335
    %v3368 = vmul.f32 %v3113, %v3336
    %v3369 = vmul.f32 %v3115, %v3336
    %v3370 = vmul.f32 %v3117, %v3337
    %v3371 = vmul.f32 %v3119, %v3337
    %v3372 = vmul.f32 %v3121, %v3338
    %v3373 = vmul.f32 %v3123, %v3338
    %v3374 = vmul.f32 %v3125, %v3339
    %v3375 = vmul.f32 %v3127, %v3339
    %v3376 = vmul.f32 %v3129, %v3340
    %v3377 = vmul.f32 %v3131, %v3340
    %v3378 = vmul.f32 %v3133, %v3341
    %v3379 = vmul.f32 %v3135, %v3341
    %v3380 = vmul.f32 %v3137, %v3342
    %v3381 = vmul.f32 %v3139, %v3342
    %v3382 = vmul.f32 %v3141, %v3343
    %v3383 = vmul.f32 %v3143, %v3343
    %v3384 = vmul.f32 %v3145, %v3344
    %v3385 = vmul.f32 %v3147, %v3344
    %v3386 = vmul.f32 %v3149, %v3345
    %v3387 = vmul.f32 %v3151, %v3345
    %v3388 = vmul.f32 %v3153, %v3346
    %v3389 = vmul.f32 %v3155, %v3346
    %v3390 = vmul.f32 %v3157, %v3347
    %v3391 = vmul.f32 %v3159, %v3347
    %v3392 = vmul.f32 %v3161, %v3348
    %v3393 = vmul.f32 %v3163, %v3348
    %v3394 = vmul.f32 %v3165, %v3349
    %v3395 = vmul.f32 %v3167, %v3349
    %v3396 = vmul.f32 %v3169, %v3350
    %v3397 = vmul.f32 %v3171, %v3350
    %v3398 = vmul.f32 %v3173, %v3351
    %v3399 = vmul.f32 %v3175, %v3351
    %v3400 = vmul.f32 %v3177, %v3352
    %v3401 = vmul.f32 %v3179, %v3352
    %v3402 = vmul.f32 %v3181, %v3353
    %v3403 = vmul.f32 %v3183, %v3353
    %v3404 = vmul.f32 %v3185, %v3354
    %v3405 = vmul.f32 %v3187, %v3354
    %v3406 = vmul.f32 %v3189, %v3355
    %v3407 = vmul.f32 %v3191, %v3355
    %v3408 = vmul.f32 %v3193, %v3356
    %v3409 = vmul.f32 %v3195, %v3356
    %v3410 = vmul.f32 %v3197, %v3357
    %v3411 = vmul.f32 %v3199, %v3357
    %v3412 = vmul.f32 %v3201, %v3358
    %v3413 = vmul.f32 %v3203, %v3358
    %v3414 = vmul.f32 %v3205, %v3359
    %v3415 = vmul.f32 %v3207, %v3359
    %v3416 = vmul.f32 %v3209, %v3360
    %v3417 = vmul.f32 %v3211, %v3360
    %v3418 = vmul.f32 %v3213, %v3361
    %v3419 = vmul.f32 %v3215, %v3361
    %v3420 = vmul.f32 %v3217, %v3362
    %v3421 = vmul.f32 %v3219, %v3362
    %v3422 = vmul.f32 %v3221, %v3363
    %v3423 = vmul.f32 %v3223, %v3363
    %v3424 = vmul.f32 %v3225, %v3364
    %v3425 = vmul.f32 %v3227, %v3364
    %v3426 = vmul.f32 %v3229, %v3365
    %v3427 = vmul.f32 %v3231, %v3365
    %v3428 = vmul.f32 %v3233, %v3366
    %v3429 = vmul.f32 %v3235, %v3366
    %v3430 = vmul.f32 %v3237, %v3367
    %v3431 = vmul.f32 %v3239, %v3367
    %v3432 = vmul.f32 %v3368, %v1274
    %v3433 = vmul.f32 %v3369, %v1306
    %v3434 = vmul.f32 %v3370, %v1275
    %v3435 = vmul.f32 %v3371, %v1307
    %v3436 = vmul.f32 %v3372, %v1276
    %v3437 = vmul.f32 %v3373, %v1308
    %v3438 = vmul.f32 %v3374, %v1277
    %v3439 = vmul.f32 %v3375, %v1309
    %v3440 = vmul.f32 %v3376, %v1278
    %v3441 = vmul.f32 %v3377, %v1310
    %v3442 = vmul.f32 %v3378, %v1279
    %v3443 = vmul.f32 %v3379, %v1311
    %v3444 = vmul.f32 %v3380, %v1280
    %v3445 = vmul.f32 %v3381, %v1312
    %v3446 = vmul.f32 %v3382, %v1281
    %v3447 = vmul.f32 %v3383, %v1313
    %v3448 = vmul.f32 %v3384, %v1282
    %v3449 = vmul.f32 %v3385, %v1314
    %v3450 = vmul.f32 %v3386, %v1283
    %v3451 = vmul.f32 %v3387, %v1315
    %v3452 = vmul.f32 %v3388, %v1284
    %v3453 = vmul.f32 %v3389, %v1316
    %v3454 = vmul.f32 %v3390, %v1285
    %v3455 = vmul.f32 %v3391, %v1317
    %v3456 = vmul.f32 %v3392, %v1286
    %v3457 = vmul.f32 %v3393, %v1318
    %v3458 = vmul.f32 %v3394, %v1287
    %v3459 = vmul.f32 %v3395, %v1319
    %v3460 = vmul.f32 %v3396, %v1288
    %v3461 = vmul.f32 %v3397, %v1320
    %v3462 = vmul.f32 %v3398, %v1289
    %v3463 = vmul.f32 %v3399, %v1321
    %v3464 = vmul.f32 %v3400, %v1290
    %v3465 = vmul.f32 %v3401, %v1322
    %v3466 = vmul.f32 %v3402, %v1291
    %v3467 = vmul.f32 %v3403, %v1323
    %v3468 = vmul.f32 %v3404, %v1292
    %v3469 = vmul.f32 %v3405, %v1324
    %v3470 = vmul.f32 %v3406, %v1293
    %v3471 = vmul.f32 %v3407, %v1325
    %v3472 = vmul.f32 %v3408, %v1294
    %v3473 = vmul.f32 %v3409, %v1326
    %v3474 = vmul.f32 %v3410, %v1295
    %v3475 = vmul.f32 %v3411, %v1327
    %v3476 = vmul.f32 %v3412, %v1296
    %v3477 = vmul.f32 %v3413, %v1328
    %v3478 = vmul.f32 %v3414, %v1297
    %v3479 = vmul.f32 %v3415, %v1329
    %v3480 = vmul.f32 %v3416, %v1298
    %v3481 = vmul.f32 %v3417, %v1330
    %v3482 = vmul.f32 %v3418, %v1299
    %v3483 = vmul.f32 %v3419, %v1331
    %v3484 = vmul.f32 %v3420, %v1300
    %v3485 = vmul.f32 %v3421, %v1332
    %v3486 = vmul.f32 %v3422, %v1301
    %v3487 = vmul.f32 %v3423, %v1333
    %v3488 = vmul.f32 %v3424, %v1302
    %v3489 = vmul.f32 %v3425, %v1334
    %v3490 = vmul.f32 %v3426, %v1303
    %v3491 = vmul.f32 %v3427, %v1335
    %v3492 = vmul.f32 %v3428, %v1304
    %v3493 = vmul.f32 %v3429, %v1336
    %v3494 = vmul.f32 %v3430, %v1305
    %v3495 = vmul.f32 %v3431, %v1337
    %v3496 = vpack.c.bf16 %v3434, %v3432
    %v3497 = vpack.c.bf16 %v3435, %v3433
    %v3498 = vpack.c.bf16 %v3438, %v3436
    %v3499 = vpack.c.bf16 %v3439, %v3437
    %v3500 = vpack.c.bf16 %v3442, %v3440
    %v3501 = vpack.c.bf16 %v3443, %v3441
    %v3502 = vpack.c.bf16 %v3446, %v3444
    %v3503 = vpack.c.bf16 %v3447, %v3445
    %v3504 = vpack.c.bf16 %v3450, %v3448
    %v3505 = vpack.c.bf16 %v3451, %v3449
    %v3506 = vpack.c.bf16 %v3454, %v3452
    %v3507 = vpack.c.bf16 %v3455, %v3453
    %v3508 = vpack.c.bf16 %v3458, %v3456
    %v3509 = vpack.c.bf16 %v3459, %v3457
    %v3510 = vpack.c.bf16 %v3462, %v3460
    %v3511 = vpack.c.bf16 %v3463, %v3461
    %v3512 = vpack.c.bf16 %v3466, %v3464
    %v3513 = vpack.c.bf16 %v3467, %v3465
    %v3514 = vpack.c.bf16 %v3470, %v3468
    %v3515 = vpack.c.bf16 %v3471, %v3469
    %v3516 = vpack.c.bf16 %v3474, %v3472
    %v3517 = vpack.c.bf16 %v3475, %v3473
    %v3518 = vpack.c.bf16 %v3478, %v3476
    %v3519 = vpack.c.bf16 %v3479, %v3477
    %v3520 = vpack.c.bf16 %v3482, %v3480
    %v3521 = vpack.c.bf16 %v3483, %v3481
    %v3522 = vpack.c.bf16 %v3486, %v3484
    %v3523 = vpack.c.bf16 %v3487, %v3485
    %v3524 = vpack.c.bf16 %v3490, %v3488
    %v3525 = vpack.c.bf16 %v3491, %v3489
    %v3526 = vpack.c.bf16 %v3494, %v3492
    %v3527 = vpack.c.bf16 %v3495, %v3493
    %v3528 = vmax.f32 %v2408, %v2410
    %3529 = vmax.xlane.f32.xlu0 %v3528
    %v3530 = vpop.xlane.xlu0 %3529
    %v3531 = vmax.f32 %v2412, %v2414
    %3532 = vmax.xlane.f32.xlu0 %v3531
    %v3533 = vpop.xlane.xlu0 %3532
    %v3534 = vmax.f32 %v2418, %v2420
    %3535 = vmax.xlane.f32.xlu0 %v3534
    %v3536 = vpop.xlane.xlu0 %3535
    %v3537 = vmax.f32 %v2422, %v2424
    %3538 = vmax.xlane.f32.xlu0 %v3537
    %v3539 = vpop.xlane.xlu0 %3538
    %v3540 = vmax.f32 %v2428, %v2430
    %3541 = vmax.xlane.f32.xlu0 %v3540
    %v3542 = vpop.xlane.xlu0 %3541
    %v3543 = vmax.f32 %v2432, %v2434
    %3544 = vmax.xlane.f32.xlu0 %v3543
    %v3545 = vpop.xlane.xlu0 %3544
    %v3546 = vmax.f32 %v2438, %v2440
    %3547 = vmax.xlane.f32.xlu0 %v3546
    %v3548 = vpop.xlane.xlu0 %3547
    %v3549 = vmax.f32 %v2442, %v2444
    %3550 = vmax.xlane.f32.xlu0 %v3549
    %v3551 = vpop.xlane.xlu0 %3550
    %v3552 = vmax.f32 %v2448, %v2450
    %3553 = vmax.xlane.f32.xlu0 %v3552
    %v3554 = vpop.xlane.xlu0 %3553
    %v3555 = vmax.f32 %v2452, %v2454
    %3556 = vmax.xlane.f32.xlu0 %v3555
    %v3557 = vpop.xlane.xlu0 %3556
    %v3558 = vmax.f32 %v2458, %v2460
    %3559 = vmax.xlane.f32.xlu0 %v3558
    %v3560 = vpop.xlane.xlu0 %3559
    %v3561 = vmax.f32 %v2462, %v2464
    %3562 = vmax.xlane.f32.xlu0 %v3561
    %v3563 = vpop.xlane.xlu0 %3562
    %v3564 = vmax.f32 %v2468, %v2470
    %3565 = vmax.xlane.f32.xlu0 %v3564
    %v3566 = vpop.xlane.xlu0 %3565
    %v3567 = vmax.f32 %v2472, %v2474
    %3568 = vmax.xlane.f32.xlu0 %v3567
    %v3569 = vpop.xlane.xlu0 %3568
    %v3570 = vmax.f32 %v2478, %v2480
    %3571 = vmax.xlane.f32.xlu0 %v3570
    %v3572 = vpop.xlane.xlu0 %3571
    %v3573 = vmax.f32 %v2482, %v2484
    %3574 = vmax.xlane.f32.xlu0 %v3573
    %v3575 = vpop.xlane.xlu0 %3574
    %v3576 = vmax.f32 %v2488, %v2490
    %3577 = vmax.xlane.f32.xlu0 %v3576
    %v3578 = vpop.xlane.xlu0 %3577
    %v3579 = vmax.f32 %v2492, %v2494
    %3580 = vmax.xlane.f32.xlu0 %v3579
    %v3581 = vpop.xlane.xlu0 %3580
    %v3582 = vmax.f32 %v2498, %v2500
    %3583 = vmax.xlane.f32.xlu0 %v3582
    %v3584 = vpop.xlane.xlu0 %3583
    %v3585 = vmax.f32 %v2502, %v2504
    %3586 = vmax.xlane.f32.xlu0 %v3585
    %v3587 = vpop.xlane.xlu0 %3586
    %v3588 = vmax.f32 %v2508, %v2510
    %3589 = vmax.xlane.f32.xlu0 %v3588
    %v3590 = vpop.xlane.xlu0 %3589
    %v3591 = vmax.f32 %v2512, %v2514
    %3592 = vmax.xlane.f32.xlu0 %v3591
    %v3593 = vpop.xlane.xlu0 %3592
    %v3594 = vmax.f32 %v2518, %v2520
    %3595 = vmax.xlane.f32.xlu0 %v3594
    %v3596 = vpop.xlane.xlu0 %3595
    %v3597 = vmax.f32 %v2522, %v2524
    %3598 = vmax.xlane.f32.xlu0 %v3597
    %v3599 = vpop.xlane.xlu0 %3598
    %v3600 = vmax.f32 %v2528, %v2530
    %3601 = vmax.xlane.f32.xlu0 %v3600
    %v3602 = vpop.xlane.xlu0 %3601
    %v3603 = vmax.f32 %v2532, %v2534
    %3604 = vmax.xlane.f32.xlu0 %v3603
    %v3605 = vpop.xlane.xlu0 %3604
    %v3606 = vmax.f32 %v2538, %v2540
    %3607 = vmax.xlane.f32.xlu0 %v3606
    %v3608 = vpop.xlane.xlu0 %3607
    %v3609 = vmax.f32 %v2542, %v2544
    %3610 = vmax.xlane.f32.xlu0 %v3609
    %v3611 = vpop.xlane.xlu0 %3610
    %v3612 = vmax.f32 %v2548, %v2550
    %3613 = vmax.xlane.f32.xlu0 %v3612
    %v3614 = vpop.xlane.xlu0 %3613
    %v3615 = vmax.f32 %v2552, %v2554
    %3616 = vmax.xlane.f32.xlu0 %v3615
    %v3617 = vpop.xlane.xlu0 %3616
    %v3618 = vmax.f32 %v2558, %v2560
    %3619 = vmax.xlane.f32.xlu0 %v3618
    %v3620 = vpop.xlane.xlu0 %3619
    %v3621 = vmax.f32 %v2562, %v2564
    %3622 = vmax.xlane.f32.xlu0 %v3621
    %v3623 = vpop.xlane.xlu0 %3622
    %v3624 = vsub.f32 %v2408, %v3530
    %v3625 = vsub.f32 %v2410, %v3530
    %v3626 = vsub.f32 %v2412, %v3533
    %v3627 = vsub.f32 %v2414, %v3533
    %v3628 = vsub.f32 %v2418, %v3536
    %v3629 = vsub.f32 %v2420, %v3536
    %v3630 = vsub.f32 %v2422, %v3539
    %v3631 = vsub.f32 %v2424, %v3539
    %v3632 = vsub.f32 %v2428, %v3542
    %v3633 = vsub.f32 %v2430, %v3542
    %v3634 = vsub.f32 %v2432, %v3545
    %v3635 = vsub.f32 %v2434, %v3545
    %v3636 = vsub.f32 %v2438, %v3548
    %v3637 = vsub.f32 %v2440, %v3548
    %v3638 = vsub.f32 %v2442, %v3551
    %v3639 = vsub.f32 %v2444, %v3551
    %v3640 = vsub.f32 %v2448, %v3554
    %v3641 = vsub.f32 %v2450, %v3554
    %v3642 = vsub.f32 %v2452, %v3557
    %v3643 = vsub.f32 %v2454, %v3557
    %v3644 = vsub.f32 %v2458, %v3560
    %v3645 = vsub.f32 %v2460, %v3560
    %v3646 = vsub.f32 %v2462, %v3563
    %v3647 = vsub.f32 %v2464, %v3563
    %v3648 = vsub.f32 %v2468, %v3566
    %v3649 = vsub.f32 %v2470, %v3566
    %v3650 = vsub.f32 %v2472, %v3569
    %v3651 = vsub.f32 %v2474, %v3569
    %v3652 = vsub.f32 %v2478, %v3572
    %v3653 = vsub.f32 %v2480, %v3572
    %v3654 = vsub.f32 %v2482, %v3575
    %v3655 = vsub.f32 %v2484, %v3575
    %v3656 = vsub.f32 %v2488, %v3578
    %v3657 = vsub.f32 %v2490, %v3578
    %v3658 = vsub.f32 %v2492, %v3581
    %v3659 = vsub.f32 %v2494, %v3581
    %v3660 = vsub.f32 %v2498, %v3584
    %v3661 = vsub.f32 %v2500, %v3584
    %v3662 = vsub.f32 %v2502, %v3587
    %v3663 = vsub.f32 %v2504, %v3587
    %v3664 = vsub.f32 %v2508, %v3590
    %v3665 = vsub.f32 %v2510, %v3590
    %v3666 = vsub.f32 %v2512, %v3593
    %v3667 = vsub.f32 %v2514, %v3593
    %v3668 = vsub.f32 %v2518, %v3596
    %v3669 = vsub.f32 %v2520, %v3596
    %v3670 = vsub.f32 %v2522, %v3599
    %v3671 = vsub.f32 %v2524, %v3599
    %v3672 = vsub.f32 %v2528, %v3602
    %v3673 = vsub.f32 %v2530, %v3602
    %v3674 = vsub.f32 %v2532, %v3605
    %v3675 = vsub.f32 %v2534, %v3605
    %v3676 = vsub.f32 %v2538, %v3608
    %v3677 = vsub.f32 %v2540, %v3608
    %v3678 = vsub.f32 %v2542, %v3611
    %v3679 = vsub.f32 %v2544, %v3611
    %v3680 = vsub.f32 %v2548, %v3614
    %v3681 = vsub.f32 %v2550, %v3614
    %v3682 = vsub.f32 %v2552, %v3617
    %v3683 = vsub.f32 %v2554, %v3617
    %v3684 = vsub.f32 %v2558, %v3620
    %v3685 = vsub.f32 %v2560, %v3620
    %v3686 = vsub.f32 %v2562, %v3623
    %v3687 = vsub.f32 %v2564, %v3623
    %v3688 = vmul.f32 %v3624, 1.442695
    %v3689 = vpow.pop %v3688
    %v3690 = vmul.f32 %v3625, 1.442695
    %v3691 = vpow.pop %v3690
    %v3692 = vmul.f32 %v3626, 1.442695
    %v3693 = vpow.pop %v3692
    %v3694 = vmul.f32 %v3627, 1.442695
    %v3695 = vpow.pop %v3694
    %v3696 = vmul.f32 %v3628, 1.442695
    %v3697 = vpow.pop %v3696
    %v3698 = vmul.f32 %v3629, 1.442695
    %v3699 = vpow.pop %v3698
    %v3700 = vmul.f32 %v3630, 1.442695
    %v3701 = vpow.pop %v3700
    %v3702 = vmul.f32 %v3631, 1.442695
    %v3703 = vpow.pop %v3702
    %v3704 = vmul.f32 %v3632, 1.442695
    %v3705 = vpow.pop %v3704
    %v3706 = vmul.f32 %v3633, 1.442695
    %v3707 = vpow.pop %v3706
    %v3708 = vmul.f32 %v3634, 1.442695
    %v3709 = vpow.pop %v3708
    %v3710 = vmul.f32 %v3635, 1.442695
    %v3711 = vpow.pop %v3710
    %v3712 = vmul.f32 %v3636, 1.442695
    %v3713 = vpow.pop %v3712
    %v3714 = vmul.f32 %v3637, 1.442695
    %v3715 = vpow.pop %v3714
    %v3716 = vmul.f32 %v3638, 1.442695
    %v3717 = vpow.pop %v3716
    %v3718 = vmul.f32 %v3639, 1.442695
    %v3719 = vpow.pop %v3718
    %v3720 = vmul.f32 %v3640, 1.442695
    %v3721 = vpow.pop %v3720
    %v3722 = vmul.f32 %v3641, 1.442695
    %v3723 = vpow.pop %v3722
    %v3724 = vmul.f32 %v3642, 1.442695
    %v3725 = vpow.pop %v3724
    %v3726 = vmul.f32 %v3643, 1.442695
    %v3727 = vpow.pop %v3726
    %v3728 = vmul.f32 %v3644, 1.442695
    %v3729 = vpow.pop %v3728
    %v3730 = vmul.f32 %v3645, 1.442695
    %v3731 = vpow.pop %v3730
    %v3732 = vmul.f32 %v3646, 1.442695
    %v3733 = vpow.pop %v3732
    %v3734 = vmul.f32 %v3647, 1.442695
    %v3735 = vpow.pop %v3734
    %v3736 = vmul.f32 %v3648, 1.442695
    %v3737 = vpow.pop %v3736
    %v3738 = vmul.f32 %v3649, 1.442695
    %v3739 = vpow.pop %v3738
    %v3740 = vmul.f32 %v3650, 1.442695
    %v3741 = vpow.pop %v3740
    %v3742 = vmul.f32 %v3651, 1.442695
    %v3743 = vpow.pop %v3742
    %v3744 = vmul.f32 %v3652, 1.442695
    %v3745 = vpow.pop %v3744
    %v3746 = vmul.f32 %v3653, 1.442695
    %v3747 = vpow.pop %v3746
    %v3748 = vmul.f32 %v3654, 1.442695
    %v3749 = vpow.pop %v3748
    %v3750 = vmul.f32 %v3655, 1.442695
    %v3751 = vpow.pop %v3750
    %v3752 = vmul.f32 %v3656, 1.442695
    %v3753 = vpow.pop %v3752
    %v3754 = vmul.f32 %v3657, 1.442695
    %v3755 = vpow.pop %v3754
    %v3756 = vmul.f32 %v3658, 1.442695
    %v3757 = vpow.pop %v3756
    %v3758 = vmul.f32 %v3659, 1.442695
    %v3759 = vpow.pop %v3758
    %v3760 = vmul.f32 %v3660, 1.442695
    %v3761 = vpow.pop %v3760
    %v3762 = vmul.f32 %v3661, 1.442695
    %v3763 = vpow.pop %v3762
    %v3764 = vmul.f32 %v3662, 1.442695
    %v3765 = vpow.pop %v3764
    %v3766 = vmul.f32 %v3663, 1.442695
    %v3767 = vpow.pop %v3766
    %v3768 = vmul.f32 %v3664, 1.442695
    %v3769 = vpow.pop %v3768
    %v3770 = vmul.f32 %v3665, 1.442695
    %v3771 = vpow.pop %v3770
    %v3772 = vmul.f32 %v3666, 1.442695
    %v3773 = vpow.pop %v3772
    %v3774 = vmul.f32 %v3667, 1.442695
    %v3775 = vpow.pop %v3774
    %v3776 = vmul.f32 %v3668, 1.442695
    %v3777 = vpow.pop %v3776
    %v3778 = vmul.f32 %v3669, 1.442695
    %v3779 = vpow.pop %v3778
    %v3780 = vmul.f32 %v3670, 1.442695
    %v3781 = vpow.pop %v3780
    %v3782 = vmul.f32 %v3671, 1.442695
    %v3783 = vpow.pop %v3782
    %v3784 = vmul.f32 %v3672, 1.442695
    %v3785 = vpow.pop %v3784
    %v3786 = vmul.f32 %v3673, 1.442695
    %v3787 = vpow.pop %v3786
    %v3788 = vmul.f32 %v3674, 1.442695
    %v3789 = vpow.pop %v3788
    %v3790 = vmul.f32 %v3675, 1.442695
    %v3791 = vpow.pop %v3790
    %v3792 = vmul.f32 %v3676, 1.442695
    %v3793 = vpow.pop %v3792
    %v3794 = vmul.f32 %v3677, 1.442695
    %v3795 = vpow.pop %v3794
    %v3796 = vmul.f32 %v3678, 1.442695
    %v3797 = vpow.pop %v3796
    %v3798 = vmul.f32 %v3679, 1.442695
    %v3799 = vpow.pop %v3798
    %v3800 = vmul.f32 %v3680, 1.442695
    %v3801 = vpow.pop %v3800
    %v3802 = vmul.f32 %v3681, 1.442695
    %v3803 = vpow.pop %v3802
    %v3804 = vmul.f32 %v3682, 1.442695
    %v3805 = vpow.pop %v3804
    %v3806 = vmul.f32 %v3683, 1.442695
    %v3807 = vpow.pop %v3806
    %v3808 = vmul.f32 %v3684, 1.442695
    %v3809 = vpow.pop %v3808
    %v3810 = vmul.f32 %v3685, 1.442695
    %v3811 = vpow.pop %v3810
    %v3812 = vmul.f32 %v3686, 1.442695
    %v3813 = vpow.pop %v3812
    %v3814 = vmul.f32 %v3687, 1.442695
    %v3815 = vpow.pop %v3814
    %v3816 = vadd.f32 %v3689, %v3691
    %3817 = vadd.xlane.f32.xlu0 %v3816
    %v3818 = vpop.xlane.xlu0 %3817
    %v3819 = vadd.f32 %v3693, %v3695
    %3820 = vadd.xlane.f32.xlu0 %v3819
    %v3821 = vpop.xlane.xlu0 %3820
    %v3822 = vadd.f32 %v3697, %v3699
    %3823 = vadd.xlane.f32.xlu0 %v3822
    %v3824 = vpop.xlane.xlu0 %3823
    %v3825 = vadd.f32 %v3701, %v3703
    %3826 = vadd.xlane.f32.xlu0 %v3825
    %v3827 = vpop.xlane.xlu0 %3826
    %v3828 = vadd.f32 %v3705, %v3707
    %3829 = vadd.xlane.f32.xlu0 %v3828
    %v3830 = vpop.xlane.xlu0 %3829
    %v3831 = vadd.f32 %v3709, %v3711
    %3832 = vadd.xlane.f32.xlu0 %v3831
    %v3833 = vpop.xlane.xlu0 %3832
    %v3834 = vadd.f32 %v3713, %v3715
    %3835 = vadd.xlane.f32.xlu0 %v3834
    %v3836 = vpop.xlane.xlu0 %3835
    %v3837 = vadd.f32 %v3717, %v3719
    %3838 = vadd.xlane.f32.xlu0 %v3837
    %v3839 = vpop.xlane.xlu0 %3838
    %v3840 = vadd.f32 %v3721, %v3723
    %3841 = vadd.xlane.f32.xlu0 %v3840
    %v3842 = vpop.xlane.xlu0 %3841
    %v3843 = vadd.f32 %v3725, %v3727
    %3844 = vadd.xlane.f32.xlu0 %v3843
    %v3845 = vpop.xlane.xlu0 %3844
    %v3846 = vadd.f32 %v3729, %v3731
    %3847 = vadd.xlane.f32.xlu0 %v3846
    %v3848 = vpop.xlane.xlu0 %3847
    %v3849 = vadd.f32 %v3733, %v3735
    %3850 = vadd.xlane.f32.xlu0 %v3849
    %v3851 = vpop.xlane.xlu0 %3850
    %v3852 = vadd.f32 %v3737, %v3739
    %3853 = vadd.xlane.f32.xlu0 %v3852
    %v3854 = vpop.xlane.xlu0 %3853
    %v3855 = vadd.f32 %v3741, %v3743
    %3856 = vadd.xlane.f32.xlu0 %v3855
    %v3857 = vpop.xlane.xlu0 %3856
    %v3858 = vadd.f32 %v3745, %v3747
    %3859 = vadd.xlane.f32.xlu0 %v3858
    %v3860 = vpop.xlane.xlu0 %3859
    %v3861 = vadd.f32 %v3749, %v3751
    %3862 = vadd.xlane.f32.xlu0 %v3861
    %v3863 = vpop.xlane.xlu0 %3862
    %v3864 = vadd.f32 %v3753, %v3755
    %3865 = vadd.xlane.f32.xlu0 %v3864
    %v3866 = vpop.xlane.xlu0 %3865
    %v3867 = vadd.f32 %v3757, %v3759
    %3868 = vadd.xlane.f32.xlu0 %v3867
    %v3869 = vpop.xlane.xlu0 %3868
    %v3870 = vadd.f32 %v3761, %v3763
    %3871 = vadd.xlane.f32.xlu0 %v3870
    %v3872 = vpop.xlane.xlu0 %3871
    %v3873 = vadd.f32 %v3765, %v3767
    %3874 = vadd.xlane.f32.xlu0 %v3873
    %v3875 = vpop.xlane.xlu0 %3874
    %v3876 = vadd.f32 %v3769, %v3771
    %3877 = vadd.xlane.f32.xlu0 %v3876
    %v3878 = vpop.xlane.xlu0 %3877
    %v3879 = vadd.f32 %v3773, %v3775
    %3880 = vadd.xlane.f32.xlu0 %v3879
    %v3881 = vpop.xlane.xlu0 %3880
    %v3882 = vadd.f32 %v3777, %v3779
    %3883 = vadd.xlane.f32.xlu0 %v3882
    %v3884 = vpop.xlane.xlu0 %3883
    %v3885 = vadd.f32 %v3781, %v3783
    %3886 = vadd.xlane.f32.xlu0 %v3885
    %v3887 = vpop.xlane.xlu0 %3886
    %v3888 = vadd.f32 %v3785, %v3787
    %3889 = vadd.xlane.f32.xlu0 %v3888
    %v3890 = vpop.xlane.xlu0 %3889
    %v3891 = vadd.f32 %v3789, %v3791
    %3892 = vadd.xlane.f32.xlu0 %v3891
    %v3893 = vpop.xlane.xlu0 %3892
    %v3894 = vadd.f32 %v3793, %v3795
    %3895 = vadd.xlane.f32.xlu0 %v3894
    %v3896 = vpop.xlane.xlu0 %3895
    %v3897 = vadd.f32 %v3797, %v3799
    %3898 = vadd.xlane.f32.xlu0 %v3897
    %v3899 = vpop.xlane.xlu0 %3898
    %v3900 = vadd.f32 %v3801, %v3803
    %3901 = vadd.xlane.f32.xlu0 %v3900
    %v3902 = vpop.xlane.xlu0 %3901
    %v3903 = vadd.f32 %v3805, %v3807
    %3904 = vadd.xlane.f32.xlu0 %v3903
    %v3905 = vpop.xlane.xlu0 %3904
    %v3906 = vadd.f32 %v3809, %v3811
    %3907 = vadd.xlane.f32.xlu0 %v3906
    %v3908 = vpop.xlane.xlu0 %3907
    %v3909 = vadd.f32 %v3813, %v3815
    %3910 = vadd.xlane.f32.xlu0 %v3909
    %v3911 = vpop.xlane.xlu0 %3910
    %v3912 = vrcp.pop %v3818
    %v3913 = vrcp.pop %v3821
    %v3914 = vrcp.pop %v3824
    %v3915 = vrcp.pop %v3827
    %v3916 = vrcp.pop %v3830
    %v3917 = vrcp.pop %v3833
    %v3918 = vrcp.pop %v3836
    %v3919 = vrcp.pop %v3839
    %v3920 = vrcp.pop %v3842
    %v3921 = vrcp.pop %v3845
    %v3922 = vrcp.pop %v3848
    %v3923 = vrcp.pop %v3851
    %v3924 = vrcp.pop %v3854
    %v3925 = vrcp.pop %v3857
    %v3926 = vrcp.pop %v3860
    %v3927 = vrcp.pop %v3863
    %v3928 = vrcp.pop %v3866
    %v3929 = vrcp.pop %v3869
    %v3930 = vrcp.pop %v3872
    %v3931 = vrcp.pop %v3875
    %v3932 = vrcp.pop %v3878
    %v3933 = vrcp.pop %v3881
    %v3934 = vrcp.pop %v3884
    %v3935 = vrcp.pop %v3887
    %v3936 = vrcp.pop %v3890
    %v3937 = vrcp.pop %v3893
    %v3938 = vrcp.pop %v3896
    %v3939 = vrcp.pop %v3899
    %v3940 = vrcp.pop %v3902
    %v3941 = vrcp.pop %v3905
    %v3942 = vrcp.pop %v3908
    %v3943 = vrcp.pop %v3911
    %v3944 = vmul.f32 %v3689, %v3912
    %v3945 = vmul.f32 %v3691, %v3912
    %v3946 = vmul.f32 %v3693, %v3913
    %v3947 = vmul.f32 %v3695, %v3913
    %v3948 = vmul.f32 %v3697, %v3914
    %v3949 = vmul.f32 %v3699, %v3914
    %v3950 = vmul.f32 %v3701, %v3915
    %v3951 = vmul.f32 %v3703, %v3915
    %v3952 = vmul.f32 %v3705, %v3916
    %v3953 = vmul.f32 %v3707, %v3916
    %v3954 = vmul.f32 %v3709, %v3917
    %v3955 = vmul.f32 %v3711, %v3917
    %v3956 = vmul.f32 %v3713, %v3918
    %v3957 = vmul.f32 %v3715, %v3918
    %v3958 = vmul.f32 %v3717, %v3919
    %v3959 = vmul.f32 %v3719, %v3919
    %v3960 = vmul.f32 %v3721, %v3920
    %v3961 = vmul.f32 %v3723, %v3920
    %v3962 = vmul.f32 %v3725, %v3921
    %v3963 = vmul.f32 %v3727, %v3921
    %v3964 = vmul.f32 %v3729, %v3922
    %v3965 = vmul.f32 %v3731, %v3922
    %v3966 = vmul.f32 %v3733, %v3923
    %v3967 = vmul.f32 %v3735, %v3923
    %v3968 = vmul.f32 %v3737, %v3924
    %v3969 = vmul.f32 %v3739, %v3924
    %v3970 = vmul.f32 %v3741, %v3925
    %v3971 = vmul.f32 %v3743, %v3925
    %v3972 = vmul.f32 %v3745, %v3926
    %v3973 = vmul.f32 %v3747, %v3926
    %v3974 = vmul.f32 %v3749, %v3927
    %v3975 = vmul.f32 %v3751, %v3927
    %v3976 = vmul.f32 %v3753, %v3928
    %v3977 = vmul.f32 %v3755, %v3928
    %v3978 = vmul.f32 %v3757, %v3929
    %v3979 = vmul.f32 %v3759, %v3929
    %v3980 = vmul.f32 %v3761, %v3930
    %v3981 = vmul.f32 %v3763, %v3930
    %v3982 = vmul.f32 %v3765, %v3931
    %v3983 = vmul.f32 %v3767, %v3931
    %v3984 = vmul.f32 %v3769, %v3932
    %v3985 = vmul.f32 %v3771, %v3932
    %v3986 = vmul.f32 %v3773, %v3933
    %v3987 = vmul.f32 %v3775, %v3933
    %v3988 = vmul.f32 %v3777, %v3934
    %v3989 = vmul.f32 %v3779, %v3934
    %v3990 = vmul.f32 %v3781, %v3935
    %v3991 = vmul.f32 %v3783, %v3935
    %v3992 = vmul.f32 %v3785, %v3936
    %v3993 = vmul.f32 %v3787, %v3936
    %v3994 = vmul.f32 %v3789, %v3937
    %v3995 = vmul.f32 %v3791, %v3937
    %v3996 = vmul.f32 %v3793, %v3938
    %v3997 = vmul.f32 %v3795, %v3938
    %v3998 = vmul.f32 %v3797, %v3939
    %v3999 = vmul.f32 %v3799, %v3939
    %v4000 = vmul.f32 %v3801, %v3940
    %v4001 = vmul.f32 %v3803, %v3940
    %v4002 = vmul.f32 %v3805, %v3941
    %v4003 = vmul.f32 %v3807, %v3941
    %v4004 = vmul.f32 %v3809, %v3942
    %v4005 = vmul.f32 %v3811, %v3942
    %v4006 = vmul.f32 %v3813, %v3943
    %v4007 = vmul.f32 %v3815, %v3943
    %v4008 = vmul.f32 %v3944, %v1274
    %v4009 = vmul.f32 %v3945, %v1306
    %v4010 = vmul.f32 %v3946, %v1275
    %v4011 = vmul.f32 %v3947, %v1307
    %v4012 = vmul.f32 %v3948, %v1276
    %v4013 = vmul.f32 %v3949, %v1308
    %v4014 = vmul.f32 %v3950, %v1277
    %v4015 = vmul.f32 %v3951, %v1309
    %v4016 = vmul.f32 %v3952, %v1278
    %v4017 = vmul.f32 %v3953, %v1310
    %v4018 = vmul.f32 %v3954, %v1279
    %v4019 = vmul.f32 %v3955, %v1311
    %v4020 = vmul.f32 %v3956, %v1280
    %v4021 = vmul.f32 %v3957, %v1312
    %v4022 = vmul.f32 %v3958, %v1281
    %v4023 = vmul.f32 %v3959, %v1313
    %v4024 = vmul.f32 %v3960, %v1282
    %v4025 = vmul.f32 %v3961, %v1314
    %v4026 = vmul.f32 %v3962, %v1283
    %v4027 = vmul.f32 %v3963, %v1315
    %v4028 = vmul.f32 %v3964, %v1284
    %v4029 = vmul.f32 %v3965, %v1316
    %v4030 = vmul.f32 %v3966, %v1285
    %v4031 = vmul.f32 %v3967, %v1317
    %v4032 = vmul.f32 %v3968, %v1286
    %v4033 = vmul.f32 %v3969, %v1318
    %v4034 = vmul.f32 %v3970, %v1287
    %v4035 = vmul.f32 %v3971, %v1319
    %v4036 = vmul.f32 %v3972, %v1288
    %v4037 = vmul.f32 %v3973, %v1320
    %v4038 = vmul.f32 %v3974, %v1289
    %v4039 = vmul.f32 %v3975, %v1321
    %v4040 = vmul.f32 %v3976, %v1290
    %v4041 = vmul.f32 %v3977, %v1322
    %v4042 = vmul.f32 %v3978, %v1291
    %v4043 = vmul.f32 %v3979, %v1323
    %v4044 = vmul.f32 %v3980, %v1292
    %v4045 = vmul.f32 %v3981, %v1324
    %v4046 = vmul.f32 %v3982, %v1293
    %v4047 = vmul.f32 %v3983, %v1325
    %v4048 = vmul.f32 %v3984, %v1294
    %v4049 = vmul.f32 %v3985, %v1326
    %v4050 = vmul.f32 %v3986, %v1295
    %v4051 = vmul.f32 %v3987, %v1327
    %v4052 = vmul.f32 %v3988, %v1296
    %v4053 = vmul.f32 %v3989, %v1328
    %v4054 = vmul.f32 %v3990, %v1297
    %v4055 = vmul.f32 %v3991, %v1329
    %v4056 = vmul.f32 %v3992, %v1298
    %v4057 = vmul.f32 %v3993, %v1330
    %v4058 = vmul.f32 %v3994, %v1299
    %v4059 = vmul.f32 %v3995, %v1331
    %v4060 = vmul.f32 %v3996, %v1300
    %v4061 = vmul.f32 %v3997, %v1332
    %v4062 = vmul.f32 %v3998, %v1301
    %v4063 = vmul.f32 %v3999, %v1333
    %v4064 = vmul.f32 %v4000, %v1302
    %v4065 = vmul.f32 %v4001, %v1334
    %v4066 = vmul.f32 %v4002, %v1303
    %v4067 = vmul.f32 %v4003, %v1335
    %v4068 = vmul.f32 %v4004, %v1304
    %v4069 = vmul.f32 %v4005, %v1336
    %v4070 = vmul.f32 %v4006, %v1305
    %v4071 = vmul.f32 %v4007, %v1337
    %v4072 = vpack.c.bf16 %v4010, %v4008
    %v4073 = vpack.c.bf16 %v4011, %v4009
    %v4074 = vpack.c.bf16 %v4014, %v4012
    %v4075 = vpack.c.bf16 %v4015, %v4013
    %v4076 = vpack.c.bf16 %v4018, %v4016
    %v4077 = vpack.c.bf16 %v4019, %v4017
    %v4078 = vpack.c.bf16 %v4022, %v4020
    %v4079 = vpack.c.bf16 %v4023, %v4021
    %v4080 = vpack.c.bf16 %v4026, %v4024
    %v4081 = vpack.c.bf16 %v4027, %v4025
    %v4082 = vpack.c.bf16 %v4030, %v4028
    %v4083 = vpack.c.bf16 %v4031, %v4029
    %v4084 = vpack.c.bf16 %v4034, %v4032
    %v4085 = vpack.c.bf16 %v4035, %v4033
    %v4086 = vpack.c.bf16 %v4038, %v4036
    %v4087 = vpack.c.bf16 %v4039, %v4037
    %v4088 = vpack.c.bf16 %v4042, %v4040
    %v4089 = vpack.c.bf16 %v4043, %v4041
    %v4090 = vpack.c.bf16 %v4046, %v4044
    %v4091 = vpack.c.bf16 %v4047, %v4045
    %v4092 = vpack.c.bf16 %v4050, %v4048
    %v4093 = vpack.c.bf16 %v4051, %v4049
    %v4094 = vpack.c.bf16 %v4054, %v4052
    %v4095 = vpack.c.bf16 %v4055, %v4053
    %v4096 = vpack.c.bf16 %v4058, %v4056
    %v4097 = vpack.c.bf16 %v4059, %v4057
    %v4098 = vpack.c.bf16 %v4062, %v4060
    %v4099 = vpack.c.bf16 %v4063, %v4061
    %v4100 = vpack.c.bf16 %v4066, %v4064
    %v4101 = vpack.c.bf16 %v4067, %v4065
    %v4102 = vpack.c.bf16 %v4070, %v4068
    %v4103 = vpack.c.bf16 %v4071, %v4069
    %v4104 = vmax.f32 %v2601, %v2603
    %4105 = vmax.xlane.f32.xlu0 %v4104
    %v4106 = vpop.xlane.xlu0 %4105
    %v4107 = vmax.f32 %v2605, %v2607
    %4108 = vmax.xlane.f32.xlu0 %v4107
    %v4109 = vpop.xlane.xlu0 %4108
    %v4110 = vmax.f32 %v2611, %v2613
    %4111 = vmax.xlane.f32.xlu0 %v4110
    %v4112 = vpop.xlane.xlu0 %4111
    %v4113 = vmax.f32 %v2615, %v2617
    %4114 = vmax.xlane.f32.xlu0 %v4113
    %v4115 = vpop.xlane.xlu0 %4114
    %v4116 = vmax.f32 %v2621, %v2623
    %4117 = vmax.xlane.f32.xlu0 %v4116
    %v4118 = vpop.xlane.xlu0 %4117
    %v4119 = vmax.f32 %v2625, %v2627
    %4120 = vmax.xlane.f32.xlu0 %v4119
    %v4121 = vpop.xlane.xlu0 %4120
    %v4122 = vmax.f32 %v2631, %v2633
    %4123 = vmax.xlane.f32.xlu0 %v4122
    %v4124 = vpop.xlane.xlu0 %4123
    %v4125 = vmax.f32 %v2635, %v2637
    %4126 = vmax.xlane.f32.xlu0 %v4125
    %v4127 = vpop.xlane.xlu0 %4126
    %v4128 = vmax.f32 %v2641, %v2643
    %4129 = vmax.xlane.f32.xlu0 %v4128
    %v4130 = vpop.xlane.xlu0 %4129
    %v4131 = vmax.f32 %v2645, %v2647
    %4132 = vmax.xlane.f32.xlu0 %v4131
    %v4133 = vpop.xlane.xlu0 %4132
    %v4134 = vmax.f32 %v2651, %v2653
    %4135 = vmax.xlane.f32.xlu0 %v4134
    %v4136 = vpop.xlane.xlu0 %4135
    %v4137 = vmax.f32 %v2655, %v2657
    %4138 = vmax.xlane.f32.xlu0 %v4137
    %v4139 = vpop.xlane.xlu0 %4138
    %v4140 = vmax.f32 %v2661, %v2663
    %4141 = vmax.xlane.f32.xlu0 %v4140
    %v4142 = vpop.xlane.xlu0 %4141
    %v4143 = vmax.f32 %v2665, %v2667
    %4144 = vmax.xlane.f32.xlu0 %v4143
    %v4145 = vpop.xlane.xlu0 %4144
    %v4146 = vmax.f32 %v2671, %v2673
    %4147 = vmax.xlane.f32.xlu0 %v4146
    %v4148 = vpop.xlane.xlu0 %4147
    %v4149 = vmax.f32 %v2675, %v2677
    %4150 = vmax.xlane.f32.xlu0 %v4149
    %v4151 = vpop.xlane.xlu0 %4150
    %v4152 = vmax.f32 %v2681, %v2683
    %4153 = vmax.xlane.f32.xlu0 %v4152
    %v4154 = vpop.xlane.xlu0 %4153
    %v4155 = vmax.f32 %v2685, %v2687
    %4156 = vmax.xlane.f32.xlu0 %v4155
    %v4157 = vpop.xlane.xlu0 %4156
    %v4158 = vmax.f32 %v2691, %v2693
    %4159 = vmax.xlane.f32.xlu0 %v4158
    %v4160 = vpop.xlane.xlu0 %4159
    %v4161 = vmax.f32 %v2695, %v2697
    %4162 = vmax.xlane.f32.xlu0 %v4161
    %v4163 = vpop.xlane.xlu0 %4162
    %v4164 = vmax.f32 %v2701, %v2703
    %4165 = vmax.xlane.f32.xlu0 %v4164
    %v4166 = vpop.xlane.xlu0 %4165
    %v4167 = vmax.f32 %v2705, %v2707
    %4168 = vmax.xlane.f32.xlu0 %v4167
    %v4169 = vpop.xlane.xlu0 %4168
    %v4170 = vmax.f32 %v2711, %v2713
    %4171 = vmax.xlane.f32.xlu0 %v4170
    %v4172 = vpop.xlane.xlu0 %4171
    %v4173 = vmax.f32 %v2715, %v2717
    %4174 = vmax.xlane.f32.xlu0 %v4173
    %v4175 = vpop.xlane.xlu0 %4174
    %v4176 = vmax.f32 %v2721, %v2723
    %4177 = vmax.xlane.f32.xlu0 %v4176
    %v4178 = vpop.xlane.xlu0 %4177
    %v4179 = vmax.f32 %v2725, %v2727
    %4180 = vmax.xlane.f32.xlu0 %v4179
    %v4181 = vpop.xlane.xlu0 %4180
    %v4182 = vmax.f32 %v2731, %v2733
    %4183 = vmax.xlane.f32.xlu0 %v4182
    %v4184 = vpop.xlane.xlu0 %4183
    %v4185 = vmax.f32 %v2735, %v2737
    %4186 = vmax.xlane.f32.xlu0 %v4185
    %v4187 = vpop.xlane.xlu0 %4186
    %v4188 = vmax.f32 %v2741, %v2743
    %4189 = vmax.xlane.f32.xlu0 %v4188
    %v4190 = vpop.xlane.xlu0 %4189
    %v4191 = vmax.f32 %v2745, %v2747
    %4192 = vmax.xlane.f32.xlu0 %v4191
    %v4193 = vpop.xlane.xlu0 %4192
    %v4194 = vmax.f32 %v2751, %v2753
    %4195 = vmax.xlane.f32.xlu0 %v4194
    %v4196 = vpop.xlane.xlu0 %4195
    %v4197 = vmax.f32 %v2755, %v2757
    %4198 = vmax.xlane.f32.xlu0 %v4197
    %v4199 = vpop.xlane.xlu0 %4198
    %v4200 = vsub.f32 %v2601, %v4106
    %v4201 = vsub.f32 %v2603, %v4106
    %v4202 = vsub.f32 %v2605, %v4109
    %v4203 = vsub.f32 %v2607, %v4109
    %v4204 = vsub.f32 %v2611, %v4112
    %v4205 = vsub.f32 %v2613, %v4112
    %v4206 = vsub.f32 %v2615, %v4115
    %v4207 = vsub.f32 %v2617, %v4115
    %v4208 = vsub.f32 %v2621, %v4118
    %v4209 = vsub.f32 %v2623, %v4118
    %v4210 = vsub.f32 %v2625, %v4121
    %v4211 = vsub.f32 %v2627, %v4121
    %v4212 = vsub.f32 %v2631, %v4124
    %v4213 = vsub.f32 %v2633, %v4124
    %v4214 = vsub.f32 %v2635, %v4127
    %v4215 = vsub.f32 %v2637, %v4127
    %v4216 = vsub.f32 %v2641, %v4130
    %v4217 = vsub.f32 %v2643, %v4130
    %v4218 = vsub.f32 %v2645, %v4133
    %v4219 = vsub.f32 %v2647, %v4133
    %v4220 = vsub.f32 %v2651, %v4136
    %v4221 = vsub.f32 %v2653, %v4136
    %v4222 = vsub.f32 %v2655, %v4139
    %v4223 = vsub.f32 %v2657, %v4139
    %v4224 = vsub.f32 %v2661, %v4142
    %v4225 = vsub.f32 %v2663, %v4142
    %v4226 = vsub.f32 %v2665, %v4145
    %v4227 = vsub.f32 %v2667, %v4145
    %v4228 = vsub.f32 %v2671, %v4148
    %v4229 = vsub.f32 %v2673, %v4148
    %v4230 = vsub.f32 %v2675, %v4151
    %v4231 = vsub.f32 %v2677, %v4151
    %v4232 = vsub.f32 %v2681, %v4154
    %v4233 = vsub.f32 %v2683, %v4154
    %v4234 = vsub.f32 %v2685, %v4157
    %v4235 = vsub.f32 %v2687, %v4157
    %v4236 = vsub.f32 %v2691, %v4160
    %v4237 = vsub.f32 %v2693, %v4160
    %v4238 = vsub.f32 %v2695, %v4163
    %v4239 = vsub.f32 %v2697, %v4163
    %v4240 = vsub.f32 %v2701, %v4166
    %v4241 = vsub.f32 %v2703, %v4166
    %v4242 = vsub.f32 %v2705, %v4169
    %v4243 = vsub.f32 %v2707, %v4169
    %v4244 = vsub.f32 %v2711, %v4172
    %v4245 = vsub.f32 %v2713, %v4172
    %v4246 = vsub.f32 %v2715, %v4175
    %v4247 = vsub.f32 %v2717, %v4175
    %v4248 = vsub.f32 %v2721, %v4178
    %v4249 = vsub.f32 %v2723, %v4178
    %v4250 = vsub.f32 %v2725, %v4181
    %v4251 = vsub.f32 %v2727, %v4181
    %v4252 = vsub.f32 %v2731, %v4184
    %v4253 = vsub.f32 %v2733, %v4184
    %v4254 = vsub.f32 %v2735, %v4187
    %v4255 = vsub.f32 %v2737, %v4187
    %v4256 = vsub.f32 %v2741, %v4190
    %v4257 = vsub.f32 %v2743, %v4190
    %v4258 = vsub.f32 %v2745, %v4193
    %v4259 = vsub.f32 %v2747, %v4193
    %v4260 = vsub.f32 %v2751, %v4196
    %v4261 = vsub.f32 %v2753, %v4196
    %v4262 = vsub.f32 %v2755, %v4199
    %v4263 = vsub.f32 %v2757, %v4199
    %v4264 = vmul.f32 %v4200, 1.442695
    %v4265 = vpow.pop %v4264
    %v4266 = vmul.f32 %v4201, 1.442695
    %v4267 = vpow.pop %v4266
    %v4268 = vmul.f32 %v4202, 1.442695
    %v4269 = vpow.pop %v4268
    %v4270 = vmul.f32 %v4203, 1.442695
    %v4271 = vpow.pop %v4270
    %v4272 = vmul.f32 %v4204, 1.442695
    %v4273 = vpow.pop %v4272
    %v4274 = vmul.f32 %v4205, 1.442695
    %v4275 = vpow.pop %v4274
    %v4276 = vmul.f32 %v4206, 1.442695
    %v4277 = vpow.pop %v4276
    %v4278 = vmul.f32 %v4207, 1.442695
    %v4279 = vpow.pop %v4278
    %v4280 = vmul.f32 %v4208, 1.442695
    %v4281 = vpow.pop %v4280
    %v4282 = vmul.f32 %v4209, 1.442695
    %v4283 = vpow.pop %v4282
    %v4284 = vmul.f32 %v4210, 1.442695
    %v4285 = vpow.pop %v4284
    %v4286 = vmul.f32 %v4211, 1.442695
    %v4287 = vpow.pop %v4286
    %v4288 = vmul.f32 %v4212, 1.442695
    %v4289 = vpow.pop %v4288
    %v4290 = vmul.f32 %v4213, 1.442695
    %v4291 = vpow.pop %v4290
    %v4292 = vmul.f32 %v4214, 1.442695
    %v4293 = vpow.pop %v4292
    %v4294 = vmul.f32 %v4215, 1.442695
    %v4295 = vpow.pop %v4294
    %v4296 = vmul.f32 %v4216, 1.442695
    %v4297 = vpow.pop %v4296
    %v4298 = vmul.f32 %v4217, 1.442695
    %v4299 = vpow.pop %v4298
    %v4300 = vmul.f32 %v4218, 1.442695
    %v4301 = vpow.pop %v4300
    %v4302 = vmul.f32 %v4219, 1.442695
    %v4303 = vpow.pop %v4302
    %v4304 = vmul.f32 %v4220, 1.442695
    %v4305 = vpow.pop %v4304
    %v4306 = vmul.f32 %v4221, 1.442695
    %v4307 = vpow.pop %v4306
    %v4308 = vmul.f32 %v4222, 1.442695
    %v4309 = vpow.pop %v4308
    %v4310 = vmul.f32 %v4223, 1.442695
    %v4311 = vpow.pop %v4310
    %v4312 = vmul.f32 %v4224, 1.442695
    %v4313 = vpow.pop %v4312
    %v4314 = vmul.f32 %v4225, 1.442695
    %v4315 = vpow.pop %v4314
    %v4316 = vmul.f32 %v4226, 1.442695
    %v4317 = vpow.pop %v4316
    %v4318 = vmul.f32 %v4227, 1.442695
    %v4319 = vpow.pop %v4318
    %v4320 = vmul.f32 %v4228, 1.442695
    %v4321 = vpow.pop %v4320
    %v4322 = vmul.f32 %v4229, 1.442695
    %v4323 = vpow.pop %v4322
    %v4324 = vmul.f32 %v4230, 1.442695
    %v4325 = vpow.pop %v4324
    %v4326 = vmul.f32 %v4231, 1.442695
    %v4327 = vpow.pop %v4326
    %v4328 = vmul.f32 %v4232, 1.442695
    %v4329 = vpow.pop %v4328
    %v4330 = vmul.f32 %v4233, 1.442695
    %v4331 = vpow.pop %v4330
    %v4332 = vmul.f32 %v4234, 1.442695
    %v4333 = vpow.pop %v4332
    %v4334 = vmul.f32 %v4235, 1.442695
    %v4335 = vpow.pop %v4334
    %v4336 = vmul.f32 %v4236, 1.442695
    %v4337 = vpow.pop %v4336
    %v4338 = vmul.f32 %v4237, 1.442695
    %v4339 = vpow.pop %v4338
    %v4340 = vmul.f32 %v4238, 1.442695
    %v4341 = vpow.pop %v4340
    %v4342 = vmul.f32 %v4239, 1.442695
    %v4343 = vpow.pop %v4342
    %v4344 = vmul.f32 %v4240, 1.442695
    %v4345 = vpow.pop %v4344
    %v4346 = vmul.f32 %v4241, 1.442695
    %v4347 = vpow.pop %v4346
    %v4348 = vmul.f32 %v4242, 1.442695
    %v4349 = vpow.pop %v4348
    %v4350 = vmul.f32 %v4243, 1.442695
    %v4351 = vpow.pop %v4350
    %v4352 = vmul.f32 %v4244, 1.442695
    %v4353 = vpow.pop %v4352
    %v4354 = vmul.f32 %v4245, 1.442695
    %v4355 = vpow.pop %v4354
    %v4356 = vmul.f32 %v4246, 1.442695
    %v4357 = vpow.pop %v4356
    %v4358 = vmul.f32 %v4247, 1.442695
    %v4359 = vpow.pop %v4358
    %v4360 = vmul.f32 %v4248, 1.442695
    %v4361 = vpow.pop %v4360
    %v4362 = vmul.f32 %v4249, 1.442695
    %v4363 = vpow.pop %v4362
    %v4364 = vmul.f32 %v4250, 1.442695
    %v4365 = vpow.pop %v4364
    %v4366 = vmul.f32 %v4251, 1.442695
    %v4367 = vpow.pop %v4366
    %v4368 = vmul.f32 %v4252, 1.442695
    %v4369 = vpow.pop %v4368
    %v4370 = vmul.f32 %v4253, 1.442695
    %v4371 = vpow.pop %v4370
    %v4372 = vmul.f32 %v4254, 1.442695
    %v4373 = vpow.pop %v4372
    %v4374 = vmul.f32 %v4255, 1.442695
    %v4375 = vpow.pop %v4374
    %v4376 = vmul.f32 %v4256, 1.442695
    %v4377 = vpow.pop %v4376
    %v4378 = vmul.f32 %v4257, 1.442695
    %v4379 = vpow.pop %v4378
    %v4380 = vmul.f32 %v4258, 1.442695
    %v4381 = vpow.pop %v4380
    %v4382 = vmul.f32 %v4259, 1.442695
    %v4383 = vpow.pop %v4382
    %v4384 = vmul.f32 %v4260, 1.442695
    %v4385 = vpow.pop %v4384
    %v4386 = vmul.f32 %v4261, 1.442695
    %v4387 = vpow.pop %v4386
    %v4388 = vmul.f32 %v4262, 1.442695
    %v4389 = vpow.pop %v4388
    %v4390 = vmul.f32 %v4263, 1.442695
    %v4391 = vpow.pop %v4390
    %v4392 = vadd.f32 %v4265, %v4267
    %4393 = vadd.xlane.f32.xlu0 %v4392
    %v4394 = vpop.xlane.xlu0 %4393
    %v4395 = vadd.f32 %v4269, %v4271
    %4396 = vadd.xlane.f32.xlu0 %v4395
    %v4397 = vpop.xlane.xlu0 %4396
    %v4398 = vadd.f32 %v4273, %v4275
    %4399 = vadd.xlane.f32.xlu0 %v4398
    %v4400 = vpop.xlane.xlu0 %4399
    %v4401 = vadd.f32 %v4277, %v4279
    %4402 = vadd.xlane.f32.xlu0 %v4401
    %v4403 = vpop.xlane.xlu0 %4402
    %v4404 = vadd.f32 %v4281, %v4283
    %4405 = vadd.xlane.f32.xlu0 %v4404
    %v4406 = vpop.xlane.xlu0 %4405
    %v4407 = vadd.f32 %v4285, %v4287
    %4408 = vadd.xlane.f32.xlu0 %v4407
    %v4409 = vpop.xlane.xlu0 %4408
    %v4410 = vadd.f32 %v4289, %v4291
    %4411 = vadd.xlane.f32.xlu0 %v4410
    %v4412 = vpop.xlane.xlu0 %4411
    %v4413 = vadd.f32 %v4293, %v4295
    %4414 = vadd.xlane.f32.xlu0 %v4413
    %v4415 = vpop.xlane.xlu0 %4414
    %v4416 = vadd.f32 %v4297, %v4299
    %4417 = vadd.xlane.f32.xlu0 %v4416
    %v4418 = vpop.xlane.xlu0 %4417
    %v4419 = vadd.f32 %v4301, %v4303
    %4420 = vadd.xlane.f32.xlu0 %v4419
    %v4421 = vpop.xlane.xlu0 %4420
    %v4422 = vadd.f32 %v4305, %v4307
    %4423 = vadd.xlane.f32.xlu0 %v4422
    %v4424 = vpop.xlane.xlu0 %4423
    %v4425 = vadd.f32 %v4309, %v4311
    %4426 = vadd.xlane.f32.xlu0 %v4425
    %v4427 = vpop.xlane.xlu0 %4426
    %v4428 = vadd.f32 %v4313, %v4315
    %4429 = vadd.xlane.f32.xlu0 %v4428
    %v4430 = vpop.xlane.xlu0 %4429
    %v4431 = vadd.f32 %v4317, %v4319
    %4432 = vadd.xlane.f32.xlu0 %v4431
    %v4433 = vpop.xlane.xlu0 %4432
    %v4434 = vadd.f32 %v4321, %v4323
    %4435 = vadd.xlane.f32.xlu0 %v4434
    %v4436 = vpop.xlane.xlu0 %4435
    %v4437 = vadd.f32 %v4325, %v4327
    %4438 = vadd.xlane.f32.xlu0 %v4437
    %v4439 = vpop.xlane.xlu0 %4438
    %v4440 = vadd.f32 %v4329, %v4331
    %4441 = vadd.xlane.f32.xlu0 %v4440
    %v4442 = vpop.xlane.xlu0 %4441
    %v4443 = vadd.f32 %v4333, %v4335
    %4444 = vadd.xlane.f32.xlu0 %v4443
    %v4445 = vpop.xlane.xlu0 %4444
    %v4446 = vadd.f32 %v4337, %v4339
    %4447 = vadd.xlane.f32.xlu0 %v4446
    %v4448 = vpop.xlane.xlu0 %4447
    %v4449 = vadd.f32 %v4341, %v4343
    %4450 = vadd.xlane.f32.xlu0 %v4449
    %v4451 = vpop.xlane.xlu0 %4450
    %v4452 = vadd.f32 %v4345, %v4347
    %4453 = vadd.xlane.f32.xlu0 %v4452
    %v4454 = vpop.xlane.xlu0 %4453
    %v4455 = vadd.f32 %v4349, %v4351
    %4456 = vadd.xlane.f32.xlu0 %v4455
    %v4457 = vpop.xlane.xlu0 %4456
    %v4458 = vadd.f32 %v4353, %v4355
    %4459 = vadd.xlane.f32.xlu0 %v4458
    %v4460 = vpop.xlane.xlu0 %4459
    %v4461 = vadd.f32 %v4357, %v4359
    %4462 = vadd.xlane.f32.xlu0 %v4461
    %v4463 = vpop.xlane.xlu0 %4462
    %v4464 = vadd.f32 %v4361, %v4363
    %4465 = vadd.xlane.f32.xlu0 %v4464
    %v4466 = vpop.xlane.xlu0 %4465
    %v4467 = vadd.f32 %v4365, %v4367
    %4468 = vadd.xlane.f32.xlu0 %v4467
    %v4469 = vpop.xlane.xlu0 %4468
    %v4470 = vadd.f32 %v4369, %v4371
    %4471 = vadd.xlane.f32.xlu0 %v4470
    %v4472 = vpop.xlane.xlu0 %4471
    %v4473 = vadd.f32 %v4373, %v4375
    %4474 = vadd.xlane.f32.xlu0 %v4473
    %v4475 = vpop.xlane.xlu0 %4474
    %v4476 = vadd.f32 %v4377, %v4379
    %4477 = vadd.xlane.f32.xlu0 %v4476
    %v4478 = vpop.xlane.xlu0 %4477
    %v4479 = vadd.f32 %v4381, %v4383
    %4480 = vadd.xlane.f32.xlu0 %v4479
    %v4481 = vpop.xlane.xlu0 %4480
    %v4482 = vadd.f32 %v4385, %v4387
    %4483 = vadd.xlane.f32.xlu0 %v4482
    %v4484 = vpop.xlane.xlu0 %4483
    %v4485 = vadd.f32 %v4389, %v4391
    %4486 = vadd.xlane.f32.xlu0 %v4485
    %v4487 = vpop.xlane.xlu0 %4486
    %v4488 = vrcp.pop %v4394
    %v4489 = vrcp.pop %v4397
    %v4490 = vrcp.pop %v4400
    %v4491 = vrcp.pop %v4403
    %v4492 = vrcp.pop %v4406
    %v4493 = vrcp.pop %v4409
    %v4494 = vrcp.pop %v4412
    %v4495 = vrcp.pop %v4415
    %v4496 = vrcp.pop %v4418
    %v4497 = vrcp.pop %v4421
    %v4498 = vrcp.pop %v4424
    %v4499 = vrcp.pop %v4427
    %v4500 = vrcp.pop %v4430
    %v4501 = vrcp.pop %v4433
    %v4502 = vrcp.pop %v4436
    %v4503 = vrcp.pop %v4439
    %v4504 = vrcp.pop %v4442
    %v4505 = vrcp.pop %v4445
    %v4506 = vrcp.pop %v4448
    %v4507 = vrcp.pop %v4451
    %v4508 = vrcp.pop %v4454
    %v4509 = vrcp.pop %v4457
    %v4510 = vrcp.pop %v4460
    %v4511 = vrcp.pop %v4463
    %v4512 = vrcp.pop %v4466
    %v4513 = vrcp.pop %v4469
    %v4514 = vrcp.pop %v4472
    %v4515 = vrcp.pop %v4475
    %v4516 = vrcp.pop %v4478
    %v4517 = vrcp.pop %v4481
    %v4518 = vrcp.pop %v4484
    %v4519 = vrcp.pop %v4487
    %v4520 = vmul.f32 %v4265, %v4488
    %v4521 = vmul.f32 %v4267, %v4488
    %v4522 = vmul.f32 %v4269, %v4489
    %v4523 = vmul.f32 %v4271, %v4489
    %v4524 = vmul.f32 %v4273, %v4490
    %v4525 = vmul.f32 %v4275, %v4490
    %v4526 = vmul.f32 %v4277, %v4491
    %v4527 = vmul.f32 %v4279, %v4491
    %v4528 = vmul.f32 %v4281, %v4492
    %v4529 = vmul.f32 %v4283, %v4492
    %v4530 = vmul.f32 %v4285, %v4493
    %v4531 = vmul.f32 %v4287, %v4493
    %v4532 = vmul.f32 %v4289, %v4494
    %v4533 = vmul.f32 %v4291, %v4494
    %v4534 = vmul.f32 %v4293, %v4495
    %v4535 = vmul.f32 %v4295, %v4495
    %v4536 = vmul.f32 %v4297, %v4496
    %v4537 = vmul.f32 %v4299, %v4496
    %v4538 = vmul.f32 %v4301, %v4497
    %v4539 = vmul.f32 %v4303, %v4497
    %v4540 = vmul.f32 %v4305, %v4498
    %v4541 = vmul.f32 %v4307, %v4498
    %v4542 = vmul.f32 %v4309, %v4499
    %v4543 = vmul.f32 %v4311, %v4499
    %v4544 = vmul.f32 %v4313, %v4500
    %v4545 = vmul.f32 %v4315, %v4500
    %v4546 = vmul.f32 %v4317, %v4501
    %v4547 = vmul.f32 %v4319, %v4501
    %v4548 = vmul.f32 %v4321, %v4502
    %v4549 = vmul.f32 %v4323, %v4502
    %v4550 = vmul.f32 %v4325, %v4503
    %v4551 = vmul.f32 %v4327, %v4503
    %v4552 = vmul.f32 %v4329, %v4504
    %v4553 = vmul.f32 %v4331, %v4504
    %v4554 = vmul.f32 %v4333, %v4505
    %v4555 = vmul.f32 %v4335, %v4505
    %v4556 = vmul.f32 %v4337, %v4506
    %v4557 = vmul.f32 %v4339, %v4506
    %v4558 = vmul.f32 %v4341, %v4507
    %v4559 = vmul.f32 %v4343, %v4507
    %v4560 = vmul.f32 %v4345, %v4508
    %v4561 = vmul.f32 %v4347, %v4508
    %v4562 = vmul.f32 %v4349, %v4509
    %v4563 = vmul.f32 %v4351, %v4509
    %v4564 = vmul.f32 %v4353, %v4510
    %v4565 = vmul.f32 %v4355, %v4510
    %v4566 = vmul.f32 %v4357, %v4511
    %v4567 = vmul.f32 %v4359, %v4511
    %v4568 = vmul.f32 %v4361, %v4512
    %v4569 = vmul.f32 %v4363, %v4512
    %v4570 = vmul.f32 %v4365, %v4513
    %v4571 = vmul.f32 %v4367, %v4513
    %v4572 = vmul.f32 %v4369, %v4514
    %v4573 = vmul.f32 %v4371, %v4514
    %v4574 = vmul.f32 %v4373, %v4515
    %v4575 = vmul.f32 %v4375, %v4515
    %v4576 = vmul.f32 %v4377, %v4516
    %v4577 = vmul.f32 %v4379, %v4516
    %v4578 = vmul.f32 %v4381, %v4517
    %v4579 = vmul.f32 %v4383, %v4517
    %v4580 = vmul.f32 %v4385, %v4518
    %v4581 = vmul.f32 %v4387, %v4518
    %v4582 = vmul.f32 %v4389, %v4519
    %v4583 = vmul.f32 %v4391, %v4519
    %v4584 = vmul.f32 %v4520, %v1274
    %v4585 = vmul.f32 %v4521, %v1306
    %v4586 = vmul.f32 %v4522, %v1275
    %v4587 = vmul.f32 %v4523, %v1307
    %v4588 = vmul.f32 %v4524, %v1276
    %v4589 = vmul.f32 %v4525, %v1308
    %v4590 = vmul.f32 %v4526, %v1277
    %v4591 = vmul.f32 %v4527, %v1309
    %v4592 = vmul.f32 %v4528, %v1278
    %v4593 = vmul.f32 %v4529, %v1310
    %v4594 = vmul.f32 %v4530, %v1279
    %v4595 = vmul.f32 %v4531, %v1311
    %v4596 = vmul.f32 %v4532, %v1280
    %v4597 = vmul.f32 %v4533, %v1312
    %v4598 = vmul.f32 %v4534, %v1281
    %v4599 = vmul.f32 %v4535, %v1313
    %v4600 = vmul.f32 %v4536, %v1282
    %v4601 = vmul.f32 %v4537, %v1314
    %v4602 = vmul.f32 %v4538, %v1283
    %v4603 = vmul.f32 %v4539, %v1315
    %v4604 = vmul.f32 %v4540, %v1284
    %v4605 = vmul.f32 %v4541, %v1316
    %v4606 = vmul.f32 %v4542, %v1285
    %v4607 = vmul.f32 %v4543, %v1317
    %v4608 = vmul.f32 %v4544, %v1286
    %v4609 = vmul.f32 %v4545, %v1318
    %v4610 = vmul.f32 %v4546, %v1287
    %v4611 = vmul.f32 %v4547, %v1319
    %v4612 = vmul.f32 %v4548, %v1288
    %v4613 = vmul.f32 %v4549, %v1320
    %v4614 = vmul.f32 %v4550, %v1289
    %v4615 = vmul.f32 %v4551, %v1321
    %v4616 = vmul.f32 %v4552, %v1290
    %v4617 = vmul.f32 %v4553, %v1322
    %v4618 = vmul.f32 %v4554, %v1291
    %v4619 = vmul.f32 %v4555, %v1323
    %v4620 = vmul.f32 %v4556, %v1292
    %v4621 = vmul.f32 %v4557, %v1324
    %v4622 = vmul.f32 %v4558, %v1293
    %v4623 = vmul.f32 %v4559, %v1325
    %v4624 = vmul.f32 %v4560, %v1294
    %v4625 = vmul.f32 %v4561, %v1326
    %v4626 = vmul.f32 %v4562, %v1295
    %v4627 = vmul.f32 %v4563, %v1327
    %v4628 = vmul.f32 %v4564, %v1296
    %v4629 = vmul.f32 %v4565, %v1328
    %v4630 = vmul.f32 %v4566, %v1297
    %v4631 = vmul.f32 %v4567, %v1329
    %v4632 = vmul.f32 %v4568, %v1298
    %v4633 = vmul.f32 %v4569, %v1330
    %v4634 = vmul.f32 %v4570, %v1299
    %v4635 = vmul.f32 %v4571, %v1331
    %v4636 = vmul.f32 %v4572, %v1300
    %v4637 = vmul.f32 %v4573, %v1332
    %v4638 = vmul.f32 %v4574, %v1301
    %v4639 = vmul.f32 %v4575, %v1333
    %v4640 = vmul.f32 %v4576, %v1302
    %v4641 = vmul.f32 %v4577, %v1334
    %v4642 = vmul.f32 %v4578, %v1303
    %v4643 = vmul.f32 %v4579, %v1335
    %v4644 = vmul.f32 %v4580, %v1304
    %v4645 = vmul.f32 %v4581, %v1336
    %v4646 = vmul.f32 %v4582, %v1305
    %v4647 = vmul.f32 %v4583, %v1337
    %v4648 = vpack.c.bf16 %v4586, %v4584
    %v4649 = vpack.c.bf16 %v4587, %v4585
    %v4650 = vpack.c.bf16 %v4590, %v4588
    %v4651 = vpack.c.bf16 %v4591, %v4589
    %v4652 = vpack.c.bf16 %v4594, %v4592
    %v4653 = vpack.c.bf16 %v4595, %v4593
    %v4654 = vpack.c.bf16 %v4598, %v4596
    %v4655 = vpack.c.bf16 %v4599, %v4597
    %v4656 = vpack.c.bf16 %v4602, %v4600
    %v4657 = vpack.c.bf16 %v4603, %v4601
    %v4658 = vpack.c.bf16 %v4606, %v4604
    %v4659 = vpack.c.bf16 %v4607, %v4605
    %v4660 = vpack.c.bf16 %v4610, %v4608
    %v4661 = vpack.c.bf16 %v4611, %v4609
    %v4662 = vpack.c.bf16 %v4614, %v4612
    %v4663 = vpack.c.bf16 %v4615, %v4613
    %v4664 = vpack.c.bf16 %v4618, %v4616
    %v4665 = vpack.c.bf16 %v4619, %v4617
    %v4666 = vpack.c.bf16 %v4622, %v4620
    %v4667 = vpack.c.bf16 %v4623, %v4621
    %v4668 = vpack.c.bf16 %v4626, %v4624
    %v4669 = vpack.c.bf16 %v4627, %v4625
    %v4670 = vpack.c.bf16 %v4630, %v4628
    %v4671 = vpack.c.bf16 %v4631, %v4629
    %v4672 = vpack.c.bf16 %v4634, %v4632
    %v4673 = vpack.c.bf16 %v4635, %v4633
    %v4674 = vpack.c.bf16 %v4638, %v4636
    %v4675 = vpack.c.bf16 %v4639, %v4637
    %v4676 = vpack.c.bf16 %v4642, %v4640
    %v4677 = vpack.c.bf16 %v4643, %v4641
    %v4678 = vpack.c.bf16 %v4646, %v4644
    %v4679 = vpack.c.bf16 %v4647, %v4645
    %v4680 = vmax.f32 %v2794, %v2796
    %4681 = vmax.xlane.f32.xlu0 %v4680
    %v4682 = vpop.xlane.xlu0 %4681
    %v4683 = vmax.f32 %v2798, %v2800
    %4684 = vmax.xlane.f32.xlu0 %v4683
    %v4685 = vpop.xlane.xlu0 %4684
    %v4686 = vmax.f32 %v2804, %v2806
    %4687 = vmax.xlane.f32.xlu0 %v4686
    %v4688 = vpop.xlane.xlu0 %4687
    %v4689 = vmax.f32 %v2808, %v2810
    %4690 = vmax.xlane.f32.xlu0 %v4689
    %v4691 = vpop.xlane.xlu0 %4690
    %v4692 = vmax.f32 %v2814, %v2816
    %4693 = vmax.xlane.f32.xlu0 %v4692
    %v4694 = vpop.xlane.xlu0 %4693
    %v4695 = vmax.f32 %v2818, %v2820
    %4696 = vmax.xlane.f32.xlu0 %v4695
    %v4697 = vpop.xlane.xlu0 %4696
    %v4698 = vmax.f32 %v2824, %v2826
    %4699 = vmax.xlane.f32.xlu0 %v4698
    %v4700 = vpop.xlane.xlu0 %4699
    %v4701 = vmax.f32 %v2828, %v2830
    %4702 = vmax.xlane.f32.xlu0 %v4701
    %v4703 = vpop.xlane.xlu0 %4702
    %v4704 = vmax.f32 %v2834, %v2836
    %4705 = vmax.xlane.f32.xlu0 %v4704
    %v4706 = vpop.xlane.xlu0 %4705
    %v4707 = vmax.f32 %v2838, %v2840
    %4708 = vmax.xlane.f32.xlu0 %v4707
    %v4709 = vpop.xlane.xlu0 %4708
    %v4710 = vmax.f32 %v2844, %v2846
    %4711 = vmax.xlane.f32.xlu0 %v4710
    %v4712 = vpop.xlane.xlu0 %4711
    %v4713 = vmax.f32 %v2848, %v2850
    %4714 = vmax.xlane.f32.xlu0 %v4713
    %v4715 = vpop.xlane.xlu0 %4714
    %v4716 = vmax.f32 %v2854, %v2856
    %4717 = vmax.xlane.f32.xlu0 %v4716
    %v4718 = vpop.xlane.xlu0 %4717
    %v4719 = vmax.f32 %v2858, %v2860
    %4720 = vmax.xlane.f32.xlu0 %v4719
    %v4721 = vpop.xlane.xlu0 %4720
    %v4722 = vmax.f32 %v2864, %v2866
    %4723 = vmax.xlane.f32.xlu0 %v4722
    %v4724 = vpop.xlane.xlu0 %4723
    %v4725 = vmax.f32 %v2868, %v2870
    %4726 = vmax.xlane.f32.xlu0 %v4725
    %v4727 = vpop.xlane.xlu0 %4726
    %v4728 = vmax.f32 %v2874, %v2876
    %4729 = vmax.xlane.f32.xlu0 %v4728
    %v4730 = vpop.xlane.xlu0 %4729
    %v4731 = vmax.f32 %v2878, %v2880
    %4732 = vmax.xlane.f32.xlu0 %v4731
    %v4733 = vpop.xlane.xlu0 %4732
    %v4734 = vmax.f32 %v2884, %v2886
    %4735 = vmax.xlane.f32.xlu0 %v4734
    %v4736 = vpop.xlane.xlu0 %4735
    %v4737 = vmax.f32 %v2888, %v2890
    %4738 = vmax.xlane.f32.xlu0 %v4737
    %v4739 = vpop.xlane.xlu0 %4738
    %v4740 = vmax.f32 %v2894, %v2896
    %4741 = vmax.xlane.f32.xlu0 %v4740
    %v4742 = vpop.xlane.xlu0 %4741
    %v4743 = vmax.f32 %v2898, %v2900
    %4744 = vmax.xlane.f32.xlu0 %v4743
    %v4745 = vpop.xlane.xlu0 %4744
    %v4746 = vmax.f32 %v2904, %v2906
    %4747 = vmax.xlane.f32.xlu0 %v4746
    %v4748 = vpop.xlane.xlu0 %4747
    %v4749 = vmax.f32 %v2908, %v2910
    %4750 = vmax.xlane.f32.xlu0 %v4749
    %v4751 = vpop.xlane.xlu0 %4750
    %v4752 = vmax.f32 %v2914, %v2916
    %4753 = vmax.xlane.f32.xlu0 %v4752
    %v4754 = vpop.xlane.xlu0 %4753
    %v4755 = vmax.f32 %v2918, %v2920
    %4756 = vmax.xlane.f32.xlu0 %v4755
    %v4757 = vpop.xlane.xlu0 %4756
    %v4758 = vmax.f32 %v2924, %v2926
    %4759 = vmax.xlane.f32.xlu0 %v4758
    %v4760 = vpop.xlane.xlu0 %4759
    %v4761 = vmax.f32 %v2928, %v2930
    %4762 = vmax.xlane.f32.xlu0 %v4761
    %v4763 = vpop.xlane.xlu0 %4762
    %v4764 = vmax.f32 %v2934, %v2936
    %4765 = vmax.xlane.f32.xlu0 %v4764
    %v4766 = vpop.xlane.xlu0 %4765
    %v4767 = vmax.f32 %v2938, %v2940
    %4768 = vmax.xlane.f32.xlu0 %v4767
    %v4769 = vpop.xlane.xlu0 %4768
    %v4770 = vmax.f32 %v2944, %v2946
    %4771 = vmax.xlane.f32.xlu0 %v4770
    %v4772 = vpop.xlane.xlu0 %4771
    %v4773 = vmax.f32 %v2948, %v2950
    %4774 = vmax.xlane.f32.xlu0 %v4773
    %v4775 = vpop.xlane.xlu0 %4774
    %v4776 = vsub.f32 %v2794, %v4682
    %v4777 = vsub.f32 %v2796, %v4682
    %v4778 = vsub.f32 %v2798, %v4685
    %v4779 = vsub.f32 %v2800, %v4685
    %v4780 = vsub.f32 %v2804, %v4688
    %v4781 = vsub.f32 %v2806, %v4688
    %v4782 = vsub.f32 %v2808, %v4691
    %v4783 = vsub.f32 %v2810, %v4691
    %v4784 = vsub.f32 %v2814, %v4694
    %v4785 = vsub.f32 %v2816, %v4694
    %v4786 = vsub.f32 %v2818, %v4697
    %v4787 = vsub.f32 %v2820, %v4697
    %v4788 = vsub.f32 %v2824, %v4700
    %v4789 = vsub.f32 %v2826, %v4700
    %v4790 = vsub.f32 %v2828, %v4703
    %v4791 = vsub.f32 %v2830, %v4703
    %v4792 = vsub.f32 %v2834, %v4706
    %v4793 = vsub.f32 %v2836, %v4706
    %v4794 = vsub.f32 %v2838, %v4709
    %v4795 = vsub.f32 %v2840, %v4709
    %v4796 = vsub.f32 %v2844, %v4712
    %v4797 = vsub.f32 %v2846, %v4712
    %v4798 = vsub.f32 %v2848, %v4715
    %v4799 = vsub.f32 %v2850, %v4715
    %v4800 = vsub.f32 %v2854, %v4718
    %v4801 = vsub.f32 %v2856, %v4718
    %v4802 = vsub.f32 %v2858, %v4721
    %v4803 = vsub.f32 %v2860, %v4721
    %v4804 = vsub.f32 %v2864, %v4724
    %v4805 = vsub.f32 %v2866, %v4724
    %v4806 = vsub.f32 %v2868, %v4727
    %v4807 = vsub.f32 %v2870, %v4727
    %v4808 = vsub.f32 %v2874, %v4730
    %v4809 = vsub.f32 %v2876, %v4730
    %v4810 = vsub.f32 %v2878, %v4733
    %v4811 = vsub.f32 %v2880, %v4733
    %v4812 = vsub.f32 %v2884, %v4736
    %v4813 = vsub.f32 %v2886, %v4736
    %v4814 = vsub.f32 %v2888, %v4739
    %v4815 = vsub.f32 %v2890, %v4739
    %v4816 = vsub.f32 %v2894, %v4742
    %v4817 = vsub.f32 %v2896, %v4742
    %v4818 = vsub.f32 %v2898, %v4745
    %v4819 = vsub.f32 %v2900, %v4745
    %v4820 = vsub.f32 %v2904, %v4748
    %v4821 = vsub.f32 %v2906, %v4748
    %v4822 = vsub.f32 %v2908, %v4751
    %v4823 = vsub.f32 %v2910, %v4751
    %v4824 = vsub.f32 %v2914, %v4754
    %v4825 = vsub.f32 %v2916, %v4754
    %v4826 = vsub.f32 %v2918, %v4757
    %v4827 = vsub.f32 %v2920, %v4757
    %v4828 = vsub.f32 %v2924, %v4760
    %v4829 = vsub.f32 %v2926, %v4760
    %v4830 = vsub.f32 %v2928, %v4763
    %v4831 = vsub.f32 %v2930, %v4763
    %v4832 = vsub.f32 %v2934, %v4766
    %v4833 = vsub.f32 %v2936, %v4766
    %v4834 = vsub.f32 %v2938, %v4769
    %v4835 = vsub.f32 %v2940, %v4769
    %v4836 = vsub.f32 %v2944, %v4772
    %v4837 = vsub.f32 %v2946, %v4772
    %v4838 = vsub.f32 %v2948, %v4775
    %v4839 = vsub.f32 %v2950, %v4775
    %v4840 = vmul.f32 %v4776, 1.442695
    %v4841 = vpow.pop %v4840
    %v4842 = vmul.f32 %v4777, 1.442695
    %v4843 = vpow.pop %v4842
    %v4844 = vmul.f32 %v4778, 1.442695
    %v4845 = vpow.pop %v4844
    %v4846 = vmul.f32 %v4779, 1.442695
    %v4847 = vpow.pop %v4846
    %v4848 = vmul.f32 %v4780, 1.442695
    %v4849 = vpow.pop %v4848
    %v4850 = vmul.f32 %v4781, 1.442695
    %v4851 = vpow.pop %v4850
    %v4852 = vmul.f32 %v4782, 1.442695
    %v4853 = vpow.pop %v4852
    %v4854 = vmul.f32 %v4783, 1.442695
    %v4855 = vpow.pop %v4854
    %v4856 = vmul.f32 %v4784, 1.442695
    %v4857 = vpow.pop %v4856
    %v4858 = vmul.f32 %v4785, 1.442695
    %v4859 = vpow.pop %v4858
    %v4860 = vmul.f32 %v4786, 1.442695
    %v4861 = vpow.pop %v4860
    %v4862 = vmul.f32 %v4787, 1.442695
    %v4863 = vpow.pop %v4862
    %v4864 = vmul.f32 %v4788, 1.442695
    %v4865 = vpow.pop %v4864
    %v4866 = vmul.f32 %v4789, 1.442695
    %v4867 = vpow.pop %v4866
    %v4868 = vmul.f32 %v4790, 1.442695
    %v4869 = vpow.pop %v4868
    %v4870 = vmul.f32 %v4791, 1.442695
    %v4871 = vpow.pop %v4870
    %v4872 = vmul.f32 %v4792, 1.442695
    %v4873 = vpow.pop %v4872
    %v4874 = vmul.f32 %v4793, 1.442695
    %v4875 = vpow.pop %v4874
    %v4876 = vmul.f32 %v4794, 1.442695
    %v4877 = vpow.pop %v4876
    %v4878 = vmul.f32 %v4795, 1.442695
    %v4879 = vpow.pop %v4878
    %v4880 = vmul.f32 %v4796, 1.442695
    %v4881 = vpow.pop %v4880
    %v4882 = vmul.f32 %v4797, 1.442695
    %v4883 = vpow.pop %v4882
    %v4884 = vmul.f32 %v4798, 1.442695
    %v4885 = vpow.pop %v4884
    %v4886 = vmul.f32 %v4799, 1.442695
    %v4887 = vpow.pop %v4886
    %v4888 = vmul.f32 %v4800, 1.442695
    %v4889 = vpow.pop %v4888
    %v4890 = vmul.f32 %v4801, 1.442695
    %v4891 = vpow.pop %v4890
    %v4892 = vmul.f32 %v4802, 1.442695
    %v4893 = vpow.pop %v4892
    %v4894 = vmul.f32 %v4803, 1.442695
    %v4895 = vpow.pop %v4894
    %v4896 = vmul.f32 %v4804, 1.442695
    %v4897 = vpow.pop %v4896
    %v4898 = vmul.f32 %v4805, 1.442695
    %v4899 = vpow.pop %v4898
    %v4900 = vmul.f32 %v4806, 1.442695
    %v4901 = vpow.pop %v4900
    %v4902 = vmul.f32 %v4807, 1.442695
    %v4903 = vpow.pop %v4902
    %v4904 = vmul.f32 %v4808, 1.442695
    %v4905 = vpow.pop %v4904
    %v4906 = vmul.f32 %v4809, 1.442695
    %v4907 = vpow.pop %v4906
    %v4908 = vmul.f32 %v4810, 1.442695
    %v4909 = vpow.pop %v4908
    %v4910 = vmul.f32 %v4811, 1.442695
    %v4911 = vpow.pop %v4910
    %v4912 = vmul.f32 %v4812, 1.442695
    %v4913 = vpow.pop %v4912
    %v4914 = vmul.f32 %v4813, 1.442695
    %v4915 = vpow.pop %v4914
    %v4916 = vmul.f32 %v4814, 1.442695
    %v4917 = vpow.pop %v4916
    %v4918 = vmul.f32 %v4815, 1.442695
    %v4919 = vpow.pop %v4918
    %v4920 = vmul.f32 %v4816, 1.442695
    %v4921 = vpow.pop %v4920
    %v4922 = vmul.f32 %v4817, 1.442695
    %v4923 = vpow.pop %v4922
    %v4924 = vmul.f32 %v4818, 1.442695
    %v4925 = vpow.pop %v4924
    %v4926 = vmul.f32 %v4819, 1.442695
    %v4927 = vpow.pop %v4926
    %v4928 = vmul.f32 %v4820, 1.442695
    %v4929 = vpow.pop %v4928
    %v4930 = vmul.f32 %v4821, 1.442695
    %v4931 = vpow.pop %v4930
    %v4932 = vmul.f32 %v4822, 1.442695
    %v4933 = vpow.pop %v4932
    %v4934 = vmul.f32 %v4823, 1.442695
    %v4935 = vpow.pop %v4934
    %v4936 = vmul.f32 %v4824, 1.442695
    %v4937 = vpow.pop %v4936
    %v4938 = vmul.f32 %v4825, 1.442695
    %v4939 = vpow.pop %v4938
    %v4940 = vmul.f32 %v4826, 1.442695
    %v4941 = vpow.pop %v4940
    %v4942 = vmul.f32 %v4827, 1.442695
    %v4943 = vpow.pop %v4942
    %v4944 = vmul.f32 %v4828, 1.442695
    %v4945 = vpow.pop %v4944
    %v4946 = vmul.f32 %v4829, 1.442695
    %v4947 = vpow.pop %v4946
    %v4948 = vmul.f32 %v4830, 1.442695
    %v4949 = vpow.pop %v4948
    %v4950 = vmul.f32 %v4831, 1.442695
    %v4951 = vpow.pop %v4950
    %v4952 = vmul.f32 %v4832, 1.442695
    %v4953 = vpow.pop %v4952
    %v4954 = vmul.f32 %v4833, 1.442695
    %v4955 = vpow.pop %v4954
    %v4956 = vmul.f32 %v4834, 1.442695
    %v4957 = vpow.pop %v4956
    %v4958 = vmul.f32 %v4835, 1.442695
    %v4959 = vpow.pop %v4958
    %v4960 = vmul.f32 %v4836, 1.442695
    %v4961 = vpow.pop %v4960
    %v4962 = vmul.f32 %v4837, 1.442695
    %v4963 = vpow.pop %v4962
    %v4964 = vmul.f32 %v4838, 1.442695
    %v4965 = vpow.pop %v4964
    %v4966 = vmul.f32 %v4839, 1.442695
    %v4967 = vpow.pop %v4966
    %v4968 = vadd.f32 %v4841, %v4843
    %4969 = vadd.xlane.f32.xlu0 %v4968
    %v4970 = vpop.xlane.xlu0 %4969
    %v4971 = vadd.f32 %v4845, %v4847
    %4972 = vadd.xlane.f32.xlu0 %v4971
    %v4973 = vpop.xlane.xlu0 %4972
    %v4974 = vadd.f32 %v4849, %v4851
    %4975 = vadd.xlane.f32.xlu0 %v4974
    %v4976 = vpop.xlane.xlu0 %4975
    %v4977 = vadd.f32 %v4853, %v4855
    %4978 = vadd.xlane.f32.xlu0 %v4977
    %v4979 = vpop.xlane.xlu0 %4978
    %v4980 = vadd.f32 %v4857, %v4859
    %4981 = vadd.xlane.f32.xlu0 %v4980
    %v4982 = vpop.xlane.xlu0 %4981
    %v4983 = vadd.f32 %v4861, %v4863
    %4984 = vadd.xlane.f32.xlu0 %v4983
    %v4985 = vpop.xlane.xlu0 %4984
    %v4986 = vadd.f32 %v4865, %v4867
    %4987 = vadd.xlane.f32.xlu0 %v4986
    %v4988 = vpop.xlane.xlu0 %4987
    %v4989 = vadd.f32 %v4869, %v4871
    %4990 = vadd.xlane.f32.xlu0 %v4989
    %v4991 = vpop.xlane.xlu0 %4990
    %v4992 = vadd.f32 %v4873, %v4875
    %4993 = vadd.xlane.f32.xlu0 %v4992
    %v4994 = vpop.xlane.xlu0 %4993
    %v4995 = vadd.f32 %v4877, %v4879
    %4996 = vadd.xlane.f32.xlu0 %v4995
    %v4997 = vpop.xlane.xlu0 %4996
    %v4998 = vadd.f32 %v4881, %v4883
    %4999 = vadd.xlane.f32.xlu0 %v4998
    %v5000 = vpop.xlane.xlu0 %4999
    %v5001 = vadd.f32 %v4885, %v4887
    %5002 = vadd.xlane.f32.xlu0 %v5001
    %v5003 = vpop.xlane.xlu0 %5002
    %v5004 = vadd.f32 %v4889, %v4891
    %5005 = vadd.xlane.f32.xlu0 %v5004
    %v5006 = vpop.xlane.xlu0 %5005
    %v5007 = vadd.f32 %v4893, %v4895
    %5008 = vadd.xlane.f32.xlu0 %v5007
    %v5009 = vpop.xlane.xlu0 %5008
    %v5010 = vadd.f32 %v4897, %v4899
    %5011 = vadd.xlane.f32.xlu0 %v5010
    %v5012 = vpop.xlane.xlu0 %5011
    %v5013 = vadd.f32 %v4901, %v4903
    %5014 = vadd.xlane.f32.xlu0 %v5013
    %v5015 = vpop.xlane.xlu0 %5014
    %v5016 = vadd.f32 %v4905, %v4907
    %5017 = vadd.xlane.f32.xlu0 %v5016
    %v5018 = vpop.xlane.xlu0 %5017
    %v5019 = vadd.f32 %v4909, %v4911
    %5020 = vadd.xlane.f32.xlu0 %v5019
    %v5021 = vpop.xlane.xlu0 %5020
    %v5022 = vadd.f32 %v4913, %v4915
    %5023 = vadd.xlane.f32.xlu0 %v5022
    %v5024 = vpop.xlane.xlu0 %5023
    %v5025 = vadd.f32 %v4917, %v4919
    %5026 = vadd.xlane.f32.xlu0 %v5025
    %v5027 = vpop.xlane.xlu0 %5026
    %v5028 = vadd.f32 %v4921, %v4923
    %5029 = vadd.xlane.f32.xlu0 %v5028
    %v5030 = vpop.xlane.xlu0 %5029
    %v5031 = vadd.f32 %v4925, %v4927
    %5032 = vadd.xlane.f32.xlu0 %v5031
    %v5033 = vpop.xlane.xlu0 %5032
    %v5034 = vadd.f32 %v4929, %v4931
    %5035 = vadd.xlane.f32.xlu0 %v5034
    %v5036 = vpop.xlane.xlu0 %5035
    %v5037 = vadd.f32 %v4933, %v4935
    %5038 = vadd.xlane.f32.xlu0 %v5037
    %v5039 = vpop.xlane.xlu0 %5038
    %v5040 = vadd.f32 %v4937, %v4939
    %5041 = vadd.xlane.f32.xlu0 %v5040
    %v5042 = vpop.xlane.xlu0 %5041
    %v5043 = vadd.f32 %v4941, %v4943
    %5044 = vadd.xlane.f32.xlu0 %v5043
    %v5045 = vpop.xlane.xlu0 %5044
    %v5046 = vadd.f32 %v4945, %v4947
    %5047 = vadd.xlane.f32.xlu0 %v5046
    %v5048 = vpop.xlane.xlu0 %5047
    %v5049 = vadd.f32 %v4949, %v4951
    %5050 = vadd.xlane.f32.xlu0 %v5049
    %v5051 = vpop.xlane.xlu0 %5050
    %v5052 = vadd.f32 %v4953, %v4955
    %5053 = vadd.xlane.f32.xlu0 %v5052
    %v5054 = vpop.xlane.xlu0 %5053
    %v5055 = vadd.f32 %v4957, %v4959
    %5056 = vadd.xlane.f32.xlu0 %v5055
    %v5057 = vpop.xlane.xlu0 %5056
    %v5058 = vadd.f32 %v4961, %v4963
    %5059 = vadd.xlane.f32.xlu0 %v5058
    %v5060 = vpop.xlane.xlu0 %5059
    %v5061 = vadd.f32 %v4965, %v4967
    %5062 = vadd.xlane.f32.xlu0 %v5061
    %v5063 = vpop.xlane.xlu0 %5062
    %v5064 = vrcp.pop %v4970
    %v5065 = vrcp.pop %v4973
    %v5066 = vrcp.pop %v4976
    %v5067 = vrcp.pop %v4979
    %v5068 = vrcp.pop %v4982
    %v5069 = vrcp.pop %v4985
    %v5070 = vrcp.pop %v4988
    %v5071 = vrcp.pop %v4991
    %v5072 = vrcp.pop %v4994
    %v5073 = vrcp.pop %v4997
    %v5074 = vrcp.pop %v5000
    %v5075 = vrcp.pop %v5003
    %v5076 = vrcp.pop %v5006
    %v5077 = vrcp.pop %v5009
    %v5078 = vrcp.pop %v5012
    %v5079 = vrcp.pop %v5015
    %v5080 = vrcp.pop %v5018
    %v5081 = vrcp.pop %v5021
    %v5082 = vrcp.pop %v5024
    %v5083 = vrcp.pop %v5027
    %v5084 = vrcp.pop %v5030
    %v5085 = vrcp.pop %v5033
    %v5086 = vrcp.pop %v5036
    %v5087 = vrcp.pop %v5039
    %v5088 = vrcp.pop %v5042
    %v5089 = vrcp.pop %v5045
    %v5090 = vrcp.pop %v5048
    %v5091 = vrcp.pop %v5051
    %v5092 = vrcp.pop %v5054
    %v5093 = vrcp.pop %v5057
    %v5094 = vrcp.pop %v5060
    %v5095 = vrcp.pop %v5063
    %v5096 = vmul.f32 %v4841, %v5064
    %v5097 = vmul.f32 %v4843, %v5064
    %v5098 = vmul.f32 %v4845, %v5065
    %v5099 = vmul.f32 %v4847, %v5065
    %v5100 = vmul.f32 %v4849, %v5066
    %v5101 = vmul.f32 %v4851, %v5066
    %v5102 = vmul.f32 %v4853, %v5067
    %v5103 = vmul.f32 %v4855, %v5067
    %v5104 = vmul.f32 %v4857, %v5068
    %v5105 = vmul.f32 %v4859, %v5068
    %v5106 = vmul.f32 %v4861, %v5069
    %v5107 = vmul.f32 %v4863, %v5069
    %v5108 = vmul.f32 %v4865, %v5070
    %v5109 = vmul.f32 %v4867, %v5070
    %v5110 = vmul.f32 %v4869, %v5071
    %v5111 = vmul.f32 %v4871, %v5071
    %v5112 = vmul.f32 %v4873, %v5072
    %v5113 = vmul.f32 %v4875, %v5072
    %v5114 = vmul.f32 %v4877, %v5073
    %v5115 = vmul.f32 %v4879, %v5073
    %v5116 = vmul.f32 %v4881, %v5074
    %v5117 = vmul.f32 %v4883, %v5074
    %v5118 = vmul.f32 %v4885, %v5075
    %v5119 = vmul.f32 %v4887, %v5075
    %v5120 = vmul.f32 %v4889, %v5076
    %v5121 = vmul.f32 %v4891, %v5076
    %v5122 = vmul.f32 %v4893, %v5077
    %v5123 = vmul.f32 %v4895, %v5077
    %v5124 = vmul.f32 %v4897, %v5078
    %v5125 = vmul.f32 %v4899, %v5078
    %v5126 = vmul.f32 %v4901, %v5079
    %v5127 = vmul.f32 %v4903, %v5079
    %v5128 = vmul.f32 %v4905, %v5080
    %v5129 = vmul.f32 %v4907, %v5080
    %v5130 = vmul.f32 %v4909, %v5081
    %v5131 = vmul.f32 %v4911, %v5081
    %v5132 = vmul.f32 %v4913, %v5082
    %v5133 = vmul.f32 %v4915, %v5082
    %v5134 = vmul.f32 %v4917, %v5083
    %v5135 = vmul.f32 %v4919, %v5083
    %v5136 = vmul.f32 %v4921, %v5084
    %v5137 = vmul.f32 %v4923, %v5084
    %v5138 = vmul.f32 %v4925, %v5085
    %v5139 = vmul.f32 %v4927, %v5085
    %v5140 = vmul.f32 %v4929, %v5086
    %v5141 = vmul.f32 %v4931, %v5086
    %v5142 = vmul.f32 %v4933, %v5087
    %v5143 = vmul.f32 %v4935, %v5087
    %v5144 = vmul.f32 %v4937, %v5088
    %v5145 = vmul.f32 %v4939, %v5088
    %v5146 = vmul.f32 %v4941, %v5089
    %v5147 = vmul.f32 %v4943, %v5089
    %v5148 = vmul.f32 %v4945, %v5090
    %v5149 = vmul.f32 %v4947, %v5090
    %v5150 = vmul.f32 %v4949, %v5091
    %v5151 = vmul.f32 %v4951, %v5091
    %v5152 = vmul.f32 %v4953, %v5092
    %v5153 = vmul.f32 %v4955, %v5092
    %v5154 = vmul.f32 %v4957, %v5093
    %v5155 = vmul.f32 %v4959, %v5093
    %v5156 = vmul.f32 %v4961, %v5094
    %v5157 = vmul.f32 %v4963, %v5094
    %v5158 = vmul.f32 %v4965, %v5095
    %v5159 = vmul.f32 %v4967, %v5095
    %v5160 = vmul.f32 %v5096, %v1274
    %v5161 = vmul.f32 %v5097, %v1306
    %v5162 = vmul.f32 %v5098, %v1275
    %v5163 = vmul.f32 %v5099, %v1307
    %v5164 = vmul.f32 %v5100, %v1276
    %v5165 = vmul.f32 %v5101, %v1308
    %v5166 = vmul.f32 %v5102, %v1277
    %v5167 = vmul.f32 %v5103, %v1309
    %v5168 = vmul.f32 %v5104, %v1278
    %v5169 = vmul.f32 %v5105, %v1310
    %v5170 = vmul.f32 %v5106, %v1279
    %v5171 = vmul.f32 %v5107, %v1311
    %v5172 = vmul.f32 %v5108, %v1280
    %v5173 = vmul.f32 %v5109, %v1312
    %v5174 = vmul.f32 %v5110, %v1281
    %v5175 = vmul.f32 %v5111, %v1313
    %v5176 = vmul.f32 %v5112, %v1282
    %v5177 = vmul.f32 %v5113, %v1314
    %v5178 = vmul.f32 %v5114, %v1283
    %v5179 = vmul.f32 %v5115, %v1315
    %v5180 = vmul.f32 %v5116, %v1284
    %v5181 = vmul.f32 %v5117, %v1316
    %v5182 = vmul.f32 %v5118, %v1285
    %v5183 = vmul.f32 %v5119, %v1317
    %v5184 = vmul.f32 %v5120, %v1286
    %v5185 = vmul.f32 %v5121, %v1318
    %v5186 = vmul.f32 %v5122, %v1287
    %v5187 = vmul.f32 %v5123, %v1319
    %v5188 = vmul.f32 %v5124, %v1288
    %v5189 = vmul.f32 %v5125, %v1320
    %v5190 = vmul.f32 %v5126, %v1289
    %v5191 = vmul.f32 %v5127, %v1321
    %v5192 = vmul.f32 %v5128, %v1290
    %v5193 = vmul.f32 %v5129, %v1322
    %v5194 = vmul.f32 %v5130, %v1291
    %v5195 = vmul.f32 %v5131, %v1323
    %v5196 = vmul.f32 %v5132, %v1292
    %v5197 = vmul.f32 %v5133, %v1324
    %v5198 = vmul.f32 %v5134, %v1293
    %v5199 = vmul.f32 %v5135, %v1325
    %v5200 = vmul.f32 %v5136, %v1294
    %v5201 = vmul.f32 %v5137, %v1326
    %v5202 = vmul.f32 %v5138, %v1295
    %v5203 = vmul.f32 %v5139, %v1327
    %v5204 = vmul.f32 %v5140, %v1296
    %v5205 = vmul.f32 %v5141, %v1328
    %v5206 = vmul.f32 %v5142, %v1297
    %v5207 = vmul.f32 %v5143, %v1329
    %v5208 = vmul.f32 %v5144, %v1298
    %v5209 = vmul.f32 %v5145, %v1330
    %v5210 = vmul.f32 %v5146, %v1299
    %v5211 = vmul.f32 %v5147, %v1331
    %v5212 = vmul.f32 %v5148, %v1300
    %v5213 = vmul.f32 %v5149, %v1332
    %v5214 = vmul.f32 %v5150, %v1301
    %v5215 = vmul.f32 %v5151, %v1333
    %v5216 = vmul.f32 %v5152, %v1302
    %v5217 = vmul.f32 %v5153, %v1334
    %v5218 = vmul.f32 %v5154, %v1303
    %v5219 = vmul.f32 %v5155, %v1335
    %v5220 = vmul.f32 %v5156, %v1304
    %v5221 = vmul.f32 %v5157, %v1336
    %v5222 = vmul.f32 %v5158, %v1305
    %v5223 = vmul.f32 %v5159, %v1337
    %v5224 = vpack.c.bf16 %v5162, %v5160
    %v5225 = vpack.c.bf16 %v5163, %v5161
    %v5226 = vpack.c.bf16 %v5166, %v5164
    %v5227 = vpack.c.bf16 %v5167, %v5165
    %v5228 = vpack.c.bf16 %v5170, %v5168
    %v5229 = vpack.c.bf16 %v5171, %v5169
    %v5230 = vpack.c.bf16 %v5174, %v5172
    %v5231 = vpack.c.bf16 %v5175, %v5173
    %v5232 = vpack.c.bf16 %v5178, %v5176
    %v5233 = vpack.c.bf16 %v5179, %v5177
    %v5234 = vpack.c.bf16 %v5182, %v5180
    %v5235 = vpack.c.bf16 %v5183, %v5181
    %v5236 = vpack.c.bf16 %v5186, %v5184
    %v5237 = vpack.c.bf16 %v5187, %v5185
    %v5238 = vpack.c.bf16 %v5190, %v5188
    %v5239 = vpack.c.bf16 %v5191, %v5189
    %v5240 = vpack.c.bf16 %v5194, %v5192
    %v5241 = vpack.c.bf16 %v5195, %v5193
    %v5242 = vpack.c.bf16 %v5198, %v5196
    %v5243 = vpack.c.bf16 %v5199, %v5197
    %v5244 = vpack.c.bf16 %v5202, %v5200
    %v5245 = vpack.c.bf16 %v5203, %v5201
    %v5246 = vpack.c.bf16 %v5206, %v5204
    %v5247 = vpack.c.bf16 %v5207, %v5205
    %v5248 = vpack.c.bf16 %v5210, %v5208
    %v5249 = vpack.c.bf16 %v5211, %v5209
    %v5250 = vpack.c.bf16 %v5214, %v5212
    %v5251 = vpack.c.bf16 %v5215, %v5213
    %v5252 = vpack.c.bf16 %v5218, %v5216
    %v5253 = vpack.c.bf16 %v5219, %v5217
    %v5254 = vpack.c.bf16 %v5222, %v5220
    %v5255 = vpack.c.bf16 %v5223, %v5221
    %v5256 = vld [vmem:[#allocation6] sm:$0xff]
    %v5257 = vld [vmem:[#allocation6 + $0x8] sm:$0xff]
    %v5258 = vld [vmem:[#allocation6 + $0x10] sm:$0xff]
    %v5259 = vld [vmem:[#allocation6 + $0x18] sm:$0xff]
    %v5260 = vld [vmem:[#allocation6 + $0x20] sm:$0xff]
    %v5261 = vld [vmem:[#allocation6 + $0x28] sm:$0xff]
    %v5262 = vld [vmem:[#allocation6 + $0x30] sm:$0xff]
    %v5263 = vld [vmem:[#allocation6 + $0x38] sm:$0xff]
    %v5264 = vld [vmem:[#allocation6 + $0x40] sm:$0xff]
    %v5265 = vld [vmem:[#allocation6 + $0x48] sm:$0xff]
    %v5266 = vld [vmem:[#allocation6 + $0x50] sm:$0xff]
    %v5267 = vld [vmem:[#allocation6 + $0x58] sm:$0xff]
    %v5268 = vld [vmem:[#allocation6 + $0x60] sm:$0xff]
    %v5269 = vld [vmem:[#allocation6 + $0x68] sm:$0xff]
    %v5270 = vld [vmem:[#allocation6 + $0x70] sm:$0xff]
    %v5271 = vld [vmem:[#allocation6 + $0x78] sm:$0xff]
    %v5272 = vld [vmem:[#allocation6 + $0x80] sm:$0xff]
    %v5273 = vld [vmem:[#allocation6 + $0x88] sm:$0xff]
    %v5274 = vld [vmem:[#allocation6 + $0x90] sm:$0xff]
    %v5275 = vld [vmem:[#allocation6 + $0x98] sm:$0xff]
    %v5276 = vld [vmem:[#allocation6 + $0xa0] sm:$0xff]
    %v5277 = vld [vmem:[#allocation6 + $0xa8] sm:$0xff]
    %v5278 = vld [vmem:[#allocation6 + $0xb0] sm:$0xff]
    %v5279 = vld [vmem:[#allocation6 + $0xb8] sm:$0xff]
    %v5280 = vld [vmem:[#allocation6 + $0xc0] sm:$0xff]
    %v5281 = vld [vmem:[#allocation6 + $0xc8] sm:$0xff]
    %v5282 = vld [vmem:[#allocation6 + $0xd0] sm:$0xff]
    %v5283 = vld [vmem:[#allocation6 + $0xd8] sm:$0xff]
    %v5284 = vld [vmem:[#allocation6 + $0xe0] sm:$0xff]
    %v5285 = vld [vmem:[#allocation6 + $0xe8] sm:$0xff]
    %v5286 = vld [vmem:[#allocation6 + $0xf0] sm:$0xff]
    %v5287 = vld [vmem:[#allocation6 + $0xf8] sm:$0xff]
    %v5288 = vld [vmem:[#allocation6 + $0x100] sm:$0xff]
    %v5289 = vld [vmem:[#allocation6 + $0x108] sm:$0xff]
    %v5290 = vld [vmem:[#allocation6 + $0x110] sm:$0xff]
    %v5291 = vld [vmem:[#allocation6 + $0x118] sm:$0xff]
    %v5292 = vld [vmem:[#allocation6 + $0x120] sm:$0xff]
    %v5293 = vld [vmem:[#allocation6 + $0x128] sm:$0xff]
    %v5294 = vld [vmem:[#allocation6 + $0x130] sm:$0xff]
    %v5295 = vld [vmem:[#allocation6 + $0x138] sm:$0xff]
    %v5296 = vld [vmem:[#allocation6 + $0x140] sm:$0xff]
    %v5297 = vld [vmem:[#allocation6 + $0x148] sm:$0xff]
    %v5298 = vld [vmem:[#allocation6 + $0x150] sm:$0xff]
    %v5299 = vld [vmem:[#allocation6 + $0x158] sm:$0xff]
    %v5300 = vld [vmem:[#allocation6 + $0x160] sm:$0xff]
    %v5301 = vld [vmem:[#allocation6 + $0x168] sm:$0xff]
    %v5302 = vld [vmem:[#allocation6 + $0x170] sm:$0xff]
    %v5303 = vld [vmem:[#allocation6 + $0x178] sm:$0xff]
    %v5304 = vld [vmem:[#allocation6 + $0x180] sm:$0xff]
    %v5305 = vld [vmem:[#allocation6 + $0x188] sm:$0xff]
    %v5306 = vld [vmem:[#allocation6 + $0x190] sm:$0xff]
    %v5307 = vld [vmem:[#allocation6 + $0x198] sm:$0xff]
    %v5308 = vld [vmem:[#allocation6 + $0x1a0] sm:$0xff]
    %v5309 = vld [vmem:[#allocation6 + $0x1a8] sm:$0xff]
    %v5310 = vld [vmem:[#allocation6 + $0x1b0] sm:$0xff]
    %v5311 = vld [vmem:[#allocation6 + $0x1b8] sm:$0xff]
    %v5312 = vld [vmem:[#allocation6 + $0x1c0] sm:$0xff]
    %v5313 = vld [vmem:[#allocation6 + $0x1c8] sm:$0xff]
    %v5314 = vld [vmem:[#allocation6 + $0x1d0] sm:$0xff]
    %v5315 = vld [vmem:[#allocation6 + $0x1d8] sm:$0xff]
    %v5316 = vld [vmem:[#allocation6 + $0x1e0] sm:$0xff]
    %v5317 = vld [vmem:[#allocation6 + $0x1e8] sm:$0xff]
    %v5318 = vld [vmem:[#allocation6 + $0x1f0] sm:$0xff]
    %v5319 = vld [vmem:[#allocation6 + $0x1f8] sm:$0xff]
    %v5320 = vld [vmem:[#allocation6 + $0x200] sm:$0xff]
    %v5321 = vld [vmem:[#allocation6 + $0x208] sm:$0xff]
    %v5322 = vld [vmem:[#allocation6 + $0x210] sm:$0xff]
    %v5323 = vld [vmem:[#allocation6 + $0x218] sm:$0xff]
    %v5324 = vld [vmem:[#allocation6 + $0x220] sm:$0xff]
    %v5325 = vld [vmem:[#allocation6 + $0x228] sm:$0xff]
    %v5326 = vld [vmem:[#allocation6 + $0x230] sm:$0xff]
    %v5327 = vld [vmem:[#allocation6 + $0x238] sm:$0xff]
    %v5328 = vld [vmem:[#allocation6 + $0x240] sm:$0xff]
    %v5329 = vld [vmem:[#allocation6 + $0x248] sm:$0xff]
    %v5330 = vld [vmem:[#allocation6 + $0x250] sm:$0xff]
    %v5331 = vld [vmem:[#allocation6 + $0x258] sm:$0xff]
    %v5332 = vld [vmem:[#allocation6 + $0x260] sm:$0xff]
    %v5333 = vld [vmem:[#allocation6 + $0x268] sm:$0xff]
    %v5334 = vld [vmem:[#allocation6 + $0x270] sm:$0xff]
    %v5335 = vld [vmem:[#allocation6 + $0x278] sm:$0xff]
    %v5336 = vld [vmem:[#allocation6 + $0x280] sm:$0xff]
    %v5337 = vld [vmem:[#allocation6 + $0x288] sm:$0xff]
    %v5338 = vld [vmem:[#allocation6 + $0x290] sm:$0xff]
    %v5339 = vld [vmem:[#allocation6 + $0x298] sm:$0xff]
    %v5340 = vld [vmem:[#allocation6 + $0x2a0] sm:$0xff]
    %v5341 = vld [vmem:[#allocation6 + $0x2a8] sm:$0xff]
    %v5342 = vld [vmem:[#allocation6 + $0x2b0] sm:$0xff]
    %v5343 = vld [vmem:[#allocation6 + $0x2b8] sm:$0xff]
    %v5344 = vld [vmem:[#allocation6 + $0x2c0] sm:$0xff]
    %v5345 = vld [vmem:[#allocation6 + $0x2c8] sm:$0xff]
    %v5346 = vld [vmem:[#allocation6 + $0x2d0] sm:$0xff]
    %v5347 = vld [vmem:[#allocation6 + $0x2d8] sm:$0xff]
    %v5348 = vld [vmem:[#allocation6 + $0x2e0] sm:$0xff]
    %v5349 = vld [vmem:[#allocation6 + $0x2e8] sm:$0xff]
    %v5350 = vld [vmem:[#allocation6 + $0x2f0] sm:$0xff]
    %v5351 = vld [vmem:[#allocation6 + $0x2f8] sm:$0xff]
    %v5352 = vld [vmem:[#allocation6 + $0x300] sm:$0xff]
    %v5353 = vld [vmem:[#allocation6 + $0x308] sm:$0xff]
    %v5354 = vld [vmem:[#allocation6 + $0x310] sm:$0xff]
    %v5355 = vld [vmem:[#allocation6 + $0x318] sm:$0xff]
    %v5356 = vld [vmem:[#allocation6 + $0x320] sm:$0xff]
    %v5357 = vld [vmem:[#allocation6 + $0x328] sm:$0xff]
    %v5358 = vld [vmem:[#allocation6 + $0x330] sm:$0xff]
    %v5359 = vld [vmem:[#allocation6 + $0x338] sm:$0xff]
    %v5360 = vld [vmem:[#allocation6 + $0x340] sm:$0xff]
    %v5361 = vld [vmem:[#allocation6 + $0x348] sm:$0xff]
    %v5362 = vld [vmem:[#allocation6 + $0x350] sm:$0xff]
    %v5363 = vld [vmem:[#allocation6 + $0x358] sm:$0xff]
    %v5364 = vld [vmem:[#allocation6 + $0x360] sm:$0xff]
    %v5365 = vld [vmem:[#allocation6 + $0x368] sm:$0xff]
    %v5366 = vld [vmem:[#allocation6 + $0x370] sm:$0xff]
    %v5367 = vld [vmem:[#allocation6 + $0x378] sm:$0xff]
    %v5368 = vld [vmem:[#allocation6 + $0x380] sm:$0xff]
    %v5369 = vld [vmem:[#allocation6 + $0x388] sm:$0xff]
    %v5370 = vld [vmem:[#allocation6 + $0x390] sm:$0xff]
    %v5371 = vld [vmem:[#allocation6 + $0x398] sm:$0xff]
    %v5372 = vld [vmem:[#allocation6 + $0x3a0] sm:$0xff]
    %v5373 = vld [vmem:[#allocation6 + $0x3a8] sm:$0xff]
    %v5374 = vld [vmem:[#allocation6 + $0x3b0] sm:$0xff]
    %v5375 = vld [vmem:[#allocation6 + $0x3b8] sm:$0xff]
    %v5376 = vld [vmem:[#allocation6 + $0x3c0] sm:$0xff]
    %v5377 = vld [vmem:[#allocation6 + $0x3c8] sm:$0xff]
    %v5378 = vld [vmem:[#allocation6 + $0x3d0] sm:$0xff]
    %v5379 = vld [vmem:[#allocation6 + $0x3d8] sm:$0xff]
    %v5380 = vld [vmem:[#allocation6 + $0x3e0] sm:$0xff]
    %v5381 = vld [vmem:[#allocation6 + $0x3e8] sm:$0xff]
    %v5382 = vld [vmem:[#allocation6 + $0x3f0] sm:$0xff]
    %v5383 = vld [vmem:[#allocation6 + $0x3f8] sm:$0xff]
    %v5384 = vld [vmem:[%s8] sm:$0x3]
    %v5386 = vlaneseq
    %v5387 = vshrl.u32 %v5386, 7
    %v5388 = vsub.s32 0, %v5387
    %v5389 = vrot.slane %v5384, %v5388
    %v5390 = vlaneseq
    %v5391 = vshrl.u32 %v5390, 7
    %v5392 = vsub.s32 1, %v5391
    %v5393 = vrot.slane %v5384, %v5392
    %v5524 = vunpack.c.l.b16 %v5256
    %v5525 = vunpack.c.h.b16 %v5256
    %v5526 = vunpack.c.l.b16 %v5257
    %v5527 = vunpack.c.h.b16 %v5257
    %v5528 = vunpack.c.l.b16 %v5258
    %v5529 = vunpack.c.h.b16 %v5258
    %v5530 = vunpack.c.l.b16 %v5259
    %v5531 = vunpack.c.h.b16 %v5259
    %v5532 = vunpack.c.l.b16 %v5260
    %v5533 = vunpack.c.h.b16 %v5260
    %v5534 = vunpack.c.l.b16 %v5261
    %v5535 = vunpack.c.h.b16 %v5261
    %v5536 = vunpack.c.l.b16 %v5262
    %v5537 = vunpack.c.h.b16 %v5262
    %v5538 = vunpack.c.l.b16 %v5263
    %v5539 = vunpack.c.h.b16 %v5263
    %v5540 = vunpack.c.l.b16 %v5264
    %v5541 = vunpack.c.h.b16 %v5264
    %v5542 = vunpack.c.l.b16 %v5265
    %v5543 = vunpack.c.h.b16 %v5265
    %v5544 = vunpack.c.l.b16 %v5266
    %v5545 = vunpack.c.h.b16 %v5266
    %v5546 = vunpack.c.l.b16 %v5267
    %v5547 = vunpack.c.h.b16 %v5267
    %v5548 = vunpack.c.l.b16 %v5268
    %v5549 = vunpack.c.h.b16 %v5268
    %v5550 = vunpack.c.l.b16 %v5269
    %v5551 = vunpack.c.h.b16 %v5269
    %v5552 = vunpack.c.l.b16 %v5270
    %v5553 = vunpack.c.h.b16 %v5270
    %v5554 = vunpack.c.l.b16 %v5271
    %v5555 = vunpack.c.h.b16 %v5271
    %v5556 = vunpack.c.l.b16 %v5272
    %v5557 = vunpack.c.h.b16 %v5272
    %v5558 = vunpack.c.l.b16 %v5273
    %v5559 = vunpack.c.h.b16 %v5273
    %v5560 = vunpack.c.l.b16 %v5274
    %v5561 = vunpack.c.h.b16 %v5274
    %v5562 = vunpack.c.l.b16 %v5275
    %v5563 = vunpack.c.h.b16 %v5275
    %v5564 = vunpack.c.l.b16 %v5276
    %v5565 = vunpack.c.h.b16 %v5276
    %v5566 = vunpack.c.l.b16 %v5277
    %v5567 = vunpack.c.h.b16 %v5277
    %v5568 = vunpack.c.l.b16 %v5278
    %v5569 = vunpack.c.h.b16 %v5278
    %v5570 = vunpack.c.l.b16 %v5279
    %v5571 = vunpack.c.h.b16 %v5279
    %v5572 = vunpack.c.l.b16 %v5280
    %v5573 = vunpack.c.h.b16 %v5280
    %v5574 = vunpack.c.l.b16 %v5281
    %v5575 = vunpack.c.h.b16 %v5281
    %v5576 = vunpack.c.l.b16 %v5282
    %v5577 = vunpack.c.h.b16 %v5282
    %v5578 = vunpack.c.l.b16 %v5283
    %v5579 = vunpack.c.h.b16 %v5283
    %v5580 = vunpack.c.l.b16 %v5284
    %v5581 = vunpack.c.h.b16 %v5284
    %v5582 = vunpack.c.l.b16 %v5285
    %v5583 = vunpack.c.h.b16 %v5285
    %v5584 = vunpack.c.l.b16 %v5286
    %v5585 = vunpack.c.h.b16 %v5286
    %v5586 = vunpack.c.l.b16 %v5287
    %v5587 = vunpack.c.h.b16 %v5287
    %v5588 = vunpack.c.l.b16 %v5288
    %v5589 = vunpack.c.h.b16 %v5288
    %v5590 = vunpack.c.l.b16 %v5289
    %v5591 = vunpack.c.h.b16 %v5289
    %v5592 = vunpack.c.l.b16 %v5290
    %v5593 = vunpack.c.h.b16 %v5290
    %v5594 = vunpack.c.l.b16 %v5291
    %v5595 = vunpack.c.h.b16 %v5291
    %v5596 = vunpack.c.l.b16 %v5292
    %v5597 = vunpack.c.h.b16 %v5292
    %v5598 = vunpack.c.l.b16 %v5293
    %v5599 = vunpack.c.h.b16 %v5293
    %v5600 = vunpack.c.l.b16 %v5294
    %v5601 = vunpack.c.h.b16 %v5294
    %v5602 = vunpack.c.l.b16 %v5295
    %v5603 = vunpack.c.h.b16 %v5295
    %v5604 = vunpack.c.l.b16 %v5296
    %v5605 = vunpack.c.h.b16 %v5296
    %v5606 = vunpack.c.l.b16 %v5297
    %v5607 = vunpack.c.h.b16 %v5297
    %v5608 = vunpack.c.l.b16 %v5298
    %v5609 = vunpack.c.h.b16 %v5298
    %v5610 = vunpack.c.l.b16 %v5299
    %v5611 = vunpack.c.h.b16 %v5299
    %v5612 = vunpack.c.l.b16 %v5300
    %v5613 = vunpack.c.h.b16 %v5300
    %v5614 = vunpack.c.l.b16 %v5301
    %v5615 = vunpack.c.h.b16 %v5301
    %v5616 = vunpack.c.l.b16 %v5302
    %v5617 = vunpack.c.h.b16 %v5302
    %v5618 = vunpack.c.l.b16 %v5303
    %v5619 = vunpack.c.h.b16 %v5303
    %v5620 = vunpack.c.l.b16 %v5304
    %v5621 = vunpack.c.h.b16 %v5304
    %v5622 = vunpack.c.l.b16 %v5305
    %v5623 = vunpack.c.h.b16 %v5305
    %v5624 = vunpack.c.l.b16 %v5306
    %v5625 = vunpack.c.h.b16 %v5306
    %v5626 = vunpack.c.l.b16 %v5307
    %v5627 = vunpack.c.h.b16 %v5307
    %v5628 = vunpack.c.l.b16 %v5308
    %v5629 = vunpack.c.h.b16 %v5308
    %v5630 = vunpack.c.l.b16 %v5309
    %v5631 = vunpack.c.h.b16 %v5309
    %v5632 = vunpack.c.l.b16 %v5310
    %v5633 = vunpack.c.h.b16 %v5310
    %v5634 = vunpack.c.l.b16 %v5311
    %v5635 = vunpack.c.h.b16 %v5311
    %v5636 = vunpack.c.l.b16 %v5312
    %v5637 = vunpack.c.h.b16 %v5312
    %v5638 = vunpack.c.l.b16 %v5313
    %v5639 = vunpack.c.h.b16 %v5313
    %v5640 = vunpack.c.l.b16 %v5314
    %v5641 = vunpack.c.h.b16 %v5314
    %v5642 = vunpack.c.l.b16 %v5315
    %v5643 = vunpack.c.h.b16 %v5315
    %v5644 = vunpack.c.l.b16 %v5316
    %v5645 = vunpack.c.h.b16 %v5316
    %v5646 = vunpack.c.l.b16 %v5317
    %v5647 = vunpack.c.h.b16 %v5317
    %v5648 = vunpack.c.l.b16 %v5318
    %v5649 = vunpack.c.h.b16 %v5318
    %v5650 = vunpack.c.l.b16 %v5319
    %v5651 = vunpack.c.h.b16 %v5319
    %v5652 = vunpack.c.l.b16 %v5320
    %v5653 = vunpack.c.h.b16 %v5320
    %v5654 = vunpack.c.l.b16 %v5321
    %v5655 = vunpack.c.h.b16 %v5321
    %v5656 = vunpack.c.l.b16 %v5322
    %v5657 = vunpack.c.h.b16 %v5322
    %v5658 = vunpack.c.l.b16 %v5323
    %v5659 = vunpack.c.h.b16 %v5323
    %v5660 = vunpack.c.l.b16 %v5324
    %v5661 = vunpack.c.h.b16 %v5324
    %v5662 = vunpack.c.l.b16 %v5325
    %v5663 = vunpack.c.h.b16 %v5325
    %v5664 = vunpack.c.l.b16 %v5326
    %v5665 = vunpack.c.h.b16 %v5326
    %v5666 = vunpack.c.l.b16 %v5327
    %v5667 = vunpack.c.h.b16 %v5327
    %v5668 = vunpack.c.l.b16 %v5328
    %v5669 = vunpack.c.h.b16 %v5328
    %v5670 = vunpack.c.l.b16 %v5329
    %v5671 = vunpack.c.h.b16 %v5329
    %v5672 = vunpack.c.l.b16 %v5330
    %v5673 = vunpack.c.h.b16 %v5330
    %v5674 = vunpack.c.l.b16 %v5331
    %v5675 = vunpack.c.h.b16 %v5331
    %v5676 = vunpack.c.l.b16 %v5332
    %v5677 = vunpack.c.h.b16 %v5332
    %v5678 = vunpack.c.l.b16 %v5333
    %v5679 = vunpack.c.h.b16 %v5333
    %v5680 = vunpack.c.l.b16 %v5334
    %v5681 = vunpack.c.h.b16 %v5334
    %v5682 = vunpack.c.l.b16 %v5335
    %v5683 = vunpack.c.h.b16 %v5335
    %v5684 = vunpack.c.l.b16 %v5336
    %v5685 = vunpack.c.h.b16 %v5336
    %v5686 = vunpack.c.l.b16 %v5337
    %v5687 = vunpack.c.h.b16 %v5337
    %v5688 = vunpack.c.l.b16 %v5338
    %v5689 = vunpack.c.h.b16 %v5338
    %v5690 = vunpack.c.l.b16 %v5339
    %v5691 = vunpack.c.h.b16 %v5339
    %v5692 = vunpack.c.l.b16 %v5340
    %v5693 = vunpack.c.h.b16 %v5340
    %v5694 = vunpack.c.l.b16 %v5341
    %v5695 = vunpack.c.h.b16 %v5341
    %v5696 = vunpack.c.l.b16 %v5342
    %v5697 = vunpack.c.h.b16 %v5342
    %v5698 = vunpack.c.l.b16 %v5343
    %v5699 = vunpack.c.h.b16 %v5343
    %v5700 = vunpack.c.l.b16 %v5344
    %v5701 = vunpack.c.h.b16 %v5344
    %v5702 = vunpack.c.l.b16 %v5345
    %v5703 = vunpack.c.h.b16 %v5345
    %v5704 = vunpack.c.l.b16 %v5346
    %v5705 = vunpack.c.h.b16 %v5346
    %v5706 = vunpack.c.l.b16 %v5347
    %v5707 = vunpack.c.h.b16 %v5347
    %v5708 = vunpack.c.l.b16 %v5348
    %v5709 = vunpack.c.h.b16 %v5348
    %v5710 = vunpack.c.l.b16 %v5349
    %v5711 = vunpack.c.h.b16 %v5349
    %v5712 = vunpack.c.l.b16 %v5350
    %v5713 = vunpack.c.h.b16 %v5350
    %v5714 = vunpack.c.l.b16 %v5351
    %v5715 = vunpack.c.h.b16 %v5351
    %v5716 = vunpack.c.l.b16 %v5352
    %v5717 = vunpack.c.h.b16 %v5352
    %v5718 = vunpack.c.l.b16 %v5353
    %v5719 = vunpack.c.h.b16 %v5353
    %v5720 = vunpack.c.l.b16 %v5354
    %v5721 = vunpack.c.h.b16 %v5354
    %v5722 = vunpack.c.l.b16 %v5355
    %v5723 = vunpack.c.h.b16 %v5355
    %v5724 = vunpack.c.l.b16 %v5356
    %v5725 = vunpack.c.h.b16 %v5356
    %v5726 = vunpack.c.l.b16 %v5357
    %v5727 = vunpack.c.h.b16 %v5357
    %v5728 = vunpack.c.l.b16 %v5358
    %v5729 = vunpack.c.h.b16 %v5358
    %v5730 = vunpack.c.l.b16 %v5359
    %v5731 = vunpack.c.h.b16 %v5359
    %v5732 = vunpack.c.l.b16 %v5360
    %v5733 = vunpack.c.h.b16 %v5360
    %v5734 = vunpack.c.l.b16 %v5361
    %v5735 = vunpack.c.h.b16 %v5361
    %v5736 = vunpack.c.l.b16 %v5362
    %v5737 = vunpack.c.h.b16 %v5362
    %v5738 = vunpack.c.l.b16 %v5363
    %v5739 = vunpack.c.h.b16 %v5363
    %v5740 = vunpack.c.l.b16 %v5364
    %v5741 = vunpack.c.h.b16 %v5364
    %v5742 = vunpack.c.l.b16 %v5365
    %v5743 = vunpack.c.h.b16 %v5365
    %v5744 = vunpack.c.l.b16 %v5366
    %v5745 = vunpack.c.h.b16 %v5366
    %v5746 = vunpack.c.l.b16 %v5367
    %v5747 = vunpack.c.h.b16 %v5367
    %v5748 = vunpack.c.l.b16 %v5368
    %v5749 = vunpack.c.h.b16 %v5368
    %v5750 = vunpack.c.l.b16 %v5369
    %v5751 = vunpack.c.h.b16 %v5369
    %v5752 = vunpack.c.l.b16 %v5370
    %v5753 = vunpack.c.h.b16 %v5370
    %v5754 = vunpack.c.l.b16 %v5371
    %v5755 = vunpack.c.h.b16 %v5371
    %v5756 = vunpack.c.l.b16 %v5372
    %v5757 = vunpack.c.h.b16 %v5372
    %v5758 = vunpack.c.l.b16 %v5373
    %v5759 = vunpack.c.h.b16 %v5373
    %v5760 = vunpack.c.l.b16 %v5374
    %v5761 = vunpack.c.h.b16 %v5374
    %v5762 = vunpack.c.l.b16 %v5375
    %v5763 = vunpack.c.h.b16 %v5375
    %v5764 = vunpack.c.l.b16 %v5376
    %v5765 = vunpack.c.h.b16 %v5376
    %v5766 = vunpack.c.l.b16 %v5377
    %v5767 = vunpack.c.h.b16 %v5377
    %v5768 = vunpack.c.l.b16 %v5378
    %v5769 = vunpack.c.h.b16 %v5378
    %v5770 = vunpack.c.l.b16 %v5379
    %v5771 = vunpack.c.h.b16 %v5379
    %v5772 = vunpack.c.l.b16 %v5380
    %v5773 = vunpack.c.h.b16 %v5380
    %v5774 = vunpack.c.l.b16 %v5381
    %v5775 = vunpack.c.h.b16 %v5381
    %v5776 = vunpack.c.l.b16 %v5382
    %v5777 = vunpack.c.h.b16 %v5382
    %v5778 = vunpack.c.l.b16 %v5383
    %v5779 = vunpack.c.h.b16 %v5383
    %v5780 = vpack.c.b16 %v5526, %v5524
    %v5781 = vpack.c.b16 %v5527, %v5525
    %v5782 = vpack.c.b16 %v5530, %v5528
    %v5783 = vpack.c.b16 %v5531, %v5529
    %v5784 = vpack.c.b16 %v5534, %v5532
    %v5785 = vpack.c.b16 %v5535, %v5533
    %v5786 = vpack.c.b16 %v5538, %v5536
    %v5787 = vpack.c.b16 %v5539, %v5537
    %v5788 = vpack.c.b16 %v5542, %v5540
    %v5789 = vpack.c.b16 %v5543, %v5541
    %v5790 = vpack.c.b16 %v5546, %v5544
    %v5791 = vpack.c.b16 %v5547, %v5545
    %v5792 = vpack.c.b16 %v5550, %v5548
    %v5793 = vpack.c.b16 %v5551, %v5549
    %v5794 = vpack.c.b16 %v5554, %v5552
    %v5795 = vpack.c.b16 %v5555, %v5553
    %v5796 = vpack.c.b16 %v5558, %v5556
    %v5797 = vpack.c.b16 %v5559, %v5557
    %v5798 = vpack.c.b16 %v5562, %v5560
    %v5799 = vpack.c.b16 %v5563, %v5561
    %v5800 = vpack.c.b16 %v5566, %v5564
    %v5801 = vpack.c.b16 %v5567, %v5565
    %v5802 = vpack.c.b16 %v5570, %v5568
    %v5803 = vpack.c.b16 %v5571, %v5569
    %v5804 = vpack.c.b16 %v5574, %v5572
    %v5805 = vpack.c.b16 %v5575, %v5573
    %v5806 = vpack.c.b16 %v5578, %v5576
    %v5807 = vpack.c.b16 %v5579, %v5577
    %v5808 = vpack.c.b16 %v5582, %v5580
    %v5809 = vpack.c.b16 %v5583, %v5581
    %v5810 = vpack.c.b16 %v5586, %v5584
    %v5811 = vpack.c.b16 %v5587, %v5585
    %v5812 = vpack.c.b16 %v5590, %v5588
    %v5813 = vpack.c.b16 %v5591, %v5589
    %v5814 = vpack.c.b16 %v5594, %v5592
    %v5815 = vpack.c.b16 %v5595, %v5593
    %v5816 = vpack.c.b16 %v5598, %v5596
    %v5817 = vpack.c.b16 %v5599, %v5597
    %v5818 = vpack.c.b16 %v5602, %v5600
    %v5819 = vpack.c.b16 %v5603, %v5601
    %v5820 = vpack.c.b16 %v5606, %v5604
    %v5821 = vpack.c.b16 %v5607, %v5605
    %v5822 = vpack.c.b16 %v5610, %v5608
    %v5823 = vpack.c.b16 %v5611, %v5609
    %v5824 = vpack.c.b16 %v5614, %v5612
    %v5825 = vpack.c.b16 %v5615, %v5613
    %v5826 = vpack.c.b16 %v5618, %v5616
    %v5827 = vpack.c.b16 %v5619, %v5617
    %v5828 = vpack.c.b16 %v5622, %v5620
    %v5829 = vpack.c.b16 %v5623, %v5621
    %v5830 = vpack.c.b16 %v5626, %v5624
    %v5831 = vpack.c.b16 %v5627, %v5625
    %v5832 = vpack.c.b16 %v5630, %v5628
    %v5833 = vpack.c.b16 %v5631, %v5629
    %v5834 = vpack.c.b16 %v5634, %v5632
    %v5835 = vpack.c.b16 %v5635, %v5633
    %v5836 = vpack.c.b16 %v5638, %v5636
    %v5837 = vpack.c.b16 %v5639, %v5637
    %v5838 = vpack.c.b16 %v5642, %v5640
    %v5839 = vpack.c.b16 %v5643, %v5641
    %v5840 = vpack.c.b16 %v5646, %v5644
    %v5841 = vpack.c.b16 %v5647, %v5645
    %v5842 = vpack.c.b16 %v5650, %v5648
    %v5843 = vpack.c.b16 %v5651, %v5649
    %v5844 = vpack.c.b16 %v5654, %v5652
    %v5845 = vpack.c.b16 %v5655, %v5653
    %v5846 = vpack.c.b16 %v5658, %v5656
    %v5847 = vpack.c.b16 %v5659, %v5657
    %v5848 = vpack.c.b16 %v5662, %v5660
    %v5849 = vpack.c.b16 %v5663, %v5661
    %v5850 = vpack.c.b16 %v5666, %v5664
    %v5851 = vpack.c.b16 %v5667, %v5665
    %v5852 = vpack.c.b16 %v5670, %v5668
    %v5853 = vpack.c.b16 %v5671, %v5669
    %v5854 = vpack.c.b16 %v5674, %v5672
    %v5855 = vpack.c.b16 %v5675, %v5673
    %v5856 = vpack.c.b16 %v5678, %v5676
    %v5857 = vpack.c.b16 %v5679, %v5677
    %v5858 = vpack.c.b16 %v5682, %v5680
    %v5859 = vpack.c.b16 %v5683, %v5681
    %v5860 = vpack.c.b16 %v5686, %v5684
    %v5861 = vpack.c.b16 %v5687, %v5685
    %v5862 = vpack.c.b16 %v5690, %v5688
    %v5863 = vpack.c.b16 %v5691, %v5689
    %v5864 = vpack.c.b16 %v5694, %v5692
    %v5865 = vpack.c.b16 %v5695, %v5693
    %v5866 = vpack.c.b16 %v5698, %v5696
    %v5867 = vpack.c.b16 %v5699, %v5697
    %v5868 = vpack.c.b16 %v5702, %v5700
    %v5869 = vpack.c.b16 %v5703, %v5701
    %v5870 = vpack.c.b16 %v5706, %v5704
    %v5871 = vpack.c.b16 %v5707, %v5705
    %v5872 = vpack.c.b16 %v5710, %v5708
    %v5873 = vpack.c.b16 %v5711, %v5709
    %v5874 = vpack.c.b16 %v5714, %v5712
    %v5875 = vpack.c.b16 %v5715, %v5713
    %v5876 = vpack.c.b16 %v5718, %v5716
    %v5877 = vpack.c.b16 %v5719, %v5717
    %v5878 = vpack.c.b16 %v5722, %v5720
    %v5879 = vpack.c.b16 %v5723, %v5721
    %v5880 = vpack.c.b16 %v5726, %v5724
    %v5881 = vpack.c.b16 %v5727, %v5725
    %v5882 = vpack.c.b16 %v5730, %v5728
    %v5883 = vpack.c.b16 %v5731, %v5729
    %v5884 = vpack.c.b16 %v5734, %v5732
    %v5885 = vpack.c.b16 %v5735, %v5733
    %v5886 = vpack.c.b16 %v5738, %v5736
    %v5887 = vpack.c.b16 %v5739, %v5737
    %v5888 = vpack.c.b16 %v5742, %v5740
    %v5889 = vpack.c.b16 %v5743, %v5741
    %v5890 = vpack.c.b16 %v5746, %v5744
    %v5891 = vpack.c.b16 %v5747, %v5745
    %v5892 = vpack.c.b16 %v5750, %v5748
    %v5893 = vpack.c.b16 %v5751, %v5749
    %v5894 = vpack.c.b16 %v5754, %v5752
    %v5895 = vpack.c.b16 %v5755, %v5753
    %v5896 = vpack.c.b16 %v5758, %v5756
    %v5897 = vpack.c.b16 %v5759, %v5757
    %v5898 = vpack.c.b16 %v5762, %v5760
    %v5899 = vpack.c.b16 %v5763, %v5761
    %v5900 = vpack.c.b16 %v5766, %v5764
    %v5901 = vpack.c.b16 %v5767, %v5765
    %v5902 = vpack.c.b16 %v5770, %v5768
    %v5903 = vpack.c.b16 %v5771, %v5769
    %v5904 = vpack.c.b16 %v5774, %v5772
    %v5905 = vpack.c.b16 %v5775, %v5773
    %v5906 = vpack.c.b16 %v5778, %v5776
    %v5907 = vpack.c.b16 %v5779, %v5777
    %6036 = vmatprep.subr.bf16.mxu0 %v5781
    %6037 = vmatpush1.bf16.msra.mxu0 %v5780
    %6038 = vmatprep.subr.bf16.mxu0 %v5783
    %6039 = vmatpush1.bf16.msra.mxu0 %v5782
    %6040 = vmatprep.subr.bf16.mxu0 %v5785
    %6041 = vmatpush1.bf16.msra.mxu0 %v5784
    %6042 = vmatprep.subr.bf16.mxu0 %v5787
    %6043 = vmatpush1.bf16.msra.mxu0 %v5786
    %6044 = vmatprep.subr.bf16.mxu0 %v5789
    %6045 = vmatpush1.bf16.msra.mxu0 %v5788
    %6046 = vmatprep.subr.bf16.mxu0 %v5791
    %6047 = vmatpush1.bf16.msra.mxu0 %v5790
    %6048 = vmatprep.subr.bf16.mxu0 %v5793
    %6049 = vmatpush1.bf16.msra.mxu0 %v5792
    %6050 = vmatprep.subr.bf16.mxu0 %v5795
    %6051 = vmatpush1.bf16.msra.mxu0 %v5794
    %6052 = vmatprep.subr.bf16.mxu0 %v5797
    %6053 = vmatpush1.bf16.msra.mxu0 %v5796
    %6054 = vmatprep.subr.bf16.mxu0 %v5799
    %6055 = vmatpush1.bf16.msra.mxu0 %v5798
    %6056 = vmatprep.subr.bf16.mxu0 %v5801
    %6057 = vmatpush1.bf16.msra.mxu0 %v5800
    %6058 = vmatprep.subr.bf16.mxu0 %v5803
    %6059 = vmatpush1.bf16.msra.mxu0 %v5802
    %6060 = vmatprep.subr.bf16.mxu0 %v5805
    %6061 = vmatpush1.bf16.msra.mxu0 %v5804
    %6062 = vmatprep.subr.bf16.mxu0 %v5807
    %6063 = vmatpush1.bf16.msra.mxu0 %v5806
    %6064 = vmatprep.subr.bf16.mxu0 %v5809
    %6065 = vmatpush1.bf16.msra.mxu0 %v5808
    %6066 = vmatprep.subr.bf16.mxu0 %v5811
    %6067 = vmatpush1.bf16.msra.mxu0 %v5810
    %6068 = vmatprep.mubr.bf16.mxu0 %v3497
    %6069 = vmatmul.mubr.bf16.gmra.mrb[0].mxu0 %v3496
    %v6070 = vpop.f32.mrb[0].mxu0
    %v6071 = vadd.f32 %v5389, %v6070
    %v6072 = vpop.f32.mrb[0].mxu0
    %v6073 = vadd.f32 %v5393, %v6072
    %v6074 = vpop.f32.mrb[0].mxu0
    %v6075 = vadd.f32 %v5389, %v6074
    %v6076 = vpop.f32.mrb[0].mxu0
    %v6077 = vadd.f32 %v5393, %v6076
    %6078 = vmatprep.mubr.bf16.mxu0 %v3499
    %6079 = vmatmul.mubr.bf16.gmra.mrb[0].mxu0 %v3498
    %v6080 = vpop.f32.mrb[0].mxu0
    %v6081 = vadd.f32 %v5389, %v6080
    %v6082 = vpop.f32.mrb[0].mxu0
    %v6083 = vadd.f32 %v5393, %v6082
    %v6084 = vpop.f32.mrb[0].mxu0
    %v6085 = vadd.f32 %v5389, %v6084
    %v6086 = vpop.f32.mrb[0].mxu0
    %v6087 = vadd.f32 %v5393, %v6086
    %6088 = vmatprep.mubr.bf16.mxu0 %v3501
    %6089 = vmatmul.mubr.bf16.gmra.mrb[0].mxu0 %v3500
    %v6090 = vpop.f32.mrb[0].mxu0
    %v6091 = vadd.f32 %v5389, %v6090
    %v6092 = vpop.f32.mrb[0].mxu0
    %v6093 = vadd.f32 %v5393, %v6092
    %v6094 = vpop.f32.mrb[0].mxu0
    %v6095 = vadd.f32 %v5389, %v6094
    %v6096 = vpop.f32.mrb[0].mxu0
    %v6097 = vadd.f32 %v5393, %v6096
    %6098 = vmatprep.mubr.bf16.mxu0 %v3503
    %6099 = vmatmul.mubr.bf16.gmra.mrb[0].mxu0 %v3502
    %v6100 = vpop.f32.mrb[0].mxu0
    %v6101 = vadd.f32 %v5389, %v6100
    %v6102 = vpop.f32.mrb[0].mxu0
    %v6103 = vadd.f32 %v5393, %v6102
    %v6104 = vpop.f32.mrb[0].mxu0
    %v6105 = vadd.f32 %v5389, %v6104
    %v6106 = vpop.f32.mrb[0].mxu0
    %v6107 = vadd.f32 %v5393, %v6106
    %6108 = vmatprep.mubr.bf16.mxu0 %v3505
    %6109 = vmatmul.mubr.bf16.gmra.mrb[0].mxu0 %v3504
    %v6110 = vpop.f32.mrb[0].mxu0
    %v6111 = vadd.f32 %v5389, %v6110
    %v6112 = vpop.f32.mrb[0].mxu0
    %v6113 = vadd.f32 %v5393, %v6112
    %v6114 = vpop.f32.mrb[0].mxu0
    %v6115 = vadd.f32 %v5389, %v6114
    %v6116 = vpop.f32.mrb[0].mxu0
    %v6117 = vadd.f32 %v5393, %v6116
    %6118 = vmatprep.mubr.bf16.mxu0 %v3507
    %6119 = vmatmul.mubr.bf16.gmra.mrb[0].mxu0 %v3506
    %v6120 = vpop.f32.mrb[0].mxu0
    %v6121 = vadd.f32 %v5389, %v6120
    %v6122 = vpop.f32.mrb[0].mxu0
    %v6123 = vadd.f32 %v5393, %v6122
    %v6124 = vpop.f32.mrb[0].mxu0
    %v6125 = vadd.f32 %v5389, %v6124
    %v6126 = vpop.f32.mrb[0].mxu0
    %v6127 = vadd.f32 %v5393, %v6126
    %6128 = vmatprep.mubr.bf16.mxu0 %v3509
    %6129 = vmatmul.mubr.bf16.gmra.mrb[0].mxu0 %v3508
    %v6130 = vpop.f32.mrb[0].mxu0
    %v6131 = vadd.f32 %v5389, %v6130
    %v6132 = vpop.f32.mrb[0].mxu0
    %v6133 = vadd.f32 %v5393, %v6132
    %v6134 = vpop.f32.mrb[0].mxu0
    %v6135 = vadd.f32 %v5389, %v6134
    %v6136 = vpop.f32.mrb[0].mxu0
    %v6137 = vadd.f32 %v5393, %v6136
    %6138 = vmatprep.mubr.bf16.mxu0 %v3511
    %6139 = vmatmul.mubr.bf16.gmra.mrb[0].mxu0 %v3510
    %v6140 = vpop.f32.mrb[0].mxu0
    %v6141 = vadd.f32 %v5389, %v6140
    %v6142 = vpop.f32.mrb[0].mxu0
    %v6143 = vadd.f32 %v5393, %v6142
    %v6144 = vpop.f32.mrb[0].mxu0
    %v6145 = vadd.f32 %v5389, %v6144
    %v6146 = vpop.f32.mrb[0].mxu0
    %v6147 = vadd.f32 %v5393, %v6146
    %6148 = vmatprep.mubr.bf16.mxu0 %v3513
    %6149 = vmatmul.mubr.bf16.gmra.mrb[0].mxu0 %v3512
    %v6150 = vpop.f32.mrb[0].mxu0
    %v6151 = vadd.f32 %v5389, %v6150
    %v6152 = vpop.f32.mrb[0].mxu0
    %v6153 = vadd.f32 %v5393, %v6152
    %v6154 = vpop.f32.mrb[0].mxu0
    %v6155 = vadd.f32 %v5389, %v6154
    %v6156 = vpop.f32.mrb[0].mxu0
    %v6157 = vadd.f32 %v5393, %v6156
    %6158 = vmatprep.mubr.bf16.mxu0 %v3515
    %6159 = vmatmul.mubr.bf16.gmra.mrb[0].mxu0 %v3514
    %v6160 = vpop.f32.mrb[0].mxu0
    %v6161 = vadd.f32 %v5389, %v6160
    %v6162 = vpop.f32.mrb[0].mxu0
    %v6163 = vadd.f32 %v5393, %v6162
    %v6164 = vpop.f32.mrb[0].mxu0
    %v6165 = vadd.f32 %v5389, %v6164
    %v6166 = vpop.f32.mrb[0].mxu0
    %v6167 = vadd.f32 %v5393, %v6166
    %6168 = vmatprep.mubr.bf16.mxu0 %v3517
    %6169 = vmatmul.mubr.bf16.gmra.mrb[0].mxu0 %v3516
    %v6170 = vpop.f32.mrb[0].mxu0
    %v6171 = vadd.f32 %v5389, %v6170
    %v6172 = vpop.f32.mrb[0].mxu0
    %v6173 = vadd.f32 %v5393, %v6172
    %v6174 = vpop.f32.mrb[0].mxu0
    %v6175 = vadd.f32 %v5389, %v6174
    %v6176 = vpop.f32.mrb[0].mxu0
    %v6177 = vadd.f32 %v5393, %v6176
    %6178 = vmatprep.mubr.bf16.mxu0 %v3519
    %6179 = vmatmul.mubr.bf16.gmra.mrb[0].mxu0 %v3518
    %v6180 = vpop.f32.mrb[0].mxu0
    %v6181 = vadd.f32 %v5389, %v6180
    %v6182 = vpop.f32.mrb[0].mxu0
    %v6183 = vadd.f32 %v5393, %v6182
    %v6184 = vpop.f32.mrb[0].mxu0
    %v6185 = vadd.f32 %v5389, %v6184
    %v6186 = vpop.f32.mrb[0].mxu0
    %v6187 = vadd.f32 %v5393, %v6186
    %6188 = vmatprep.mubr.bf16.mxu0 %v3521
    %6189 = vmatmul.mubr.bf16.gmra.mrb[0].mxu0 %v3520
    %v6190 = vpop.f32.mrb[0].mxu0
    %v6191 = vadd.f32 %v5389, %v6190
    %v6192 = vpop.f32.mrb[0].mxu0
    %v6193 = vadd.f32 %v5393, %v6192
    %v6194 = vpop.f32.mrb[0].mxu0
    %v6195 = vadd.f32 %v5389, %v6194
    %v6196 = vpop.f32.mrb[0].mxu0
    %v6197 = vadd.f32 %v5393, %v6196
    %6198 = vmatprep.mubr.bf16.mxu0 %v3523
    %6199 = vmatmul.mubr.bf16.gmra.mrb[0].mxu0 %v3522
    %v6200 = vpop.f32.mrb[0].mxu0
    %v6201 = vadd.f32 %v5389, %v6200
    %v6202 = vpop.f32.mrb[0].mxu0
    %v6203 = vadd.f32 %v5393, %v6202
    %v6204 = vpop.f32.mrb[0].mxu0
    %v6205 = vadd.f32 %v5389, %v6204
    %v6206 = vpop.f32.mrb[0].mxu0
    %v6207 = vadd.f32 %v5393, %v6206
    %6208 = vmatprep.mubr.bf16.mxu0 %v3525
    %6209 = vmatmul.mubr.bf16.gmra.mrb[0].mxu0 %v3524
    %v6210 = vpop.f32.mrb[0].mxu0
    %v6211 = vadd.f32 %v5389, %v6210
    %v6212 = vpop.f32.mrb[0].mxu0
    %v6213 = vadd.f32 %v5393, %v6212
    %v6214 = vpop.f32.mrb[0].mxu0
    %v6215 = vadd.f32 %v5389, %v6214
    %v6216 = vpop.f32.mrb[0].mxu0
    %v6217 = vadd.f32 %v5393, %v6216
    %6218 = vmatprep.mubr.bf16.mxu0 %v3527
    %6219 = vmatmul.mubr.bf16.gmra.mrb[0].mxu0 %v3526
    %v6220 = vpop.f32.mrb[0].mxu0
    %v6221 = vadd.f32 %v5389, %v6220
    %v6222 = vpop.f32.mrb[0].mxu0
    %v6223 = vadd.f32 %v5393, %v6222
    %v6224 = vpop.f32.mrb[0].mxu0
    %v6225 = vadd.f32 %v5389, %v6224
    %v6226 = vpop.f32.mrb[0].mxu0
    %v6227 = vadd.f32 %v5393, %v6226
    %6228 = vdwg.mxu0
    %6229 = vmatprep.subr.bf16.mxu0 %v5813
    %6230 = vmatpush1.bf16.msra.mxu0 %v5812
    %6231 = vmatprep.subr.bf16.mxu0 %v5815
    %6232 = vmatpush1.bf16.msra.mxu0 %v5814
    %6233 = vmatprep.subr.bf16.mxu0 %v5817
    %6234 = vmatpush1.bf16.msra.mxu0 %v5816
    %6235 = vmatprep.subr.bf16.mxu0 %v5819
    %6236 = vmatpush1.bf16.msra.mxu0 %v5818
    %6237 = vmatprep.subr.bf16.mxu0 %v5821
    %6238 = vmatpush1.bf16.msra.mxu0 %v5820
    %6239 = vmatprep.subr.bf16.mxu0 %v5823
    %6240 = vmatpush1.bf16.msra.mxu0 %v5822
    %6241 = vmatprep.subr.bf16.mxu0 %v5825
    %6242 = vmatpush1.bf16.msra.mxu0 %v5824
    %6243 = vmatprep.subr.bf16.mxu0 %v5827
    %6244 = vmatpush1.bf16.msra.mxu0 %v5826
    %6245 = vmatprep.subr.bf16.mxu0 %v5829
    %6246 = vmatpush1.bf16.msra.mxu0 %v5828
    %6247 = vmatprep.subr.bf16.mxu0 %v5831
    %6248 = vmatpush1.bf16.msra.mxu0 %v5830
    %6249 = vmatprep.subr.bf16.mxu0 %v5833
    %6250 = vmatpush1.bf16.msra.mxu0 %v5832
    %6251 = vmatprep.subr.bf16.mxu0 %v5835
    %6252 = vmatpush1.bf16.msra.mxu0 %v5834
    %6253 = vmatprep.subr.bf16.mxu0 %v5837
    %6254 = vmatpush1.bf16.msra.mxu0 %v5836
    %6255 = vmatprep.subr.bf16.mxu0 %v5839
    %6256 = vmatpush1.bf16.msra.mxu0 %v5838
    %6257 = vmatprep.subr.bf16.mxu0 %v5841
    %6258 = vmatpush1.bf16.msra.mxu0 %v5840
    %6259 = vmatprep.subr.bf16.mxu0 %v5843
    %6260 = vmatpush1.bf16.msra.mxu0 %v5842
    %6261 = vmatprep.mubr.bf16.mxu0 %v4073
    %6262 = vmatmul.mubr.bf16.gmra.mrb[0].mxu0 %v4072
    %v6263 = vpop.f32.mrb[0].mxu0
    %v6264 = vadd.f32 %v6071, %v6263
    %v6265 = vpop.f32.mrb[0].mxu0
    %v6266 = vadd.f32 %v6073, %v6265
    %v6267 = vpop.f32.mrb[0].mxu0
    %v6268 = vadd.f32 %v6075, %v6267
    %v6269 = vpop.f32.mrb[0].mxu0
    %v6270 = vadd.f32 %v6077, %v6269
    %6271 = vmatprep.mubr.bf16.mxu0 %v4075
    %6272 = vmatmul.mubr.bf16.gmra.mrb[0].mxu0 %v4074
    %v6273 = vpop.f32.mrb[0].mxu0
    %v6274 = vadd.f32 %v6081, %v6273
    %v6275 = vpop.f32.mrb[0].mxu0
    %v6276 = vadd.f32 %v6083, %v6275
    %v6277 = vpop.f32.mrb[0].mxu0
    %v6278 = vadd.f32 %v6085, %v6277
    %v6279 = vpop.f32.mrb[0].mxu0
    %v6280 = vadd.f32 %v6087, %v6279
    %6281 = vmatprep.mubr.bf16.mxu0 %v4077
    %6282 = vmatmul.mubr.bf16.gmra.mrb[0].mxu0 %v4076
    %v6283 = vpop.f32.mrb[0].mxu0
    %v6284 = vadd.f32 %v6091, %v6283
    %v6285 = vpop.f32.mrb[0].mxu0
    %v6286 = vadd.f32 %v6093, %v6285
    %v6287 = vpop.f32.mrb[0].mxu0
    %v6288 = vadd.f32 %v6095, %v6287
    %v6289 = vpop.f32.mrb[0].mxu0
    %v6290 = vadd.f32 %v6097, %v6289
    %6291 = vmatprep.mubr.bf16.mxu0 %v4079
    %6292 = vmatmul.mubr.bf16.gmra.mrb[0].mxu0 %v4078
    %v6293 = vpop.f32.mrb[0].mxu0
    %v6294 = vadd.f32 %v6101, %v6293
    %v6295 = vpop.f32.mrb[0].mxu0
    %v6296 = vadd.f32 %v6103, %v6295
    %v6297 = vpop.f32.mrb[0].mxu0
    %v6298 = vadd.f32 %v6105, %v6297
    %v6299 = vpop.f32.mrb[0].mxu0
    %v6300 = vadd.f32 %v6107, %v6299
    %6301 = vmatprep.mubr.bf16.mxu0 %v4081
    %6302 = vmatmul.mubr.bf16.gmra.mrb[0].mxu0 %v4080
    %v6303 = vpop.f32.mrb[0].mxu0
    %v6304 = vadd.f32 %v6111, %v6303
    %v6305 = vpop.f32.mrb[0].mxu0
    %v6306 = vadd.f32 %v6113, %v6305
    %v6307 = vpop.f32.mrb[0].mxu0
    %v6308 = vadd.f32 %v6115, %v6307
    %v6309 = vpop.f32.mrb[0].mxu0
    %v6310 = vadd.f32 %v6117, %v6309
    %6311 = vmatprep.mubr.bf16.mxu0 %v4083
    %6312 = vmatmul.mubr.bf16.gmra.mrb[0].mxu0 %v4082
    %v6313 = vpop.f32.mrb[0].mxu0
    %v6314 = vadd.f32 %v6121, %v6313
    %v6315 = vpop.f32.mrb[0].mxu0
    %v6316 = vadd.f32 %v6123, %v6315
    %v6317 = vpop.f32.mrb[0].mxu0
    %v6318 = vadd.f32 %v6125, %v6317
    %v6319 = vpop.f32.mrb[0].mxu0
    %v6320 = vadd.f32 %v6127, %v6319
    %6321 = vmatprep.mubr.bf16.mxu0 %v4085
    %6322 = vmatmul.mubr.bf16.gmra.mrb[0].mxu0 %v4084
    %v6323 = vpop.f32.mrb[0].mxu0
    %v6324 = vadd.f32 %v6131, %v6323
    %v6325 = vpop.f32.mrb[0].mxu0
    %v6326 = vadd.f32 %v6133, %v6325
    %v6327 = vpop.f32.mrb[0].mxu0
    %v6328 = vadd.f32 %v6135, %v6327
    %v6329 = vpop.f32.mrb[0].mxu0
    %v6330 = vadd.f32 %v6137, %v6329
    %6331 = vmatprep.mubr.bf16.mxu0 %v4087
    %6332 = vmatmul.mubr.bf16.gmra.mrb[0].mxu0 %v4086
    %v6333 = vpop.f32.mrb[0].mxu0
    %v6334 = vadd.f32 %v6141, %v6333
    %v6335 = vpop.f32.mrb[0].mxu0
    %v6336 = vadd.f32 %v6143, %v6335
    %v6337 = vpop.f32.mrb[0].mxu0
    %v6338 = vadd.f32 %v6145, %v6337
    %v6339 = vpop.f32.mrb[0].mxu0
    %v6340 = vadd.f32 %v6147, %v6339
    %6341 = vmatprep.mubr.bf16.mxu0 %v4089
    %6342 = vmatmul.mubr.bf16.gmra.mrb[0].mxu0 %v4088
    %v6343 = vpop.f32.mrb[0].mxu0
    %v6344 = vadd.f32 %v6151, %v6343
    %v6345 = vpop.f32.mrb[0].mxu0
    %v6346 = vadd.f32 %v6153, %v6345
    %v6347 = vpop.f32.mrb[0].mxu0
    %v6348 = vadd.f32 %v6155, %v6347
    %v6349 = vpop.f32.mrb[0].mxu0
    %v6350 = vadd.f32 %v6157, %v6349
    %6351 = vmatprep.mubr.bf16.mxu0 %v4091
    %6352 = vmatmul.mubr.bf16.gmra.mrb[0].mxu0 %v4090
    %v6353 = vpop.f32.mrb[0].mxu0
    %v6354 = vadd.f32 %v6161, %v6353
    %v6355 = vpop.f32.mrb[0].mxu0
    %v6356 = vadd.f32 %v6163, %v6355
    %v6357 = vpop.f32.mrb[0].mxu0
    %v6358 = vadd.f32 %v6165, %v6357
    %v6359 = vpop.f32.mrb[0].mxu0
    %v6360 = vadd.f32 %v6167, %v6359
    %6361 = vmatprep.mubr.bf16.mxu0 %v4093
    %6362 = vmatmul.mubr.bf16.gmra.mrb[0].mxu0 %v4092
    %v6363 = vpop.f32.mrb[0].mxu0
    %v6364 = vadd.f32 %v6171, %v6363
    %v6365 = vpop.f32.mrb[0].mxu0
    %v6366 = vadd.f32 %v6173, %v6365
    %v6367 = vpop.f32.mrb[0].mxu0
    %v6368 = vadd.f32 %v6175, %v6367
    %v6369 = vpop.f32.mrb[0].mxu0
    %v6370 = vadd.f32 %v6177, %v6369
    %6371 = vmatprep.mubr.bf16.mxu0 %v4095
    %6372 = vmatmul.mubr.bf16.gmra.mrb[0].mxu0 %v4094
    %v6373 = vpop.f32.mrb[0].mxu0
    %v6374 = vadd.f32 %v6181, %v6373
    %v6375 = vpop.f32.mrb[0].mxu0
    %v6376 = vadd.f32 %v6183, %v6375
    %v6377 = vpop.f32.mrb[0].mxu0
    %v6378 = vadd.f32 %v6185, %v6377
    %v6379 = vpop.f32.mrb[0].mxu0
    %v6380 = vadd.f32 %v6187, %v6379
    %6381 = vmatprep.mubr.bf16.mxu0 %v4097
    %6382 = vmatmul.mubr.bf16.gmra.mrb[0].mxu0 %v4096
    %v6383 = vpop.f32.mrb[0].mxu0
    %v6384 = vadd.f32 %v6191, %v6383
    %v6385 = vpop.f32.mrb[0].mxu0
    %v6386 = vadd.f32 %v6193, %v6385
    %v6387 = vpop.f32.mrb[0].mxu0
    %v6388 = vadd.f32 %v6195, %v6387
    %v6389 = vpop.f32.mrb[0].mxu0
    %v6390 = vadd.f32 %v6197, %v6389
    %6391 = vmatprep.mubr.bf16.mxu0 %v4099
    %6392 = vmatmul.mubr.bf16.gmra.mrb[0].mxu0 %v4098
    %v6393 = vpop.f32.mrb[0].mxu0
    %v6394 = vadd.f32 %v6201, %v6393
    %v6395 = vpop.f32.mrb[0].mxu0
    %v6396 = vadd.f32 %v6203, %v6395
    %v6397 = vpop.f32.mrb[0].mxu0
    %v6398 = vadd.f32 %v6205, %v6397
    %v6399 = vpop.f32.mrb[0].mxu0
    %v6400 = vadd.f32 %v6207, %v6399
    %6401 = vmatprep.mubr.bf16.mxu0 %v4101
    %6402 = vmatmul.mubr.bf16.gmra.mrb[0].mxu0 %v4100
    %v6403 = vpop.f32.mrb[0].mxu0
    %v6404 = vadd.f32 %v6211, %v6403
    %v6405 = vpop.f32.mrb[0].mxu0
    %v6406 = vadd.f32 %v6213, %v6405
    %v6407 = vpop.f32.mrb[0].mxu0
    %v6408 = vadd.f32 %v6215, %v6407
    %v6409 = vpop.f32.mrb[0].mxu0
    %v6410 = vadd.f32 %v6217, %v6409
    %6411 = vmatprep.mubr.bf16.mxu0 %v4103
    %6412 = vmatmul.mubr.bf16.gmra.mrb[0].mxu0 %v4102
    %v6413 = vpop.f32.mrb[0].mxu0
    %v6414 = vadd.f32 %v6221, %v6413
    %v6415 = vpop.f32.mrb[0].mxu0
    %v6416 = vadd.f32 %v6223, %v6415
    %v6417 = vpop.f32.mrb[0].mxu0
    %v6418 = vadd.f32 %v6225, %v6417
    %v6419 = vpop.f32.mrb[0].mxu0
    %v6420 = vadd.f32 %v6227, %v6419
    %6421 = vdwg.mxu0
    %6422 = vmatprep.subr.bf16.mxu0 %v5845
    %6423 = vmatpush1.bf16.msra.mxu0 %v5844
    %6424 = vmatprep.subr.bf16.mxu0 %v5847
    %6425 = vmatpush1.bf16.msra.mxu0 %v5846
    %6426 = vmatprep.subr.bf16.mxu0 %v5849
    %6427 = vmatpush1.bf16.msra.mxu0 %v5848
    %6428 = vmatprep.subr.bf16.mxu0 %v5851
    %6429 = vmatpush1.bf16.msra.mxu0 %v5850
    %6430 = vmatprep.subr.bf16.mxu0 %v5853
    %6431 = vmatpush1.bf16.msra.mxu0 %v5852
    %6432 = vmatprep.subr.bf16.mxu0 %v5855
    %6433 = vmatpush1.bf16.msra.mxu0 %v5854
    %6434 = vmatprep.subr.bf16.mxu0 %v5857
    %6435 = vmatpush1.bf16.msra.mxu0 %v5856
    %6436 = vmatprep.subr.bf16.mxu0 %v5859
    %6437 = vmatpush1.bf16.msra.mxu0 %v5858
    %6438 = vmatprep.subr.bf16.mxu0 %v5861
    %6439 = vmatpush1.bf16.msra.mxu0 %v5860
    %6440 = vmatprep.subr.bf16.mxu0 %v5863
    %6441 = vmatpush1.bf16.msra.mxu0 %v5862
    %6442 = vmatprep.subr.bf16.mxu0 %v5865
    %6443 = vmatpush1.bf16.msra.mxu0 %v5864
    %6444 = vmatprep.subr.bf16.mxu0 %v5867
    %6445 = vmatpush1.bf16.msra.mxu0 %v5866
    %6446 = vmatprep.subr.bf16.mxu0 %v5869
    %6447 = vmatpush1.bf16.msra.mxu0 %v5868
    %6448 = vmatprep.subr.bf16.mxu0 %v5871
    %6449 = vmatpush1.bf16.msra.mxu0 %v5870
    %6450 = vmatprep.subr.bf16.mxu0 %v5873
    %6451 = vmatpush1.bf16.msra.mxu0 %v5872
    %6452 = vmatprep.subr.bf16.mxu0 %v5875
    %6453 = vmatpush1.bf16.msra.mxu0 %v5874
    %6454 = vmatprep.mubr.bf16.mxu0 %v4649
    %6455 = vmatmul.mubr.bf16.gmra.mrb[0].mxu0 %v4648
    %v6456 = vpop.f32.mrb[0].mxu0
    %v6457 = vadd.f32 %v6264, %v6456
    %v6458 = vpop.f32.mrb[0].mxu0
    %v6459 = vadd.f32 %v6266, %v6458
    %v6460 = vpop.f32.mrb[0].mxu0
    %v6461 = vadd.f32 %v6268, %v6460
    %v6462 = vpop.f32.mrb[0].mxu0
    %v6463 = vadd.f32 %v6270, %v6462
    %6464 = vmatprep.mubr.bf16.mxu0 %v4651
    %6465 = vmatmul.mubr.bf16.gmra.mrb[0].mxu0 %v4650
    %v6466 = vpop.f32.mrb[0].mxu0
    %v6467 = vadd.f32 %v6274, %v6466
    %v6468 = vpop.f32.mrb[0].mxu0
    %v6469 = vadd.f32 %v6276, %v6468
    %v6470 = vpop.f32.mrb[0].mxu0
    %v6471 = vadd.f32 %v6278, %v6470
    %v6472 = vpop.f32.mrb[0].mxu0
    %v6473 = vadd.f32 %v6280, %v6472
    %6474 = vmatprep.mubr.bf16.mxu0 %v4653
    %6475 = vmatmul.mubr.bf16.gmra.mrb[0].mxu0 %v4652
    %v6476 = vpop.f32.mrb[0].mxu0
    %v6477 = vadd.f32 %v6284, %v6476
    %v6478 = vpop.f32.mrb[0].mxu0
    %v6479 = vadd.f32 %v6286, %v6478
    %v6480 = vpop.f32.mrb[0].mxu0
    %v6481 = vadd.f32 %v6288, %v6480
    %v6482 = vpop.f32.mrb[0].mxu0
    %v6483 = vadd.f32 %v6290, %v6482
    %6484 = vmatprep.mubr.bf16.mxu0 %v4655
    %6485 = vmatmul.mubr.bf16.gmra.mrb[0].mxu0 %v4654
    %v6486 = vpop.f32.mrb[0].mxu0
    %v6487 = vadd.f32 %v6294, %v6486
    %v6488 = vpop.f32.mrb[0].mxu0
    %v6489 = vadd.f32 %v6296, %v6488
    %v6490 = vpop.f32.mrb[0].mxu0
    %v6491 = vadd.f32 %v6298, %v6490
    %v6492 = vpop.f32.mrb[0].mxu0
    %v6493 = vadd.f32 %v6300, %v6492
    %6494 = vmatprep.mubr.bf16.mxu0 %v4657
    %6495 = vmatmul.mubr.bf16.gmra.mrb[0].mxu0 %v4656
    %v6496 = vpop.f32.mrb[0].mxu0
    %v6497 = vadd.f32 %v6304, %v6496
    %v6498 = vpop.f32.mrb[0].mxu0
    %v6499 = vadd.f32 %v6306, %v6498
    %v6500 = vpop.f32.mrb[0].mxu0
    %v6501 = vadd.f32 %v6308, %v6500
    %v6502 = vpop.f32.mrb[0].mxu0
    %v6503 = vadd.f32 %v6310, %v6502
    %6504 = vmatprep.mubr.bf16.mxu0 %v4659
    %6505 = vmatmul.mubr.bf16.gmra.mrb[0].mxu0 %v4658
    %v6506 = vpop.f32.mrb[0].mxu0
    %v6507 = vadd.f32 %v6314, %v6506
    %v6508 = vpop.f32.mrb[0].mxu0
    %v6509 = vadd.f32 %v6316, %v6508
    %v6510 = vpop.f32.mrb[0].mxu0
    %v6511 = vadd.f32 %v6318, %v6510
    %v6512 = vpop.f32.mrb[0].mxu0
    %v6513 = vadd.f32 %v6320, %v6512
    %6514 = vmatprep.mubr.bf16.mxu0 %v4661
    %6515 = vmatmul.mubr.bf16.gmra.mrb[0].mxu0 %v4660
    %v6516 = vpop.f32.mrb[0].mxu0
    %v6517 = vadd.f32 %v6324, %v6516
    %v6518 = vpop.f32.mrb[0].mxu0
    %v6519 = vadd.f32 %v6326, %v6518
    %v6520 = vpop.f32.mrb[0].mxu0
    %v6521 = vadd.f32 %v6328, %v6520
    %v6522 = vpop.f32.mrb[0].mxu0
    %v6523 = vadd.f32 %v6330, %v6522
    %6524 = vmatprep.mubr.bf16.mxu0 %v4663
    %6525 = vmatmul.mubr.bf16.gmra.mrb[0].mxu0 %v4662
    %v6526 = vpop.f32.mrb[0].mxu0
    %v6527 = vadd.f32 %v6334, %v6526
    %v6528 = vpop.f32.mrb[0].mxu0
    %v6529 = vadd.f32 %v6336, %v6528
    %v6530 = vpop.f32.mrb[0].mxu0
    %v6531 = vadd.f32 %v6338, %v6530
    %v6532 = vpop.f32.mrb[0].mxu0
    %v6533 = vadd.f32 %v6340, %v6532
    %6534 = vmatprep.mubr.bf16.mxu0 %v4665
    %6535 = vmatmul.mubr.bf16.gmra.mrb[0].mxu0 %v4664
    %v6536 = vpop.f32.mrb[0].mxu0
    %v6537 = vadd.f32 %v6344, %v6536
    %v6538 = vpop.f32.mrb[0].mxu0
    %v6539 = vadd.f32 %v6346, %v6538
    %v6540 = vpop.f32.mrb[0].mxu0
    %v6541 = vadd.f32 %v6348, %v6540
    %v6542 = vpop.f32.mrb[0].mxu0
    %v6543 = vadd.f32 %v6350, %v6542
    %6544 = vmatprep.mubr.bf16.mxu0 %v4667
    %6545 = vmatmul.mubr.bf16.gmra.mrb[0].mxu0 %v4666
    %v6546 = vpop.f32.mrb[0].mxu0
    %v6547 = vadd.f32 %v6354, %v6546
    %v6548 = vpop.f32.mrb[0].mxu0
    %v6549 = vadd.f32 %v6356, %v6548
    %v6550 = vpop.f32.mrb[0].mxu0
    %v6551 = vadd.f32 %v6358, %v6550
    %v6552 = vpop.f32.mrb[0].mxu0
    %v6553 = vadd.f32 %v6360, %v6552
    %6554 = vmatprep.mubr.bf16.mxu0 %v4669
    %6555 = vmatmul.mubr.bf16.gmra.mrb[0].mxu0 %v4668
    %v6556 = vpop.f32.mrb[0].mxu0
    %v6557 = vadd.f32 %v6364, %v6556
    %v6558 = vpop.f32.mrb[0].mxu0
    %v6559 = vadd.f32 %v6366, %v6558
    %v6560 = vpop.f32.mrb[0].mxu0
    %v6561 = vadd.f32 %v6368, %v6560
    %v6562 = vpop.f32.mrb[0].mxu0
    %v6563 = vadd.f32 %v6370, %v6562
    %6564 = vmatprep.mubr.bf16.mxu0 %v4671
    %6565 = vmatmul.mubr.bf16.gmra.mrb[0].mxu0 %v4670
    %v6566 = vpop.f32.mrb[0].mxu0
    %v6567 = vadd.f32 %v6374, %v6566
    %v6568 = vpop.f32.mrb[0].mxu0
    %v6569 = vadd.f32 %v6376, %v6568
    %v6570 = vpop.f32.mrb[0].mxu0
    %v6571 = vadd.f32 %v6378, %v6570
    %v6572 = vpop.f32.mrb[0].mxu0
    %v6573 = vadd.f32 %v6380, %v6572
    %6574 = vmatprep.mubr.bf16.mxu0 %v4673
    %6575 = vmatmul.mubr.bf16.gmra.mrb[0].mxu0 %v4672
    %v6576 = vpop.f32.mrb[0].mxu0
    %v6577 = vadd.f32 %v6384, %v6576
    %v6578 = vpop.f32.mrb[0].mxu0
    %v6579 = vadd.f32 %v6386, %v6578
    %v6580 = vpop.f32.mrb[0].mxu0
    %v6581 = vadd.f32 %v6388, %v6580
    %v6582 = vpop.f32.mrb[0].mxu0
    %v6583 = vadd.f32 %v6390, %v6582
    %6584 = vmatprep.mubr.bf16.mxu0 %v4675
    %6585 = vmatmul.mubr.bf16.gmra.mrb[0].mxu0 %v4674
    %v6586 = vpop.f32.mrb[0].mxu0
    %v6587 = vadd.f32 %v6394, %v6586
    %v6588 = vpop.f32.mrb[0].mxu0
    %v6589 = vadd.f32 %v6396, %v6588
    %v6590 = vpop.f32.mrb[0].mxu0
    %v6591 = vadd.f32 %v6398, %v6590
    %v6592 = vpop.f32.mrb[0].mxu0
    %v6593 = vadd.f32 %v6400, %v6592
    %6594 = vmatprep.mubr.bf16.mxu0 %v4677
    %6595 = vmatmul.mubr.bf16.gmra.mrb[0].mxu0 %v4676
    %v6596 = vpop.f32.mrb[0].mxu0
    %v6597 = vadd.f32 %v6404, %v6596
    %v6598 = vpop.f32.mrb[0].mxu0
    %v6599 = vadd.f32 %v6406, %v6598
    %v6600 = vpop.f32.mrb[0].mxu0
    %v6601 = vadd.f32 %v6408, %v6600
    %v6602 = vpop.f32.mrb[0].mxu0
    %v6603 = vadd.f32 %v6410, %v6602
    %6604 = vmatprep.mubr.bf16.mxu0 %v4679
    %6605 = vmatmul.mubr.bf16.gmra.mrb[0].mxu0 %v4678
    %v6606 = vpop.f32.mrb[0].mxu0
    %v6607 = vadd.f32 %v6414, %v6606
    %v6608 = vpop.f32.mrb[0].mxu0
    %v6609 = vadd.f32 %v6416, %v6608
    %v6610 = vpop.f32.mrb[0].mxu0
    %v6611 = vadd.f32 %v6418, %v6610
    %v6612 = vpop.f32.mrb[0].mxu0
    %v6613 = vadd.f32 %v6420, %v6612
    %6614 = vdwg.mxu0
    %6615 = vmatprep.subr.bf16.mxu0 %v5877
    %6616 = vmatpush1.bf16.msra.mxu0 %v5876
    %6617 = vmatprep.subr.bf16.mxu0 %v5879
    %6618 = vmatpush1.bf16.msra.mxu0 %v5878
    %6619 = vmatprep.subr.bf16.mxu0 %v5881
    %6620 = vmatpush1.bf16.msra.mxu0 %v5880
    %6621 = vmatprep.subr.bf16.mxu0 %v5883
    %6622 = vmatpush1.bf16.msra.mxu0 %v5882
    %6623 = vmatprep.subr.bf16.mxu0 %v5885
    %6624 = vmatpush1.bf16.msra.mxu0 %v5884
    %6625 = vmatprep.subr.bf16.mxu0 %v5887
    %6626 = vmatpush1.bf16.msra.mxu0 %v5886
    %6627 = vmatprep.subr.bf16.mxu0 %v5889
    %6628 = vmatpush1.bf16.msra.mxu0 %v5888
    %6629 = vmatprep.subr.bf16.mxu0 %v5891
    %6630 = vmatpush1.bf16.msra.mxu0 %v5890
    %6631 = vmatprep.subr.bf16.mxu0 %v5893
    %6632 = vmatpush1.bf16.msra.mxu0 %v5892
    %6633 = vmatprep.subr.bf16.mxu0 %v5895
    %6634 = vmatpush1.bf16.msra.mxu0 %v5894
    %6635 = vmatprep.subr.bf16.mxu0 %v5897
    %6636 = vmatpush1.bf16.msra.mxu0 %v5896
    %6637 = vmatprep.subr.bf16.mxu0 %v5899
    %6638 = vmatpush1.bf16.msra.mxu0 %v5898
    %6639 = vmatprep.subr.bf16.mxu0 %v5901
    %6640 = vmatpush1.bf16.msra.mxu0 %v5900
    %6641 = vmatprep.subr.bf16.mxu0 %v5903
    %6642 = vmatpush1.bf16.msra.mxu0 %v5902
    %6643 = vmatprep.subr.bf16.mxu0 %v5905
    %6644 = vmatpush1.bf16.msra.mxu0 %v5904
    %6645 = vmatprep.subr.bf16.mxu0 %v5907
    %6646 = vmatpush1.bf16.msra.mxu0 %v5906
    %6647 = vmatprep.mubr.bf16.mxu0 %v5225
    %6648 = vmatmul.mubr.bf16.gmra.mrb[0].mxu0 %v5224
    %v6649 = vpop.f32.mrb[0].mxu0
    %v6650 = vadd.f32 %v6457, %v6649
    %v6651 = vpop.f32.mrb[0].mxu0
    %v6652 = vadd.f32 %v6459, %v6651
    %v6653 = vpop.f32.mrb[0].mxu0
    %v6654 = vadd.f32 %v6461, %v6653
    %v6655 = vpop.f32.mrb[0].mxu0
    %v6656 = vadd.f32 %v6463, %v6655
    %6657 = vmatprep.mubr.bf16.mxu0 %v5227
    %6658 = vmatmul.mubr.bf16.gmra.mrb[0].mxu0 %v5226
    %v6659 = vpop.f32.mrb[0].mxu0
    %v6660 = vadd.f32 %v6467, %v6659
    %v6661 = vpop.f32.mrb[0].mxu0
    %v6662 = vadd.f32 %v6469, %v6661
    %v6663 = vpop.f32.mrb[0].mxu0
    %v6664 = vadd.f32 %v6471, %v6663
    %v6665 = vpop.f32.mrb[0].mxu0
    %v6666 = vadd.f32 %v6473, %v6665
    %6667 = vmatprep.mubr.bf16.mxu0 %v5229
    %6668 = vmatmul.mubr.bf16.gmra.mrb[0].mxu0 %v5228
    %v6669 = vpop.f32.mrb[0].mxu0
    %v6670 = vadd.f32 %v6477, %v6669
    %v6671 = vpop.f32.mrb[0].mxu0
    %v6672 = vadd.f32 %v6479, %v6671
    %v6673 = vpop.f32.mrb[0].mxu0
    %v6674 = vadd.f32 %v6481, %v6673
    %v6675 = vpop.f32.mrb[0].mxu0
    %v6676 = vadd.f32 %v6483, %v6675
    %6677 = vmatprep.mubr.bf16.mxu0 %v5231
    %6678 = vmatmul.mubr.bf16.gmra.mrb[0].mxu0 %v5230
    %v6679 = vpop.f32.mrb[0].mxu0
    %v6680 = vadd.f32 %v6487, %v6679
    %v6681 = vpop.f32.mrb[0].mxu0
    %v6682 = vadd.f32 %v6489, %v6681
    %v6683 = vpop.f32.mrb[0].mxu0
    %v6684 = vadd.f32 %v6491, %v6683
    %v6685 = vpop.f32.mrb[0].mxu0
    %v6686 = vadd.f32 %v6493, %v6685
    %6687 = vmatprep.mubr.bf16.mxu0 %v5233
    %6688 = vmatmul.mubr.bf16.gmra.mrb[0].mxu0 %v5232
    %v6689 = vpop.f32.mrb[0].mxu0
    %v6690 = vadd.f32 %v6497, %v6689
    %v6691 = vpop.f32.mrb[0].mxu0
    %v6692 = vadd.f32 %v6499, %v6691
    %v6693 = vpop.f32.mrb[0].mxu0
    %v6694 = vadd.f32 %v6501, %v6693
    %v6695 = vpop.f32.mrb[0].mxu0
    %v6696 = vadd.f32 %v6503, %v6695
    %6697 = vmatprep.mubr.bf16.mxu0 %v5235
    %6698 = vmatmul.mubr.bf16.gmra.mrb[0].mxu0 %v5234
    %v6699 = vpop.f32.mrb[0].mxu0
    %v6700 = vadd.f32 %v6507, %v6699
    %v6701 = vpop.f32.mrb[0].mxu0
    %v6702 = vadd.f32 %v6509, %v6701
    %v6703 = vpop.f32.mrb[0].mxu0
    %v6704 = vadd.f32 %v6511, %v6703
    %v6705 = vpop.f32.mrb[0].mxu0
    %v6706 = vadd.f32 %v6513, %v6705
    %6707 = vmatprep.mubr.bf16.mxu0 %v5237
    %6708 = vmatmul.mubr.bf16.gmra.mrb[0].mxu0 %v5236
    %v6709 = vpop.f32.mrb[0].mxu0
    %v6710 = vadd.f32 %v6517, %v6709
    %v6711 = vpop.f32.mrb[0].mxu0
    %v6712 = vadd.f32 %v6519, %v6711
    %v6713 = vpop.f32.mrb[0].mxu0
    %v6714 = vadd.f32 %v6521, %v6713
    %v6715 = vpop.f32.mrb[0].mxu0
    %v6716 = vadd.f32 %v6523, %v6715
    %6717 = vmatprep.mubr.bf16.mxu0 %v5239
    %6718 = vmatmul.mubr.bf16.gmra.mrb[0].mxu0 %v5238
    %v6719 = vpop.f32.mrb[0].mxu0
    %v6720 = vadd.f32 %v6527, %v6719
    %v6721 = vpop.f32.mrb[0].mxu0
    %v6722 = vadd.f32 %v6529, %v6721
    %v6723 = vpop.f32.mrb[0].mxu0
    %v6724 = vadd.f32 %v6531, %v6723
    %v6725 = vpop.f32.mrb[0].mxu0
    %v6726 = vadd.f32 %v6533, %v6725
    %6727 = vmatprep.mubr.bf16.mxu0 %v5241
    %6728 = vmatmul.mubr.bf16.gmra.mrb[0].mxu0 %v5240
    %v6729 = vpop.f32.mrb[0].mxu0
    %v6730 = vadd.f32 %v6537, %v6729
    %v6731 = vpop.f32.mrb[0].mxu0
    %v6732 = vadd.f32 %v6539, %v6731
    %v6733 = vpop.f32.mrb[0].mxu0
    %v6734 = vadd.f32 %v6541, %v6733
    %v6735 = vpop.f32.mrb[0].mxu0
    %v6736 = vadd.f32 %v6543, %v6735
    %6737 = vmatprep.mubr.bf16.mxu0 %v5243
    %6738 = vmatmul.mubr.bf16.gmra.mrb[0].mxu0 %v5242
    %v6739 = vpop.f32.mrb[0].mxu0
    %v6740 = vadd.f32 %v6547, %v6739
    %v6741 = vpop.f32.mrb[0].mxu0
    %v6742 = vadd.f32 %v6549, %v6741
    %v6743 = vpop.f32.mrb[0].mxu0
    %v6744 = vadd.f32 %v6551, %v6743
    %v6745 = vpop.f32.mrb[0].mxu0
    %v6746 = vadd.f32 %v6553, %v6745
    %6747 = vmatprep.mubr.bf16.mxu0 %v5245
    %6748 = vmatmul.mubr.bf16.gmra.mrb[0].mxu0 %v5244
    %v6749 = vpop.f32.mrb[0].mxu0
    %v6750 = vadd.f32 %v6557, %v6749
    %v6751 = vpop.f32.mrb[0].mxu0
    %v6752 = vadd.f32 %v6559, %v6751
    %v6753 = vpop.f32.mrb[0].mxu0
    %v6754 = vadd.f32 %v6561, %v6753
    %v6755 = vpop.f32.mrb[0].mxu0
    %v6756 = vadd.f32 %v6563, %v6755
    %6757 = vmatprep.mubr.bf16.mxu0 %v5247
    %6758 = vmatmul.mubr.bf16.gmra.mrb[0].mxu0 %v5246
    %v6759 = vpop.f32.mrb[0].mxu0
    %v6760 = vadd.f32 %v6567, %v6759
    %v6761 = vpop.f32.mrb[0].mxu0
    %v6762 = vadd.f32 %v6569, %v6761
    %v6763 = vpop.f32.mrb[0].mxu0
    %v6764 = vadd.f32 %v6571, %v6763
    %v6765 = vpop.f32.mrb[0].mxu0
    %v6766 = vadd.f32 %v6573, %v6765
    %6767 = vmatprep.mubr.bf16.mxu0 %v5249
    %6768 = vmatmul.mubr.bf16.gmra.mrb[0].mxu0 %v5248
    %v6769 = vpop.f32.mrb[0].mxu0
    %v6770 = vadd.f32 %v6577, %v6769
    %v6771 = vpop.f32.mrb[0].mxu0
    %v6772 = vadd.f32 %v6579, %v6771
    %v6773 = vpop.f32.mrb[0].mxu0
    %v6774 = vadd.f32 %v6581, %v6773
    %v6775 = vpop.f32.mrb[0].mxu0
    %v6776 = vadd.f32 %v6583, %v6775
    %6777 = vmatprep.mubr.bf16.mxu0 %v5251
    %6778 = vmatmul.mubr.bf16.gmra.mrb[0].mxu0 %v5250
    %v6779 = vpop.f32.mrb[0].mxu0
    %v6780 = vadd.f32 %v6587, %v6779
    %v6781 = vpop.f32.mrb[0].mxu0
    %v6782 = vadd.f32 %v6589, %v6781
    %v6783 = vpop.f32.mrb[0].mxu0
    %v6784 = vadd.f32 %v6591, %v6783
    %v6785 = vpop.f32.mrb[0].mxu0
    %v6786 = vadd.f32 %v6593, %v6785
    %6787 = vmatprep.mubr.bf16.mxu0 %v5253
    %6788 = vmatmul.mubr.bf16.gmra.mrb[0].mxu0 %v5252
    %v6789 = vpop.f32.mrb[0].mxu0
    %v6790 = vadd.f32 %v6597, %v6789
    %v6791 = vpop.f32.mrb[0].mxu0
    %v6792 = vadd.f32 %v6599, %v6791
    %v6793 = vpop.f32.mrb[0].mxu0
    %v6794 = vadd.f32 %v6601, %v6793
    %v6795 = vpop.f32.mrb[0].mxu0
    %v6796 = vadd.f32 %v6603, %v6795
    %6797 = vmatprep.mubr.bf16.mxu0 %v5255
    %6798 = vmatmul.mubr.bf16.gmra.mrb[0].mxu0 %v5254
    %v6799 = vpop.f32.mrb[0].mxu0
    %v6800 = vadd.f32 %v6607, %v6799
    %v6801 = vpop.f32.mrb[0].mxu0
    %v6802 = vadd.f32 %v6609, %v6801
    %v6803 = vpop.f32.mrb[0].mxu0
    %v6804 = vadd.f32 %v6611, %v6803
    %v6805 = vpop.f32.mrb[0].mxu0
    %v6806 = vadd.f32 %v6613, %v6805
    %6807 = vdwg.mxu0
    %v6808 = vld [vmem:[%s9] sm:$0xf]
    %v6809 = vld [vmem:[%s9 + $0x4] sm:$0xf]
    %v6810 = vld [vmem:[%s9 + $0x8] sm:$0xf]
    %v6811 = vld [vmem:[%s9 + $0xc] sm:$0xf]
    %v6812 = vld [vmem:[%s9 + $0x10] sm:$0xf]
    %v6813 = vld [vmem:[%s9 + $0x14] sm:$0xf]
    %v6814 = vld [vmem:[%s9 + $0x18] sm:$0xf]
    %v6815 = vld [vmem:[%s9 + $0x1c] sm:$0xf]
    %v6816 = vld [vmem:[%s9 + $0x20] sm:$0xf]
    %v6817 = vld [vmem:[%s9 + $0x24] sm:$0xf]
    %v6818 = vld [vmem:[%s9 + $0x28] sm:$0xf]
    %v6819 = vld [vmem:[%s9 + $0x2c] sm:$0xf]
    %v6820 = vld [vmem:[%s9 + $0x30] sm:$0xf]
    %v6821 = vld [vmem:[%s9 + $0x34] sm:$0xf]
    %v6822 = vld [vmem:[%s9 + $0x38] sm:$0xf]
    %v6823 = vld [vmem:[%s9 + $0x3c] sm:$0xf]
    %v6824 = vld [vmem:[%s9 + $0x40] sm:$0xf]
    %v6825 = vld [vmem:[%s9 + $0x44] sm:$0xf]
    %v6826 = vld [vmem:[%s9 + $0x48] sm:$0xf]
    %v6827 = vld [vmem:[%s9 + $0x4c] sm:$0xf]
    %v6828 = vld [vmem:[%s9 + $0x50] sm:$0xf]
    %v6829 = vld [vmem:[%s9 + $0x54] sm:$0xf]
    %v6830 = vld [vmem:[%s9 + $0x58] sm:$0xf]
    %v6831 = vld [vmem:[%s9 + $0x5c] sm:$0xf]
    %v6832 = vld [vmem:[%s9 + $0x60] sm:$0xf]
    %v6833 = vld [vmem:[%s9 + $0x64] sm:$0xf]
    %v6834 = vld [vmem:[%s9 + $0x68] sm:$0xf]
    %v6835 = vld [vmem:[%s9 + $0x6c] sm:$0xf]
    %v6836 = vld [vmem:[%s9 + $0x70] sm:$0xf]
    %v6837 = vld [vmem:[%s9 + $0x74] sm:$0xf]
    %v6838 = vld [vmem:[%s9 + $0x78] sm:$0xf]
    %v6839 = vld [vmem:[%s9 + $0x7c] sm:$0xf]
    %v6840 = vpack.c.bf16 %v6654, %v6650
    %v6841 = vpack.c.bf16 %v6656, %v6652
    %v6842 = vpack.c.bf16 %v6664, %v6660
    %v6843 = vpack.c.bf16 %v6666, %v6662
    %v6844 = vpack.c.bf16 %v6674, %v6670
    %v6845 = vpack.c.bf16 %v6676, %v6672
    %v6846 = vpack.c.bf16 %v6684, %v6680
    %v6847 = vpack.c.bf16 %v6686, %v6682
    %v6848 = vpack.c.bf16 %v6694, %v6690
    %v6849 = vpack.c.bf16 %v6696, %v6692
    %v6850 = vpack.c.bf16 %v6704, %v6700
    %v6851 = vpack.c.bf16 %v6706, %v6702
    %v6852 = vpack.c.bf16 %v6714, %v6710
    %v6853 = vpack.c.bf16 %v6716, %v6712
    %v6854 = vpack.c.bf16 %v6724, %v6720
    %v6855 = vpack.c.bf16 %v6726, %v6722
    %v6856 = vpack.c.bf16 %v6734, %v6730
    %v6857 = vpack.c.bf16 %v6736, %v6732
    %v6858 = vpack.c.bf16 %v6744, %v6740
    %v6859 = vpack.c.bf16 %v6746, %v6742
    %v6860 = vpack.c.bf16 %v6754, %v6750
    %v6861 = vpack.c.bf16 %v6756, %v6752
    %v6862 = vpack.c.bf16 %v6764, %v6760
    %v6863 = vpack.c.bf16 %v6766, %v6762
    %v6864 = vpack.c.bf16 %v6774, %v6770
    %v6865 = vpack.c.bf16 %v6776, %v6772
    %v6866 = vpack.c.bf16 %v6784, %v6780
    %v6867 = vpack.c.bf16 %v6786, %v6782
    %v6868 = vpack.c.bf16 %v6794, %v6790
    %v6869 = vpack.c.bf16 %v6796, %v6792
    %v6870 = vpack.c.bf16 %v6804, %v6800
    %v6871 = vpack.c.bf16 %v6806, %v6802
    %v6872 = vld [vmem:[%s10] sm:$0x1]
    %v6874 = vlaneseq
    %v6875 = vshrl.u32 %v6874, 7
    %v6876 = vsub.s32 0, %v6875
    %v6877 = vrot.slane %v6872, %v6876
    %v6911 = vunpack.c.l.b16 %v6808
    %v6912 = vunpack.c.l.b16 %v6809
    %v6913 = vunpack.c.l.b16 %v6810
    %v6914 = vunpack.c.l.b16 %v6811
    %v6915 = vunpack.c.l.b16 %v6812
    %v6916 = vunpack.c.l.b16 %v6813
    %v6917 = vunpack.c.l.b16 %v6814
    %v6918 = vunpack.c.l.b16 %v6815
    %v6919 = vunpack.c.l.b16 %v6816
    %v6920 = vunpack.c.l.b16 %v6817
    %v6921 = vunpack.c.l.b16 %v6818
    %v6922 = vunpack.c.l.b16 %v6819
    %v6923 = vunpack.c.l.b16 %v6820
    %v6924 = vunpack.c.l.b16 %v6821
    %v6925 = vunpack.c.l.b16 %v6822
    %v6926 = vunpack.c.l.b16 %v6823
    %v6927 = vunpack.c.l.b16 %v6824
    %v6928 = vunpack.c.l.b16 %v6825
    %v6929 = vunpack.c.l.b16 %v6826
    %v6930 = vunpack.c.l.b16 %v6827
    %v6931 = vunpack.c.l.b16 %v6828
    %v6932 = vunpack.c.l.b16 %v6829
    %v6933 = vunpack.c.l.b16 %v6830
    %v6934 = vunpack.c.l.b16 %v6831
    %v6935 = vunpack.c.l.b16 %v6832
    %v6936 = vunpack.c.l.b16 %v6833
    %v6937 = vunpack.c.l.b16 %v6834
    %v6938 = vunpack.c.l.b16 %v6835
    %v6939 = vunpack.c.l.b16 %v6836
    %v6940 = vunpack.c.l.b16 %v6837
    %v6941 = vunpack.c.l.b16 %v6838
    %v6942 = vunpack.c.l.b16 %v6839
    %v6943 = vpack.c.b16 %v6912, %v6911
    %v6944 = vpack.c.b16 %v6914, %v6913
    %v6945 = vpack.c.b16 %v6916, %v6915
    %v6946 = vpack.c.b16 %v6918, %v6917
    %v6947 = vpack.c.b16 %v6920, %v6919
    %v6948 = vpack.c.b16 %v6922, %v6921
    %v6949 = vpack.c.b16 %v6924, %v6923
    %v6950 = vpack.c.b16 %v6926, %v6925
    %v6951 = vpack.c.b16 %v6928, %v6927
    %v6952 = vpack.c.b16 %v6930, %v6929
    %v6953 = vpack.c.b16 %v6932, %v6931
    %v6954 = vpack.c.b16 %v6934, %v6933
    %v6955 = vpack.c.b16 %v6936, %v6935
    %v6956 = vpack.c.b16 %v6938, %v6937
    %v6957 = vpack.c.b16 %v6940, %v6939
    %v6958 = vpack.c.b16 %v6942, %v6941
    %6975 = vmatprep.subr.bf16.mxu0 0
    %6976 = vmatpush1.bf16.msra.mxu0 %v6943
    %6977 = vmatprep.subr.bf16.mxu0 0
    %6978 = vmatpush1.bf16.msra.mxu0 %v6944
    %6979 = vmatprep.subr.bf16.mxu0 0
    %6980 = vmatpush1.bf16.msra.mxu0 %v6945
    %6981 = vmatprep.subr.bf16.mxu0 0
    %6982 = vmatpush1.bf16.msra.mxu0 %v6946
    %6983 = vmatprep.subr.bf16.mxu0 0
    %6984 = vmatpush1.bf16.msra.mxu0 %v6947
    %6985 = vmatprep.subr.bf16.mxu0 0
    %6986 = vmatpush1.bf16.msra.mxu0 %v6948
    %6987 = vmatprep.subr.bf16.mxu0 0
    %6988 = vmatpush1.bf16.msra.mxu0 %v6949
    %6989 = vmatprep.subr.bf16.mxu0 0
    %6990 = vmatpush1.bf16.msra.mxu0 %v6950
    %6991 = vmatprep.subr.bf16.mxu0 0
    %6992 = vmatpush1.bf16.msra.mxu0 %v6951
    %6993 = vmatprep.subr.bf16.mxu0 0
    %6994 = vmatpush1.bf16.msra.mxu0 %v6952
    %6995 = vmatprep.subr.bf16.mxu0 0
    %6996 = vmatpush1.bf16.msra.mxu0 %v6953
    %6997 = vmatprep.subr.bf16.mxu0 0
    %6998 = vmatpush1.bf16.msra.mxu0 %v6954
    %6999 = vmatprep.subr.bf16.mxu0 0
    %7000 = vmatpush1.bf16.msra.mxu0 %v6955
    %7001 = vmatprep.subr.bf16.mxu0 0
    %7002 = vmatpush1.bf16.msra.mxu0 %v6956
    %7003 = vmatprep.subr.bf16.mxu0 0
    %7004 = vmatpush1.bf16.msra.mxu0 %v6957
    %7005 = vmatprep.subr.bf16.mxu0 0
    %7006 = vmatpush1.bf16.msra.mxu0 %v6958
    %7007 = vmatprep.mubr.bf16.mxu0 %v6841
    %7008 = vmatmul.mubr.bf16.gmra.mrb[0].mxu0 %v6840
    %v7009 = vpop.f32.mrb[0].mxu0
    %v7010 = vadd.f32 %v6877, %v7009
    %v7011 = vpop.f32.mrb[0].mxu0
    %v7012 = vpop.f32.mrb[0].mxu0
    %v7013 = vadd.f32 %v6877, %v7012
    %v7014 = vpop.f32.mrb[0].mxu0
    %7015 = vmatprep.mubr.bf16.mxu0 %v6843
    %7016 = vmatmul.mubr.bf16.gmra.mrb[0].mxu0 %v6842
    %v7017 = vpop.f32.mrb[0].mxu0
    %v7018 = vadd.f32 %v6877, %v7017
    %v7019 = vpop.f32.mrb[0].mxu0
    %v7020 = vpop.f32.mrb[0].mxu0
    %v7021 = vadd.f32 %v6877, %v7020
    %v7022 = vpop.f32.mrb[0].mxu0
    %7023 = vmatprep.mubr.bf16.mxu0 %v6845
    %7024 = vmatmul.mubr.bf16.gmra.mrb[0].mxu0 %v6844
    %v7025 = vpop.f32.mrb[0].mxu0
    %v7026 = vadd.f32 %v6877, %v7025
    %v7027 = vpop.f32.mrb[0].mxu0
    %v7028 = vpop.f32.mrb[0].mxu0
    %v7029 = vadd.f32 %v6877, %v7028
    %v7030 = vpop.f32.mrb[0].mxu0
    %7031 = vmatprep.mubr.bf16.mxu0 %v6847
    %7032 = vmatmul.mubr.bf16.gmra.mrb[0].mxu0 %v6846
    %v7033 = vpop.f32.mrb[0].mxu0
    %v7034 = vadd.f32 %v6877, %v7033
    %v7035 = vpop.f32.mrb[0].mxu0
    %v7036 = vpop.f32.mrb[0].mxu0
    %v7037 = vadd.f32 %v6877, %v7036
    %v7038 = vpop.f32.mrb[0].mxu0
    %7039 = vmatprep.mubr.bf16.mxu0 %v6849
    %7040 = vmatmul.mubr.bf16.gmra.mrb[0].mxu0 %v6848
    %v7041 = vpop.f32.mrb[0].mxu0
    %v7042 = vadd.f32 %v6877, %v7041
    %v7043 = vpop.f32.mrb[0].mxu0
    %v7044 = vpop.f32.mrb[0].mxu0
    %v7045 = vadd.f32 %v6877, %v7044
    %v7046 = vpop.f32.mrb[0].mxu0
    %7047 = vmatprep.mubr.bf16.mxu0 %v6851
    %7048 = vmatmul.mubr.bf16.gmra.mrb[0].mxu0 %v6850
    %v7049 = vpop.f32.mrb[0].mxu0
    %v7050 = vadd.f32 %v6877, %v7049
    %v7051 = vpop.f32.mrb[0].mxu0
    %v7052 = vpop.f32.mrb[0].mxu0
    %v7053 = vadd.f32 %v6877, %v7052
    %v7054 = vpop.f32.mrb[0].mxu0
    %7055 = vmatprep.mubr.bf16.mxu0 %v6853
    %7056 = vmatmul.mubr.bf16.gmra.mrb[0].mxu0 %v6852
    %v7057 = vpop.f32.mrb[0].mxu0
    %v7058 = vadd.f32 %v6877, %v7057
    %v7059 = vpop.f32.mrb[0].mxu0
    %v7060 = vpop.f32.mrb[0].mxu0
    %v7061 = vadd.f32 %v6877, %v7060
    %v7062 = vpop.f32.mrb[0].mxu0
    %7063 = vmatprep.mubr.bf16.mxu0 %v6855
    %7064 = vmatmul.mubr.bf16.gmra.mrb[0].mxu0 %v6854
    %v7065 = vpop.f32.mrb[0].mxu0
    %v7066 = vadd.f32 %v6877, %v7065
    %v7067 = vpop.f32.mrb[0].mxu0
    %v7068 = vpop.f32.mrb[0].mxu0
    %v7069 = vadd.f32 %v6877, %v7068
    %v7070 = vpop.f32.mrb[0].mxu0
    %7071 = vmatprep.mubr.bf16.mxu0 %v6857
    %7072 = vmatmul.mubr.bf16.gmra.mrb[0].mxu0 %v6856
    %v7073 = vpop.f32.mrb[0].mxu0
    %v7074 = vadd.f32 %v6877, %v7073
    %v7075 = vpop.f32.mrb[0].mxu0
    %v7076 = vpop.f32.mrb[0].mxu0
    %v7077 = vadd.f32 %v6877, %v7076
    %v7078 = vpop.f32.mrb[0].mxu0
    %7079 = vmatprep.mubr.bf16.mxu0 %v6859
    %7080 = vmatmul.mubr.bf16.gmra.mrb[0].mxu0 %v6858
    %v7081 = vpop.f32.mrb[0].mxu0
    %v7082 = vadd.f32 %v6877, %v7081
    %v7083 = vpop.f32.mrb[0].mxu0
    %v7084 = vpop.f32.mrb[0].mxu0
    %v7085 = vadd.f32 %v6877, %v7084
    %v7086 = vpop.f32.mrb[0].mxu0
    %7087 = vmatprep.mubr.bf16.mxu0 %v6861
    %7088 = vmatmul.mubr.bf16.gmra.mrb[0].mxu0 %v6860
    %v7089 = vpop.f32.mrb[0].mxu0
    %v7090 = vadd.f32 %v6877, %v7089
    %v7091 = vpop.f32.mrb[0].mxu0
    %v7092 = vpop.f32.mrb[0].mxu0
    %v7093 = vadd.f32 %v6877, %v7092
    %v7094 = vpop.f32.mrb[0].mxu0
    %7095 = vmatprep.mubr.bf16.mxu0 %v6863
    %7096 = vmatmul.mubr.bf16.gmra.mrb[0].mxu0 %v6862
    %v7097 = vpop.f32.mrb[0].mxu0
    %v7098 = vadd.f32 %v6877, %v7097
    %v7099 = vpop.f32.mrb[0].mxu0
    %v7100 = vpop.f32.mrb[0].mxu0
    %v7101 = vadd.f32 %v6877, %v7100
    %v7102 = vpop.f32.mrb[0].mxu0
    %7103 = vmatprep.mubr.bf16.mxu0 %v6865
    %7104 = vmatmul.mubr.bf16.gmra.mrb[0].mxu0 %v6864
    %v7105 = vpop.f32.mrb[0].mxu0
    %v7106 = vadd.f32 %v6877, %v7105
    %v7107 = vpop.f32.mrb[0].mxu0
    %v7108 = vpop.f32.mrb[0].mxu0
    %v7109 = vadd.f32 %v6877, %v7108
    %v7110 = vpop.f32.mrb[0].mxu0
    %7111 = vmatprep.mubr.bf16.mxu0 %v6867
    %7112 = vmatmul.mubr.bf16.gmra.mrb[0].mxu0 %v6866
    %v7113 = vpop.f32.mrb[0].mxu0
    %v7114 = vadd.f32 %v6877, %v7113
    %v7115 = vpop.f32.mrb[0].mxu0
    %v7116 = vpop.f32.mrb[0].mxu0
    %v7117 = vadd.f32 %v6877, %v7116
    %v7118 = vpop.f32.mrb[0].mxu0
    %7119 = vmatprep.mubr.bf16.mxu0 %v6869
    %7120 = vmatmul.mubr.bf16.gmra.mrb[0].mxu0 %v6868
    %v7121 = vpop.f32.mrb[0].mxu0
    %v7122 = vadd.f32 %v6877, %v7121
    %v7123 = vpop.f32.mrb[0].mxu0
    %v7124 = vpop.f32.mrb[0].mxu0
    %v7125 = vadd.f32 %v6877, %v7124
    %v7126 = vpop.f32.mrb[0].mxu0
    %7127 = vmatprep.mubr.bf16.mxu0 %v6871
    %7128 = vmatmul.mubr.bf16.gmra.mrb[0].mxu0 %v6870
    %v7129 = vpop.f32.mrb[0].mxu0
    %v7130 = vadd.f32 %v6877, %v7129
    %v7131 = vpop.f32.mrb[0].mxu0
    %v7132 = vpop.f32.mrb[0].mxu0
    %v7133 = vadd.f32 %v6877, %v7132
    %v7134 = vpop.f32.mrb[0].mxu0
    %7135 = vdwg.mxu0
    %v7136 = vmax.f32 %v7010, 0.0
    %v7137 = vmax.f32 %v7013, 0.0
    %v7138 = vmax.f32 %v7018, 0.0
    %v7139 = vmax.f32 %v7021, 0.0
    %v7140 = vmax.f32 %v7026, 0.0
    %v7141 = vmax.f32 %v7029, 0.0
    %v7142 = vmax.f32 %v7034, 0.0
    %v7143 = vmax.f32 %v7037, 0.0
    %v7144 = vmax.f32 %v7042, 0.0
    %v7145 = vmax.f32 %v7045, 0.0
    %v7146 = vmax.f32 %v7050, 0.0
    %v7147 = vmax.f32 %v7053, 0.0
    %v7148 = vmax.f32 %v7058, 0.0
    %v7149 = vmax.f32 %v7061, 0.0
    %v7150 = vmax.f32 %v7066, 0.0
    %v7151 = vmax.f32 %v7069, 0.0
    %v7152 = vmax.f32 %v7074, 0.0
    %v7153 = vmax.f32 %v7077, 0.0
    %v7154 = vmax.f32 %v7082, 0.0
    %v7155 = vmax.f32 %v7085, 0.0
    %v7156 = vmax.f32 %v7090, 0.0
    %v7157 = vmax.f32 %v7093, 0.0
    %v7158 = vmax.f32 %v7098, 0.0
    %v7159 = vmax.f32 %v7101, 0.0
    %v7160 = vmax.f32 %v7106, 0.0
    %v7161 = vmax.f32 %v7109, 0.0
    %v7162 = vmax.f32 %v7114, 0.0
    %v7163 = vmax.f32 %v7117, 0.0
    %v7164 = vmax.f32 %v7122, 0.0
    %v7165 = vmax.f32 %v7125, 0.0
    %v7166 = vmax.f32 %v7130, 0.0
    %v7167 = vmax.f32 %v7133, 0.0
    %v7168 = vld [vmem:[%s11] sm:$0x1]
    %v7169 = vpack.c.bf16 %v7137, %v7136
    %v7170 = vpack.c.bf16 %v7139, %v7138
    %v7171 = vpack.c.bf16 %v7141, %v7140
    %v7172 = vpack.c.bf16 %v7143, %v7142
    %v7173 = vpack.c.bf16 %v7145, %v7144
    %v7174 = vpack.c.bf16 %v7147, %v7146
    %v7175 = vpack.c.bf16 %v7149, %v7148
    %v7176 = vpack.c.bf16 %v7151, %v7150
    %v7177 = vpack.c.bf16 %v7153, %v7152
    %v7178 = vpack.c.bf16 %v7155, %v7154
    %v7179 = vpack.c.bf16 %v7157, %v7156
    %v7180 = vpack.c.bf16 %v7159, %v7158
    %v7181 = vpack.c.bf16 %v7161, %v7160
    %v7182 = vpack.c.bf16 %v7163, %v7162
    %v7183 = vpack.c.bf16 %v7165, %v7164
    %v7184 = vpack.c.bf16 %v7167, %v7166
    %v7185 = vld [vmem:[#allocation2] sm:$0x1]
    %7187 = vset.pattern.permute.xlu0 0
    %7188 = vperm.xlu0 %7187, %v7185
    %v7189 = vpop.permute.xlu0 %7188
    %v7191 = vlaneseq
    %v7192 = vshrl.u32 %v7191, 7
    %v7193 = vsub.s32 0, %v7192
    %v7194 = vrot.slane %v7189, %v7193
    %vm7195 = vcmask 523264
    %v7197 = vsel %vm7195, %v7168, 0
    %v7200 = vsel %vm7195, %v7169, 0
    %v7203 = vsel %vm7195, %v7170, 0
    %v7206 = vsel %vm7195, %v7171, 0
    %v7209 = vsel %vm7195, %v7172, 0
    %v7212 = vsel %vm7195, %v7173, 0
    %v7215 = vsel %vm7195, %v7174, 0
    %v7218 = vsel %vm7195, %v7175, 0
    %v7221 = vsel %vm7195, %v7176, 0
    %v7224 = vsel %vm7195, %v7177, 0
    %v7227 = vsel %vm7195, %v7178, 0
    %v7230 = vsel %vm7195, %v7179, 0
    %v7233 = vsel %vm7195, %v7180, 0
    %v7236 = vsel %vm7195, %v7181, 0
    %v7239 = vsel %vm7195, %v7182, 0
    %v7242 = vsel %vm7195, %v7183, 0
    %v7245 = vsel %vm7195, %v7184, 0
    %7247 = vmatprep.subr.bf16.mxu0 0
    %7248 = vmatpush1.bf16.xpose.msra.mxu0 %v7200
    %7249 = vmatprep.subr.bf16.mxu0 0
    %7250 = vmatpush1.bf16.xpose.msra.mxu0 %v7203
    %7251 = vmatprep.subr.bf16.mxu0 0
    %7252 = vmatpush1.bf16.xpose.msra.mxu0 %v7206
    %7253 = vmatprep.subr.bf16.mxu0 0
    %7254 = vmatpush1.bf16.xpose.msra.mxu0 %v7209
    %7255 = vmatprep.subr.bf16.mxu0 0
    %7256 = vmatpush1.bf16.xpose.msra.mxu0 %v7212
    %7257 = vmatprep.subr.bf16.mxu0 0
    %7258 = vmatpush1.bf16.xpose.msra.mxu0 %v7215
    %7259 = vmatprep.subr.bf16.mxu0 0
    %7260 = vmatpush1.bf16.xpose.msra.mxu0 %v7218
    %7261 = vmatprep.subr.bf16.mxu0 0
    %7262 = vmatpush1.bf16.xpose.msra.mxu0 %v7221
    %7263 = vmatprep.subr.bf16.mxu0 0
    %7264 = vmatpush1.bf16.xpose.msra.mxu0 %v7224
    %7265 = vmatprep.subr.bf16.mxu0 0
    %7266 = vmatpush1.bf16.xpose.msra.mxu0 %v7227
    %7267 = vmatprep.subr.bf16.mxu0 0
    %7268 = vmatpush1.bf16.xpose.msra.mxu0 %v7230
    %7269 = vmatprep.subr.bf16.mxu0 0
    %7270 = vmatpush1.bf16.xpose.msra.mxu0 %v7233
    %7271 = vmatprep.subr.bf16.mxu0 0
    %7272 = vmatpush1.bf16.xpose.msra.mxu0 %v7236
    %7273 = vmatprep.subr.bf16.mxu0 0
    %7274 = vmatpush1.bf16.xpose.msra.mxu0 %v7239
    %7275 = vmatprep.subr.bf16.mxu0 0
    %7276 = vmatpush1.bf16.xpose.msra.mxu0 %v7242
    %7277 = vmatprep.subr.bf16.mxu0 0
    %7278 = vmatpush1.bf16.xpose.msra.mxu0 %v7245
    %7279 = vmatprep.mubr.bf16.mxu0 0
    %7280 = vmatmul.mubr.bf16.gmra.mrb[0].mxu0 %v7197
    %v7281 = vpop.f32.mrb[0].mxu0
    %v7282 = vadd.f32 %v7194, %v7281
    %v7283 = vpop.f32.mrb[0].mxu0
    %v7284 = vadd.f32 %v7194, %v7283
    %v7285 = vpop.f32.mrb[0].mxu0
    %v7286 = vpop.f32.mrb[0].mxu0
    %7287 = vdwg.mxu0
    %v7288 = vand.u32 2147483647, %v7282
    %v7289 = vand.u32 2147483647, %v7284
    %v7290 = vsub.f32 0.0, %v7288
    %v7291 = vsub.f32 0.0, %v7289
    %v7292 = vmul.f32 %v7290, 1.442695
    %v7293 = vpow.pop %v7292
    %v7294 = vmul.f32 %v7291, 1.442695
    %v7295 = vpow.pop %v7294
    %vm7296 = vcmp.ge.f32.partialorder %v7282, 0.0
    %vm7297 = vcmp.ge.f32.partialorder %v7284, 0.0
    %v7298 = vsel %vm7296, 1.0, %v7293
    %v7299 = vsel %vm7297, 1.0, %v7295
    %v7300 = vadd.f32 %v7293, 1.0
    %v7301 = vadd.f32 %v7295, 1.0
    %v7302 = vrcp.pop %v7300
    %v7303 = vmul.f32 %v7298, %v7302
    %v7304 = vrcp.pop %v7301
    %v7305 = vmul.f32 %v7299, %v7304
    %v7308 = vcombine.low %v7303, %v7305
    %v7310 = vunpack.c.l.s4 1966171168
    %v7311 = vunpack.c.0.s8 %v7310
    %v7312 = vlaneseq
    %v7313 = vshrl.u32 %v7312, 7
    %v7314 = vsub.s32 %v7311, %v7313
    %v7315 = vrot.slane %v7308, %v7314
    %v7317 = vunpack.c.l.s4 1966171168
    %v7318 = vunpack.c.0.s8 %v7317
    %v7319 = vlaneseq
    %v7320 = vshrl.u32 %v7319, 7
    %v7321 = vsub.s32 %v7318, %v7320
    %v7322 = vrot.slane %v7315, %v7321
    %v7324 = vlaneseq
    %vm7325 = vcmp.ge.s32.totalorder %v7324, 0
    %vm7326 = vcmp.lt.s32.totalorder %v7324, 256
    %vm7327 = vmand %vm7325, %vm7326
    %7328 = vst.msk [vmem:[#allocation8] sm:$0x3] %vm7327, %v7322
    // Predicated region
    $region62: #{tpu_custom_call.1} parent=1 // pred_check
      _
    $region63: #{tpu_custom_call.1} parent=1 // pred_check_branch
      %7330 = sbr.rel (0) target = $region65
    $region64: #{tpu_custom_call.1} parent=1 // pred_region
      %s7332 = ssub.s32 32, 32
      %7333 = vsyncadd [#allocation5], %s7332
      %s7335 = sshll.u32 [#allocation8], 4
      %s7336 = int_to_ptr.vmem [resolvable:$true] %s7335
      %7338 = dma.vmem_to_hbm [thread:$0]  %s7336, 32, %s13, [#allocation5]
    $region65: #{tpu_custom_call.1} parent=1 // pred_fallthru
      _
    // Predicated region
    $region66: #{tpu_custom_call.1} parent=1 // pred_check
      _
    $region67: #{tpu_custom_call.1} parent=1 // pred_check_branch
      %7340 = sbr.rel (0) target = $region69
    $region68: #{tpu_custom_call.1} parent=1 // pred_region
      %7341 = dma.done [#allocation5], 32
    $region69: #{tpu_custom_call.1} parent=1 // pred_fallthru
      _
    %7342 = vsyncpa [#allocation4], 1
    %7343 = vsyncpa [#allocation7], 1
    %7344 = vsyncpa [#allocation5], 1

</llo_original>
